<compile_context>
chip_gen: v7x
topology: tpu7x:2x2x1
jax: 0.10.0
libtpu: 0.0.40
codegen_flags: <defaults>
</compile_context>

<pallas_src>
import functools

import jax
import jax.numpy as jnp
from jax import lax
from jax.experimental import pallas as pl
from jax.experimental.pallas import tpu as pltpu

B = 2
L = 200          # Linear(1000, 600) forces L = 200 since 20 * (L // 4) = 1000
EPS = 1e-5


def _even_selector(rows, cols):
    """0/1 selector S with S[2*c, c] = 1 (keep even columns), built in-kernel."""
    r = lax.broadcasted_iota(jnp.int32, (rows, cols), 0)
    c = lax.broadcasted_iota(jnp.int32, (rows, cols), 1)
    return (r == 2 * c).astype(jnp.float32)


# --------------------------------------------------------------------------
# Single fused kernel:
#   Conv1d(1->10,k3,same) + BN + MaxPool2 + tanh
# + Conv1d(10->20,k3,same) + BN + MaxPool2 + tanh
# + Flatten + Linear(1000->600) + tanh + Linear(600->1)
# --------------------------------------------------------------------------
def _fused_kernel(x_ref, c1_ref, w2_ref, bn2_ref, fcs_ref, fc1w_hbm,
                  out_ref, mlp_scr, fc1w_vmem, fc1w_sem,
                  *, batch, length, in_features):
    n = batch * length
    c2 = 20                       # conv2 output channels
    l2 = length // 2
    l4 = length // 4
    n2 = n // 2

    # ---- Kick off the fc1 weight DMA immediately; hidden behind conv stage ---
    fc1w_cp = pltpu.make_async_copy(fc1w_hbm, fc1w_vmem, fc1w_sem)
    fc1w_cp.start()

    x = x_ref[...]                                            # (1, n) f32

    # ---- Conv1d(1 -> 10, k=3, 'same') via shifted adds (VPU broadcasts) ------
    pos = lax.broadcasted_iota(jnp.int32, x.shape, 1) % length
    x_m1 = jnp.where(pos == 0, 0.0, pltpu.roll(x, shift=1, axis=1))               # x[l-1]
    x_p1 = jnp.where(pos == length - 1, 0.0, pltpu.roll(x, shift=n - 1, axis=1))  # x[l+1]
    c1 = c1_ref[...]                                          # (10, 6): taps, bias, gamma, beta
    h = c1[:, 0:1] * x_m1 + c1[:, 1:2] * x + c1[:, 2:3] * x_p1 + c1[:, 3:4]       # (10, n)

    # ---- BatchNorm1d(10), training-mode batch stats + affine ------------------
    mu = jnp.mean(h, axis=1, keepdims=True)
    var = jnp.mean((h - mu) ** 2, axis=1, keepdims=True)
    h = c1[:, 4:5] * (h - mu) * lax.rsqrt(var + EPS) + c1[:, 5:6]

    # ---- MaxPool1d(2) BEFORE tanh (monotonic => identical result, half the
    #      transcendentals): roll+max, then even-column 0/1 selector matmul.
    #      Pool pairs never straddle a batch boundary (L is even). ------------
    m1 = jnp.maximum(h, pltpu.roll(h, shift=n - 1, axis=1))
    p1 = jnp.tanh(jnp.dot(m1, _even_selector(n, n2),
                          preferred_element_type=jnp.float32))                    # (10, n2)

    # ---- Conv1d(10 -> 20, k=3, 'same'): per-tap MXU matmuls, bf16 operands ----
    pos2 = lax.broadcasted_iota(jnp.int32, p1.shape, 1) % l2
    p1_m1 = jnp.where(pos2 == 0, 0.0, pltpu.roll(p1, shift=1, axis=1))
    p1_p1 = jnp.where(pos2 == l2 - 1, 0.0, pltpu.roll(p1, shift=n2 - 1, axis=1))
    bn2 = bn2_ref[...]                                        # (20, 3): bias, gamma, beta
    h2 = (jnp.dot(w2_ref[0], p1_m1.astype(jnp.bfloat16), preferred_element_type=jnp.float32)
          + jnp.dot(w2_ref[1], p1.astype(jnp.bfloat16), preferred_element_type=jnp.float32)
          + jnp.dot(w2_ref[2], p1_p1.astype(jnp.bfloat16), preferred_element_type=jnp.float32)
          + bn2[:, 0:1])                                      # (20, n2) f32

    # ---- BatchNorm1d(20) + MaxPool1d(2) + tanh --------------------------------
    mu2 = jnp.mean(h2, axis=1, keepdims=True)
    var2 = jnp.mean((h2 - mu2) ** 2, axis=1, keepdims=True)
    h2 = bn2[:, 1:2] * (h2 - mu2) * lax.rsqrt(var2 + EPS) + bn2[:, 2:3]
    m2 = jnp.maximum(h2, pltpu.roll(h2, shift=n2 - 1, axis=1))
    p2 = jnp.tanh(jnp.dot(m2, _even_selector(n2, n // 4),
                          preferred_element_type=jnp.float32))                    # (20, n//4)

    # ---- Flatten(start_dim=1): (20, B*l4) -> (B, 20*l4) in lane-padded scratch
    # TODO(synk): a single reshape/transpose relayout would collapse this to one
    # store, but Mosaic reshape support for (20, B*50) -> (B, 1000) is not
    # guaranteed, so keep the known-good unrolled slice stores.
    for bi in range(batch):
        for c in range(c2):
            mlp_scr[bi:bi + 1, c * l4:(c + 1) * l4] = p2[c:c + 1, bi * l4:(bi + 1) * l4]
    # Zero only the pad lanes (fc1_w pad rows are zero, but 0 * NaN is NaN).
    mlp_scr[:, in_features:] = jnp.zeros(
        (batch, mlp_scr.shape[1] - in_features), jnp.float32)

    # ---- Linear(1000 -> 600): bf16 MXU operands, f32 accumulate, f32 tanh -----
    fc1w_cp.wait()                                # weight DMA overlapped above
    fc1_b = fcs_ref[0:1, :]                                   # (1, 600)
    h1 = jnp.tanh(jnp.dot(mlp_scr[...].astype(jnp.bfloat16), fc1w_vmem[...],
                          preferred_element_type=jnp.float32) + fc1_b)

    # ---- Linear(600 -> 1): VPU multiply + lane reduction (no N=1 MXU matmul) --
    fc2_w = fcs_ref[1:2, :]                                   # (1, 600)
    fc2_b = fcs_ref[2:3, 0:1]                                 # (1, 1)
    out_ref[...] = jnp.sum(h1 * fc2_w, axis=1, keepdims=True) + fc2_b


# --------------------------------------------------------------------------
# Forward wrapper: single pallas_call, no per-call repacking
# --------------------------------------------------------------------------
def cnn_1d_forward(x, pp):
    b, c_in, length = x.shape
    assert c_in == 1 and length % 4 == 0
    in_features = 20 * (length // 4)
    feat_pad, out_f = pp["fc1_w"].shape           # (1024, 600)

    vmem = pl.BlockSpec(memory_space=pltpu.MemorySpace.VMEM)
    x_flat = x.reshape(1, b * length)             # flat column index = b*L + l

    return pl.pallas_call(
        functools.partial(_fused_kernel, batch=b, length=length,
                          in_features=in_features),
        out_shape=jax.ShapeDtypeStruct((b, 1), jnp.float32),
        in_specs=[vmem, vmem, vmem, vmem, vmem,
                  pl.BlockSpec(memory_space=pl.ANY)],   # fc1_w stays in HBM
        out_specs=vmem,
        scratch_shapes=[pltpu.VMEM((b, feat_pad), jnp.float32),      # MLP input
                        pltpu.VMEM((feat_pad, out_f), jnp.bfloat16),  # fc1_w dst
                        pltpu.SemaphoreType.DMA(())],
    )(x_flat, pp["c1"], pp["w2"], pp["bn2"], pp["fcs"], pp["fc1_w"])


# --------------------------------------------------------------------------
# One-time parameter repacking (hoisted out of the forward path)
# --------------------------------------------------------------------------
def prepare_params(p, length=L):
    l4 = length // 4
    out_f, in_f = p["fc1_w"].shape              # (600, 1000)
    assert in_f == 20 * l4
    feat_pad = ((in_f + 127) // 128) * 128      # lane-dense K dim (1024)

    # conv1 slab: 3 taps | conv bias | BN gamma | BN beta    -> (10, 6)
    c1 = jnp.concatenate([p["w1"][:, 0, :],
                          p["b1"].reshape(10, 1),
                          p["g1"].reshape(10, 1),
                          p["be1"].reshape(10, 1)], axis=1)

    # conv2/BN2 slab: conv bias | BN gamma | BN beta         -> (20, 3)
    bn2 = jnp.stack([p["b2"], p["g2"], p["be2"]], axis=1)

    # fc slab: row0 = fc1 bias, row1 = fc2 weight, row2[0] = fc2 bias -> (3, 600)
    fcs = jnp.stack([p["fc1_b"],
                     p["fc2_w"].reshape(-1),
                     jnp.zeros((out_f,), jnp.float32).at[0].set(p["fc2_b"][0])],
                    axis=0)

    # fc1 weight: transposed, zero row-padded to 1024, bf16 (DMA'd manually).
    fc1w = jnp.concatenate(
        [p["fc1_w"].T, jnp.zeros((feat_pad - in_f, out_f), jnp.float32)], axis=0
    ).astype(jnp.bfloat16)                      # (1024, 600)

    return {
        "c1": c1,
        "w2": jnp.transpose(p["w2"], (2, 0, 1)).astype(jnp.bfloat16),  # (3, 20, 10)
        "bn2": bn2,
        "fcs": fcs,
        "fc1_w": fc1w,
    }


# --------------------------------------------------------------------------
# Deterministic parameter init (PyTorch shapes; synthetic values)
# --------------------------------------------------------------------------
def init_params(key):
    ks = jax.random.split(key, 8)
    return {
        "w1": jax.random.normal(ks[0], (10, 1, 3), jnp.float32) * 0.3,
        "b1": jax.random.normal(ks[1], (10,), jnp.float32) * 0.1,
        "g1": jnp.ones((10,), jnp.float32),
        "be1": jnp.zeros((10,), jnp.float32),
        "w2": jax.random.normal(ks[2], (20, 10, 3), jnp.float32) * 0.2,
        "b2": jax.random.normal(ks[3], (20,), jnp.float32) * 0.1,
        "g2": jnp.ones((20,), jnp.float32),
        "be2": jnp.zeros((20,), jnp.float32),
        "fc1_w": jax.random.normal(ks[4], (600, 1000), jnp.float32) * 0.05,
        "fc1_b": jax.random.normal(ks[5], (600,), jnp.float32) * 0.05,
        "fc2_w": jax.random.normal(ks[6], (1, 600), jnp.float32) * 0.05,
        "fc2_b": jax.random.normal(ks[7], (1,), jnp.float32) * 0.05,
    }


# --------------------------------------------------------------------------
# Pure-JAX reference (mirrors the PyTorch forward, training-mode BN)
# --------------------------------------------------------------------------
def reference_forward(x, p):
    def conv1d_same(a, w, b):
        lcur = a.shape[2]
        a_pad = jnp.pad(a, ((0, 0), (0, 0), (1, 1)))
        out = sum(jnp.einsum("oi,bil->bol", w[:, :, k], a_pad[:, :, k:k + lcur])
                  for k in range(w.shape[2]))
        return out + b[None, :, None]

    def bn_train(a, g, beta):
        mu = a.mean(axis=(0, 2), keepdims=True)
        var = ((a - mu) ** 2).mean(axis=(0, 2), keepdims=True)
        return g[None, :, None] * (a - mu) / jnp.sqrt(var + EPS) + beta[None, :, None]

    def maxpool2(a):
        bb, cc, ll = a.shape
        return a.reshape(bb, cc, ll // 2, 2).max(axis=-1)

    h = maxpool2(jnp.tanh(bn_train(conv1d_same(x, p["w1"], p["b1"]), p["g1"], p["be1"])))
    h = maxpool2(jnp.tanh(bn_train(conv1d_same(h, p["w2"], p["b2"]), p["g2"], p["be2"])))
    flat = h.reshape(h.shape[0], -1)
    h2 = jnp.tanh(flat @ p["fc1_w"].T + p["fc1_b"])
    return h2 @ p["fc2_w"].T + p["fc2_b"]


if __name__ == "__main__":
    key = jax.random.PRNGKey(0)
    pkey, xkey = jax.random.split(key)
    params = init_params(pkey)
    prepped = prepare_params(params)          # hoisted, one-time repacking
    x = jax.random.normal(xkey, (B, 1, L), jnp.float32)

    fwd = jax.jit(cnn_1d_forward)
    out = jax.block_until_ready(fwd(x, prepped))

    ref = reference_forward(x, params)
    assert out.shape == (B, 1), out.shape
    # conv2 + fc1 run with bf16 MXU operands (f32 accumulate); well within tol.
    assert bool(jnp.allclose(out, ref, rtol=2e-2, atol=2e-2)), (out, ref)
    print("KERNEL_OK")
</pallas_src>

<mosaic_0001>
module attributes {stable_mosaic.version = 11 : i64} {
  func.func @_fused_kernel(%arg0: memref<1x400xf32, #tpu.memory_space<vmem>>, %arg1: memref<10x6xf32, #tpu.memory_space<vmem>>, %arg2: memref<3x20x10xbf16, #tpu.memory_space<vmem>>, %arg3: memref<20x3xf32, #tpu.memory_space<vmem>>, %arg4: memref<3x600xf32, #tpu.memory_space<vmem>>, %arg5: memref<1024x600xbf16, #tpu.memory_space<any>>, %arg6: memref<2x1xf32, #tpu.memory_space<vmem>>, %arg7: memref<2x1024xf32, #tpu.memory_space<vmem>>, %arg8: memref<1024x600xbf16, #tpu.memory_space<vmem>>, %arg9: memref<!tpu.dma_semaphore, #tpu.memory_space<semaphore_mem>>) attributes {dimension_semantics = [], scalar_prefetch = 0 : i64, scratch_operands = 3 : i64, tpu.core_type = #tpu.core_type<tc>} {
    tpu.enqueue_dma source(%arg5 : memref<1024x600xbf16, #tpu.memory_space<any>>) target(%arg8 : memref<1024x600xbf16, #tpu.memory_space<vmem>>) target_semaphore(%arg9 : memref<!tpu.dma_semaphore, #tpu.memory_space<semaphore_mem>>)
    %c0 = arith.constant 0 : index
    %c0_0 = arith.constant 0 : index
    %0 = vector.load %arg0[%c0, %c0_0] : memref<1x400xf32, #tpu.memory_space<vmem>>, vector<1x400xf32>
    %1 = tpu.iota {dimensions = array<i32: 1>} : vector<1x400xi32>
    %c200_i32 = arith.constant 200 : i32
    %c0_i32 = arith.constant 0 : i32
    %2 = arith.cmpi eq, %c200_i32, %c0_i32 : i32
    %c1_i32 = arith.constant 1 : i32
    %3 = arith.select %2, %c1_i32, %c200_i32 : i32
    %4 = vector.broadcast %3 : i32 to vector<1x400xi32>
    %5 = arith.remsi %1, %4 : vector<1x400xi32>
    %c0_i32_1 = arith.constant 0 : i32
    %6 = vector.broadcast %c0_i32_1 : i32 to vector<1x400xi32>
    %7 = arith.cmpi ne, %5, %6 : vector<1x400xi32>
    %c0_i32_2 = arith.constant 0 : i32
    %8 = vector.broadcast %c0_i32_2 : i32 to vector<1x400xi32>
    %9 = arith.cmpi slt, %5, %8 : vector<1x400xi32>
    %c0_i32_3 = arith.constant 0 : i32
    %10 = arith.cmpi slt, %3, %c0_i32_3 : i32
    %11 = vector.broadcast %10 : i1 to vector<1x400xi1>
    %12 = vector.broadcast %11 : vector<1x400xi1> to vector<1x400xi1>
    %13 = arith.xori %9, %12 : vector<1x400xi1>
    %14 = arith.andi %13, %7 : vector<1x400xi1>
    %15 = vector.broadcast %3 : i32 to vector<1x400xi32>
    %16 = arith.addi %5, %15 : vector<1x400xi32>
    %17 = arith.select %14, %16, %5 : vector<1x400xi1>, vector<1x400xi32>
    %c0_i32_4 = arith.constant 0 : i32
    %18 = vector.broadcast %c0_i32_4 : i32 to vector<1x400xi32>
    %19 = arith.cmpi eq, %17, %18 : vector<1x400xi32>
    %c1_i32_5 = arith.constant 1 : i32
    %20 = tpu.dynamic_rotate %0 by %c1_i32_5 dim 1 : vector<1x400xf32>, i32 -> vector<1x400xf32>
    %cst = arith.constant 0.000000e+00 : f32
    %21 = vector.broadcast %cst : f32 to vector<1x400xf32>
    %22 = arith.select %19, %21, %20 : vector<1x400xi1>, vector<1x400xf32>
    %c199_i32 = arith.constant 199 : i32
    %23 = vector.broadcast %c199_i32 : i32 to vector<1x400xi32>
    %24 = arith.cmpi eq, %17, %23 : vector<1x400xi32>
    %c399_i32 = arith.constant 399 : i32
    %25 = tpu.dynamic_rotate %0 by %c399_i32 dim 1 : vector<1x400xf32>, i32 -> vector<1x400xf32>
    %cst_6 = arith.constant 0.000000e+00 : f32
    %26 = vector.broadcast %cst_6 : f32 to vector<1x400xf32>
    %27 = arith.select %24, %26, %25 : vector<1x400xi1>, vector<1x400xf32>
    %c0_7 = arith.constant 0 : index
    %c0_8 = arith.constant 0 : index
    %28 = vector.load %arg1[%c0_7, %c0_8] : memref<10x6xf32, #tpu.memory_space<vmem>>, vector<10x6xf32>
    %29 = vector.extract_strided_slice %28 {offsets = [0, 0], sizes = [10, 1], strides = [1, 1]} : vector<10x6xf32> to vector<10x1xf32>
    %30 = vector.broadcast %29 : vector<10x1xf32> to vector<10x400xf32>
    %31 = vector.broadcast %22 : vector<1x400xf32> to vector<10x400xf32>
    %32 = arith.mulf %30, %31 : vector<10x400xf32>
    %33 = vector.extract_strided_slice %28 {offsets = [0, 1], sizes = [10, 1], strides = [1, 1]} : vector<10x6xf32> to vector<10x1xf32>
    %34 = vector.broadcast %33 : vector<10x1xf32> to vector<10x400xf32>
    %35 = vector.broadcast %0 : vector<1x400xf32> to vector<10x400xf32>
    %36 = arith.mulf %34, %35 : vector<10x400xf32>
    %37 = arith.addf %32, %36 : vector<10x400xf32>
    %38 = vector.extract_strided_slice %28 {offsets = [0, 2], sizes = [10, 1], strides = [1, 1]} : vector<10x6xf32> to vector<10x1xf32>
    %39 = vector.broadcast %38 : vector<10x1xf32> to vector<10x400xf32>
    %40 = vector.broadcast %27 : vector<1x400xf32> to vector<10x400xf32>
    %41 = arith.mulf %39, %40 : vector<10x400xf32>
    %42 = arith.addf %37, %41 : vector<10x400xf32>
    %43 = vector.extract_strided_slice %28 {offsets = [0, 3], sizes = [10, 1], strides = [1, 1]} : vector<10x6xf32> to vector<10x1xf32>
    %44 = vector.broadcast %43 : vector<10x1xf32> to vector<10x400xf32>
    %45 = arith.addf %42, %44 : vector<10x400xf32>
    %cst_9 = arith.constant dense<0.000000e+00> : vector<10xf32>
    %46 = vector.multi_reduction <add>, %45, %cst_9 [1] : vector<10x400xf32> to vector<10xf32>
    %47 = vector.shape_cast %46 : vector<10xf32> to vector<10x1xf32>
    %cst_10 = arith.constant 4.000000e+02 : f32
    %48 = vector.broadcast %cst_10 : f32 to vector<10x1xf32>
    %49 = arith.divf %47, %48 : vector<10x1xf32>
    %50 = vector.broadcast %49 : vector<10x1xf32> to vector<10x400xf32>
    %51 = arith.subf %45, %50 : vector<10x400xf32>
    %52 = arith.mulf %51, %51 : vector<10x400xf32>
    %cst_11 = arith.constant dense<0.000000e+00> : vector<10xf32>
    %53 = vector.multi_reduction <add>, %52, %cst_11 [1] : vector<10x400xf32> to vector<10xf32>
    %54 = vector.shape_cast %53 : vector<10xf32> to vector<10x1xf32>
    %cst_12 = arith.constant 4.000000e+02 : f32
    %55 = vector.broadcast %cst_12 : f32 to vector<10x1xf32>
    %56 = arith.divf %54, %55 : vector<10x1xf32>
    %57 = vector.extract_strided_slice %28 {offsets = [0, 4], sizes = [10, 1], strides = [1, 1]} : vector<10x6xf32> to vector<10x1xf32>
    %58 = vector.broadcast %49 : vector<10x1xf32> to vector<10x400xf32>
    %59 = arith.subf %45, %58 : vector<10x400xf32>
    %60 = vector.broadcast %57 : vector<10x1xf32> to vector<10x400xf32>
    %61 = arith.mulf %60, %59 : vector<10x400xf32>
    %cst_13 = arith.constant 9.99999974E-6 : f32
    %62 = vector.broadcast %cst_13 : f32 to vector<10x1xf32>
    %63 = arith.addf %56, %62 : vector<10x1xf32>
    %64 = math.rsqrt %63 : vector<10x1xf32>
    %65 = vector.broadcast %64 : vector<10x1xf32> to vector<10x400xf32>
    %66 = arith.mulf %61, %65 : vector<10x400xf32>
    %67 = vector.extract_strided_slice %28 {offsets = [0, 5], sizes = [10, 1], strides = [1, 1]} : vector<10x6xf32> to vector<10x1xf32>
    %68 = vector.broadcast %67 : vector<10x1xf32> to vector<10x400xf32>
    %69 = arith.addf %66, %68 : vector<10x400xf32>
    %c399_i32_14 = arith.constant 399 : i32
    %70 = tpu.dynamic_rotate %69 by %c399_i32_14 dim 1 : vector<10x400xf32>, i32 -> vector<10x400xf32>
    %71 = arith.maximumf %69, %70 : vector<10x400xf32>
    %72 = tpu.iota {dimensions = array<i32: 0>} : vector<400x200xi32>
    %73 = tpu.iota {dimensions = array<i32: 1>} : vector<400x200xi32>
    %c2_i32 = arith.constant 2 : i32
    %74 = vector.broadcast %c2_i32 : i32 to vector<400x200xi32>
    %75 = arith.muli %74, %73 : vector<400x200xi32>
    %76 = arith.cmpi eq, %72, %75 : vector<400x200xi32>
    %77 = arith.extui %76 : vector<400x200xi1> to vector<400x200xi32>
    %78 = arith.sitofp %77 : vector<400x200xi32> to vector<400x200xf32>
    %cst_15 = arith.constant dense<0.000000e+00> : vector<10x200xf32>
    %79 = tpu.matmul %71, %78, %cst_15 {dimension_numbers = #tpu.dot_dimension_numbers<[1], [0], [0], [1], [0, 0, 1, 1], [], []>} : vector<10x400xf32>, vector<400x200xf32>, vector<10x200xf32> -> vector<10x200xf32>
    %80 = math.tanh %79 : vector<10x200xf32>
    %81 = tpu.iota {dimensions = array<i32: 1>} : vector<10x200xi32>
    %c100_i32 = arith.constant 100 : i32
    %c0_i32_16 = arith.constant 0 : i32
    %82 = arith.cmpi eq, %c100_i32, %c0_i32_16 : i32
    %c1_i32_17 = arith.constant 1 : i32
    %83 = arith.select %82, %c1_i32_17, %c100_i32 : i32
    %84 = vector.broadcast %83 : i32 to vector<10x200xi32>
    %85 = arith.remsi %81, %84 : vector<10x200xi32>
    %c0_i32_18 = arith.constant 0 : i32
    %86 = vector.broadcast %c0_i32_18 : i32 to vector<10x200xi32>
    %87 = arith.cmpi ne, %85, %86 : vector<10x200xi32>
    %c0_i32_19 = arith.constant 0 : i32
    %88 = vector.broadcast %c0_i32_19 : i32 to vector<10x200xi32>
    %89 = arith.cmpi slt, %85, %88 : vector<10x200xi32>
    %c0_i32_20 = arith.constant 0 : i32
    %90 = arith.cmpi slt, %83, %c0_i32_20 : i32
    %91 = vector.broadcast %90 : i1 to vector<10x200xi1>
    %92 = vector.broadcast %91 : vector<10x200xi1> to vector<10x200xi1>
    %93 = arith.xori %89, %92 : vector<10x200xi1>
    %94 = arith.andi %93, %87 : vector<10x200xi1>
    %95 = vector.broadcast %83 : i32 to vector<10x200xi32>
    %96 = arith.addi %85, %95 : vector<10x200xi32>
    %97 = arith.select %94, %96, %85 : vector<10x200xi1>, vector<10x200xi32>
    %c0_i32_21 = arith.constant 0 : i32
    %98 = vector.broadcast %c0_i32_21 : i32 to vector<10x200xi32>
    %99 = arith.cmpi eq, %97, %98 : vector<10x200xi32>
    %c1_i32_22 = arith.constant 1 : i32
    %100 = tpu.dynamic_rotate %80 by %c1_i32_22 dim 1 : vector<10x200xf32>, i32 -> vector<10x200xf32>
    %cst_23 = arith.constant 0.000000e+00 : f32
    %101 = vector.broadcast %cst_23 : f32 to vector<10x200xf32>
    %102 = arith.select %99, %101, %100 : vector<10x200xi1>, vector<10x200xf32>
    %c99_i32 = arith.constant 99 : i32
    %103 = vector.broadcast %c99_i32 : i32 to vector<10x200xi32>
    %104 = arith.cmpi eq, %97, %103 : vector<10x200xi32>
    %c199_i32_24 = arith.constant 199 : i32
    %105 = tpu.dynamic_rotate %80 by %c199_i32_24 dim 1 : vector<10x200xf32>, i32 -> vector<10x200xf32>
    %cst_25 = arith.constant 0.000000e+00 : f32
    %106 = vector.broadcast %cst_25 : f32 to vector<10x200xf32>
    %107 = arith.select %104, %106, %105 : vector<10x200xi1>, vector<10x200xf32>
    %c0_26 = arith.constant 0 : index
    %c0_27 = arith.constant 0 : index
    %108 = vector.load %arg3[%c0_26, %c0_27] : memref<20x3xf32, #tpu.memory_space<vmem>>, vector<20x3xf32>
    %c0_28 = arith.constant 0 : index
    %c0_29 = arith.constant 0 : index
    %c0_30 = arith.constant 0 : index
    %109 = vector.load %arg2[%c0_28, %c0_29, %c0_30] : memref<3x20x10xbf16, #tpu.memory_space<vmem>>, vector<1x20x10xbf16>
    %110 = vector.shape_cast %109 : vector<1x20x10xbf16> to vector<20x10xbf16>
    %111 = arith.truncf %102 : vector<10x200xf32> to vector<10x200xbf16>
    %cst_31 = arith.constant dense<0.000000e+00> : vector<20x200xf32>
    %112 = tpu.matmul %110, %111, %cst_31 {dimension_numbers = #tpu.dot_dimension_numbers<[1], [0], [0], [1], [0, 0, 1, 1], [], []>} : vector<20x10xbf16>, vector<10x200xbf16>, vector<20x200xf32> -> vector<20x200xf32>
    %c1 = arith.constant 1 : index
    %c0_32 = arith.constant 0 : index
    %c0_33 = arith.constant 0 : index
    %113 = vector.load %arg2[%c1, %c0_32, %c0_33] : memref<3x20x10xbf16, #tpu.memory_space<vmem>>, vector<1x20x10xbf16>
    %114 = vector.shape_cast %113 : vector<1x20x10xbf16> to vector<20x10xbf16>
    %115 = arith.truncf %80 : vector<10x200xf32> to vector<10x200xbf16>
    %cst_34 = arith.constant dense<0.000000e+00> : vector<20x200xf32>
    %116 = tpu.matmul %114, %115, %cst_34 {dimension_numbers = #tpu.dot_dimension_numbers<[1], [0], [0], [1], [0, 0, 1, 1], [], []>} : vector<20x10xbf16>, vector<10x200xbf16>, vector<20x200xf32> -> vector<20x200xf32>
    %117 = arith.addf %112, %116 : vector<20x200xf32>
    %c2 = arith.constant 2 : index
    %c0_35 = arith.constant 0 : index
    %c0_36 = arith.constant 0 : index
    %118 = vector.load %arg2[%c2, %c0_35, %c0_36] : memref<3x20x10xbf16, #tpu.memory_space<vmem>>, vector<1x20x10xbf16>
    %119 = vector.shape_cast %118 : vector<1x20x10xbf16> to vector<20x10xbf16>
    %120 = arith.truncf %107 : vector<10x200xf32> to vector<10x200xbf16>
    %cst_37 = arith.constant dense<0.000000e+00> : vector<20x200xf32>
    %121 = tpu.matmul %119, %120, %cst_37 {dimension_numbers = #tpu.dot_dimension_numbers<[1], [0], [0], [1], [0, 0, 1, 1], [], []>} : vector<20x10xbf16>, vector<10x200xbf16>, vector<20x200xf32> -> vector<20x200xf32>
    %122 = arith.addf %117, %121 : vector<20x200xf32>
    %123 = vector.extract_strided_slice %108 {offsets = [0, 0], sizes = [20, 1], strides = [1, 1]} : vector<20x3xf32> to vector<20x1xf32>
    %124 = vector.broadcast %123 : vector<20x1xf32> to vector<20x200xf32>
    %125 = arith.addf %122, %124 : vector<20x200xf32>
    %cst_38 = arith.constant dense<0.000000e+00> : vector<20xf32>
    %126 = vector.multi_reduction <add>, %125, %cst_38 [1] : vector<20x200xf32> to vector<20xf32>
    %127 = vector.shape_cast %126 : vector<20xf32> to vector<20x1xf32>
    %cst_39 = arith.constant 2.000000e+02 : f32
    %128 = vector.broadcast %cst_39 : f32 to vector<20x1xf32>
    %129 = arith.divf %127, %128 : vector<20x1xf32>
    %130 = vector.broadcast %129 : vector<20x1xf32> to vector<20x200xf32>
    %131 = arith.subf %125, %130 : vector<20x200xf32>
    %132 = arith.mulf %131, %131 : vector<20x200xf32>
    %cst_40 = arith.constant dense<0.000000e+00> : vector<20xf32>
    %133 = vector.multi_reduction <add>, %132, %cst_40 [1] : vector<20x200xf32> to vector<20xf32>
    %134 = vector.shape_cast %133 : vector<20xf32> to vector<20x1xf32>
    %cst_41 = arith.constant 2.000000e+02 : f32
    %135 = vector.broadcast %cst_41 : f32 to vector<20x1xf32>
    %136 = arith.divf %134, %135 : vector<20x1xf32>
    %137 = vector.extract_strided_slice %108 {offsets = [0, 1], sizes = [20, 1], strides = [1, 1]} : vector<20x3xf32> to vector<20x1xf32>
    %138 = vector.broadcast %129 : vector<20x1xf32> to vector<20x200xf32>
    %139 = arith.subf %125, %138 : vector<20x200xf32>
    %140 = vector.broadcast %137 : vector<20x1xf32> to vector<20x200xf32>
    %141 = arith.mulf %140, %139 : vector<20x200xf32>
    %cst_42 = arith.constant 9.99999974E-6 : f32
    %142 = vector.broadcast %cst_42 : f32 to vector<20x1xf32>
    %143 = arith.addf %136, %142 : vector<20x1xf32>
    %144 = math.rsqrt %143 : vector<20x1xf32>
    %145 = vector.broadcast %144 : vector<20x1xf32> to vector<20x200xf32>
    %146 = arith.mulf %141, %145 : vector<20x200xf32>
    %147 = vector.extract_strided_slice %108 {offsets = [0, 2], sizes = [20, 1], strides = [1, 1]} : vector<20x3xf32> to vector<20x1xf32>
    %148 = vector.broadcast %147 : vector<20x1xf32> to vector<20x200xf32>
    %149 = arith.addf %146, %148 : vector<20x200xf32>
    %c199_i32_43 = arith.constant 199 : i32
    %150 = tpu.dynamic_rotate %149 by %c199_i32_43 dim 1 : vector<20x200xf32>, i32 -> vector<20x200xf32>
    %151 = arith.maximumf %149, %150 : vector<20x200xf32>
    %152 = tpu.iota {dimensions = array<i32: 0>} : vector<200x100xi32>
    %153 = tpu.iota {dimensions = array<i32: 1>} : vector<200x100xi32>
    %c2_i32_44 = arith.constant 2 : i32
    %154 = vector.broadcast %c2_i32_44 : i32 to vector<200x100xi32>
    %155 = arith.muli %154, %153 : vector<200x100xi32>
    %156 = arith.cmpi eq, %152, %155 : vector<200x100xi32>
    %157 = arith.extui %156 : vector<200x100xi1> to vector<200x100xi32>
    %158 = arith.sitofp %157 : vector<200x100xi32> to vector<200x100xf32>
    %cst_45 = arith.constant dense<0.000000e+00> : vector<20x100xf32>
    %159 = tpu.matmul %151, %158, %cst_45 {dimension_numbers = #tpu.dot_dimension_numbers<[1], [0], [0], [1], [0, 0, 1, 1], [], []>} : vector<20x200xf32>, vector<200x100xf32>, vector<20x100xf32> -> vector<20x100xf32>
    %160 = math.tanh %159 : vector<20x100xf32>
    %161 = vector.extract_strided_slice %160 {offsets = [0, 0], sizes = [1, 50], strides = [1, 1]} : vector<20x100xf32> to vector<1x50xf32>
    %c0_46 = arith.constant 0 : index
    %c0_47 = arith.constant 0 : index
    %162 = vector.load %arg7[%c0_46, %c0_47] : memref<2x1024xf32, #tpu.memory_space<vmem>>, vector<1x50xf32>
    tpu.vector_store %arg7[%c0_46, %c0_47], %161 {strides = array<i32>} : memref<2x1024xf32, #tpu.memory_space<vmem>>, vector<1x50xf32>,
    %163 = vector.extract_strided_slice %160 {offsets = [1, 0], sizes = [1, 50], strides = [1, 1]} : vector<20x100xf32> to vector<1x50xf32>
    %c0_48 = arith.constant 0 : index
    %c50 = arith.constant 50 : index
    %164 = vector.load %arg7[%c0_48, %c50] : memref<2x1024xf32, #tpu.memory_space<vmem>>, vector<1x50xf32>
    tpu.vector_store %arg7[%c0_48, %c50], %163 {strides = array<i32>} : memref<2x1024xf32, #tpu.memory_space<vmem>>, vector<1x50xf32>,
    %165 = vector.extract_strided_slice %160 {offsets = [2, 0], sizes = [1, 50], strides = [1, 1]} : vector<20x100xf32> to vector<1x50xf32>
    %c0_49 = arith.constant 0 : index
    %c100 = arith.constant 100 : index
    %166 = vector.load %arg7[%c0_49, %c100] : memref<2x1024xf32, #tpu.memory_space<vmem>>, vector<1x50xf32>
    tpu.vector_store %arg7[%c0_49, %c100], %165 {strides = array<i32>} : memref<2x1024xf32, #tpu.memory_space<vmem>>, vector<1x50xf32>,
    %167 = vector.extract_strided_slice %160 {offsets = [3, 0], sizes = [1, 50], strides = [1, 1]} : vector<20x100xf32> to vector<1x50xf32>
    %c0_50 = arith.constant 0 : index
    %c150 = arith.constant 150 : index
    %168 = vector.load %arg7[%c0_50, %c150] : memref<2x1024xf32, #tpu.memory_space<vmem>>, vector<1x50xf32>
    tpu.vector_store %arg7[%c0_50, %c150], %167 {strides = array<i32>} : memref<2x1024xf32, #tpu.memory_space<vmem>>, vector<1x50xf32>,
    %169 = vector.extract_strided_slice %160 {offsets = [4, 0], sizes = [1, 50], strides = [1, 1]} : vector<20x100xf32> to vector<1x50xf32>
    %c0_51 = arith.constant 0 : index
    %c200 = arith.constant 200 : index
    %170 = vector.load %arg7[%c0_51, %c200] : memref<2x1024xf32, #tpu.memory_space<vmem>>, vector<1x50xf32>
    tpu.vector_store %arg7[%c0_51, %c200], %169 {strides = array<i32>} : memref<2x1024xf32, #tpu.memory_space<vmem>>, vector<1x50xf32>,
    %171 = vector.extract_strided_slice %160 {offsets = [5, 0], sizes = [1, 50], strides = [1, 1]} : vector<20x100xf32> to vector<1x50xf32>
    %c0_52 = arith.constant 0 : index
    %c250 = arith.constant 250 : index
    %172 = vector.load %arg7[%c0_52, %c250] : memref<2x1024xf32, #tpu.memory_space<vmem>>, vector<1x50xf32>
    tpu.vector_store %arg7[%c0_52, %c250], %171 {strides = array<i32>} : memref<2x1024xf32, #tpu.memory_space<vmem>>, vector<1x50xf32>,
    %173 = vector.extract_strided_slice %160 {offsets = [6, 0], sizes = [1, 50], strides = [1, 1]} : vector<20x100xf32> to vector<1x50xf32>
    %c0_53 = arith.constant 0 : index
    %c300 = arith.constant 300 : index
    %174 = vector.load %arg7[%c0_53, %c300] : memref<2x1024xf32, #tpu.memory_space<vmem>>, vector<1x50xf32>
    tpu.vector_store %arg7[%c0_53, %c300], %173 {strides = array<i32>} : memref<2x1024xf32, #tpu.memory_space<vmem>>, vector<1x50xf32>,
    %175 = vector.extract_strided_slice %160 {offsets = [7, 0], sizes = [1, 50], strides = [1, 1]} : vector<20x100xf32> to vector<1x50xf32>
    %c0_54 = arith.constant 0 : index
    %c350 = arith.constant 350 : index
    %176 = vector.load %arg7[%c0_54, %c350] : memref<2x1024xf32, #tpu.memory_space<vmem>>, vector<1x50xf32>
    tpu.vector_store %arg7[%c0_54, %c350], %175 {strides = array<i32>} : memref<2x1024xf32, #tpu.memory_space<vmem>>, vector<1x50xf32>,
    %177 = vector.extract_strided_slice %160 {offsets = [8, 0], sizes = [1, 50], strides = [1, 1]} : vector<20x100xf32> to vector<1x50xf32>
    %c0_55 = arith.constant 0 : index
    %c400 = arith.constant 400 : index
    %178 = vector.load %arg7[%c0_55, %c400] : memref<2x1024xf32, #tpu.memory_space<vmem>>, vector<1x50xf32>
    tpu.vector_store %arg7[%c0_55, %c400], %177 {strides = array<i32>} : memref<2x1024xf32, #tpu.memory_space<vmem>>, vector<1x50xf32>,
    %179 = vector.extract_strided_slice %160 {offsets = [9, 0], sizes = [1, 50], strides = [1, 1]} : vector<20x100xf32> to vector<1x50xf32>
    %c0_56 = arith.constant 0 : index
    %c450 = arith.constant 450 : index
    %180 = vector.load %arg7[%c0_56, %c450] : memref<2x1024xf32, #tpu.memory_space<vmem>>, vector<1x50xf32>
    tpu.vector_store %arg7[%c0_56, %c450], %179 {strides = array<i32>} : memref<2x1024xf32, #tpu.memory_space<vmem>>, vector<1x50xf32>,
    %181 = vector.extract_strided_slice %160 {offsets = [10, 0], sizes = [1, 50], strides = [1, 1]} : vector<20x100xf32> to vector<1x50xf32>
    %c0_57 = arith.constant 0 : index
    %c500 = arith.constant 500 : index
    %182 = vector.load %arg7[%c0_57, %c500] : memref<2x1024xf32, #tpu.memory_space<vmem>>, vector<1x50xf32>
    tpu.vector_store %arg7[%c0_57, %c500], %181 {strides = array<i32>} : memref<2x1024xf32, #tpu.memory_space<vmem>>, vector<1x50xf32>,
    %183 = vector.extract_strided_slice %160 {offsets = [11, 0], sizes = [1, 50], strides = [1, 1]} : vector<20x100xf32> to vector<1x50xf32>
    %c0_58 = arith.constant 0 : index
    %c550 = arith.constant 550 : index
    %184 = vector.load %arg7[%c0_58, %c550] : memref<2x1024xf32, #tpu.memory_space<vmem>>, vector<1x50xf32>
    tpu.vector_store %arg7[%c0_58, %c550], %183 {strides = array<i32>} : memref<2x1024xf32, #tpu.memory_space<vmem>>, vector<1x50xf32>,
    %185 = vector.extract_strided_slice %160 {offsets = [12, 0], sizes = [1, 50], strides = [1, 1]} : vector<20x100xf32> to vector<1x50xf32>
    %c0_59 = arith.constant 0 : index
    %c600 = arith.constant 600 : index
    %186 = vector.load %arg7[%c0_59, %c600] : memref<2x1024xf32, #tpu.memory_space<vmem>>, vector<1x50xf32>
    tpu.vector_store %arg7[%c0_59, %c600], %185 {strides = array<i32>} : memref<2x1024xf32, #tpu.memory_space<vmem>>, vector<1x50xf32>,
    %187 = vector.extract_strided_slice %160 {offsets = [13, 0], sizes = [1, 50], strides = [1, 1]} : vector<20x100xf32> to vector<1x50xf32>
    %c0_60 = arith.constant 0 : index
    %c650 = arith.constant 650 : index
    %188 = vector.load %arg7[%c0_60, %c650] : memref<2x1024xf32, #tpu.memory_space<vmem>>, vector<1x50xf32>
    tpu.vector_store %arg7[%c0_60, %c650], %187 {strides = array<i32>} : memref<2x1024xf32, #tpu.memory_space<vmem>>, vector<1x50xf32>,
    %189 = vector.extract_strided_slice %160 {offsets = [14, 0], sizes = [1, 50], strides = [1, 1]} : vector<20x100xf32> to vector<1x50xf32>
    %c0_61 = arith.constant 0 : index
    %c700 = arith.constant 700 : index
    %190 = vector.load %arg7[%c0_61, %c700] : memref<2x1024xf32, #tpu.memory_space<vmem>>, vector<1x50xf32>
    tpu.vector_store %arg7[%c0_61, %c700], %189 {strides = array<i32>} : memref<2x1024xf32, #tpu.memory_space<vmem>>, vector<1x50xf32>,
    %191 = vector.extract_strided_slice %160 {offsets = [15, 0], sizes = [1, 50], strides = [1, 1]} : vector<20x100xf32> to vector<1x50xf32>
    %c0_62 = arith.constant 0 : index
    %c750 = arith.constant 750 : index
    %192 = vector.load %arg7[%c0_62, %c750] : memref<2x1024xf32, #tpu.memory_space<vmem>>, vector<1x50xf32>
    tpu.vector_store %arg7[%c0_62, %c750], %191 {strides = array<i32>} : memref<2x1024xf32, #tpu.memory_space<vmem>>, vector<1x50xf32>,
    %193 = vector.extract_strided_slice %160 {offsets = [16, 0], sizes = [1, 50], strides = [1, 1]} : vector<20x100xf32> to vector<1x50xf32>
    %c0_63 = arith.constant 0 : index
    %c800 = arith.constant 800 : index
    %194 = vector.load %arg7[%c0_63, %c800] : memref<2x1024xf32, #tpu.memory_space<vmem>>, vector<1x50xf32>
    tpu.vector_store %arg7[%c0_63, %c800], %193 {strides = array<i32>} : memref<2x1024xf32, #tpu.memory_space<vmem>>, vector<1x50xf32>,
    %195 = vector.extract_strided_slice %160 {offsets = [17, 0], sizes = [1, 50], strides = [1, 1]} : vector<20x100xf32> to vector<1x50xf32>
    %c0_64 = arith.constant 0 : index
    %c850 = arith.constant 850 : index
    %196 = vector.load %arg7[%c0_64, %c850] : memref<2x1024xf32, #tpu.memory_space<vmem>>, vector<1x50xf32>
    tpu.vector_store %arg7[%c0_64, %c850], %195 {strides = array<i32>} : memref<2x1024xf32, #tpu.memory_space<vmem>>, vector<1x50xf32>,
    %197 = vector.extract_strided_slice %160 {offsets = [18, 0], sizes = [1, 50], strides = [1, 1]} : vector<20x100xf32> to vector<1x50xf32>
    %c0_65 = arith.constant 0 : index
    %c900 = arith.constant 900 : index
    %198 = vector.load %arg7[%c0_65, %c900] : memref<2x1024xf32, #tpu.memory_space<vmem>>, vector<1x50xf32>
    tpu.vector_store %arg7[%c0_65, %c900], %197 {strides = array<i32>} : memref<2x1024xf32, #tpu.memory_space<vmem>>, vector<1x50xf32>,
    %199 = vector.extract_strided_slice %160 {offsets = [19, 0], sizes = [1, 50], strides = [1, 1]} : vector<20x100xf32> to vector<1x50xf32>
    %c0_66 = arith.constant 0 : index
    %c950 = arith.constant 950 : index
    %200 = vector.load %arg7[%c0_66, %c950] : memref<2x1024xf32, #tpu.memory_space<vmem>>, vector<1x50xf32>
    tpu.vector_store %arg7[%c0_66, %c950], %199 {strides = array<i32>} : memref<2x1024xf32, #tpu.memory_space<vmem>>, vector<1x50xf32>,
    %201 = vector.extract_strided_slice %160 {offsets = [0, 50], sizes = [1, 50], strides = [1, 1]} : vector<20x100xf32> to vector<1x50xf32>
    %c1_67 = arith.constant 1 : index
    %c0_68 = arith.constant 0 : index
    %202 = vector.load %arg7[%c1_67, %c0_68] : memref<2x1024xf32, #tpu.memory_space<vmem>>, vector<1x50xf32>
    tpu.vector_store %arg7[%c1_67, %c0_68], %201 {strides = array<i32>} : memref<2x1024xf32, #tpu.memory_space<vmem>>, vector<1x50xf32>,
    %203 = vector.extract_strided_slice %160 {offsets = [1, 50], sizes = [1, 50], strides = [1, 1]} : vector<20x100xf32> to vector<1x50xf32>
    %c1_69 = arith.constant 1 : index
    %c50_70 = arith.constant 50 : index
    %204 = vector.load %arg7[%c1_69, %c50_70] : memref<2x1024xf32, #tpu.memory_space<vmem>>, vector<1x50xf32>
    tpu.vector_store %arg7[%c1_69, %c50_70], %203 {strides = array<i32>} : memref<2x1024xf32, #tpu.memory_space<vmem>>, vector<1x50xf32>,
    %205 = vector.extract_strided_slice %160 {offsets = [2, 50], sizes = [1, 50], strides = [1, 1]} : vector<20x100xf32> to vector<1x50xf32>
    %c1_71 = arith.constant 1 : index
    %c100_72 = arith.constant 100 : index
    %206 = vector.load %arg7[%c1_71, %c100_72] : memref<2x1024xf32, #tpu.memory_space<vmem>>, vector<1x50xf32>
    tpu.vector_store %arg7[%c1_71, %c100_72], %205 {strides = array<i32>} : memref<2x1024xf32, #tpu.memory_space<vmem>>, vector<1x50xf32>,
    %207 = vector.extract_strided_slice %160 {offsets = [3, 50], sizes = [1, 50], strides = [1, 1]} : vector<20x100xf32> to vector<1x50xf32>
    %c1_73 = arith.constant 1 : index
    %c150_74 = arith.constant 150 : index
    %208 = vector.load %arg7[%c1_73, %c150_74] : memref<2x1024xf32, #tpu.memory_space<vmem>>, vector<1x50xf32>
    tpu.vector_store %arg7[%c1_73, %c150_74], %207 {strides = array<i32>} : memref<2x1024xf32, #tpu.memory_space<vmem>>, vector<1x50xf32>,
    %209 = vector.extract_strided_slice %160 {offsets = [4, 50], sizes = [1, 50], strides = [1, 1]} : vector<20x100xf32> to vector<1x50xf32>
    %c1_75 = arith.constant 1 : index
    %c200_76 = arith.constant 200 : index
    %210 = vector.load %arg7[%c1_75, %c200_76] : memref<2x1024xf32, #tpu.memory_space<vmem>>, vector<1x50xf32>
    tpu.vector_store %arg7[%c1_75, %c200_76], %209 {strides = array<i32>} : memref<2x1024xf32, #tpu.memory_space<vmem>>, vector<1x50xf32>,
    %211 = vector.extract_strided_slice %160 {offsets = [5, 50], sizes = [1, 50], strides = [1, 1]} : vector<20x100xf32> to vector<1x50xf32>
    %c1_77 = arith.constant 1 : index
    %c250_78 = arith.constant 250 : index
    %212 = vector.load %arg7[%c1_77, %c250_78] : memref<2x1024xf32, #tpu.memory_space<vmem>>, vector<1x50xf32>
    tpu.vector_store %arg7[%c1_77, %c250_78], %211 {strides = array<i32>} : memref<2x1024xf32, #tpu.memory_space<vmem>>, vector<1x50xf32>,
    %213 = vector.extract_strided_slice %160 {offsets = [6, 50], sizes = [1, 50], strides = [1, 1]} : vector<20x100xf32> to vector<1x50xf32>
    %c1_79 = arith.constant 1 : index
    %c300_80 = arith.constant 300 : index
    %214 = vector.load %arg7[%c1_79, %c300_80] : memref<2x1024xf32, #tpu.memory_space<vmem>>, vector<1x50xf32>
    tpu.vector_store %arg7[%c1_79, %c300_80], %213 {strides = array<i32>} : memref<2x1024xf32, #tpu.memory_space<vmem>>, vector<1x50xf32>,
    %215 = vector.extract_strided_slice %160 {offsets = [7, 50], sizes = [1, 50], strides = [1, 1]} : vector<20x100xf32> to vector<1x50xf32>
    %c1_81 = arith.constant 1 : index
    %c350_82 = arith.constant 350 : index
    %216 = vector.load %arg7[%c1_81, %c350_82] : memref<2x1024xf32, #tpu.memory_space<vmem>>, vector<1x50xf32>
    tpu.vector_store %arg7[%c1_81, %c350_82], %215 {strides = array<i32>} : memref<2x1024xf32, #tpu.memory_space<vmem>>, vector<1x50xf32>,
    %217 = vector.extract_strided_slice %160 {offsets = [8, 50], sizes = [1, 50], strides = [1, 1]} : vector<20x100xf32> to vector<1x50xf32>
    %c1_83 = arith.constant 1 : index
    %c400_84 = arith.constant 400 : index
    %218 = vector.load %arg7[%c1_83, %c400_84] : memref<2x1024xf32, #tpu.memory_space<vmem>>, vector<1x50xf32>
    tpu.vector_store %arg7[%c1_83, %c400_84], %217 {strides = array<i32>} : memref<2x1024xf32, #tpu.memory_space<vmem>>, vector<1x50xf32>,
    %219 = vector.extract_strided_slice %160 {offsets = [9, 50], sizes = [1, 50], strides = [1, 1]} : vector<20x100xf32> to vector<1x50xf32>
    %c1_85 = arith.constant 1 : index
    %c450_86 = arith.constant 450 : index
    %220 = vector.load %arg7[%c1_85, %c450_86] : memref<2x1024xf32, #tpu.memory_space<vmem>>, vector<1x50xf32>
    tpu.vector_store %arg7[%c1_85, %c450_86], %219 {strides = array<i32>} : memref<2x1024xf32, #tpu.memory_space<vmem>>, vector<1x50xf32>,
    %221 = vector.extract_strided_slice %160 {offsets = [10, 50], sizes = [1, 50], strides = [1, 1]} : vector<20x100xf32> to vector<1x50xf32>
    %c1_87 = arith.constant 1 : index
    %c500_88 = arith.constant 500 : index
    %222 = vector.load %arg7[%c1_87, %c500_88] : memref<2x1024xf32, #tpu.memory_space<vmem>>, vector<1x50xf32>
    tpu.vector_store %arg7[%c1_87, %c500_88], %221 {strides = array<i32>} : memref<2x1024xf32, #tpu.memory_space<vmem>>, vector<1x50xf32>,
    %223 = vector.extract_strided_slice %160 {offsets = [11, 50], sizes = [1, 50], strides = [1, 1]} : vector<20x100xf32> to vector<1x50xf32>
    %c1_89 = arith.constant 1 : index
    %c550_90 = arith.constant 550 : index
    %224 = vector.load %arg7[%c1_89, %c550_90] : memref<2x1024xf32, #tpu.memory_space<vmem>>, vector<1x50xf32>
    tpu.vector_store %arg7[%c1_89, %c550_90], %223 {strides = array<i32>} : memref<2x1024xf32, #tpu.memory_space<vmem>>, vector<1x50xf32>,
    %225 = vector.extract_strided_slice %160 {offsets = [12, 50], sizes = [1, 50], strides = [1, 1]} : vector<20x100xf32> to vector<1x50xf32>
    %c1_91 = arith.constant 1 : index
    %c600_92 = arith.constant 600 : index
    %226 = vector.load %arg7[%c1_91, %c600_92] : memref<2x1024xf32, #tpu.memory_space<vmem>>, vector<1x50xf32>
    tpu.vector_store %arg7[%c1_91, %c600_92], %225 {strides = array<i32>} : memref<2x1024xf32, #tpu.memory_space<vmem>>, vector<1x50xf32>,
    %227 = vector.extract_strided_slice %160 {offsets = [13, 50], sizes = [1, 50], strides = [1, 1]} : vector<20x100xf32> to vector<1x50xf32>
    %c1_93 = arith.constant 1 : index
    %c650_94 = arith.constant 650 : index
    %228 = vector.load %arg7[%c1_93, %c650_94] : memref<2x1024xf32, #tpu.memory_space<vmem>>, vector<1x50xf32>
    tpu.vector_store %arg7[%c1_93, %c650_94], %227 {strides = array<i32>} : memref<2x1024xf32, #tpu.memory_space<vmem>>, vector<1x50xf32>,
    %229 = vector.extract_strided_slice %160 {offsets = [14, 50], sizes = [1, 50], strides = [1, 1]} : vector<20x100xf32> to vector<1x50xf32>
    %c1_95 = arith.constant 1 : index
    %c700_96 = arith.constant 700 : index
    %230 = vector.load %arg7[%c1_95, %c700_96] : memref<2x1024xf32, #tpu.memory_space<vmem>>, vector<1x50xf32>
    tpu.vector_store %arg7[%c1_95, %c700_96], %229 {strides = array<i32>} : memref<2x1024xf32, #tpu.memory_space<vmem>>, vector<1x50xf32>,
    %231 = vector.extract_strided_slice %160 {offsets = [15, 50], sizes = [1, 50], strides = [1, 1]} : vector<20x100xf32> to vector<1x50xf32>
    %c1_97 = arith.constant 1 : index
    %c750_98 = arith.constant 750 : index
    %232 = vector.load %arg7[%c1_97, %c750_98] : memref<2x1024xf32, #tpu.memory_space<vmem>>, vector<1x50xf32>
    tpu.vector_store %arg7[%c1_97, %c750_98], %231 {strides = array<i32>} : memref<2x1024xf32, #tpu.memory_space<vmem>>, vector<1x50xf32>,
    %233 = vector.extract_strided_slice %160 {offsets = [16, 50], sizes = [1, 50], strides = [1, 1]} : vector<20x100xf32> to vector<1x50xf32>
    %c1_99 = arith.constant 1 : index
    %c800_100 = arith.constant 800 : index
    %234 = vector.load %arg7[%c1_99, %c800_100] : memref<2x1024xf32, #tpu.memory_space<vmem>>, vector<1x50xf32>
    tpu.vector_store %arg7[%c1_99, %c800_100], %233 {strides = array<i32>} : memref<2x1024xf32, #tpu.memory_space<vmem>>, vector<1x50xf32>,
    %235 = vector.extract_strided_slice %160 {offsets = [17, 50], sizes = [1, 50], strides = [1, 1]} : vector<20x100xf32> to vector<1x50xf32>
    %c1_101 = arith.constant 1 : index
    %c850_102 = arith.constant 850 : index
    %236 = vector.load %arg7[%c1_101, %c850_102] : memref<2x1024xf32, #tpu.memory_space<vmem>>, vector<1x50xf32>
    tpu.vector_store %arg7[%c1_101, %c850_102], %235 {strides = array<i32>} : memref<2x1024xf32, #tpu.memory_space<vmem>>, vector<1x50xf32>,
    %237 = vector.extract_strided_slice %160 {offsets = [18, 50], sizes = [1, 50], strides = [1, 1]} : vector<20x100xf32> to vector<1x50xf32>
    %c1_103 = arith.constant 1 : index
    %c900_104 = arith.constant 900 : index
    %238 = vector.load %arg7[%c1_103, %c900_104] : memref<2x1024xf32, #tpu.memory_space<vmem>>, vector<1x50xf32>
    tpu.vector_store %arg7[%c1_103, %c900_104], %237 {strides = array<i32>} : memref<2x1024xf32, #tpu.memory_space<vmem>>, vector<1x50xf32>,
    %239 = vector.extract_strided_slice %160 {offsets = [19, 50], sizes = [1, 50], strides = [1, 1]} : vector<20x100xf32> to vector<1x50xf32>
    %c1_105 = arith.constant 1 : index
    %c950_106 = arith.constant 950 : index
    %240 = vector.load %arg7[%c1_105, %c950_106] : memref<2x1024xf32, #tpu.memory_space<vmem>>, vector<1x50xf32>
    tpu.vector_store %arg7[%c1_105, %c950_106], %239 {strides = array<i32>} : memref<2x1024xf32, #tpu.memory_space<vmem>>, vector<1x50xf32>,
    %cst_107 = arith.constant 0.000000e+00 : f32
    %241 = vector.broadcast %cst_107 : f32 to vector<2x24xf32>
    %c0_108 = arith.constant 0 : index
    %c1000 = arith.constant 1000 : index
    %242 = vector.load %arg7[%c0_108, %c1000] : memref<2x1024xf32, #tpu.memory_space<vmem>>, vector<2x24xf32>
    tpu.vector_store %arg7[%c0_108, %c1000], %241 {strides = array<i32>} : memref<2x1024xf32, #tpu.memory_space<vmem>>, vector<2x24xf32>,
    tpu.wait_dma2 semaphore(%arg9 : memref<!tpu.dma_semaphore, #tpu.memory_space<semaphore_mem>>) src(%arg5 : memref<1024x600xbf16, #tpu.memory_space<any>>) dst(%arg8 : memref<1024x600xbf16, #tpu.memory_space<vmem>>)
    %c0_109 = arith.constant 0 : index
    %c0_110 = arith.constant 0 : index
    %243 = vector.load %arg4[%c0_109, %c0_110] : memref<3x600xf32, #tpu.memory_space<vmem>>, vector<1x600xf32>
    %c0_111 = arith.constant 0 : index
    %c0_112 = arith.constant 0 : index
    %244 = vector.load %arg7[%c0_111, %c0_112] : memref<2x1024xf32, #tpu.memory_space<vmem>>, vector<2x1024xf32>
    %245 = arith.truncf %244 : vector<2x1024xf32> to vector<2x1024xbf16>
    %c0_113 = arith.constant 0 : index
    %c0_114 = arith.constant 0 : index
    %246 = vector.load %arg8[%c0_113, %c0_114] : memref<1024x600xbf16, #tpu.memory_space<vmem>>, vector<1024x600xbf16>
    %cst_115 = arith.constant dense<0.000000e+00> : vector<2x600xf32>
    %247 = tpu.matmul %245, %246, %cst_115 {dimension_numbers = #tpu.dot_dimension_numbers<[1], [0], [0], [1], [0, 0, 1, 1], [], []>} : vector<2x1024xbf16>, vector<1024x600xbf16>, vector<2x600xf32> -> vector<2x600xf32>
    %248 = vector.broadcast %243 : vector<1x600xf32> to vector<2x600xf32>
    %249 = arith.addf %247, %248 : vector<2x600xf32>
    %250 = math.tanh %249 : vector<2x600xf32>
    %c1_116 = arith.constant 1 : index
    %c0_117 = arith.constant 0 : index
    %251 = vector.load %arg4[%c1_116, %c0_117] : memref<3x600xf32, #tpu.memory_space<vmem>>, vector<1x600xf32>
    %c2_118 = arith.constant 2 : index
    %c0_119 = arith.constant 0 : index
    %252 = vector.load %arg4[%c2_118, %c0_119] : memref<3x600xf32, #tpu.memory_space<vmem>>, vector<1x1xf32>
    %253 = vector.broadcast %251 : vector<1x600xf32> to vector<2x600xf32>
    %254 = arith.mulf %250, %253 : vector<2x600xf32>
    %cst_120 = arith.constant dense<0.000000e+00> : vector<2xf32>
    %255 = vector.multi_reduction <add>, %254, %cst_120 [1] : vector<2x600xf32> to vector<2xf32>
    %256 = vector.shape_cast %255 : vector<2xf32> to vector<2x1xf32>
    %257 = vector.broadcast %252 : vector<1x1xf32> to vector<2x1xf32>
    %258 = arith.addf %256, %257 : vector<2x1xf32>
    %c0_121 = arith.constant 0 : index
    %c0_122 = arith.constant 0 : index
    %259 = vector.load %arg6[%c0_121, %c0_122] : memref<2x1xf32, #tpu.memory_space<vmem>>, vector<2x1xf32>
    tpu.vector_store %arg6[%c0_121, %c0_122], %258 {strides = array<i32>} : memref<2x1xf32, #tpu.memory_space<vmem>>, vector<2x1xf32>,
    return
  }
}

</mosaic_0001>

<llo_original>
// kernel: cnn_1d_forward.1
$region0: #{cnn_1d_forward.1}
  #allocation0 [shape = 'u32[]', space=smem, size = 0x4, offset = 0x4, fixed_abs, tag = 'smem constant byte address 0x4 - core index']
  #allocation1 [shape = 'u32[144,128]{1,0:T(1,128)}', space=vmem, size = 0x12000, scoped, tag = 'internal scratch']
  #allocation2 [shape = 'f32[2,1024]{1,0:T(2,128)}', space=vmem, size = 0x2000, scoped, tag = 'scratch operand']
  #allocation3 [shape = 'bf16[1024,600]{1,0:T(16,128)(2,1)}', space=vmem, size = 0x140000, scoped, tag = 'scratch operand']
  #allocation4 [shape = 's32[1]{0}', space=sflag, size = 0x4, scoped, tag = 'scratch operand']
  #allocation5 [shape = 's32[]', space=sflag, size = 0x4, offset = 0, fixed_abs, tag = 'sflag constant byte address 0x0 - dummy sync flag']
  %s0 = inlined_call_operand.vmem [shape: f32[1,400], index: 0, kind: input, shape index: {}]
  %s1 = inlined_call_operand.vmem [shape: f32[10,6], index: 1, kind: input, shape index: {}]
  %s2 = inlined_call_operand.vmem [shape: bf16[3,20,10], index: 2, kind: input, shape index: {}]
  %s3 = inlined_call_operand.vmem [shape: f32[20,3], index: 3, kind: input, shape index: {}]
  %s4 = inlined_call_operand.vmem [shape: f32[3,600], index: 4, kind: input, shape index: {}]
  %s5 = inlined_call_operand.vmem [shape: bf16[1024,600], index: 5, kind: input, shape index: {}]
  %s6 = inlined_call_operand.vmem [shape: f32[2,1], index: 6, kind: output, shape index: {}]
  %s7 = sld [smem:[#allocation0]]
  $region78: #{cnn_1d_forward.1} parent=0
    _
  %s9 = ssub.s32 1, %s7
  %s10 = scalar_select 0, %s9, %s7
  // Predicated region
  $region2: #{cnn_1d_forward.1} parent=0 // pred_check
    _
  $region3: #{cnn_1d_forward.1} parent=0 // pred_check_branch
    %12 = sbr.rel (0) target = $region5
  $region4: #{cnn_1d_forward.1} parent=0 // pred_region
    _
  $region5: #{cnn_1d_forward.1} parent=0 // pred_fallthru
    _
  // Predicated region
  $region6: #{cnn_1d_forward.1} parent=0 // pred_check
    _
  $region7: #{cnn_1d_forward.1} parent=0 // pred_check_branch
    %14 = sbr.rel (0) target = $region9
  $region8: #{cnn_1d_forward.1} parent=0 // pred_region
    _
  $region9: #{cnn_1d_forward.1} parent=0 // pred_fallthru
    _
  // Predicated region
  $region10: #{cnn_1d_forward.1} parent=0 // pred_check
    _
  $region11: #{cnn_1d_forward.1} parent=0 // pred_check_branch
    %16 = sbr.rel (0) target = $region13
  $region12: #{cnn_1d_forward.1} parent=0 // pred_region
    _
  $region13: #{cnn_1d_forward.1} parent=0 // pred_fallthru
    _
  // Predicated region
  $region14: #{cnn_1d_forward.1} parent=0 // pred_check
    _
  $region15: #{cnn_1d_forward.1} parent=0 // pred_check_branch
    %18 = sbr.rel (0) target = $region17
  $region16: #{cnn_1d_forward.1} parent=0 // pred_region
    _
  $region17: #{cnn_1d_forward.1} parent=0 // pred_fallthru
    _
  // Predicated region
  $region18: #{cnn_1d_forward.1} parent=0 // pred_check
    _
  $region19: #{cnn_1d_forward.1} parent=0 // pred_check_branch
    %20 = sbr.rel (0) target = $region21
  $region20: #{cnn_1d_forward.1} parent=0 // pred_region
    _
  $region21: #{cnn_1d_forward.1} parent=0 // pred_fallthru
    _
  %p23 = scmp.lt.u32.totalorder 4, 8
  %p24 = pneg %p23
  // Predicated region
  $region22: #{cnn_1d_forward.1} parent=0 // pred_check
    _
  $region23: #{cnn_1d_forward.1} parent=0 // pred_check_branch
    %26 = sbr.rel (%p23) target = $region25
  $region24: #{cnn_1d_forward.1} parent=0 // pred_region
    %s1319 = sand.u32 4, 7
    %p1320 = scmp.eq.s32.totalorder %s1319, 0
    // Predicated region
    $region37: #{cnn_1d_forward.1} parent=24 // pred_check
      %p1321 = pneg %p1320
    $region38: #{cnn_1d_forward.1} parent=24 // pred_check_branch
      %1323 = sbr.rel (%p1321) target = $region40
    $region39: #{cnn_1d_forward.1} parent=24 // pred_region
      %s1324 = sshrl.u32 4, 3
      // While loop
      $region41: #{cnn_1d_forward.1} parent=39 // loop_pre_header
        _
      $region42: #{cnn_1d_forward.1} parent=39 // loop_header
        %s1328 = sphi 0, %s1330
        %p1329 = scmp.ge.s32.totalorder %s1328, %s1324
        %s1333 = sphi 0, %s2618
        %s1334 = sphi %s5, %s2621
        %s1335 = sphi [#allocation3], %s2622
      $region43: #{cnn_1d_forward.1} parent=39 // loop_header_branch
        %1332 = sbr.rel (%p1329) target = $region47
      $region44: #{cnn_1d_forward.1} parent=39 // loop_body
        %v1336 = vld [vmem:[%s1334] sm:$0xff]
        %1337 = vst [vmem:[%s1335] sm:$0xff] %v1336
        %v1338 = vld [vmem:[%s1334 + $0x14] sm:$0xff]
        %1339 = vst [vmem:[%s1335 + $0x4] sm:$0xff] %v1338
        %v1340 = vld [vmem:[%s1334 + $0x4] sm:$0xff]
        %1341 = vst [vmem:[%s1335 + $0x8] sm:$0xff] %v1340
        %v1342 = vld [vmem:[%s1334 + $0x18] sm:$0xff]
        %1343 = vst [vmem:[%s1335 + $0xc] sm:$0xff] %v1342
        %v1344 = vld [vmem:[%s1334 + $0x8] sm:$0xff]
        %1345 = vst [vmem:[%s1335 + $0x10] sm:$0xff] %v1344
        %v1346 = vld [vmem:[%s1334 + $0x1c] sm:$0xff]
        %1347 = vst [vmem:[%s1335 + $0x14] sm:$0xff] %v1346
        %v1348 = vld [vmem:[%s1334 + $0xc] sm:$0xff]
        %1349 = vst [vmem:[%s1335 + $0x18] sm:$0xff] %v1348
        %v1350 = vld [vmem:[%s1334 + $0x20] sm:$0xff]
        %1351 = vst [vmem:[%s1335 + $0x1c] sm:$0xff] %v1350
        %v1352 = vld [vmem:[%s1334 + $0x10] sm:$0xff]
        %1353 = vst [vmem:[%s1335 + $0x20] sm:$0xff] %v1352
        %v1354 = vld [vmem:[%s1334 + $0x24] sm:$0xff]
        %1355 = vst [vmem:[%s1335 + $0x24] sm:$0xff] %v1354
        %v1356 = vld [vmem:[%s1334 + $0x28] sm:$0xff]
        %1357 = vst [vmem:[%s1335 + $0x28] sm:$0xff] %v1356
        %v1358 = vld [vmem:[%s1334 + $0x3c] sm:$0xff]
        %1359 = vst [vmem:[%s1335 + $0x2c] sm:$0xff] %v1358
        %v1360 = vld [vmem:[%s1334 + $0x2c] sm:$0xff]
        %1361 = vst [vmem:[%s1335 + $0x30] sm:$0xff] %v1360
        %v1362 = vld [vmem:[%s1334 + $0x40] sm:$0xff]
        %1363 = vst [vmem:[%s1335 + $0x34] sm:$0xff] %v1362
        %v1364 = vld [vmem:[%s1334 + $0x30] sm:$0xff]
        %1365 = vst [vmem:[%s1335 + $0x38] sm:$0xff] %v1364
        %v1366 = vld [vmem:[%s1334 + $0x44] sm:$0xff]
        %1367 = vst [vmem:[%s1335 + $0x3c] sm:$0xff] %v1366
        %v1368 = vld [vmem:[%s1334 + $0x34] sm:$0xff]
        %1369 = vst [vmem:[%s1335 + $0x40] sm:$0xff] %v1368
        %v1370 = vld [vmem:[%s1334 + $0x48] sm:$0xff]
        %1371 = vst [vmem:[%s1335 + $0x44] sm:$0xff] %v1370
        %v1372 = vld [vmem:[%s1334 + $0x38] sm:$0xff]
        %1373 = vst [vmem:[%s1335 + $0x48] sm:$0xff] %v1372
        %v1374 = vld [vmem:[%s1334 + $0x4c] sm:$0xff]
        %1375 = vst [vmem:[%s1335 + $0x4c] sm:$0xff] %v1374
        %v1376 = vld [vmem:[%s1334 + $0x50] sm:$0xff]
        %1377 = vst [vmem:[%s1335 + $0x50] sm:$0xff] %v1376
        %v1378 = vld [vmem:[%s1334 + $0x64] sm:$0xff]
        %1379 = vst [vmem:[%s1335 + $0x54] sm:$0xff] %v1378
        %v1380 = vld [vmem:[%s1334 + $0x54] sm:$0xff]
        %1381 = vst [vmem:[%s1335 + $0x58] sm:$0xff] %v1380
        %v1382 = vld [vmem:[%s1334 + $0x68] sm:$0xff]
        %1383 = vst [vmem:[%s1335 + $0x5c] sm:$0xff] %v1382
        %v1384 = vld [vmem:[%s1334 + $0x58] sm:$0xff]
        %1385 = vst [vmem:[%s1335 + $0x60] sm:$0xff] %v1384
        %v1386 = vld [vmem:[%s1334 + $0x6c] sm:$0xff]
        %1387 = vst [vmem:[%s1335 + $0x64] sm:$0xff] %v1386
        %v1388 = vld [vmem:[%s1334 + $0x5c] sm:$0xff]
        %1389 = vst [vmem:[%s1335 + $0x68] sm:$0xff] %v1388
        %v1390 = vld [vmem:[%s1334 + $0x70] sm:$0xff]
        %1391 = vst [vmem:[%s1335 + $0x6c] sm:$0xff] %v1390
        %v1392 = vld [vmem:[%s1334 + $0x60] sm:$0xff]
        %1393 = vst [vmem:[%s1335 + $0x70] sm:$0xff] %v1392
        %v1394 = vld [vmem:[%s1334 + $0x74] sm:$0xff]
        %1395 = vst [vmem:[%s1335 + $0x74] sm:$0xff] %v1394
        %v1396 = vld [vmem:[%s1334 + $0x78] sm:$0xff]
        %1397 = vst [vmem:[%s1335 + $0x78] sm:$0xff] %v1396
        %v1398 = vld [vmem:[%s1334 + $0x8c] sm:$0xff]
        %1399 = vst [vmem:[%s1335 + $0x7c] sm:$0xff] %v1398
        %v1400 = vld [vmem:[%s1334 + $0x7c] sm:$0xff]
        %1401 = vst [vmem:[%s1335 + $0x80] sm:$0xff] %v1400
        %v1402 = vld [vmem:[%s1334 + $0x90] sm:$0xff]
        %1403 = vst [vmem:[%s1335 + $0x84] sm:$0xff] %v1402
        %v1404 = vld [vmem:[%s1334 + $0x80] sm:$0xff]
        %1405 = vst [vmem:[%s1335 + $0x88] sm:$0xff] %v1404
        %v1406 = vld [vmem:[%s1334 + $0x94] sm:$0xff]
        %1407 = vst [vmem:[%s1335 + $0x8c] sm:$0xff] %v1406
        %v1408 = vld [vmem:[%s1334 + $0x84] sm:$0xff]
        %1409 = vst [vmem:[%s1335 + $0x90] sm:$0xff] %v1408
        %v1410 = vld [vmem:[%s1334 + $0x98] sm:$0xff]
        %1411 = vst [vmem:[%s1335 + $0x94] sm:$0xff] %v1410
        %v1412 = vld [vmem:[%s1334 + $0x88] sm:$0xff]
        %1413 = vst [vmem:[%s1335 + $0x98] sm:$0xff] %v1412
        %v1414 = vld [vmem:[%s1334 + $0x9c] sm:$0xff]
        %1415 = vst [vmem:[%s1335 + $0x9c] sm:$0xff] %v1414
        %v1416 = vld [vmem:[%s1334 + $0xa0] sm:$0xff]
        %1417 = vst [vmem:[%s1335 + $0xa0] sm:$0xff] %v1416
        %v1418 = vld [vmem:[%s1334 + $0xb4] sm:$0xff]
        %1419 = vst [vmem:[%s1335 + $0xa4] sm:$0xff] %v1418
        %v1420 = vld [vmem:[%s1334 + $0xa4] sm:$0xff]
        %1421 = vst [vmem:[%s1335 + $0xa8] sm:$0xff] %v1420
        %v1422 = vld [vmem:[%s1334 + $0xb8] sm:$0xff]
        %1423 = vst [vmem:[%s1335 + $0xac] sm:$0xff] %v1422
        %v1424 = vld [vmem:[%s1334 + $0xa8] sm:$0xff]
        %1425 = vst [vmem:[%s1335 + $0xb0] sm:$0xff] %v1424
        %v1426 = vld [vmem:[%s1334 + $0xbc] sm:$0xff]
        %1427 = vst [vmem:[%s1335 + $0xb4] sm:$0xff] %v1426
        %v1428 = vld [vmem:[%s1334 + $0xac] sm:$0xff]
        %1429 = vst [vmem:[%s1335 + $0xb8] sm:$0xff] %v1428
        %v1430 = vld [vmem:[%s1334 + $0xc0] sm:$0xff]
        %1431 = vst [vmem:[%s1335 + $0xbc] sm:$0xff] %v1430
        %v1432 = vld [vmem:[%s1334 + $0xb0] sm:$0xff]
        %1433 = vst [vmem:[%s1335 + $0xc0] sm:$0xff] %v1432
        %v1434 = vld [vmem:[%s1334 + $0xc4] sm:$0xff]
        %1435 = vst [vmem:[%s1335 + $0xc4] sm:$0xff] %v1434
        %v1436 = vld [vmem:[%s1334 + $0xc8] sm:$0xff]
        %1437 = vst [vmem:[%s1335 + $0xc8] sm:$0xff] %v1436
        %v1438 = vld [vmem:[%s1334 + $0xdc] sm:$0xff]
        %1439 = vst [vmem:[%s1335 + $0xcc] sm:$0xff] %v1438
        %v1440 = vld [vmem:[%s1334 + $0xcc] sm:$0xff]
        %1441 = vst [vmem:[%s1335 + $0xd0] sm:$0xff] %v1440
        %v1442 = vld [vmem:[%s1334 + $0xe0] sm:$0xff]
        %1443 = vst [vmem:[%s1335 + $0xd4] sm:$0xff] %v1442
        %v1444 = vld [vmem:[%s1334 + $0xd0] sm:$0xff]
        %1445 = vst [vmem:[%s1335 + $0xd8] sm:$0xff] %v1444
        %v1446 = vld [vmem:[%s1334 + $0xe4] sm:$0xff]
        %1447 = vst [vmem:[%s1335 + $0xdc] sm:$0xff] %v1446
        %v1448 = vld [vmem:[%s1334 + $0xd4] sm:$0xff]
        %1449 = vst [vmem:[%s1335 + $0xe0] sm:$0xff] %v1448
        %v1450 = vld [vmem:[%s1334 + $0xe8] sm:$0xff]
        %1451 = vst [vmem:[%s1335 + $0xe4] sm:$0xff] %v1450
        %v1452 = vld [vmem:[%s1334 + $0xd8] sm:$0xff]
        %1453 = vst [vmem:[%s1335 + $0xe8] sm:$0xff] %v1452
        %v1454 = vld [vmem:[%s1334 + $0xec] sm:$0xff]
        %1455 = vst [vmem:[%s1335 + $0xec] sm:$0xff] %v1454
        %v1456 = vld [vmem:[%s1334 + $0xf0] sm:$0xff]
        %1457 = vst [vmem:[%s1335 + $0xf0] sm:$0xff] %v1456
        %v1458 = vld [vmem:[%s1334 + $0x104] sm:$0xff]
        %1459 = vst [vmem:[%s1335 + $0xf4] sm:$0xff] %v1458
        %v1460 = vld [vmem:[%s1334 + $0xf4] sm:$0xff]
        %1461 = vst [vmem:[%s1335 + $0xf8] sm:$0xff] %v1460
        %v1462 = vld [vmem:[%s1334 + $0x108] sm:$0xff]
        %1463 = vst [vmem:[%s1335 + $0xfc] sm:$0xff] %v1462
        %v1464 = vld [vmem:[%s1334 + $0xf8] sm:$0xff]
        %1465 = vst [vmem:[%s1335 + $0x100] sm:$0xff] %v1464
        %v1466 = vld [vmem:[%s1334 + $0x10c] sm:$0xff]
        %1467 = vst [vmem:[%s1335 + $0x104] sm:$0xff] %v1466
        %v1468 = vld [vmem:[%s1334 + $0xfc] sm:$0xff]
        %1469 = vst [vmem:[%s1335 + $0x108] sm:$0xff] %v1468
        %v1470 = vld [vmem:[%s1334 + $0x110] sm:$0xff]
        %1471 = vst [vmem:[%s1335 + $0x10c] sm:$0xff] %v1470
        %v1472 = vld [vmem:[%s1334 + $0x100] sm:$0xff]
        %1473 = vst [vmem:[%s1335 + $0x110] sm:$0xff] %v1472
        %v1474 = vld [vmem:[%s1334 + $0x114] sm:$0xff]
        %1475 = vst [vmem:[%s1335 + $0x114] sm:$0xff] %v1474
        %v1476 = vld [vmem:[%s1334 + $0x118] sm:$0xff]
        %1477 = vst [vmem:[%s1335 + $0x118] sm:$0xff] %v1476
        %v1478 = vld [vmem:[%s1334 + $0x12c] sm:$0xff]
        %1479 = vst [vmem:[%s1335 + $0x11c] sm:$0xff] %v1478
        %v1480 = vld [vmem:[%s1334 + $0x11c] sm:$0xff]
        %1481 = vst [vmem:[%s1335 + $0x120] sm:$0xff] %v1480
        %v1482 = vld [vmem:[%s1334 + $0x130] sm:$0xff]
        %1483 = vst [vmem:[%s1335 + $0x124] sm:$0xff] %v1482
        %v1484 = vld [vmem:[%s1334 + $0x120] sm:$0xff]
        %1485 = vst [vmem:[%s1335 + $0x128] sm:$0xff] %v1484
        %v1486 = vld [vmem:[%s1334 + $0x134] sm:$0xff]
        %1487 = vst [vmem:[%s1335 + $0x12c] sm:$0xff] %v1486
        %v1488 = vld [vmem:[%s1334 + $0x124] sm:$0xff]
        %1489 = vst [vmem:[%s1335 + $0x130] sm:$0xff] %v1488
        %v1490 = vld [vmem:[%s1334 + $0x138] sm:$0xff]
        %1491 = vst [vmem:[%s1335 + $0x134] sm:$0xff] %v1490
        %v1492 = vld [vmem:[%s1334 + $0x128] sm:$0xff]
        %1493 = vst [vmem:[%s1335 + $0x138] sm:$0xff] %v1492
        %v1494 = vld [vmem:[%s1334 + $0x13c] sm:$0xff]
        %1495 = vst [vmem:[%s1335 + $0x13c] sm:$0xff] %v1494
        %v1496 = vld [vmem:[%s1334 + $0x140] sm:$0xff]
        %1497 = vst [vmem:[%s1335 + $0x140] sm:$0xff] %v1496
        %v1498 = vld [vmem:[%s1334 + $0x154] sm:$0xff]
        %1499 = vst [vmem:[%s1335 + $0x144] sm:$0xff] %v1498
        %v1500 = vld [vmem:[%s1334 + $0x144] sm:$0xff]
        %1501 = vst [vmem:[%s1335 + $0x148] sm:$0xff] %v1500
        %v1502 = vld [vmem:[%s1334 + $0x158] sm:$0xff]
        %1503 = vst [vmem:[%s1335 + $0x14c] sm:$0xff] %v1502
        %v1504 = vld [vmem:[%s1334 + $0x148] sm:$0xff]
        %1505 = vst [vmem:[%s1335 + $0x150] sm:$0xff] %v1504
        %v1506 = vld [vmem:[%s1334 + $0x15c] sm:$0xff]
        %1507 = vst [vmem:[%s1335 + $0x154] sm:$0xff] %v1506
        %v1508 = vld [vmem:[%s1334 + $0x14c] sm:$0xff]
        %1509 = vst [vmem:[%s1335 + $0x158] sm:$0xff] %v1508
        %v1510 = vld [vmem:[%s1334 + $0x160] sm:$0xff]
        %1511 = vst [vmem:[%s1335 + $0x15c] sm:$0xff] %v1510
        %v1512 = vld [vmem:[%s1334 + $0x150] sm:$0xff]
        %1513 = vst [vmem:[%s1335 + $0x160] sm:$0xff] %v1512
        %v1514 = vld [vmem:[%s1334 + $0x164] sm:$0xff]
        %1515 = vst [vmem:[%s1335 + $0x164] sm:$0xff] %v1514
        %v1516 = vld [vmem:[%s1334 + $0x168] sm:$0xff]
        %1517 = vst [vmem:[%s1335 + $0x168] sm:$0xff] %v1516
        %v1518 = vld [vmem:[%s1334 + $0x17c] sm:$0xff]
        %1519 = vst [vmem:[%s1335 + $0x16c] sm:$0xff] %v1518
        %v1520 = vld [vmem:[%s1334 + $0x16c] sm:$0xff]
        %1521 = vst [vmem:[%s1335 + $0x170] sm:$0xff] %v1520
        %v1522 = vld [vmem:[%s1334 + $0x180] sm:$0xff]
        %1523 = vst [vmem:[%s1335 + $0x174] sm:$0xff] %v1522
        %v1524 = vld [vmem:[%s1334 + $0x170] sm:$0xff]
        %1525 = vst [vmem:[%s1335 + $0x178] sm:$0xff] %v1524
        %v1526 = vld [vmem:[%s1334 + $0x184] sm:$0xff]
        %1527 = vst [vmem:[%s1335 + $0x17c] sm:$0xff] %v1526
        %v1528 = vld [vmem:[%s1334 + $0x174] sm:$0xff]
        %1529 = vst [vmem:[%s1335 + $0x180] sm:$0xff] %v1528
        %v1530 = vld [vmem:[%s1334 + $0x188] sm:$0xff]
        %1531 = vst [vmem:[%s1335 + $0x184] sm:$0xff] %v1530
        %v1532 = vld [vmem:[%s1334 + $0x178] sm:$0xff]
        %1533 = vst [vmem:[%s1335 + $0x188] sm:$0xff] %v1532
        %v1534 = vld [vmem:[%s1334 + $0x18c] sm:$0xff]
        %1535 = vst [vmem:[%s1335 + $0x18c] sm:$0xff] %v1534
        %v1536 = vld [vmem:[%s1334 + $0x190] sm:$0xff]
        %1537 = vst [vmem:[%s1335 + $0x190] sm:$0xff] %v1536
        %v1538 = vld [vmem:[%s1334 + $0x1a4] sm:$0xff]
        %1539 = vst [vmem:[%s1335 + $0x194] sm:$0xff] %v1538
        %v1540 = vld [vmem:[%s1334 + $0x194] sm:$0xff]
        %1541 = vst [vmem:[%s1335 + $0x198] sm:$0xff] %v1540
        %v1542 = vld [vmem:[%s1334 + $0x1a8] sm:$0xff]
        %1543 = vst [vmem:[%s1335 + $0x19c] sm:$0xff] %v1542
        %v1544 = vld [vmem:[%s1334 + $0x198] sm:$0xff]
        %1545 = vst [vmem:[%s1335 + $0x1a0] sm:$0xff] %v1544
        %v1546 = vld [vmem:[%s1334 + $0x1ac] sm:$0xff]
        %1547 = vst [vmem:[%s1335 + $0x1a4] sm:$0xff] %v1546
        %v1548 = vld [vmem:[%s1334 + $0x19c] sm:$0xff]
        %1549 = vst [vmem:[%s1335 + $0x1a8] sm:$0xff] %v1548
        %v1550 = vld [vmem:[%s1334 + $0x1b0] sm:$0xff]
        %1551 = vst [vmem:[%s1335 + $0x1ac] sm:$0xff] %v1550
        %v1552 = vld [vmem:[%s1334 + $0x1a0] sm:$0xff]
        %1553 = vst [vmem:[%s1335 + $0x1b0] sm:$0xff] %v1552
        %v1554 = vld [vmem:[%s1334 + $0x1b4] sm:$0xff]
        %1555 = vst [vmem:[%s1335 + $0x1b4] sm:$0xff] %v1554
        %v1556 = vld [vmem:[%s1334 + $0x1b8] sm:$0xff]
        %1557 = vst [vmem:[%s1335 + $0x1b8] sm:$0xff] %v1556
        %v1558 = vld [vmem:[%s1334 + $0x1cc] sm:$0xff]
        %1559 = vst [vmem:[%s1335 + $0x1bc] sm:$0xff] %v1558
        %v1560 = vld [vmem:[%s1334 + $0x1bc] sm:$0xff]
        %1561 = vst [vmem:[%s1335 + $0x1c0] sm:$0xff] %v1560
        %v1562 = vld [vmem:[%s1334 + $0x1d0] sm:$0xff]
        %1563 = vst [vmem:[%s1335 + $0x1c4] sm:$0xff] %v1562
        %v1564 = vld [vmem:[%s1334 + $0x1c0] sm:$0xff]
        %1565 = vst [vmem:[%s1335 + $0x1c8] sm:$0xff] %v1564
        %v1566 = vld [vmem:[%s1334 + $0x1d4] sm:$0xff]
        %1567 = vst [vmem:[%s1335 + $0x1cc] sm:$0xff] %v1566
        %v1568 = vld [vmem:[%s1334 + $0x1c4] sm:$0xff]
        %1569 = vst [vmem:[%s1335 + $0x1d0] sm:$0xff] %v1568
        %v1570 = vld [vmem:[%s1334 + $0x1d8] sm:$0xff]
        %1571 = vst [vmem:[%s1335 + $0x1d4] sm:$0xff] %v1570
        %v1572 = vld [vmem:[%s1334 + $0x1c8] sm:$0xff]
        %1573 = vst [vmem:[%s1335 + $0x1d8] sm:$0xff] %v1572
        %v1574 = vld [vmem:[%s1334 + $0x1dc] sm:$0xff]
        %1575 = vst [vmem:[%s1335 + $0x1dc] sm:$0xff] %v1574
        %v1576 = vld [vmem:[%s1334 + $0x1e0] sm:$0xff]
        %1577 = vst [vmem:[%s1335 + $0x1e0] sm:$0xff] %v1576
        %v1578 = vld [vmem:[%s1334 + $0x1f4] sm:$0xff]
        %1579 = vst [vmem:[%s1335 + $0x1e4] sm:$0xff] %v1578
        %v1580 = vld [vmem:[%s1334 + $0x1e4] sm:$0xff]
        %1581 = vst [vmem:[%s1335 + $0x1e8] sm:$0xff] %v1580
        %v1582 = vld [vmem:[%s1334 + $0x1f8] sm:$0xff]
        %1583 = vst [vmem:[%s1335 + $0x1ec] sm:$0xff] %v1582
        %v1584 = vld [vmem:[%s1334 + $0x1e8] sm:$0xff]
        %1585 = vst [vmem:[%s1335 + $0x1f0] sm:$0xff] %v1584
        %v1586 = vld [vmem:[%s1334 + $0x1fc] sm:$0xff]
        %1587 = vst [vmem:[%s1335 + $0x1f4] sm:$0xff] %v1586
        %v1588 = vld [vmem:[%s1334 + $0x1ec] sm:$0xff]
        %1589 = vst [vmem:[%s1335 + $0x1f8] sm:$0xff] %v1588
        %v1590 = vld [vmem:[%s1334 + $0x200] sm:$0xff]
        %1591 = vst [vmem:[%s1335 + $0x1fc] sm:$0xff] %v1590
        %v1592 = vld [vmem:[%s1334 + $0x1f0] sm:$0xff]
        %1593 = vst [vmem:[%s1335 + $0x200] sm:$0xff] %v1592
        %v1594 = vld [vmem:[%s1334 + $0x204] sm:$0xff]
        %1595 = vst [vmem:[%s1335 + $0x204] sm:$0xff] %v1594
        %v1596 = vld [vmem:[%s1334 + $0x208] sm:$0xff]
        %1597 = vst [vmem:[%s1335 + $0x208] sm:$0xff] %v1596
        %v1598 = vld [vmem:[%s1334 + $0x21c] sm:$0xff]
        %1599 = vst [vmem:[%s1335 + $0x20c] sm:$0xff] %v1598
        %v1600 = vld [vmem:[%s1334 + $0x20c] sm:$0xff]
        %1601 = vst [vmem:[%s1335 + $0x210] sm:$0xff] %v1600
        %v1602 = vld [vmem:[%s1334 + $0x220] sm:$0xff]
        %1603 = vst [vmem:[%s1335 + $0x214] sm:$0xff] %v1602
        %v1604 = vld [vmem:[%s1334 + $0x210] sm:$0xff]
        %1605 = vst [vmem:[%s1335 + $0x218] sm:$0xff] %v1604
        %v1606 = vld [vmem:[%s1334 + $0x224] sm:$0xff]
        %1607 = vst [vmem:[%s1335 + $0x21c] sm:$0xff] %v1606
        %v1608 = vld [vmem:[%s1334 + $0x214] sm:$0xff]
        %1609 = vst [vmem:[%s1335 + $0x220] sm:$0xff] %v1608
        %v1610 = vld [vmem:[%s1334 + $0x228] sm:$0xff]
        %1611 = vst [vmem:[%s1335 + $0x224] sm:$0xff] %v1610
        %v1612 = vld [vmem:[%s1334 + $0x218] sm:$0xff]
        %1613 = vst [vmem:[%s1335 + $0x228] sm:$0xff] %v1612
        %v1614 = vld [vmem:[%s1334 + $0x22c] sm:$0xff]
        %1615 = vst [vmem:[%s1335 + $0x22c] sm:$0xff] %v1614
        %v1616 = vld [vmem:[%s1334 + $0x230] sm:$0xff]
        %1617 = vst [vmem:[%s1335 + $0x230] sm:$0xff] %v1616
        %v1618 = vld [vmem:[%s1334 + $0x244] sm:$0xff]
        %1619 = vst [vmem:[%s1335 + $0x234] sm:$0xff] %v1618
        %v1620 = vld [vmem:[%s1334 + $0x234] sm:$0xff]
        %1621 = vst [vmem:[%s1335 + $0x238] sm:$0xff] %v1620
        %v1622 = vld [vmem:[%s1334 + $0x248] sm:$0xff]
        %1623 = vst [vmem:[%s1335 + $0x23c] sm:$0xff] %v1622
        %v1624 = vld [vmem:[%s1334 + $0x238] sm:$0xff]
        %1625 = vst [vmem:[%s1335 + $0x240] sm:$0xff] %v1624
        %v1626 = vld [vmem:[%s1334 + $0x24c] sm:$0xff]
        %1627 = vst [vmem:[%s1335 + $0x244] sm:$0xff] %v1626
        %v1628 = vld [vmem:[%s1334 + $0x23c] sm:$0xff]
        %1629 = vst [vmem:[%s1335 + $0x248] sm:$0xff] %v1628
        %v1630 = vld [vmem:[%s1334 + $0x250] sm:$0xff]
        %1631 = vst [vmem:[%s1335 + $0x24c] sm:$0xff] %v1630
        %v1632 = vld [vmem:[%s1334 + $0x240] sm:$0xff]
        %1633 = vst [vmem:[%s1335 + $0x250] sm:$0xff] %v1632
        %v1634 = vld [vmem:[%s1334 + $0x254] sm:$0xff]
        %1635 = vst [vmem:[%s1335 + $0x254] sm:$0xff] %v1634
        %v1636 = vld [vmem:[%s1334 + $0x258] sm:$0xff]
        %1637 = vst [vmem:[%s1335 + $0x258] sm:$0xff] %v1636
        %v1638 = vld [vmem:[%s1334 + $0x26c] sm:$0xff]
        %1639 = vst [vmem:[%s1335 + $0x25c] sm:$0xff] %v1638
        %v1640 = vld [vmem:[%s1334 + $0x25c] sm:$0xff]
        %1641 = vst [vmem:[%s1335 + $0x260] sm:$0xff] %v1640
        %v1642 = vld [vmem:[%s1334 + $0x270] sm:$0xff]
        %1643 = vst [vmem:[%s1335 + $0x264] sm:$0xff] %v1642
        %v1644 = vld [vmem:[%s1334 + $0x260] sm:$0xff]
        %1645 = vst [vmem:[%s1335 + $0x268] sm:$0xff] %v1644
        %v1646 = vld [vmem:[%s1334 + $0x274] sm:$0xff]
        %1647 = vst [vmem:[%s1335 + $0x26c] sm:$0xff] %v1646
        %v1648 = vld [vmem:[%s1334 + $0x264] sm:$0xff]
        %1649 = vst [vmem:[%s1335 + $0x270] sm:$0xff] %v1648
        %v1650 = vld [vmem:[%s1334 + $0x278] sm:$0xff]
        %1651 = vst [vmem:[%s1335 + $0x274] sm:$0xff] %v1650
        %v1652 = vld [vmem:[%s1334 + $0x268] sm:$0xff]
        %1653 = vst [vmem:[%s1335 + $0x278] sm:$0xff] %v1652
        %v1654 = vld [vmem:[%s1334 + $0x27c] sm:$0xff]
        %1655 = vst [vmem:[%s1335 + $0x27c] sm:$0xff] %v1654
        %v1656 = vld [vmem:[%s1334 + $0x280] sm:$0xff]
        %1657 = vst [vmem:[%s1335 + $0x280] sm:$0xff] %v1656
        %v1658 = vld [vmem:[%s1334 + $0x294] sm:$0xff]
        %1659 = vst [vmem:[%s1335 + $0x284] sm:$0xff] %v1658
        %v1660 = vld [vmem:[%s1334 + $0x284] sm:$0xff]
        %1661 = vst [vmem:[%s1335 + $0x288] sm:$0xff] %v1660
        %v1662 = vld [vmem:[%s1334 + $0x298] sm:$0xff]
        %1663 = vst [vmem:[%s1335 + $0x28c] sm:$0xff] %v1662
        %v1664 = vld [vmem:[%s1334 + $0x288] sm:$0xff]
        %1665 = vst [vmem:[%s1335 + $0x290] sm:$0xff] %v1664
        %v1666 = vld [vmem:[%s1334 + $0x29c] sm:$0xff]
        %1667 = vst [vmem:[%s1335 + $0x294] sm:$0xff] %v1666
        %v1668 = vld [vmem:[%s1334 + $0x28c] sm:$0xff]
        %1669 = vst [vmem:[%s1335 + $0x298] sm:$0xff] %v1668
        %v1670 = vld [vmem:[%s1334 + $0x2a0] sm:$0xff]
        %1671 = vst [vmem:[%s1335 + $0x29c] sm:$0xff] %v1670
        %v1672 = vld [vmem:[%s1334 + $0x290] sm:$0xff]
        %1673 = vst [vmem:[%s1335 + $0x2a0] sm:$0xff] %v1672
        %v1674 = vld [vmem:[%s1334 + $0x2a4] sm:$0xff]
        %1675 = vst [vmem:[%s1335 + $0x2a4] sm:$0xff] %v1674
        %v1676 = vld [vmem:[%s1334 + $0x2a8] sm:$0xff]
        %1677 = vst [vmem:[%s1335 + $0x2a8] sm:$0xff] %v1676
        %v1678 = vld [vmem:[%s1334 + $0x2bc] sm:$0xff]
        %1679 = vst [vmem:[%s1335 + $0x2ac] sm:$0xff] %v1678
        %v1680 = vld [vmem:[%s1334 + $0x2ac] sm:$0xff]
        %1681 = vst [vmem:[%s1335 + $0x2b0] sm:$0xff] %v1680
        %v1682 = vld [vmem:[%s1334 + $0x2c0] sm:$0xff]
        %1683 = vst [vmem:[%s1335 + $0x2b4] sm:$0xff] %v1682
        %v1684 = vld [vmem:[%s1334 + $0x2b0] sm:$0xff]
        %1685 = vst [vmem:[%s1335 + $0x2b8] sm:$0xff] %v1684
        %v1686 = vld [vmem:[%s1334 + $0x2c4] sm:$0xff]
        %1687 = vst [vmem:[%s1335 + $0x2bc] sm:$0xff] %v1686
        %v1688 = vld [vmem:[%s1334 + $0x2b4] sm:$0xff]
        %1689 = vst [vmem:[%s1335 + $0x2c0] sm:$0xff] %v1688
        %v1690 = vld [vmem:[%s1334 + $0x2c8] sm:$0xff]
        %1691 = vst [vmem:[%s1335 + $0x2c4] sm:$0xff] %v1690
        %v1692 = vld [vmem:[%s1334 + $0x2b8] sm:$0xff]
        %1693 = vst [vmem:[%s1335 + $0x2c8] sm:$0xff] %v1692
        %v1694 = vld [vmem:[%s1334 + $0x2cc] sm:$0xff]
        %1695 = vst [vmem:[%s1335 + $0x2cc] sm:$0xff] %v1694
        %v1696 = vld [vmem:[%s1334 + $0x2d0] sm:$0xff]
        %1697 = vst [vmem:[%s1335 + $0x2d0] sm:$0xff] %v1696
        %v1698 = vld [vmem:[%s1334 + $0x2e4] sm:$0xff]
        %1699 = vst [vmem:[%s1335 + $0x2d4] sm:$0xff] %v1698
        %v1700 = vld [vmem:[%s1334 + $0x2d4] sm:$0xff]
        %1701 = vst [vmem:[%s1335 + $0x2d8] sm:$0xff] %v1700
        %v1702 = vld [vmem:[%s1334 + $0x2e8] sm:$0xff]
        %1703 = vst [vmem:[%s1335 + $0x2dc] sm:$0xff] %v1702
        %v1704 = vld [vmem:[%s1334 + $0x2d8] sm:$0xff]
        %1705 = vst [vmem:[%s1335 + $0x2e0] sm:$0xff] %v1704
        %v1706 = vld [vmem:[%s1334 + $0x2ec] sm:$0xff]
        %1707 = vst [vmem:[%s1335 + $0x2e4] sm:$0xff] %v1706
        %v1708 = vld [vmem:[%s1334 + $0x2dc] sm:$0xff]
        %1709 = vst [vmem:[%s1335 + $0x2e8] sm:$0xff] %v1708
        %v1710 = vld [vmem:[%s1334 + $0x2f0] sm:$0xff]
        %1711 = vst [vmem:[%s1335 + $0x2ec] sm:$0xff] %v1710
        %v1712 = vld [vmem:[%s1334 + $0x2e0] sm:$0xff]
        %1713 = vst [vmem:[%s1335 + $0x2f0] sm:$0xff] %v1712
        %v1714 = vld [vmem:[%s1334 + $0x2f4] sm:$0xff]
        %1715 = vst [vmem:[%s1335 + $0x2f4] sm:$0xff] %v1714
        %v1716 = vld [vmem:[%s1334 + $0x2f8] sm:$0xff]
        %1717 = vst [vmem:[%s1335 + $0x2f8] sm:$0xff] %v1716
        %v1718 = vld [vmem:[%s1334 + $0x30c] sm:$0xff]
        %1719 = vst [vmem:[%s1335 + $0x2fc] sm:$0xff] %v1718
        %v1720 = vld [vmem:[%s1334 + $0x2fc] sm:$0xff]
        %1721 = vst [vmem:[%s1335 + $0x300] sm:$0xff] %v1720
        %v1722 = vld [vmem:[%s1334 + $0x310] sm:$0xff]
        %1723 = vst [vmem:[%s1335 + $0x304] sm:$0xff] %v1722
        %v1724 = vld [vmem:[%s1334 + $0x300] sm:$0xff]
        %1725 = vst [vmem:[%s1335 + $0x308] sm:$0xff] %v1724
        %v1726 = vld [vmem:[%s1334 + $0x314] sm:$0xff]
        %1727 = vst [vmem:[%s1335 + $0x30c] sm:$0xff] %v1726
        %v1728 = vld [vmem:[%s1334 + $0x304] sm:$0xff]
        %1729 = vst [vmem:[%s1335 + $0x310] sm:$0xff] %v1728
        %v1730 = vld [vmem:[%s1334 + $0x318] sm:$0xff]
        %1731 = vst [vmem:[%s1335 + $0x314] sm:$0xff] %v1730
        %v1732 = vld [vmem:[%s1334 + $0x308] sm:$0xff]
        %1733 = vst [vmem:[%s1335 + $0x318] sm:$0xff] %v1732
        %v1734 = vld [vmem:[%s1334 + $0x31c] sm:$0xff]
        %1735 = vst [vmem:[%s1335 + $0x31c] sm:$0xff] %v1734
        %v1736 = vld [vmem:[%s1334 + $0x320] sm:$0xff]
        %1737 = vst [vmem:[%s1335 + $0x320] sm:$0xff] %v1736
        %v1738 = vld [vmem:[%s1334 + $0x334] sm:$0xff]
        %1739 = vst [vmem:[%s1335 + $0x324] sm:$0xff] %v1738
        %v1740 = vld [vmem:[%s1334 + $0x324] sm:$0xff]
        %1741 = vst [vmem:[%s1335 + $0x328] sm:$0xff] %v1740
        %v1742 = vld [vmem:[%s1334 + $0x338] sm:$0xff]
        %1743 = vst [vmem:[%s1335 + $0x32c] sm:$0xff] %v1742
        %v1744 = vld [vmem:[%s1334 + $0x328] sm:$0xff]
        %1745 = vst [vmem:[%s1335 + $0x330] sm:$0xff] %v1744
        %v1746 = vld [vmem:[%s1334 + $0x33c] sm:$0xff]
        %1747 = vst [vmem:[%s1335 + $0x334] sm:$0xff] %v1746
        %v1748 = vld [vmem:[%s1334 + $0x32c] sm:$0xff]
        %1749 = vst [vmem:[%s1335 + $0x338] sm:$0xff] %v1748
        %v1750 = vld [vmem:[%s1334 + $0x340] sm:$0xff]
        %1751 = vst [vmem:[%s1335 + $0x33c] sm:$0xff] %v1750
        %v1752 = vld [vmem:[%s1334 + $0x330] sm:$0xff]
        %1753 = vst [vmem:[%s1335 + $0x340] sm:$0xff] %v1752
        %v1754 = vld [vmem:[%s1334 + $0x344] sm:$0xff]
        %1755 = vst [vmem:[%s1335 + $0x344] sm:$0xff] %v1754
        %v1756 = vld [vmem:[%s1334 + $0x348] sm:$0xff]
        %1757 = vst [vmem:[%s1335 + $0x348] sm:$0xff] %v1756
        %v1758 = vld [vmem:[%s1334 + $0x35c] sm:$0xff]
        %1759 = vst [vmem:[%s1335 + $0x34c] sm:$0xff] %v1758
        %v1760 = vld [vmem:[%s1334 + $0x34c] sm:$0xff]
        %1761 = vst [vmem:[%s1335 + $0x350] sm:$0xff] %v1760
        %v1762 = vld [vmem:[%s1334 + $0x360] sm:$0xff]
        %1763 = vst [vmem:[%s1335 + $0x354] sm:$0xff] %v1762
        %v1764 = vld [vmem:[%s1334 + $0x350] sm:$0xff]
        %1765 = vst [vmem:[%s1335 + $0x358] sm:$0xff] %v1764
        %v1766 = vld [vmem:[%s1334 + $0x364] sm:$0xff]
        %1767 = vst [vmem:[%s1335 + $0x35c] sm:$0xff] %v1766
        %v1768 = vld [vmem:[%s1334 + $0x354] sm:$0xff]
        %1769 = vst [vmem:[%s1335 + $0x360] sm:$0xff] %v1768
        %v1770 = vld [vmem:[%s1334 + $0x368] sm:$0xff]
        %1771 = vst [vmem:[%s1335 + $0x364] sm:$0xff] %v1770
        %v1772 = vld [vmem:[%s1334 + $0x358] sm:$0xff]
        %1773 = vst [vmem:[%s1335 + $0x368] sm:$0xff] %v1772
        %v1774 = vld [vmem:[%s1334 + $0x36c] sm:$0xff]
        %1775 = vst [vmem:[%s1335 + $0x36c] sm:$0xff] %v1774
        %v1776 = vld [vmem:[%s1334 + $0x370] sm:$0xff]
        %1777 = vst [vmem:[%s1335 + $0x370] sm:$0xff] %v1776
        %v1778 = vld [vmem:[%s1334 + $0x384] sm:$0xff]
        %1779 = vst [vmem:[%s1335 + $0x374] sm:$0xff] %v1778
        %v1780 = vld [vmem:[%s1334 + $0x374] sm:$0xff]
        %1781 = vst [vmem:[%s1335 + $0x378] sm:$0xff] %v1780
        %v1782 = vld [vmem:[%s1334 + $0x388] sm:$0xff]
        %1783 = vst [vmem:[%s1335 + $0x37c] sm:$0xff] %v1782
        %v1784 = vld [vmem:[%s1334 + $0x378] sm:$0xff]
        %1785 = vst [vmem:[%s1335 + $0x380] sm:$0xff] %v1784
        %v1786 = vld [vmem:[%s1334 + $0x38c] sm:$0xff]
        %1787 = vst [vmem:[%s1335 + $0x384] sm:$0xff] %v1786
        %v1788 = vld [vmem:[%s1334 + $0x37c] sm:$0xff]
        %1789 = vst [vmem:[%s1335 + $0x388] sm:$0xff] %v1788
        %v1790 = vld [vmem:[%s1334 + $0x390] sm:$0xff]
        %1791 = vst [vmem:[%s1335 + $0x38c] sm:$0xff] %v1790
        %v1792 = vld [vmem:[%s1334 + $0x380] sm:$0xff]
        %1793 = vst [vmem:[%s1335 + $0x390] sm:$0xff] %v1792
        %v1794 = vld [vmem:[%s1334 + $0x394] sm:$0xff]
        %1795 = vst [vmem:[%s1335 + $0x394] sm:$0xff] %v1794
        %v1796 = vld [vmem:[%s1334 + $0x398] sm:$0xff]
        %1797 = vst [vmem:[%s1335 + $0x398] sm:$0xff] %v1796
        %v1798 = vld [vmem:[%s1334 + $0x3ac] sm:$0xff]
        %1799 = vst [vmem:[%s1335 + $0x39c] sm:$0xff] %v1798
        %v1800 = vld [vmem:[%s1334 + $0x39c] sm:$0xff]
        %1801 = vst [vmem:[%s1335 + $0x3a0] sm:$0xff] %v1800
        %v1802 = vld [vmem:[%s1334 + $0x3b0] sm:$0xff]
        %1803 = vst [vmem:[%s1335 + $0x3a4] sm:$0xff] %v1802
        %v1804 = vld [vmem:[%s1334 + $0x3a0] sm:$0xff]
        %1805 = vst [vmem:[%s1335 + $0x3a8] sm:$0xff] %v1804
        %v1806 = vld [vmem:[%s1334 + $0x3b4] sm:$0xff]
        %1807 = vst [vmem:[%s1335 + $0x3ac] sm:$0xff] %v1806
        %v1808 = vld [vmem:[%s1334 + $0x3a4] sm:$0xff]
        %1809 = vst [vmem:[%s1335 + $0x3b0] sm:$0xff] %v1808
        %v1810 = vld [vmem:[%s1334 + $0x3b8] sm:$0xff]
        %1811 = vst [vmem:[%s1335 + $0x3b4] sm:$0xff] %v1810
        %v1812 = vld [vmem:[%s1334 + $0x3a8] sm:$0xff]
        %1813 = vst [vmem:[%s1335 + $0x3b8] sm:$0xff] %v1812
        %v1814 = vld [vmem:[%s1334 + $0x3bc] sm:$0xff]
        %1815 = vst [vmem:[%s1335 + $0x3bc] sm:$0xff] %v1814
        %v1816 = vld [vmem:[%s1334 + $0x3c0] sm:$0xff]
        %1817 = vst [vmem:[%s1335 + $0x3c0] sm:$0xff] %v1816
        %v1818 = vld [vmem:[%s1334 + $0x3d4] sm:$0xff]
        %1819 = vst [vmem:[%s1335 + $0x3c4] sm:$0xff] %v1818
        %v1820 = vld [vmem:[%s1334 + $0x3c4] sm:$0xff]
        %1821 = vst [vmem:[%s1335 + $0x3c8] sm:$0xff] %v1820
        %v1822 = vld [vmem:[%s1334 + $0x3d8] sm:$0xff]
        %1823 = vst [vmem:[%s1335 + $0x3cc] sm:$0xff] %v1822
        %v1824 = vld [vmem:[%s1334 + $0x3c8] sm:$0xff]
        %1825 = vst [vmem:[%s1335 + $0x3d0] sm:$0xff] %v1824
        %v1826 = vld [vmem:[%s1334 + $0x3dc] sm:$0xff]
        %1827 = vst [vmem:[%s1335 + $0x3d4] sm:$0xff] %v1826
        %v1828 = vld [vmem:[%s1334 + $0x3cc] sm:$0xff]
        %1829 = vst [vmem:[%s1335 + $0x3d8] sm:$0xff] %v1828
        %v1830 = vld [vmem:[%s1334 + $0x3e0] sm:$0xff]
        %1831 = vst [vmem:[%s1335 + $0x3dc] sm:$0xff] %v1830
        %v1832 = vld [vmem:[%s1334 + $0x3d0] sm:$0xff]
        %1833 = vst [vmem:[%s1335 + $0x3e0] sm:$0xff] %v1832
        %v1834 = vld [vmem:[%s1334 + $0x3e4] sm:$0xff]
        %1835 = vst [vmem:[%s1335 + $0x3e4] sm:$0xff] %v1834
        %v1836 = vld [vmem:[%s1334 + $0x3e8] sm:$0xff]
        %1837 = vst [vmem:[%s1335 + $0x3e8] sm:$0xff] %v1836
        %v1838 = vld [vmem:[%s1334 + $0x3fc] sm:$0xff]
        %1839 = vst [vmem:[%s1335 + $0x3ec] sm:$0xff] %v1838
        %v1840 = vld [vmem:[%s1334 + $0x3ec] sm:$0xff]
        %1841 = vst [vmem:[%s1335 + $0x3f0] sm:$0xff] %v1840
        %v1842 = vld [vmem:[%s1334 + $0x400] sm:$0xff]
        %1843 = vst [vmem:[%s1335 + $0x3f4] sm:$0xff] %v1842
        %v1844 = vld [vmem:[%s1334 + $0x3f0] sm:$0xff]
        %1845 = vst [vmem:[%s1335 + $0x3f8] sm:$0xff] %v1844
        %v1846 = vld [vmem:[%s1334 + $0x404] sm:$0xff]
        %1847 = vst [vmem:[%s1335 + $0x3fc] sm:$0xff] %v1846
        %v1848 = vld [vmem:[%s1334 + $0x3f4] sm:$0xff]
        %1849 = vst [vmem:[%s1335 + $0x400] sm:$0xff] %v1848
        %v1850 = vld [vmem:[%s1334 + $0x408] sm:$0xff]
        %1851 = vst [vmem:[%s1335 + $0x404] sm:$0xff] %v1850
        %v1852 = vld [vmem:[%s1334 + $0x3f8] sm:$0xff]
        %1853 = vst [vmem:[%s1335 + $0x408] sm:$0xff] %v1852
        %v1854 = vld [vmem:[%s1334 + $0x40c] sm:$0xff]
        %1855 = vst [vmem:[%s1335 + $0x40c] sm:$0xff] %v1854
        %v1856 = vld [vmem:[%s1334 + $0x410] sm:$0xff]
        %1857 = vst [vmem:[%s1335 + $0x410] sm:$0xff] %v1856
        %v1858 = vld [vmem:[%s1334 + $0x424] sm:$0xff]
        %1859 = vst [vmem:[%s1335 + $0x414] sm:$0xff] %v1858
        %v1860 = vld [vmem:[%s1334 + $0x414] sm:$0xff]
        %1861 = vst [vmem:[%s1335 + $0x418] sm:$0xff] %v1860
        %v1862 = vld [vmem:[%s1334 + $0x428] sm:$0xff]
        %1863 = vst [vmem:[%s1335 + $0x41c] sm:$0xff] %v1862
        %v1864 = vld [vmem:[%s1334 + $0x418] sm:$0xff]
        %1865 = vst [vmem:[%s1335 + $0x420] sm:$0xff] %v1864
        %v1866 = vld [vmem:[%s1334 + $0x42c] sm:$0xff]
        %1867 = vst [vmem:[%s1335 + $0x424] sm:$0xff] %v1866
        %v1868 = vld [vmem:[%s1334 + $0x41c] sm:$0xff]
        %1869 = vst [vmem:[%s1335 + $0x428] sm:$0xff] %v1868
        %v1870 = vld [vmem:[%s1334 + $0x430] sm:$0xff]
        %1871 = vst [vmem:[%s1335 + $0x42c] sm:$0xff] %v1870
        %v1872 = vld [vmem:[%s1334 + $0x420] sm:$0xff]
        %1873 = vst [vmem:[%s1335 + $0x430] sm:$0xff] %v1872
        %v1874 = vld [vmem:[%s1334 + $0x434] sm:$0xff]
        %1875 = vst [vmem:[%s1335 + $0x434] sm:$0xff] %v1874
        %v1876 = vld [vmem:[%s1334 + $0x438] sm:$0xff]
        %1877 = vst [vmem:[%s1335 + $0x438] sm:$0xff] %v1876
        %v1878 = vld [vmem:[%s1334 + $0x44c] sm:$0xff]
        %1879 = vst [vmem:[%s1335 + $0x43c] sm:$0xff] %v1878
        %v1880 = vld [vmem:[%s1334 + $0x43c] sm:$0xff]
        %1881 = vst [vmem:[%s1335 + $0x440] sm:$0xff] %v1880
        %v1882 = vld [vmem:[%s1334 + $0x450] sm:$0xff]
        %1883 = vst [vmem:[%s1335 + $0x444] sm:$0xff] %v1882
        %v1884 = vld [vmem:[%s1334 + $0x440] sm:$0xff]
        %1885 = vst [vmem:[%s1335 + $0x448] sm:$0xff] %v1884
        %v1886 = vld [vmem:[%s1334 + $0x454] sm:$0xff]
        %1887 = vst [vmem:[%s1335 + $0x44c] sm:$0xff] %v1886
        %v1888 = vld [vmem:[%s1334 + $0x444] sm:$0xff]
        %1889 = vst [vmem:[%s1335 + $0x450] sm:$0xff] %v1888
        %v1890 = vld [vmem:[%s1334 + $0x458] sm:$0xff]
        %1891 = vst [vmem:[%s1335 + $0x454] sm:$0xff] %v1890
        %v1892 = vld [vmem:[%s1334 + $0x448] sm:$0xff]
        %1893 = vst [vmem:[%s1335 + $0x458] sm:$0xff] %v1892
        %v1894 = vld [vmem:[%s1334 + $0x45c] sm:$0xff]
        %1895 = vst [vmem:[%s1335 + $0x45c] sm:$0xff] %v1894
        %v1896 = vld [vmem:[%s1334 + $0x460] sm:$0xff]
        %1897 = vst [vmem:[%s1335 + $0x460] sm:$0xff] %v1896
        %v1898 = vld [vmem:[%s1334 + $0x474] sm:$0xff]
        %1899 = vst [vmem:[%s1335 + $0x464] sm:$0xff] %v1898
        %v1900 = vld [vmem:[%s1334 + $0x464] sm:$0xff]
        %1901 = vst [vmem:[%s1335 + $0x468] sm:$0xff] %v1900
        %v1902 = vld [vmem:[%s1334 + $0x478] sm:$0xff]
        %1903 = vst [vmem:[%s1335 + $0x46c] sm:$0xff] %v1902
        %v1904 = vld [vmem:[%s1334 + $0x468] sm:$0xff]
        %1905 = vst [vmem:[%s1335 + $0x470] sm:$0xff] %v1904
        %v1906 = vld [vmem:[%s1334 + $0x47c] sm:$0xff]
        %1907 = vst [vmem:[%s1335 + $0x474] sm:$0xff] %v1906
        %v1908 = vld [vmem:[%s1334 + $0x46c] sm:$0xff]
        %1909 = vst [vmem:[%s1335 + $0x478] sm:$0xff] %v1908
        %v1910 = vld [vmem:[%s1334 + $0x480] sm:$0xff]
        %1911 = vst [vmem:[%s1335 + $0x47c] sm:$0xff] %v1910
        %v1912 = vld [vmem:[%s1334 + $0x470] sm:$0xff]
        %1913 = vst [vmem:[%s1335 + $0x480] sm:$0xff] %v1912
        %v1914 = vld [vmem:[%s1334 + $0x484] sm:$0xff]
        %1915 = vst [vmem:[%s1335 + $0x484] sm:$0xff] %v1914
        %v1916 = vld [vmem:[%s1334 + $0x488] sm:$0xff]
        %1917 = vst [vmem:[%s1335 + $0x488] sm:$0xff] %v1916
        %v1918 = vld [vmem:[%s1334 + $0x49c] sm:$0xff]
        %1919 = vst [vmem:[%s1335 + $0x48c] sm:$0xff] %v1918
        %v1920 = vld [vmem:[%s1334 + $0x48c] sm:$0xff]
        %1921 = vst [vmem:[%s1335 + $0x490] sm:$0xff] %v1920
        %v1922 = vld [vmem:[%s1334 + $0x4a0] sm:$0xff]
        %1923 = vst [vmem:[%s1335 + $0x494] sm:$0xff] %v1922
        %v1924 = vld [vmem:[%s1334 + $0x490] sm:$0xff]
        %1925 = vst [vmem:[%s1335 + $0x498] sm:$0xff] %v1924
        %v1926 = vld [vmem:[%s1334 + $0x4a4] sm:$0xff]
        %1927 = vst [vmem:[%s1335 + $0x49c] sm:$0xff] %v1926
        %v1928 = vld [vmem:[%s1334 + $0x494] sm:$0xff]
        %1929 = vst [vmem:[%s1335 + $0x4a0] sm:$0xff] %v1928
        %v1930 = vld [vmem:[%s1334 + $0x4a8] sm:$0xff]
        %1931 = vst [vmem:[%s1335 + $0x4a4] sm:$0xff] %v1930
        %v1932 = vld [vmem:[%s1334 + $0x498] sm:$0xff]
        %1933 = vst [vmem:[%s1335 + $0x4a8] sm:$0xff] %v1932
        %v1934 = vld [vmem:[%s1334 + $0x4ac] sm:$0xff]
        %1935 = vst [vmem:[%s1335 + $0x4ac] sm:$0xff] %v1934
        %v1936 = vld [vmem:[%s1334 + $0x4b0] sm:$0xff]
        %1937 = vst [vmem:[%s1335 + $0x4b0] sm:$0xff] %v1936
        %v1938 = vld [vmem:[%s1334 + $0x4c4] sm:$0xff]
        %1939 = vst [vmem:[%s1335 + $0x4b4] sm:$0xff] %v1938
        %v1940 = vld [vmem:[%s1334 + $0x4b4] sm:$0xff]
        %1941 = vst [vmem:[%s1335 + $0x4b8] sm:$0xff] %v1940
        %v1942 = vld [vmem:[%s1334 + $0x4c8] sm:$0xff]
        %1943 = vst [vmem:[%s1335 + $0x4bc] sm:$0xff] %v1942
        %v1944 = vld [vmem:[%s1334 + $0x4b8] sm:$0xff]
        %1945 = vst [vmem:[%s1335 + $0x4c0] sm:$0xff] %v1944
        %v1946 = vld [vmem:[%s1334 + $0x4cc] sm:$0xff]
        %1947 = vst [vmem:[%s1335 + $0x4c4] sm:$0xff] %v1946
        %v1948 = vld [vmem:[%s1334 + $0x4bc] sm:$0xff]
        %1949 = vst [vmem:[%s1335 + $0x4c8] sm:$0xff] %v1948
        %v1950 = vld [vmem:[%s1334 + $0x4d0] sm:$0xff]
        %1951 = vst [vmem:[%s1335 + $0x4cc] sm:$0xff] %v1950
        %v1952 = vld [vmem:[%s1334 + $0x4c0] sm:$0xff]
        %1953 = vst [vmem:[%s1335 + $0x4d0] sm:$0xff] %v1952
        %v1954 = vld [vmem:[%s1334 + $0x4d4] sm:$0xff]
        %1955 = vst [vmem:[%s1335 + $0x4d4] sm:$0xff] %v1954
        %v1956 = vld [vmem:[%s1334 + $0x4d8] sm:$0xff]
        %1957 = vst [vmem:[%s1335 + $0x4d8] sm:$0xff] %v1956
        %v1958 = vld [vmem:[%s1334 + $0x4ec] sm:$0xff]
        %1959 = vst [vmem:[%s1335 + $0x4dc] sm:$0xff] %v1958
        %v1960 = vld [vmem:[%s1334 + $0x4dc] sm:$0xff]
        %1961 = vst [vmem:[%s1335 + $0x4e0] sm:$0xff] %v1960
        %v1962 = vld [vmem:[%s1334 + $0x4f0] sm:$0xff]
        %1963 = vst [vmem:[%s1335 + $0x4e4] sm:$0xff] %v1962
        %v1964 = vld [vmem:[%s1334 + $0x4e0] sm:$0xff]
        %1965 = vst [vmem:[%s1335 + $0x4e8] sm:$0xff] %v1964
        %v1966 = vld [vmem:[%s1334 + $0x4f4] sm:$0xff]
        %1967 = vst [vmem:[%s1335 + $0x4ec] sm:$0xff] %v1966
        %v1968 = vld [vmem:[%s1334 + $0x4e4] sm:$0xff]
        %1969 = vst [vmem:[%s1335 + $0x4f0] sm:$0xff] %v1968
        %v1970 = vld [vmem:[%s1334 + $0x4f8] sm:$0xff]
        %1971 = vst [vmem:[%s1335 + $0x4f4] sm:$0xff] %v1970
        %v1972 = vld [vmem:[%s1334 + $0x4e8] sm:$0xff]
        %1973 = vst [vmem:[%s1335 + $0x4f8] sm:$0xff] %v1972
        %v1974 = vld [vmem:[%s1334 + $0x4fc] sm:$0xff]
        %1975 = vst [vmem:[%s1335 + $0x4fc] sm:$0xff] %v1974
        %v1976 = vld [vmem:[%s1334 + $0x500] sm:$0xff]
        %1977 = vst [vmem:[%s1335 + $0x500] sm:$0xff] %v1976
        %v1978 = vld [vmem:[%s1334 + $0x514] sm:$0xff]
        %1979 = vst [vmem:[%s1335 + $0x504] sm:$0xff] %v1978
        %v1980 = vld [vmem:[%s1334 + $0x504] sm:$0xff]
        %1981 = vst [vmem:[%s1335 + $0x508] sm:$0xff] %v1980
        %v1982 = vld [vmem:[%s1334 + $0x518] sm:$0xff]
        %1983 = vst [vmem:[%s1335 + $0x50c] sm:$0xff] %v1982
        %v1984 = vld [vmem:[%s1334 + $0x508] sm:$0xff]
        %1985 = vst [vmem:[%s1335 + $0x510] sm:$0xff] %v1984
        %v1986 = vld [vmem:[%s1334 + $0x51c] sm:$0xff]
        %1987 = vst [vmem:[%s1335 + $0x514] sm:$0xff] %v1986
        %v1988 = vld [vmem:[%s1334 + $0x50c] sm:$0xff]
        %1989 = vst [vmem:[%s1335 + $0x518] sm:$0xff] %v1988
        %v1990 = vld [vmem:[%s1334 + $0x520] sm:$0xff]
        %1991 = vst [vmem:[%s1335 + $0x51c] sm:$0xff] %v1990
        %v1992 = vld [vmem:[%s1334 + $0x510] sm:$0xff]
        %1993 = vst [vmem:[%s1335 + $0x520] sm:$0xff] %v1992
        %v1994 = vld [vmem:[%s1334 + $0x524] sm:$0xff]
        %1995 = vst [vmem:[%s1335 + $0x524] sm:$0xff] %v1994
        %v1996 = vld [vmem:[%s1334 + $0x528] sm:$0xff]
        %1997 = vst [vmem:[%s1335 + $0x528] sm:$0xff] %v1996
        %v1998 = vld [vmem:[%s1334 + $0x53c] sm:$0xff]
        %1999 = vst [vmem:[%s1335 + $0x52c] sm:$0xff] %v1998
        %v2000 = vld [vmem:[%s1334 + $0x52c] sm:$0xff]
        %2001 = vst [vmem:[%s1335 + $0x530] sm:$0xff] %v2000
        %v2002 = vld [vmem:[%s1334 + $0x540] sm:$0xff]
        %2003 = vst [vmem:[%s1335 + $0x534] sm:$0xff] %v2002
        %v2004 = vld [vmem:[%s1334 + $0x530] sm:$0xff]
        %2005 = vst [vmem:[%s1335 + $0x538] sm:$0xff] %v2004
        %v2006 = vld [vmem:[%s1334 + $0x544] sm:$0xff]
        %2007 = vst [vmem:[%s1335 + $0x53c] sm:$0xff] %v2006
        %v2008 = vld [vmem:[%s1334 + $0x534] sm:$0xff]
        %2009 = vst [vmem:[%s1335 + $0x540] sm:$0xff] %v2008
        %v2010 = vld [vmem:[%s1334 + $0x548] sm:$0xff]
        %2011 = vst [vmem:[%s1335 + $0x544] sm:$0xff] %v2010
        %v2012 = vld [vmem:[%s1334 + $0x538] sm:$0xff]
        %2013 = vst [vmem:[%s1335 + $0x548] sm:$0xff] %v2012
        %v2014 = vld [vmem:[%s1334 + $0x54c] sm:$0xff]
        %2015 = vst [vmem:[%s1335 + $0x54c] sm:$0xff] %v2014
        %v2016 = vld [vmem:[%s1334 + $0x550] sm:$0xff]
        %2017 = vst [vmem:[%s1335 + $0x550] sm:$0xff] %v2016
        %v2018 = vld [vmem:[%s1334 + $0x564] sm:$0xff]
        %2019 = vst [vmem:[%s1335 + $0x554] sm:$0xff] %v2018
        %v2020 = vld [vmem:[%s1334 + $0x554] sm:$0xff]
        %2021 = vst [vmem:[%s1335 + $0x558] sm:$0xff] %v2020
        %v2022 = vld [vmem:[%s1334 + $0x568] sm:$0xff]
        %2023 = vst [vmem:[%s1335 + $0x55c] sm:$0xff] %v2022
        %v2024 = vld [vmem:[%s1334 + $0x558] sm:$0xff]
        %2025 = vst [vmem:[%s1335 + $0x560] sm:$0xff] %v2024
        %v2026 = vld [vmem:[%s1334 + $0x56c] sm:$0xff]
        %2027 = vst [vmem:[%s1335 + $0x564] sm:$0xff] %v2026
        %v2028 = vld [vmem:[%s1334 + $0x55c] sm:$0xff]
        %2029 = vst [vmem:[%s1335 + $0x568] sm:$0xff] %v2028
        %v2030 = vld [vmem:[%s1334 + $0x570] sm:$0xff]
        %2031 = vst [vmem:[%s1335 + $0x56c] sm:$0xff] %v2030
        %v2032 = vld [vmem:[%s1334 + $0x560] sm:$0xff]
        %2033 = vst [vmem:[%s1335 + $0x570] sm:$0xff] %v2032
        %v2034 = vld [vmem:[%s1334 + $0x574] sm:$0xff]
        %2035 = vst [vmem:[%s1335 + $0x574] sm:$0xff] %v2034
        %v2036 = vld [vmem:[%s1334 + $0x578] sm:$0xff]
        %2037 = vst [vmem:[%s1335 + $0x578] sm:$0xff] %v2036
        %v2038 = vld [vmem:[%s1334 + $0x58c] sm:$0xff]
        %2039 = vst [vmem:[%s1335 + $0x57c] sm:$0xff] %v2038
        %v2040 = vld [vmem:[%s1334 + $0x57c] sm:$0xff]
        %2041 = vst [vmem:[%s1335 + $0x580] sm:$0xff] %v2040
        %v2042 = vld [vmem:[%s1334 + $0x590] sm:$0xff]
        %2043 = vst [vmem:[%s1335 + $0x584] sm:$0xff] %v2042
        %v2044 = vld [vmem:[%s1334 + $0x580] sm:$0xff]
        %2045 = vst [vmem:[%s1335 + $0x588] sm:$0xff] %v2044
        %v2046 = vld [vmem:[%s1334 + $0x594] sm:$0xff]
        %2047 = vst [vmem:[%s1335 + $0x58c] sm:$0xff] %v2046
        %v2048 = vld [vmem:[%s1334 + $0x584] sm:$0xff]
        %2049 = vst [vmem:[%s1335 + $0x590] sm:$0xff] %v2048
        %v2050 = vld [vmem:[%s1334 + $0x598] sm:$0xff]
        %2051 = vst [vmem:[%s1335 + $0x594] sm:$0xff] %v2050
        %v2052 = vld [vmem:[%s1334 + $0x588] sm:$0xff]
        %2053 = vst [vmem:[%s1335 + $0x598] sm:$0xff] %v2052
        %v2054 = vld [vmem:[%s1334 + $0x59c] sm:$0xff]
        %2055 = vst [vmem:[%s1335 + $0x59c] sm:$0xff] %v2054
        %v2056 = vld [vmem:[%s1334 + $0x5a0] sm:$0xff]
        %2057 = vst [vmem:[%s1335 + $0x5a0] sm:$0xff] %v2056
        %v2058 = vld [vmem:[%s1334 + $0x5b4] sm:$0xff]
        %2059 = vst [vmem:[%s1335 + $0x5a4] sm:$0xff] %v2058
        %v2060 = vld [vmem:[%s1334 + $0x5a4] sm:$0xff]
        %2061 = vst [vmem:[%s1335 + $0x5a8] sm:$0xff] %v2060
        %v2062 = vld [vmem:[%s1334 + $0x5b8] sm:$0xff]
        %2063 = vst [vmem:[%s1335 + $0x5ac] sm:$0xff] %v2062
        %v2064 = vld [vmem:[%s1334 + $0x5a8] sm:$0xff]
        %2065 = vst [vmem:[%s1335 + $0x5b0] sm:$0xff] %v2064
        %v2066 = vld [vmem:[%s1334 + $0x5bc] sm:$0xff]
        %2067 = vst [vmem:[%s1335 + $0x5b4] sm:$0xff] %v2066
        %v2068 = vld [vmem:[%s1334 + $0x5ac] sm:$0xff]
        %2069 = vst [vmem:[%s1335 + $0x5b8] sm:$0xff] %v2068
        %v2070 = vld [vmem:[%s1334 + $0x5c0] sm:$0xff]
        %2071 = vst [vmem:[%s1335 + $0x5bc] sm:$0xff] %v2070
        %v2072 = vld [vmem:[%s1334 + $0x5b0] sm:$0xff]
        %2073 = vst [vmem:[%s1335 + $0x5c0] sm:$0xff] %v2072
        %v2074 = vld [vmem:[%s1334 + $0x5c4] sm:$0xff]
        %2075 = vst [vmem:[%s1335 + $0x5c4] sm:$0xff] %v2074
        %v2076 = vld [vmem:[%s1334 + $0x5c8] sm:$0xff]
        %2077 = vst [vmem:[%s1335 + $0x5c8] sm:$0xff] %v2076
        %v2078 = vld [vmem:[%s1334 + $0x5dc] sm:$0xff]
        %2079 = vst [vmem:[%s1335 + $0x5cc] sm:$0xff] %v2078
        %v2080 = vld [vmem:[%s1334 + $0x5cc] sm:$0xff]
        %2081 = vst [vmem:[%s1335 + $0x5d0] sm:$0xff] %v2080
        %v2082 = vld [vmem:[%s1334 + $0x5e0] sm:$0xff]
        %2083 = vst [vmem:[%s1335 + $0x5d4] sm:$0xff] %v2082
        %v2084 = vld [vmem:[%s1334 + $0x5d0] sm:$0xff]
        %2085 = vst [vmem:[%s1335 + $0x5d8] sm:$0xff] %v2084
        %v2086 = vld [vmem:[%s1334 + $0x5e4] sm:$0xff]
        %2087 = vst [vmem:[%s1335 + $0x5dc] sm:$0xff] %v2086
        %v2088 = vld [vmem:[%s1334 + $0x5d4] sm:$0xff]
        %2089 = vst [vmem:[%s1335 + $0x5e0] sm:$0xff] %v2088
        %v2090 = vld [vmem:[%s1334 + $0x5e8] sm:$0xff]
        %2091 = vst [vmem:[%s1335 + $0x5e4] sm:$0xff] %v2090
        %v2092 = vld [vmem:[%s1334 + $0x5d8] sm:$0xff]
        %2093 = vst [vmem:[%s1335 + $0x5e8] sm:$0xff] %v2092
        %v2094 = vld [vmem:[%s1334 + $0x5ec] sm:$0xff]
        %2095 = vst [vmem:[%s1335 + $0x5ec] sm:$0xff] %v2094
        %v2096 = vld [vmem:[%s1334 + $0x5f0] sm:$0xff]
        %2097 = vst [vmem:[%s1335 + $0x5f0] sm:$0xff] %v2096
        %v2098 = vld [vmem:[%s1334 + $0x604] sm:$0xff]
        %2099 = vst [vmem:[%s1335 + $0x5f4] sm:$0xff] %v2098
        %v2100 = vld [vmem:[%s1334 + $0x5f4] sm:$0xff]
        %2101 = vst [vmem:[%s1335 + $0x5f8] sm:$0xff] %v2100
        %v2102 = vld [vmem:[%s1334 + $0x608] sm:$0xff]
        %2103 = vst [vmem:[%s1335 + $0x5fc] sm:$0xff] %v2102
        %v2104 = vld [vmem:[%s1334 + $0x5f8] sm:$0xff]
        %2105 = vst [vmem:[%s1335 + $0x600] sm:$0xff] %v2104
        %v2106 = vld [vmem:[%s1334 + $0x60c] sm:$0xff]
        %2107 = vst [vmem:[%s1335 + $0x604] sm:$0xff] %v2106
        %v2108 = vld [vmem:[%s1334 + $0x5fc] sm:$0xff]
        %2109 = vst [vmem:[%s1335 + $0x608] sm:$0xff] %v2108
        %v2110 = vld [vmem:[%s1334 + $0x610] sm:$0xff]
        %2111 = vst [vmem:[%s1335 + $0x60c] sm:$0xff] %v2110
        %v2112 = vld [vmem:[%s1334 + $0x600] sm:$0xff]
        %2113 = vst [vmem:[%s1335 + $0x610] sm:$0xff] %v2112
        %v2114 = vld [vmem:[%s1334 + $0x614] sm:$0xff]
        %2115 = vst [vmem:[%s1335 + $0x614] sm:$0xff] %v2114
        %v2116 = vld [vmem:[%s1334 + $0x618] sm:$0xff]
        %2117 = vst [vmem:[%s1335 + $0x618] sm:$0xff] %v2116
        %v2118 = vld [vmem:[%s1334 + $0x62c] sm:$0xff]
        %2119 = vst [vmem:[%s1335 + $0x61c] sm:$0xff] %v2118
        %v2120 = vld [vmem:[%s1334 + $0x61c] sm:$0xff]
        %2121 = vst [vmem:[%s1335 + $0x620] sm:$0xff] %v2120
        %v2122 = vld [vmem:[%s1334 + $0x630] sm:$0xff]
        %2123 = vst [vmem:[%s1335 + $0x624] sm:$0xff] %v2122
        %v2124 = vld [vmem:[%s1334 + $0x620] sm:$0xff]
        %2125 = vst [vmem:[%s1335 + $0x628] sm:$0xff] %v2124
        %v2126 = vld [vmem:[%s1334 + $0x634] sm:$0xff]
        %2127 = vst [vmem:[%s1335 + $0x62c] sm:$0xff] %v2126
        %v2128 = vld [vmem:[%s1334 + $0x624] sm:$0xff]
        %2129 = vst [vmem:[%s1335 + $0x630] sm:$0xff] %v2128
        %v2130 = vld [vmem:[%s1334 + $0x638] sm:$0xff]
        %2131 = vst [vmem:[%s1335 + $0x634] sm:$0xff] %v2130
        %v2132 = vld [vmem:[%s1334 + $0x628] sm:$0xff]
        %2133 = vst [vmem:[%s1335 + $0x638] sm:$0xff] %v2132
        %v2134 = vld [vmem:[%s1334 + $0x63c] sm:$0xff]
        %2135 = vst [vmem:[%s1335 + $0x63c] sm:$0xff] %v2134
        %v2136 = vld [vmem:[%s1334 + $0x640] sm:$0xff]
        %2137 = vst [vmem:[%s1335 + $0x640] sm:$0xff] %v2136
        %v2138 = vld [vmem:[%s1334 + $0x654] sm:$0xff]
        %2139 = vst [vmem:[%s1335 + $0x644] sm:$0xff] %v2138
        %v2140 = vld [vmem:[%s1334 + $0x644] sm:$0xff]
        %2141 = vst [vmem:[%s1335 + $0x648] sm:$0xff] %v2140
        %v2142 = vld [vmem:[%s1334 + $0x658] sm:$0xff]
        %2143 = vst [vmem:[%s1335 + $0x64c] sm:$0xff] %v2142
        %v2144 = vld [vmem:[%s1334 + $0x648] sm:$0xff]
        %2145 = vst [vmem:[%s1335 + $0x650] sm:$0xff] %v2144
        %v2146 = vld [vmem:[%s1334 + $0x65c] sm:$0xff]
        %2147 = vst [vmem:[%s1335 + $0x654] sm:$0xff] %v2146
        %v2148 = vld [vmem:[%s1334 + $0x64c] sm:$0xff]
        %2149 = vst [vmem:[%s1335 + $0x658] sm:$0xff] %v2148
        %v2150 = vld [vmem:[%s1334 + $0x660] sm:$0xff]
        %2151 = vst [vmem:[%s1335 + $0x65c] sm:$0xff] %v2150
        %v2152 = vld [vmem:[%s1334 + $0x650] sm:$0xff]
        %2153 = vst [vmem:[%s1335 + $0x660] sm:$0xff] %v2152
        %v2154 = vld [vmem:[%s1334 + $0x664] sm:$0xff]
        %2155 = vst [vmem:[%s1335 + $0x664] sm:$0xff] %v2154
        %v2156 = vld [vmem:[%s1334 + $0x668] sm:$0xff]
        %2157 = vst [vmem:[%s1335 + $0x668] sm:$0xff] %v2156
        %v2158 = vld [vmem:[%s1334 + $0x67c] sm:$0xff]
        %2159 = vst [vmem:[%s1335 + $0x66c] sm:$0xff] %v2158
        %v2160 = vld [vmem:[%s1334 + $0x66c] sm:$0xff]
        %2161 = vst [vmem:[%s1335 + $0x670] sm:$0xff] %v2160
        %v2162 = vld [vmem:[%s1334 + $0x680] sm:$0xff]
        %2163 = vst [vmem:[%s1335 + $0x674] sm:$0xff] %v2162
        %v2164 = vld [vmem:[%s1334 + $0x670] sm:$0xff]
        %2165 = vst [vmem:[%s1335 + $0x678] sm:$0xff] %v2164
        %v2166 = vld [vmem:[%s1334 + $0x684] sm:$0xff]
        %2167 = vst [vmem:[%s1335 + $0x67c] sm:$0xff] %v2166
        %v2168 = vld [vmem:[%s1334 + $0x674] sm:$0xff]
        %2169 = vst [vmem:[%s1335 + $0x680] sm:$0xff] %v2168
        %v2170 = vld [vmem:[%s1334 + $0x688] sm:$0xff]
        %2171 = vst [vmem:[%s1335 + $0x684] sm:$0xff] %v2170
        %v2172 = vld [vmem:[%s1334 + $0x678] sm:$0xff]
        %2173 = vst [vmem:[%s1335 + $0x688] sm:$0xff] %v2172
        %v2174 = vld [vmem:[%s1334 + $0x68c] sm:$0xff]
        %2175 = vst [vmem:[%s1335 + $0x68c] sm:$0xff] %v2174
        %v2176 = vld [vmem:[%s1334 + $0x690] sm:$0xff]
        %2177 = vst [vmem:[%s1335 + $0x690] sm:$0xff] %v2176
        %v2178 = vld [vmem:[%s1334 + $0x6a4] sm:$0xff]
        %2179 = vst [vmem:[%s1335 + $0x694] sm:$0xff] %v2178
        %v2180 = vld [vmem:[%s1334 + $0x694] sm:$0xff]
        %2181 = vst [vmem:[%s1335 + $0x698] sm:$0xff] %v2180
        %v2182 = vld [vmem:[%s1334 + $0x6a8] sm:$0xff]
        %2183 = vst [vmem:[%s1335 + $0x69c] sm:$0xff] %v2182
        %v2184 = vld [vmem:[%s1334 + $0x698] sm:$0xff]
        %2185 = vst [vmem:[%s1335 + $0x6a0] sm:$0xff] %v2184
        %v2186 = vld [vmem:[%s1334 + $0x6ac] sm:$0xff]
        %2187 = vst [vmem:[%s1335 + $0x6a4] sm:$0xff] %v2186
        %v2188 = vld [vmem:[%s1334 + $0x69c] sm:$0xff]
        %2189 = vst [vmem:[%s1335 + $0x6a8] sm:$0xff] %v2188
        %v2190 = vld [vmem:[%s1334 + $0x6b0] sm:$0xff]
        %2191 = vst [vmem:[%s1335 + $0x6ac] sm:$0xff] %v2190
        %v2192 = vld [vmem:[%s1334 + $0x6a0] sm:$0xff]
        %2193 = vst [vmem:[%s1335 + $0x6b0] sm:$0xff] %v2192
        %v2194 = vld [vmem:[%s1334 + $0x6b4] sm:$0xff]
        %2195 = vst [vmem:[%s1335 + $0x6b4] sm:$0xff] %v2194
        %v2196 = vld [vmem:[%s1334 + $0x6b8] sm:$0xff]
        %2197 = vst [vmem:[%s1335 + $0x6b8] sm:$0xff] %v2196
        %v2198 = vld [vmem:[%s1334 + $0x6cc] sm:$0xff]
        %2199 = vst [vmem:[%s1335 + $0x6bc] sm:$0xff] %v2198
        %v2200 = vld [vmem:[%s1334 + $0x6bc] sm:$0xff]
        %2201 = vst [vmem:[%s1335 + $0x6c0] sm:$0xff] %v2200
        %v2202 = vld [vmem:[%s1334 + $0x6d0] sm:$0xff]
        %2203 = vst [vmem:[%s1335 + $0x6c4] sm:$0xff] %v2202
        %v2204 = vld [vmem:[%s1334 + $0x6c0] sm:$0xff]
        %2205 = vst [vmem:[%s1335 + $0x6c8] sm:$0xff] %v2204
        %v2206 = vld [vmem:[%s1334 + $0x6d4] sm:$0xff]
        %2207 = vst [vmem:[%s1335 + $0x6cc] sm:$0xff] %v2206
        %v2208 = vld [vmem:[%s1334 + $0x6c4] sm:$0xff]
        %2209 = vst [vmem:[%s1335 + $0x6d0] sm:$0xff] %v2208
        %v2210 = vld [vmem:[%s1334 + $0x6d8] sm:$0xff]
        %2211 = vst [vmem:[%s1335 + $0x6d4] sm:$0xff] %v2210
        %v2212 = vld [vmem:[%s1334 + $0x6c8] sm:$0xff]
        %2213 = vst [vmem:[%s1335 + $0x6d8] sm:$0xff] %v2212
        %v2214 = vld [vmem:[%s1334 + $0x6dc] sm:$0xff]
        %2215 = vst [vmem:[%s1335 + $0x6dc] sm:$0xff] %v2214
        %v2216 = vld [vmem:[%s1334 + $0x6e0] sm:$0xff]
        %2217 = vst [vmem:[%s1335 + $0x6e0] sm:$0xff] %v2216
        %v2218 = vld [vmem:[%s1334 + $0x6f4] sm:$0xff]
        %2219 = vst [vmem:[%s1335 + $0x6e4] sm:$0xff] %v2218
        %v2220 = vld [vmem:[%s1334 + $0x6e4] sm:$0xff]
        %2221 = vst [vmem:[%s1335 + $0x6e8] sm:$0xff] %v2220
        %v2222 = vld [vmem:[%s1334 + $0x6f8] sm:$0xff]
        %2223 = vst [vmem:[%s1335 + $0x6ec] sm:$0xff] %v2222
        %v2224 = vld [vmem:[%s1334 + $0x6e8] sm:$0xff]
        %2225 = vst [vmem:[%s1335 + $0x6f0] sm:$0xff] %v2224
        %v2226 = vld [vmem:[%s1334 + $0x6fc] sm:$0xff]
        %2227 = vst [vmem:[%s1335 + $0x6f4] sm:$0xff] %v2226
        %v2228 = vld [vmem:[%s1334 + $0x6ec] sm:$0xff]
        %2229 = vst [vmem:[%s1335 + $0x6f8] sm:$0xff] %v2228
        %v2230 = vld [vmem:[%s1334 + $0x700] sm:$0xff]
        %2231 = vst [vmem:[%s1335 + $0x6fc] sm:$0xff] %v2230
        %v2232 = vld [vmem:[%s1334 + $0x6f0] sm:$0xff]
        %2233 = vst [vmem:[%s1335 + $0x700] sm:$0xff] %v2232
        %v2234 = vld [vmem:[%s1334 + $0x704] sm:$0xff]
        %2235 = vst [vmem:[%s1335 + $0x704] sm:$0xff] %v2234
        %v2236 = vld [vmem:[%s1334 + $0x708] sm:$0xff]
        %2237 = vst [vmem:[%s1335 + $0x708] sm:$0xff] %v2236
        %v2238 = vld [vmem:[%s1334 + $0x71c] sm:$0xff]
        %2239 = vst [vmem:[%s1335 + $0x70c] sm:$0xff] %v2238
        %v2240 = vld [vmem:[%s1334 + $0x70c] sm:$0xff]
        %2241 = vst [vmem:[%s1335 + $0x710] sm:$0xff] %v2240
        %v2242 = vld [vmem:[%s1334 + $0x720] sm:$0xff]
        %2243 = vst [vmem:[%s1335 + $0x714] sm:$0xff] %v2242
        %v2244 = vld [vmem:[%s1334 + $0x710] sm:$0xff]
        %2245 = vst [vmem:[%s1335 + $0x718] sm:$0xff] %v2244
        %v2246 = vld [vmem:[%s1334 + $0x724] sm:$0xff]
        %2247 = vst [vmem:[%s1335 + $0x71c] sm:$0xff] %v2246
        %v2248 = vld [vmem:[%s1334 + $0x714] sm:$0xff]
        %2249 = vst [vmem:[%s1335 + $0x720] sm:$0xff] %v2248
        %v2250 = vld [vmem:[%s1334 + $0x728] sm:$0xff]
        %2251 = vst [vmem:[%s1335 + $0x724] sm:$0xff] %v2250
        %v2252 = vld [vmem:[%s1334 + $0x718] sm:$0xff]
        %2253 = vst [vmem:[%s1335 + $0x728] sm:$0xff] %v2252
        %v2254 = vld [vmem:[%s1334 + $0x72c] sm:$0xff]
        %2255 = vst [vmem:[%s1335 + $0x72c] sm:$0xff] %v2254
        %v2256 = vld [vmem:[%s1334 + $0x730] sm:$0xff]
        %2257 = vst [vmem:[%s1335 + $0x730] sm:$0xff] %v2256
        %v2258 = vld [vmem:[%s1334 + $0x744] sm:$0xff]
        %2259 = vst [vmem:[%s1335 + $0x734] sm:$0xff] %v2258
        %v2260 = vld [vmem:[%s1334 + $0x734] sm:$0xff]
        %2261 = vst [vmem:[%s1335 + $0x738] sm:$0xff] %v2260
        %v2262 = vld [vmem:[%s1334 + $0x748] sm:$0xff]
        %2263 = vst [vmem:[%s1335 + $0x73c] sm:$0xff] %v2262
        %v2264 = vld [vmem:[%s1334 + $0x738] sm:$0xff]
        %2265 = vst [vmem:[%s1335 + $0x740] sm:$0xff] %v2264
        %v2266 = vld [vmem:[%s1334 + $0x74c] sm:$0xff]
        %2267 = vst [vmem:[%s1335 + $0x744] sm:$0xff] %v2266
        %v2268 = vld [vmem:[%s1334 + $0x73c] sm:$0xff]
        %2269 = vst [vmem:[%s1335 + $0x748] sm:$0xff] %v2268
        %v2270 = vld [vmem:[%s1334 + $0x750] sm:$0xff]
        %2271 = vst [vmem:[%s1335 + $0x74c] sm:$0xff] %v2270
        %v2272 = vld [vmem:[%s1334 + $0x740] sm:$0xff]
        %2273 = vst [vmem:[%s1335 + $0x750] sm:$0xff] %v2272
        %v2274 = vld [vmem:[%s1334 + $0x754] sm:$0xff]
        %2275 = vst [vmem:[%s1335 + $0x754] sm:$0xff] %v2274
        %v2276 = vld [vmem:[%s1334 + $0x758] sm:$0xff]
        %2277 = vst [vmem:[%s1335 + $0x758] sm:$0xff] %v2276
        %v2278 = vld [vmem:[%s1334 + $0x76c] sm:$0xff]
        %2279 = vst [vmem:[%s1335 + $0x75c] sm:$0xff] %v2278
        %v2280 = vld [vmem:[%s1334 + $0x75c] sm:$0xff]
        %2281 = vst [vmem:[%s1335 + $0x760] sm:$0xff] %v2280
        %v2282 = vld [vmem:[%s1334 + $0x770] sm:$0xff]
        %2283 = vst [vmem:[%s1335 + $0x764] sm:$0xff] %v2282
        %v2284 = vld [vmem:[%s1334 + $0x760] sm:$0xff]
        %2285 = vst [vmem:[%s1335 + $0x768] sm:$0xff] %v2284
        %v2286 = vld [vmem:[%s1334 + $0x774] sm:$0xff]
        %2287 = vst [vmem:[%s1335 + $0x76c] sm:$0xff] %v2286
        %v2288 = vld [vmem:[%s1334 + $0x764] sm:$0xff]
        %2289 = vst [vmem:[%s1335 + $0x770] sm:$0xff] %v2288
        %v2290 = vld [vmem:[%s1334 + $0x778] sm:$0xff]
        %2291 = vst [vmem:[%s1335 + $0x774] sm:$0xff] %v2290
        %v2292 = vld [vmem:[%s1334 + $0x768] sm:$0xff]
        %2293 = vst [vmem:[%s1335 + $0x778] sm:$0xff] %v2292
        %v2294 = vld [vmem:[%s1334 + $0x77c] sm:$0xff]
        %2295 = vst [vmem:[%s1335 + $0x77c] sm:$0xff] %v2294
        %v2296 = vld [vmem:[%s1334 + $0x780] sm:$0xff]
        %2297 = vst [vmem:[%s1335 + $0x780] sm:$0xff] %v2296
        %v2298 = vld [vmem:[%s1334 + $0x794] sm:$0xff]
        %2299 = vst [vmem:[%s1335 + $0x784] sm:$0xff] %v2298
        %v2300 = vld [vmem:[%s1334 + $0x784] sm:$0xff]
        %2301 = vst [vmem:[%s1335 + $0x788] sm:$0xff] %v2300
        %v2302 = vld [vmem:[%s1334 + $0x798] sm:$0xff]
        %2303 = vst [vmem:[%s1335 + $0x78c] sm:$0xff] %v2302
        %v2304 = vld [vmem:[%s1334 + $0x788] sm:$0xff]
        %2305 = vst [vmem:[%s1335 + $0x790] sm:$0xff] %v2304
        %v2306 = vld [vmem:[%s1334 + $0x79c] sm:$0xff]
        %2307 = vst [vmem:[%s1335 + $0x794] sm:$0xff] %v2306
        %v2308 = vld [vmem:[%s1334 + $0x78c] sm:$0xff]
        %2309 = vst [vmem:[%s1335 + $0x798] sm:$0xff] %v2308
        %v2310 = vld [vmem:[%s1334 + $0x7a0] sm:$0xff]
        %2311 = vst [vmem:[%s1335 + $0x79c] sm:$0xff] %v2310
        %v2312 = vld [vmem:[%s1334 + $0x790] sm:$0xff]
        %2313 = vst [vmem:[%s1335 + $0x7a0] sm:$0xff] %v2312
        %v2314 = vld [vmem:[%s1334 + $0x7a4] sm:$0xff]
        %2315 = vst [vmem:[%s1335 + $0x7a4] sm:$0xff] %v2314
        %v2316 = vld [vmem:[%s1334 + $0x7a8] sm:$0xff]
        %2317 = vst [vmem:[%s1335 + $0x7a8] sm:$0xff] %v2316
        %v2318 = vld [vmem:[%s1334 + $0x7bc] sm:$0xff]
        %2319 = vst [vmem:[%s1335 + $0x7ac] sm:$0xff] %v2318
        %v2320 = vld [vmem:[%s1334 + $0x7ac] sm:$0xff]
        %2321 = vst [vmem:[%s1335 + $0x7b0] sm:$0xff] %v2320
        %v2322 = vld [vmem:[%s1334 + $0x7c0] sm:$0xff]
        %2323 = vst [vmem:[%s1335 + $0x7b4] sm:$0xff] %v2322
        %v2324 = vld [vmem:[%s1334 + $0x7b0] sm:$0xff]
        %2325 = vst [vmem:[%s1335 + $0x7b8] sm:$0xff] %v2324
        %v2326 = vld [vmem:[%s1334 + $0x7c4] sm:$0xff]
        %2327 = vst [vmem:[%s1335 + $0x7bc] sm:$0xff] %v2326
        %v2328 = vld [vmem:[%s1334 + $0x7b4] sm:$0xff]
        %2329 = vst [vmem:[%s1335 + $0x7c0] sm:$0xff] %v2328
        %v2330 = vld [vmem:[%s1334 + $0x7c8] sm:$0xff]
        %2331 = vst [vmem:[%s1335 + $0x7c4] sm:$0xff] %v2330
        %v2332 = vld [vmem:[%s1334 + $0x7b8] sm:$0xff]
        %2333 = vst [vmem:[%s1335 + $0x7c8] sm:$0xff] %v2332
        %v2334 = vld [vmem:[%s1334 + $0x7cc] sm:$0xff]
        %2335 = vst [vmem:[%s1335 + $0x7cc] sm:$0xff] %v2334
        %v2336 = vld [vmem:[%s1334 + $0x7d0] sm:$0xff]
        %2337 = vst [vmem:[%s1335 + $0x7d0] sm:$0xff] %v2336
        %v2338 = vld [vmem:[%s1334 + $0x7e4] sm:$0xff]
        %2339 = vst [vmem:[%s1335 + $0x7d4] sm:$0xff] %v2338
        %v2340 = vld [vmem:[%s1334 + $0x7d4] sm:$0xff]
        %2341 = vst [vmem:[%s1335 + $0x7d8] sm:$0xff] %v2340
        %v2342 = vld [vmem:[%s1334 + $0x7e8] sm:$0xff]
        %2343 = vst [vmem:[%s1335 + $0x7dc] sm:$0xff] %v2342
        %v2344 = vld [vmem:[%s1334 + $0x7d8] sm:$0xff]
        %2345 = vst [vmem:[%s1335 + $0x7e0] sm:$0xff] %v2344
        %v2346 = vld [vmem:[%s1334 + $0x7ec] sm:$0xff]
        %2347 = vst [vmem:[%s1335 + $0x7e4] sm:$0xff] %v2346
        %v2348 = vld [vmem:[%s1334 + $0x7dc] sm:$0xff]
        %2349 = vst [vmem:[%s1335 + $0x7e8] sm:$0xff] %v2348
        %v2350 = vld [vmem:[%s1334 + $0x7f0] sm:$0xff]
        %2351 = vst [vmem:[%s1335 + $0x7ec] sm:$0xff] %v2350
        %v2352 = vld [vmem:[%s1334 + $0x7e0] sm:$0xff]
        %2353 = vst [vmem:[%s1335 + $0x7f0] sm:$0xff] %v2352
        %v2354 = vld [vmem:[%s1334 + $0x7f4] sm:$0xff]
        %2355 = vst [vmem:[%s1335 + $0x7f4] sm:$0xff] %v2354
        %v2356 = vld [vmem:[%s1334 + $0x7f8] sm:$0xff]
        %2357 = vst [vmem:[%s1335 + $0x7f8] sm:$0xff] %v2356
        %v2358 = vld [vmem:[%s1334 + $0x80c] sm:$0xff]
        %2359 = vst [vmem:[%s1335 + $0x7fc] sm:$0xff] %v2358
        %v2360 = vld [vmem:[%s1334 + $0x7fc] sm:$0xff]
        %2361 = vst [vmem:[%s1335 + $0x800] sm:$0xff] %v2360
        %v2362 = vld [vmem:[%s1334 + $0x810] sm:$0xff]
        %2363 = vst [vmem:[%s1335 + $0x804] sm:$0xff] %v2362
        %v2364 = vld [vmem:[%s1334 + $0x800] sm:$0xff]
        %2365 = vst [vmem:[%s1335 + $0x808] sm:$0xff] %v2364
        %v2366 = vld [vmem:[%s1334 + $0x814] sm:$0xff]
        %2367 = vst [vmem:[%s1335 + $0x80c] sm:$0xff] %v2366
        %v2368 = vld [vmem:[%s1334 + $0x804] sm:$0xff]
        %2369 = vst [vmem:[%s1335 + $0x810] sm:$0xff] %v2368
        %v2370 = vld [vmem:[%s1334 + $0x818] sm:$0xff]
        %2371 = vst [vmem:[%s1335 + $0x814] sm:$0xff] %v2370
        %v2372 = vld [vmem:[%s1334 + $0x808] sm:$0xff]
        %2373 = vst [vmem:[%s1335 + $0x818] sm:$0xff] %v2372
        %v2374 = vld [vmem:[%s1334 + $0x81c] sm:$0xff]
        %2375 = vst [vmem:[%s1335 + $0x81c] sm:$0xff] %v2374
        %v2376 = vld [vmem:[%s1334 + $0x820] sm:$0xff]
        %2377 = vst [vmem:[%s1335 + $0x820] sm:$0xff] %v2376
        %v2378 = vld [vmem:[%s1334 + $0x834] sm:$0xff]
        %2379 = vst [vmem:[%s1335 + $0x824] sm:$0xff] %v2378
        %v2380 = vld [vmem:[%s1334 + $0x824] sm:$0xff]
        %2381 = vst [vmem:[%s1335 + $0x828] sm:$0xff] %v2380
        %v2382 = vld [vmem:[%s1334 + $0x838] sm:$0xff]
        %2383 = vst [vmem:[%s1335 + $0x82c] sm:$0xff] %v2382
        %v2384 = vld [vmem:[%s1334 + $0x828] sm:$0xff]
        %2385 = vst [vmem:[%s1335 + $0x830] sm:$0xff] %v2384
        %v2386 = vld [vmem:[%s1334 + $0x83c] sm:$0xff]
        %2387 = vst [vmem:[%s1335 + $0x834] sm:$0xff] %v2386
        %v2388 = vld [vmem:[%s1334 + $0x82c] sm:$0xff]
        %2389 = vst [vmem:[%s1335 + $0x838] sm:$0xff] %v2388
        %v2390 = vld [vmem:[%s1334 + $0x840] sm:$0xff]
        %2391 = vst [vmem:[%s1335 + $0x83c] sm:$0xff] %v2390
        %v2392 = vld [vmem:[%s1334 + $0x830] sm:$0xff]
        %2393 = vst [vmem:[%s1335 + $0x840] sm:$0xff] %v2392
        %v2394 = vld [vmem:[%s1334 + $0x844] sm:$0xff]
        %2395 = vst [vmem:[%s1335 + $0x844] sm:$0xff] %v2394
        %v2396 = vld [vmem:[%s1334 + $0x848] sm:$0xff]
        %2397 = vst [vmem:[%s1335 + $0x848] sm:$0xff] %v2396
        %v2398 = vld [vmem:[%s1334 + $0x85c] sm:$0xff]
        %2399 = vst [vmem:[%s1335 + $0x84c] sm:$0xff] %v2398
        %v2400 = vld [vmem:[%s1334 + $0x84c] sm:$0xff]
        %2401 = vst [vmem:[%s1335 + $0x850] sm:$0xff] %v2400
        %v2402 = vld [vmem:[%s1334 + $0x860] sm:$0xff]
        %2403 = vst [vmem:[%s1335 + $0x854] sm:$0xff] %v2402
        %v2404 = vld [vmem:[%s1334 + $0x850] sm:$0xff]
        %2405 = vst [vmem:[%s1335 + $0x858] sm:$0xff] %v2404
        %v2406 = vld [vmem:[%s1334 + $0x864] sm:$0xff]
        %2407 = vst [vmem:[%s1335 + $0x85c] sm:$0xff] %v2406
        %v2408 = vld [vmem:[%s1334 + $0x854] sm:$0xff]
        %2409 = vst [vmem:[%s1335 + $0x860] sm:$0xff] %v2408
        %v2410 = vld [vmem:[%s1334 + $0x868] sm:$0xff]
        %2411 = vst [vmem:[%s1335 + $0x864] sm:$0xff] %v2410
        %v2412 = vld [vmem:[%s1334 + $0x858] sm:$0xff]
        %2413 = vst [vmem:[%s1335 + $0x868] sm:$0xff] %v2412
        %v2414 = vld [vmem:[%s1334 + $0x86c] sm:$0xff]
        %2415 = vst [vmem:[%s1335 + $0x86c] sm:$0xff] %v2414
        %v2416 = vld [vmem:[%s1334 + $0x870] sm:$0xff]
        %2417 = vst [vmem:[%s1335 + $0x870] sm:$0xff] %v2416
        %v2418 = vld [vmem:[%s1334 + $0x884] sm:$0xff]
        %2419 = vst [vmem:[%s1335 + $0x874] sm:$0xff] %v2418
        %v2420 = vld [vmem:[%s1334 + $0x874] sm:$0xff]
        %2421 = vst [vmem:[%s1335 + $0x878] sm:$0xff] %v2420
        %v2422 = vld [vmem:[%s1334 + $0x888] sm:$0xff]
        %2423 = vst [vmem:[%s1335 + $0x87c] sm:$0xff] %v2422
        %v2424 = vld [vmem:[%s1334 + $0x878] sm:$0xff]
        %2425 = vst [vmem:[%s1335 + $0x880] sm:$0xff] %v2424
        %v2426 = vld [vmem:[%s1334 + $0x88c] sm:$0xff]
        %2427 = vst [vmem:[%s1335 + $0x884] sm:$0xff] %v2426
        %v2428 = vld [vmem:[%s1334 + $0x87c] sm:$0xff]
        %2429 = vst [vmem:[%s1335 + $0x888] sm:$0xff] %v2428
        %v2430 = vld [vmem:[%s1334 + $0x890] sm:$0xff]
        %2431 = vst [vmem:[%s1335 + $0x88c] sm:$0xff] %v2430
        %v2432 = vld [vmem:[%s1334 + $0x880] sm:$0xff]
        %2433 = vst [vmem:[%s1335 + $0x890] sm:$0xff] %v2432
        %v2434 = vld [vmem:[%s1334 + $0x894] sm:$0xff]
        %2435 = vst [vmem:[%s1335 + $0x894] sm:$0xff] %v2434
        %v2436 = vld [vmem:[%s1334 + $0x898] sm:$0xff]
        %2437 = vst [vmem:[%s1335 + $0x898] sm:$0xff] %v2436
        %v2438 = vld [vmem:[%s1334 + $0x8ac] sm:$0xff]
        %2439 = vst [vmem:[%s1335 + $0x89c] sm:$0xff] %v2438
        %v2440 = vld [vmem:[%s1334 + $0x89c] sm:$0xff]
        %2441 = vst [vmem:[%s1335 + $0x8a0] sm:$0xff] %v2440
        %v2442 = vld [vmem:[%s1334 + $0x8b0] sm:$0xff]
        %2443 = vst [vmem:[%s1335 + $0x8a4] sm:$0xff] %v2442
        %v2444 = vld [vmem:[%s1334 + $0x8a0] sm:$0xff]
        %2445 = vst [vmem:[%s1335 + $0x8a8] sm:$0xff] %v2444
        %v2446 = vld [vmem:[%s1334 + $0x8b4] sm:$0xff]
        %2447 = vst [vmem:[%s1335 + $0x8ac] sm:$0xff] %v2446
        %v2448 = vld [vmem:[%s1334 + $0x8a4] sm:$0xff]
        %2449 = vst [vmem:[%s1335 + $0x8b0] sm:$0xff] %v2448
        %v2450 = vld [vmem:[%s1334 + $0x8b8] sm:$0xff]
        %2451 = vst [vmem:[%s1335 + $0x8b4] sm:$0xff] %v2450
        %v2452 = vld [vmem:[%s1334 + $0x8a8] sm:$0xff]
        %2453 = vst [vmem:[%s1335 + $0x8b8] sm:$0xff] %v2452
        %v2454 = vld [vmem:[%s1334 + $0x8bc] sm:$0xff]
        %2455 = vst [vmem:[%s1335 + $0x8bc] sm:$0xff] %v2454
        %v2456 = vld [vmem:[%s1334 + $0x8c0] sm:$0xff]
        %2457 = vst [vmem:[%s1335 + $0x8c0] sm:$0xff] %v2456
        %v2458 = vld [vmem:[%s1334 + $0x8d4] sm:$0xff]
        %2459 = vst [vmem:[%s1335 + $0x8c4] sm:$0xff] %v2458
        %v2460 = vld [vmem:[%s1334 + $0x8c4] sm:$0xff]
        %2461 = vst [vmem:[%s1335 + $0x8c8] sm:$0xff] %v2460
        %v2462 = vld [vmem:[%s1334 + $0x8d8] sm:$0xff]
        %2463 = vst [vmem:[%s1335 + $0x8cc] sm:$0xff] %v2462
        %v2464 = vld [vmem:[%s1334 + $0x8c8] sm:$0xff]
        %2465 = vst [vmem:[%s1335 + $0x8d0] sm:$0xff] %v2464
        %v2466 = vld [vmem:[%s1334 + $0x8dc] sm:$0xff]
        %2467 = vst [vmem:[%s1335 + $0x8d4] sm:$0xff] %v2466
        %v2468 = vld [vmem:[%s1334 + $0x8cc] sm:$0xff]
        %2469 = vst [vmem:[%s1335 + $0x8d8] sm:$0xff] %v2468
        %v2470 = vld [vmem:[%s1334 + $0x8e0] sm:$0xff]
        %2471 = vst [vmem:[%s1335 + $0x8dc] sm:$0xff] %v2470
        %v2472 = vld [vmem:[%s1334 + $0x8d0] sm:$0xff]
        %2473 = vst [vmem:[%s1335 + $0x8e0] sm:$0xff] %v2472
        %v2474 = vld [vmem:[%s1334 + $0x8e4] sm:$0xff]
        %2475 = vst [vmem:[%s1335 + $0x8e4] sm:$0xff] %v2474
        %v2476 = vld [vmem:[%s1334 + $0x8e8] sm:$0xff]
        %2477 = vst [vmem:[%s1335 + $0x8e8] sm:$0xff] %v2476
        %v2478 = vld [vmem:[%s1334 + $0x8fc] sm:$0xff]
        %2479 = vst [vmem:[%s1335 + $0x8ec] sm:$0xff] %v2478
        %v2480 = vld [vmem:[%s1334 + $0x8ec] sm:$0xff]
        %2481 = vst [vmem:[%s1335 + $0x8f0] sm:$0xff] %v2480
        %v2482 = vld [vmem:[%s1334 + $0x900] sm:$0xff]
        %2483 = vst [vmem:[%s1335 + $0x8f4] sm:$0xff] %v2482
        %v2484 = vld [vmem:[%s1334 + $0x8f0] sm:$0xff]
        %2485 = vst [vmem:[%s1335 + $0x8f8] sm:$0xff] %v2484
        %v2486 = vld [vmem:[%s1334 + $0x904] sm:$0xff]
        %2487 = vst [vmem:[%s1335 + $0x8fc] sm:$0xff] %v2486
        %v2488 = vld [vmem:[%s1334 + $0x8f4] sm:$0xff]
        %2489 = vst [vmem:[%s1335 + $0x900] sm:$0xff] %v2488
        %v2490 = vld [vmem:[%s1334 + $0x908] sm:$0xff]
        %2491 = vst [vmem:[%s1335 + $0x904] sm:$0xff] %v2490
        %v2492 = vld [vmem:[%s1334 + $0x8f8] sm:$0xff]
        %2493 = vst [vmem:[%s1335 + $0x908] sm:$0xff] %v2492
        %v2494 = vld [vmem:[%s1334 + $0x90c] sm:$0xff]
        %2495 = vst [vmem:[%s1335 + $0x90c] sm:$0xff] %v2494
        %v2496 = vld [vmem:[%s1334 + $0x910] sm:$0xff]
        %2497 = vst [vmem:[%s1335 + $0x910] sm:$0xff] %v2496
        %v2498 = vld [vmem:[%s1334 + $0x924] sm:$0xff]
        %2499 = vst [vmem:[%s1335 + $0x914] sm:$0xff] %v2498
        %v2500 = vld [vmem:[%s1334 + $0x914] sm:$0xff]
        %2501 = vst [vmem:[%s1335 + $0x918] sm:$0xff] %v2500
        %v2502 = vld [vmem:[%s1334 + $0x928] sm:$0xff]
        %2503 = vst [vmem:[%s1335 + $0x91c] sm:$0xff] %v2502
        %v2504 = vld [vmem:[%s1334 + $0x918] sm:$0xff]
        %2505 = vst [vmem:[%s1335 + $0x920] sm:$0xff] %v2504
        %v2506 = vld [vmem:[%s1334 + $0x92c] sm:$0xff]
        %2507 = vst [vmem:[%s1335 + $0x924] sm:$0xff] %v2506
        %v2508 = vld [vmem:[%s1334 + $0x91c] sm:$0xff]
        %2509 = vst [vmem:[%s1335 + $0x928] sm:$0xff] %v2508
        %v2510 = vld [vmem:[%s1334 + $0x930] sm:$0xff]
        %2511 = vst [vmem:[%s1335 + $0x92c] sm:$0xff] %v2510
        %v2512 = vld [vmem:[%s1334 + $0x920] sm:$0xff]
        %2513 = vst [vmem:[%s1335 + $0x930] sm:$0xff] %v2512
        %v2514 = vld [vmem:[%s1334 + $0x934] sm:$0xff]
        %2515 = vst [vmem:[%s1335 + $0x934] sm:$0xff] %v2514
        %v2516 = vld [vmem:[%s1334 + $0x938] sm:$0xff]
        %2517 = vst [vmem:[%s1335 + $0x938] sm:$0xff] %v2516
        %v2518 = vld [vmem:[%s1334 + $0x94c] sm:$0xff]
        %2519 = vst [vmem:[%s1335 + $0x93c] sm:$0xff] %v2518
        %v2520 = vld [vmem:[%s1334 + $0x93c] sm:$0xff]
        %2521 = vst [vmem:[%s1335 + $0x940] sm:$0xff] %v2520
        %v2522 = vld [vmem:[%s1334 + $0x950] sm:$0xff]
        %2523 = vst [vmem:[%s1335 + $0x944] sm:$0xff] %v2522
        %v2524 = vld [vmem:[%s1334 + $0x940] sm:$0xff]
        %2525 = vst [vmem:[%s1335 + $0x948] sm:$0xff] %v2524
        %v2526 = vld [vmem:[%s1334 + $0x954] sm:$0xff]
        %2527 = vst [vmem:[%s1335 + $0x94c] sm:$0xff] %v2526
        %v2528 = vld [vmem:[%s1334 + $0x944] sm:$0xff]
        %2529 = vst [vmem:[%s1335 + $0x950] sm:$0xff] %v2528
        %v2530 = vld [vmem:[%s1334 + $0x958] sm:$0xff]
        %2531 = vst [vmem:[%s1335 + $0x954] sm:$0xff] %v2530
        %v2532 = vld [vmem:[%s1334 + $0x948] sm:$0xff]
        %2533 = vst [vmem:[%s1335 + $0x958] sm:$0xff] %v2532
        %v2534 = vld [vmem:[%s1334 + $0x95c] sm:$0xff]
        %2535 = vst [vmem:[%s1335 + $0x95c] sm:$0xff] %v2534
        %v2536 = vld [vmem:[%s1334 + $0x960] sm:$0xff]
        %2537 = vst [vmem:[%s1335 + $0x960] sm:$0xff] %v2536
        %v2538 = vld [vmem:[%s1334 + $0x974] sm:$0xff]
        %2539 = vst [vmem:[%s1335 + $0x964] sm:$0xff] %v2538
        %v2540 = vld [vmem:[%s1334 + $0x964] sm:$0xff]
        %2541 = vst [vmem:[%s1335 + $0x968] sm:$0xff] %v2540
        %v2542 = vld [vmem:[%s1334 + $0x978] sm:$0xff]
        %2543 = vst [vmem:[%s1335 + $0x96c] sm:$0xff] %v2542
        %v2544 = vld [vmem:[%s1334 + $0x968] sm:$0xff]
        %2545 = vst [vmem:[%s1335 + $0x970] sm:$0xff] %v2544
        %v2546 = vld [vmem:[%s1334 + $0x97c] sm:$0xff]
        %2547 = vst [vmem:[%s1335 + $0x974] sm:$0xff] %v2546
        %v2548 = vld [vmem:[%s1334 + $0x96c] sm:$0xff]
        %2549 = vst [vmem:[%s1335 + $0x978] sm:$0xff] %v2548
        %v2550 = vld [vmem:[%s1334 + $0x980] sm:$0xff]
        %2551 = vst [vmem:[%s1335 + $0x97c] sm:$0xff] %v2550
        %v2552 = vld [vmem:[%s1334 + $0x970] sm:$0xff]
        %2553 = vst [vmem:[%s1335 + $0x980] sm:$0xff] %v2552
        %v2554 = vld [vmem:[%s1334 + $0x984] sm:$0xff]
        %2555 = vst [vmem:[%s1335 + $0x984] sm:$0xff] %v2554
        %v2556 = vld [vmem:[%s1334 + $0x988] sm:$0xff]
        %2557 = vst [vmem:[%s1335 + $0x988] sm:$0xff] %v2556
        %v2558 = vld [vmem:[%s1334 + $0x99c] sm:$0xff]
        %2559 = vst [vmem:[%s1335 + $0x98c] sm:$0xff] %v2558
        %v2560 = vld [vmem:[%s1334 + $0x98c] sm:$0xff]
        %2561 = vst [vmem:[%s1335 + $0x990] sm:$0xff] %v2560
        %v2562 = vld [vmem:[%s1334 + $0x9a0] sm:$0xff]
        %2563 = vst [vmem:[%s1335 + $0x994] sm:$0xff] %v2562
        %v2564 = vld [vmem:[%s1334 + $0x990] sm:$0xff]
        %2565 = vst [vmem:[%s1335 + $0x998] sm:$0xff] %v2564
        %v2566 = vld [vmem:[%s1334 + $0x9a4] sm:$0xff]
        %2567 = vst [vmem:[%s1335 + $0x99c] sm:$0xff] %v2566
        %v2568 = vld [vmem:[%s1334 + $0x994] sm:$0xff]
        %2569 = vst [vmem:[%s1335 + $0x9a0] sm:$0xff] %v2568
        %v2570 = vld [vmem:[%s1334 + $0x9a8] sm:$0xff]
        %2571 = vst [vmem:[%s1335 + $0x9a4] sm:$0xff] %v2570
        %v2572 = vld [vmem:[%s1334 + $0x998] sm:$0xff]
        %2573 = vst [vmem:[%s1335 + $0x9a8] sm:$0xff] %v2572
        %v2574 = vld [vmem:[%s1334 + $0x9ac] sm:$0xff]
        %2575 = vst [vmem:[%s1335 + $0x9ac] sm:$0xff] %v2574
        %v2576 = vld [vmem:[%s1334 + $0x9b0] sm:$0xff]
        %2577 = vst [vmem:[%s1335 + $0x9b0] sm:$0xff] %v2576
        %v2578 = vld [vmem:[%s1334 + $0x9c4] sm:$0xff]
        %2579 = vst [vmem:[%s1335 + $0x9b4] sm:$0xff] %v2578
        %v2580 = vld [vmem:[%s1334 + $0x9b4] sm:$0xff]
        %2581 = vst [vmem:[%s1335 + $0x9b8] sm:$0xff] %v2580
        %v2582 = vld [vmem:[%s1334 + $0x9c8] sm:$0xff]
        %2583 = vst [vmem:[%s1335 + $0x9bc] sm:$0xff] %v2582
        %v2584 = vld [vmem:[%s1334 + $0x9b8] sm:$0xff]
        %2585 = vst [vmem:[%s1335 + $0x9c0] sm:$0xff] %v2584
        %v2586 = vld [vmem:[%s1334 + $0x9cc] sm:$0xff]
        %2587 = vst [vmem:[%s1335 + $0x9c4] sm:$0xff] %v2586
        %v2588 = vld [vmem:[%s1334 + $0x9bc] sm:$0xff]
        %2589 = vst [vmem:[%s1335 + $0x9c8] sm:$0xff] %v2588
        %v2590 = vld [vmem:[%s1334 + $0x9d0] sm:$0xff]
        %2591 = vst [vmem:[%s1335 + $0x9cc] sm:$0xff] %v2590
        %v2592 = vld [vmem:[%s1334 + $0x9c0] sm:$0xff]
        %2593 = vst [vmem:[%s1335 + $0x9d0] sm:$0xff] %v2592
        %v2594 = vld [vmem:[%s1334 + $0x9d4] sm:$0xff]
        %2595 = vst [vmem:[%s1335 + $0x9d4] sm:$0xff] %v2594
        %v2596 = vld [vmem:[%s1334 + $0x9d8] sm:$0xff]
        %2597 = vst [vmem:[%s1335 + $0x9d8] sm:$0xff] %v2596
        %v2598 = vld [vmem:[%s1334 + $0x9ec] sm:$0xff]
        %2599 = vst [vmem:[%s1335 + $0x9dc] sm:$0xff] %v2598
        %v2600 = vld [vmem:[%s1334 + $0x9dc] sm:$0xff]
        %2601 = vst [vmem:[%s1335 + $0x9e0] sm:$0xff] %v2600
        %v2602 = vld [vmem:[%s1334 + $0x9f0] sm:$0xff]
        %2603 = vst [vmem:[%s1335 + $0x9e4] sm:$0xff] %v2602
        %v2604 = vld [vmem:[%s1334 + $0x9e0] sm:$0xff]
        %2605 = vst [vmem:[%s1335 + $0x9e8] sm:$0xff] %v2604
        %v2606 = vld [vmem:[%s1334 + $0x9f4] sm:$0xff]
        %2607 = vst [vmem:[%s1335 + $0x9ec] sm:$0xff] %v2606
        %v2608 = vld [vmem:[%s1334 + $0x9e4] sm:$0xff]
        %2609 = vst [vmem:[%s1335 + $0x9f0] sm:$0xff] %v2608
        %v2610 = vld [vmem:[%s1334 + $0x9f8] sm:$0xff]
        %2611 = vst [vmem:[%s1335 + $0x9f4] sm:$0xff] %v2610
        %v2612 = vld [vmem:[%s1334 + $0x9e8] sm:$0xff]
        %2613 = vst [vmem:[%s1335 + $0x9f8] sm:$0xff] %v2612
        %v2614 = vld [vmem:[%s1334 + $0x9fc] sm:$0xff]
        %2615 = vst [vmem:[%s1335 + $0x9fc] sm:$0xff] %v2614
        %s2616 = sadd.s32 1, %s1333
        %p2617 = scmp.ge.s32.totalorder %s2616, %s1324
        %s2618 = scalar_select %p2617, 0, %s2616
        %s2619 = smul.u32 %s2618, 8
        %s2620 = smul.u32 %s2618, 8
        %s2621 = scalar_lea.vmem %s5, %s2619
        %s2622 = scalar_lea.vmem [#allocation3], %s2620
      $region45: #{cnn_1d_forward.1} parent=39 // loop_footer
        %s1330 = sadd.s32 %s1328, 1
      $region46: #{cnn_1d_forward.1} parent=39 // loop_footer_branch
        %1327 = sbr.rel target = $region42
      $region47: #{cnn_1d_forward.1} parent=39 // loop_exit
        _
    $region40: #{cnn_1d_forward.1} parent=24 // pred_fallthru
      _
    %p2623 = pneg %p1320
    // Predicated region
    $region48: #{cnn_1d_forward.1} parent=24 // pred_check
      _
    $region49: #{cnn_1d_forward.1} parent=24 // pred_check_branch
      %2625 = sbr.rel (%p1320) target = $region51
    $region50: #{cnn_1d_forward.1} parent=24 // pred_region
      %s2626 = sand.u32 4, 7
      %s2627 = ssub.s32 4, %s2626
      %s2628 = scalar_lea.vmem %s5, %s2627
      %s2629 = ssub.s32 4, %s2626
      %s2630 = scalar_lea.vmem [#allocation3], %s2629
      %s2631 = sshrl.u32 4, 3
      // While loop
      $region52: #{cnn_1d_forward.1} parent=50 // loop_pre_header
        _
      $region53: #{cnn_1d_forward.1} parent=50 // loop_header
        %s2635 = sphi 0, %s2637
        %p2636 = scmp.ge.s32.totalorder %s2635, %s2631
        %s2640 = sphi 0, %s3925
        %s2641 = sphi %s5, %s3928
        %s2642 = sphi [#allocation3], %s3929
      $region54: #{cnn_1d_forward.1} parent=50 // loop_header_branch
        %2639 = sbr.rel (%p2636) target = $region58
      $region55: #{cnn_1d_forward.1} parent=50 // loop_body
        %v2643 = vld [vmem:[%s2641] sm:$0xff]
        %2644 = vst [vmem:[%s2642] sm:$0xff] %v2643
        %v2645 = vld [vmem:[%s2641 + $0x14] sm:$0xff]
        %2646 = vst [vmem:[%s2642 + $0x4] sm:$0xff] %v2645
        %v2647 = vld [vmem:[%s2641 + $0x4] sm:$0xff]
        %2648 = vst [vmem:[%s2642 + $0x8] sm:$0xff] %v2647
        %v2649 = vld [vmem:[%s2641 + $0x18] sm:$0xff]
        %2650 = vst [vmem:[%s2642 + $0xc] sm:$0xff] %v2649
        %v2651 = vld [vmem:[%s2641 + $0x8] sm:$0xff]
        %2652 = vst [vmem:[%s2642 + $0x10] sm:$0xff] %v2651
        %v2653 = vld [vmem:[%s2641 + $0x1c] sm:$0xff]
        %2654 = vst [vmem:[%s2642 + $0x14] sm:$0xff] %v2653
        %v2655 = vld [vmem:[%s2641 + $0xc] sm:$0xff]
        %2656 = vst [vmem:[%s2642 + $0x18] sm:$0xff] %v2655
        %v2657 = vld [vmem:[%s2641 + $0x20] sm:$0xff]
        %2658 = vst [vmem:[%s2642 + $0x1c] sm:$0xff] %v2657
        %v2659 = vld [vmem:[%s2641 + $0x10] sm:$0xff]
        %2660 = vst [vmem:[%s2642 + $0x20] sm:$0xff] %v2659
        %v2661 = vld [vmem:[%s2641 + $0x24] sm:$0xff]
        %2662 = vst [vmem:[%s2642 + $0x24] sm:$0xff] %v2661
        %v2663 = vld [vmem:[%s2641 + $0x28] sm:$0xff]
        %2664 = vst [vmem:[%s2642 + $0x28] sm:$0xff] %v2663
        %v2665 = vld [vmem:[%s2641 + $0x3c] sm:$0xff]
        %2666 = vst [vmem:[%s2642 + $0x2c] sm:$0xff] %v2665
        %v2667 = vld [vmem:[%s2641 + $0x2c] sm:$0xff]
        %2668 = vst [vmem:[%s2642 + $0x30] sm:$0xff] %v2667
        %v2669 = vld [vmem:[%s2641 + $0x40] sm:$0xff]
        %2670 = vst [vmem:[%s2642 + $0x34] sm:$0xff] %v2669
        %v2671 = vld [vmem:[%s2641 + $0x30] sm:$0xff]
        %2672 = vst [vmem:[%s2642 + $0x38] sm:$0xff] %v2671
        %v2673 = vld [vmem:[%s2641 + $0x44] sm:$0xff]
        %2674 = vst [vmem:[%s2642 + $0x3c] sm:$0xff] %v2673
        %v2675 = vld [vmem:[%s2641 + $0x34] sm:$0xff]
        %2676 = vst [vmem:[%s2642 + $0x40] sm:$0xff] %v2675
        %v2677 = vld [vmem:[%s2641 + $0x48] sm:$0xff]
        %2678 = vst [vmem:[%s2642 + $0x44] sm:$0xff] %v2677
        %v2679 = vld [vmem:[%s2641 + $0x38] sm:$0xff]
        %2680 = vst [vmem:[%s2642 + $0x48] sm:$0xff] %v2679
        %v2681 = vld [vmem:[%s2641 + $0x4c] sm:$0xff]
        %2682 = vst [vmem:[%s2642 + $0x4c] sm:$0xff] %v2681
        %v2683 = vld [vmem:[%s2641 + $0x50] sm:$0xff]
        %2684 = vst [vmem:[%s2642 + $0x50] sm:$0xff] %v2683
        %v2685 = vld [vmem:[%s2641 + $0x64] sm:$0xff]
        %2686 = vst [vmem:[%s2642 + $0x54] sm:$0xff] %v2685
        %v2687 = vld [vmem:[%s2641 + $0x54] sm:$0xff]
        %2688 = vst [vmem:[%s2642 + $0x58] sm:$0xff] %v2687
        %v2689 = vld [vmem:[%s2641 + $0x68] sm:$0xff]
        %2690 = vst [vmem:[%s2642 + $0x5c] sm:$0xff] %v2689
        %v2691 = vld [vmem:[%s2641 + $0x58] sm:$0xff]
        %2692 = vst [vmem:[%s2642 + $0x60] sm:$0xff] %v2691
        %v2693 = vld [vmem:[%s2641 + $0x6c] sm:$0xff]
        %2694 = vst [vmem:[%s2642 + $0x64] sm:$0xff] %v2693
        %v2695 = vld [vmem:[%s2641 + $0x5c] sm:$0xff]
        %2696 = vst [vmem:[%s2642 + $0x68] sm:$0xff] %v2695
        %v2697 = vld [vmem:[%s2641 + $0x70] sm:$0xff]
        %2698 = vst [vmem:[%s2642 + $0x6c] sm:$0xff] %v2697
        %v2699 = vld [vmem:[%s2641 + $0x60] sm:$0xff]
        %2700 = vst [vmem:[%s2642 + $0x70] sm:$0xff] %v2699
        %v2701 = vld [vmem:[%s2641 + $0x74] sm:$0xff]
        %2702 = vst [vmem:[%s2642 + $0x74] sm:$0xff] %v2701
        %v2703 = vld [vmem:[%s2641 + $0x78] sm:$0xff]
        %2704 = vst [vmem:[%s2642 + $0x78] sm:$0xff] %v2703
        %v2705 = vld [vmem:[%s2641 + $0x8c] sm:$0xff]
        %2706 = vst [vmem:[%s2642 + $0x7c] sm:$0xff] %v2705
        %v2707 = vld [vmem:[%s2641 + $0x7c] sm:$0xff]
        %2708 = vst [vmem:[%s2642 + $0x80] sm:$0xff] %v2707
        %v2709 = vld [vmem:[%s2641 + $0x90] sm:$0xff]
        %2710 = vst [vmem:[%s2642 + $0x84] sm:$0xff] %v2709
        %v2711 = vld [vmem:[%s2641 + $0x80] sm:$0xff]
        %2712 = vst [vmem:[%s2642 + $0x88] sm:$0xff] %v2711
        %v2713 = vld [vmem:[%s2641 + $0x94] sm:$0xff]
        %2714 = vst [vmem:[%s2642 + $0x8c] sm:$0xff] %v2713
        %v2715 = vld [vmem:[%s2641 + $0x84] sm:$0xff]
        %2716 = vst [vmem:[%s2642 + $0x90] sm:$0xff] %v2715
        %v2717 = vld [vmem:[%s2641 + $0x98] sm:$0xff]
        %2718 = vst [vmem:[%s2642 + $0x94] sm:$0xff] %v2717
        %v2719 = vld [vmem:[%s2641 + $0x88] sm:$0xff]
        %2720 = vst [vmem:[%s2642 + $0x98] sm:$0xff] %v2719
        %v2721 = vld [vmem:[%s2641 + $0x9c] sm:$0xff]
        %2722 = vst [vmem:[%s2642 + $0x9c] sm:$0xff] %v2721
        %v2723 = vld [vmem:[%s2641 + $0xa0] sm:$0xff]
        %2724 = vst [vmem:[%s2642 + $0xa0] sm:$0xff] %v2723
        %v2725 = vld [vmem:[%s2641 + $0xb4] sm:$0xff]
        %2726 = vst [vmem:[%s2642 + $0xa4] sm:$0xff] %v2725
        %v2727 = vld [vmem:[%s2641 + $0xa4] sm:$0xff]
        %2728 = vst [vmem:[%s2642 + $0xa8] sm:$0xff] %v2727
        %v2729 = vld [vmem:[%s2641 + $0xb8] sm:$0xff]
        %2730 = vst [vmem:[%s2642 + $0xac] sm:$0xff] %v2729
        %v2731 = vld [vmem:[%s2641 + $0xa8] sm:$0xff]
        %2732 = vst [vmem:[%s2642 + $0xb0] sm:$0xff] %v2731
        %v2733 = vld [vmem:[%s2641 + $0xbc] sm:$0xff]
        %2734 = vst [vmem:[%s2642 + $0xb4] sm:$0xff] %v2733
        %v2735 = vld [vmem:[%s2641 + $0xac] sm:$0xff]
        %2736 = vst [vmem:[%s2642 + $0xb8] sm:$0xff] %v2735
        %v2737 = vld [vmem:[%s2641 + $0xc0] sm:$0xff]
        %2738 = vst [vmem:[%s2642 + $0xbc] sm:$0xff] %v2737
        %v2739 = vld [vmem:[%s2641 + $0xb0] sm:$0xff]
        %2740 = vst [vmem:[%s2642 + $0xc0] sm:$0xff] %v2739
        %v2741 = vld [vmem:[%s2641 + $0xc4] sm:$0xff]
        %2742 = vst [vmem:[%s2642 + $0xc4] sm:$0xff] %v2741
        %v2743 = vld [vmem:[%s2641 + $0xc8] sm:$0xff]
        %2744 = vst [vmem:[%s2642 + $0xc8] sm:$0xff] %v2743
        %v2745 = vld [vmem:[%s2641 + $0xdc] sm:$0xff]
        %2746 = vst [vmem:[%s2642 + $0xcc] sm:$0xff] %v2745
        %v2747 = vld [vmem:[%s2641 + $0xcc] sm:$0xff]
        %2748 = vst [vmem:[%s2642 + $0xd0] sm:$0xff] %v2747
        %v2749 = vld [vmem:[%s2641 + $0xe0] sm:$0xff]
        %2750 = vst [vmem:[%s2642 + $0xd4] sm:$0xff] %v2749
        %v2751 = vld [vmem:[%s2641 + $0xd0] sm:$0xff]
        %2752 = vst [vmem:[%s2642 + $0xd8] sm:$0xff] %v2751
        %v2753 = vld [vmem:[%s2641 + $0xe4] sm:$0xff]
        %2754 = vst [vmem:[%s2642 + $0xdc] sm:$0xff] %v2753
        %v2755 = vld [vmem:[%s2641 + $0xd4] sm:$0xff]
        %2756 = vst [vmem:[%s2642 + $0xe0] sm:$0xff] %v2755
        %v2757 = vld [vmem:[%s2641 + $0xe8] sm:$0xff]
        %2758 = vst [vmem:[%s2642 + $0xe4] sm:$0xff] %v2757
        %v2759 = vld [vmem:[%s2641 + $0xd8] sm:$0xff]
        %2760 = vst [vmem:[%s2642 + $0xe8] sm:$0xff] %v2759
        %v2761 = vld [vmem:[%s2641 + $0xec] sm:$0xff]
        %2762 = vst [vmem:[%s2642 + $0xec] sm:$0xff] %v2761
        %v2763 = vld [vmem:[%s2641 + $0xf0] sm:$0xff]
        %2764 = vst [vmem:[%s2642 + $0xf0] sm:$0xff] %v2763
        %v2765 = vld [vmem:[%s2641 + $0x104] sm:$0xff]
        %2766 = vst [vmem:[%s2642 + $0xf4] sm:$0xff] %v2765
        %v2767 = vld [vmem:[%s2641 + $0xf4] sm:$0xff]
        %2768 = vst [vmem:[%s2642 + $0xf8] sm:$0xff] %v2767
        %v2769 = vld [vmem:[%s2641 + $0x108] sm:$0xff]
        %2770 = vst [vmem:[%s2642 + $0xfc] sm:$0xff] %v2769
        %v2771 = vld [vmem:[%s2641 + $0xf8] sm:$0xff]
        %2772 = vst [vmem:[%s2642 + $0x100] sm:$0xff] %v2771
        %v2773 = vld [vmem:[%s2641 + $0x10c] sm:$0xff]
        %2774 = vst [vmem:[%s2642 + $0x104] sm:$0xff] %v2773
        %v2775 = vld [vmem:[%s2641 + $0xfc] sm:$0xff]
        %2776 = vst [vmem:[%s2642 + $0x108] sm:$0xff] %v2775
        %v2777 = vld [vmem:[%s2641 + $0x110] sm:$0xff]
        %2778 = vst [vmem:[%s2642 + $0x10c] sm:$0xff] %v2777
        %v2779 = vld [vmem:[%s2641 + $0x100] sm:$0xff]
        %2780 = vst [vmem:[%s2642 + $0x110] sm:$0xff] %v2779
        %v2781 = vld [vmem:[%s2641 + $0x114] sm:$0xff]
        %2782 = vst [vmem:[%s2642 + $0x114] sm:$0xff] %v2781
        %v2783 = vld [vmem:[%s2641 + $0x118] sm:$0xff]
        %2784 = vst [vmem:[%s2642 + $0x118] sm:$0xff] %v2783
        %v2785 = vld [vmem:[%s2641 + $0x12c] sm:$0xff]
        %2786 = vst [vmem:[%s2642 + $0x11c] sm:$0xff] %v2785
        %v2787 = vld [vmem:[%s2641 + $0x11c] sm:$0xff]
        %2788 = vst [vmem:[%s2642 + $0x120] sm:$0xff] %v2787
        %v2789 = vld [vmem:[%s2641 + $0x130] sm:$0xff]
        %2790 = vst [vmem:[%s2642 + $0x124] sm:$0xff] %v2789
        %v2791 = vld [vmem:[%s2641 + $0x120] sm:$0xff]
        %2792 = vst [vmem:[%s2642 + $0x128] sm:$0xff] %v2791
        %v2793 = vld [vmem:[%s2641 + $0x134] sm:$0xff]
        %2794 = vst [vmem:[%s2642 + $0x12c] sm:$0xff] %v2793
        %v2795 = vld [vmem:[%s2641 + $0x124] sm:$0xff]
        %2796 = vst [vmem:[%s2642 + $0x130] sm:$0xff] %v2795
        %v2797 = vld [vmem:[%s2641 + $0x138] sm:$0xff]
        %2798 = vst [vmem:[%s2642 + $0x134] sm:$0xff] %v2797
        %v2799 = vld [vmem:[%s2641 + $0x128] sm:$0xff]
        %2800 = vst [vmem:[%s2642 + $0x138] sm:$0xff] %v2799
        %v2801 = vld [vmem:[%s2641 + $0x13c] sm:$0xff]
        %2802 = vst [vmem:[%s2642 + $0x13c] sm:$0xff] %v2801
        %v2803 = vld [vmem:[%s2641 + $0x140] sm:$0xff]
        %2804 = vst [vmem:[%s2642 + $0x140] sm:$0xff] %v2803
        %v2805 = vld [vmem:[%s2641 + $0x154] sm:$0xff]
        %2806 = vst [vmem:[%s2642 + $0x144] sm:$0xff] %v2805
        %v2807 = vld [vmem:[%s2641 + $0x144] sm:$0xff]
        %2808 = vst [vmem:[%s2642 + $0x148] sm:$0xff] %v2807
        %v2809 = vld [vmem:[%s2641 + $0x158] sm:$0xff]
        %2810 = vst [vmem:[%s2642 + $0x14c] sm:$0xff] %v2809
        %v2811 = vld [vmem:[%s2641 + $0x148] sm:$0xff]
        %2812 = vst [vmem:[%s2642 + $0x150] sm:$0xff] %v2811
        %v2813 = vld [vmem:[%s2641 + $0x15c] sm:$0xff]
        %2814 = vst [vmem:[%s2642 + $0x154] sm:$0xff] %v2813
        %v2815 = vld [vmem:[%s2641 + $0x14c] sm:$0xff]
        %2816 = vst [vmem:[%s2642 + $0x158] sm:$0xff] %v2815
        %v2817 = vld [vmem:[%s2641 + $0x160] sm:$0xff]
        %2818 = vst [vmem:[%s2642 + $0x15c] sm:$0xff] %v2817
        %v2819 = vld [vmem:[%s2641 + $0x150] sm:$0xff]
        %2820 = vst [vmem:[%s2642 + $0x160] sm:$0xff] %v2819
        %v2821 = vld [vmem:[%s2641 + $0x164] sm:$0xff]
        %2822 = vst [vmem:[%s2642 + $0x164] sm:$0xff] %v2821
        %v2823 = vld [vmem:[%s2641 + $0x168] sm:$0xff]
        %2824 = vst [vmem:[%s2642 + $0x168] sm:$0xff] %v2823
        %v2825 = vld [vmem:[%s2641 + $0x17c] sm:$0xff]
        %2826 = vst [vmem:[%s2642 + $0x16c] sm:$0xff] %v2825
        %v2827 = vld [vmem:[%s2641 + $0x16c] sm:$0xff]
        %2828 = vst [vmem:[%s2642 + $0x170] sm:$0xff] %v2827
        %v2829 = vld [vmem:[%s2641 + $0x180] sm:$0xff]
        %2830 = vst [vmem:[%s2642 + $0x174] sm:$0xff] %v2829
        %v2831 = vld [vmem:[%s2641 + $0x170] sm:$0xff]
        %2832 = vst [vmem:[%s2642 + $0x178] sm:$0xff] %v2831
        %v2833 = vld [vmem:[%s2641 + $0x184] sm:$0xff]
        %2834 = vst [vmem:[%s2642 + $0x17c] sm:$0xff] %v2833
        %v2835 = vld [vmem:[%s2641 + $0x174] sm:$0xff]
        %2836 = vst [vmem:[%s2642 + $0x180] sm:$0xff] %v2835
        %v2837 = vld [vmem:[%s2641 + $0x188] sm:$0xff]
        %2838 = vst [vmem:[%s2642 + $0x184] sm:$0xff] %v2837
        %v2839 = vld [vmem:[%s2641 + $0x178] sm:$0xff]
        %2840 = vst [vmem:[%s2642 + $0x188] sm:$0xff] %v2839
        %v2841 = vld [vmem:[%s2641 + $0x18c] sm:$0xff]
        %2842 = vst [vmem:[%s2642 + $0x18c] sm:$0xff] %v2841
        %v2843 = vld [vmem:[%s2641 + $0x190] sm:$0xff]
        %2844 = vst [vmem:[%s2642 + $0x190] sm:$0xff] %v2843
        %v2845 = vld [vmem:[%s2641 + $0x1a4] sm:$0xff]
        %2846 = vst [vmem:[%s2642 + $0x194] sm:$0xff] %v2845
        %v2847 = vld [vmem:[%s2641 + $0x194] sm:$0xff]
        %2848 = vst [vmem:[%s2642 + $0x198] sm:$0xff] %v2847
        %v2849 = vld [vmem:[%s2641 + $0x1a8] sm:$0xff]
        %2850 = vst [vmem:[%s2642 + $0x19c] sm:$0xff] %v2849
        %v2851 = vld [vmem:[%s2641 + $0x198] sm:$0xff]
        %2852 = vst [vmem:[%s2642 + $0x1a0] sm:$0xff] %v2851
        %v2853 = vld [vmem:[%s2641 + $0x1ac] sm:$0xff]
        %2854 = vst [vmem:[%s2642 + $0x1a4] sm:$0xff] %v2853
        %v2855 = vld [vmem:[%s2641 + $0x19c] sm:$0xff]
        %2856 = vst [vmem:[%s2642 + $0x1a8] sm:$0xff] %v2855
        %v2857 = vld [vmem:[%s2641 + $0x1b0] sm:$0xff]
        %2858 = vst [vmem:[%s2642 + $0x1ac] sm:$0xff] %v2857
        %v2859 = vld [vmem:[%s2641 + $0x1a0] sm:$0xff]
        %2860 = vst [vmem:[%s2642 + $0x1b0] sm:$0xff] %v2859
        %v2861 = vld [vmem:[%s2641 + $0x1b4] sm:$0xff]
        %2862 = vst [vmem:[%s2642 + $0x1b4] sm:$0xff] %v2861
        %v2863 = vld [vmem:[%s2641 + $0x1b8] sm:$0xff]
        %2864 = vst [vmem:[%s2642 + $0x1b8] sm:$0xff] %v2863
        %v2865 = vld [vmem:[%s2641 + $0x1cc] sm:$0xff]
        %2866 = vst [vmem:[%s2642 + $0x1bc] sm:$0xff] %v2865
        %v2867 = vld [vmem:[%s2641 + $0x1bc] sm:$0xff]
        %2868 = vst [vmem:[%s2642 + $0x1c0] sm:$0xff] %v2867
        %v2869 = vld [vmem:[%s2641 + $0x1d0] sm:$0xff]
        %2870 = vst [vmem:[%s2642 + $0x1c4] sm:$0xff] %v2869
        %v2871 = vld [vmem:[%s2641 + $0x1c0] sm:$0xff]
        %2872 = vst [vmem:[%s2642 + $0x1c8] sm:$0xff] %v2871
        %v2873 = vld [vmem:[%s2641 + $0x1d4] sm:$0xff]
        %2874 = vst [vmem:[%s2642 + $0x1cc] sm:$0xff] %v2873
        %v2875 = vld [vmem:[%s2641 + $0x1c4] sm:$0xff]
        %2876 = vst [vmem:[%s2642 + $0x1d0] sm:$0xff] %v2875
        %v2877 = vld [vmem:[%s2641 + $0x1d8] sm:$0xff]
        %2878 = vst [vmem:[%s2642 + $0x1d4] sm:$0xff] %v2877
        %v2879 = vld [vmem:[%s2641 + $0x1c8] sm:$0xff]
        %2880 = vst [vmem:[%s2642 + $0x1d8] sm:$0xff] %v2879
        %v2881 = vld [vmem:[%s2641 + $0x1dc] sm:$0xff]
        %2882 = vst [vmem:[%s2642 + $0x1dc] sm:$0xff] %v2881
        %v2883 = vld [vmem:[%s2641 + $0x1e0] sm:$0xff]
        %2884 = vst [vmem:[%s2642 + $0x1e0] sm:$0xff] %v2883
        %v2885 = vld [vmem:[%s2641 + $0x1f4] sm:$0xff]
        %2886 = vst [vmem:[%s2642 + $0x1e4] sm:$0xff] %v2885
        %v2887 = vld [vmem:[%s2641 + $0x1e4] sm:$0xff]
        %2888 = vst [vmem:[%s2642 + $0x1e8] sm:$0xff] %v2887
        %v2889 = vld [vmem:[%s2641 + $0x1f8] sm:$0xff]
        %2890 = vst [vmem:[%s2642 + $0x1ec] sm:$0xff] %v2889
        %v2891 = vld [vmem:[%s2641 + $0x1e8] sm:$0xff]
        %2892 = vst [vmem:[%s2642 + $0x1f0] sm:$0xff] %v2891
        %v2893 = vld [vmem:[%s2641 + $0x1fc] sm:$0xff]
        %2894 = vst [vmem:[%s2642 + $0x1f4] sm:$0xff] %v2893
        %v2895 = vld [vmem:[%s2641 + $0x1ec] sm:$0xff]
        %2896 = vst [vmem:[%s2642 + $0x1f8] sm:$0xff] %v2895
        %v2897 = vld [vmem:[%s2641 + $0x200] sm:$0xff]
        %2898 = vst [vmem:[%s2642 + $0x1fc] sm:$0xff] %v2897
        %v2899 = vld [vmem:[%s2641 + $0x1f0] sm:$0xff]
        %2900 = vst [vmem:[%s2642 + $0x200] sm:$0xff] %v2899
        %v2901 = vld [vmem:[%s2641 + $0x204] sm:$0xff]
        %2902 = vst [vmem:[%s2642 + $0x204] sm:$0xff] %v2901
        %v2903 = vld [vmem:[%s2641 + $0x208] sm:$0xff]
        %2904 = vst [vmem:[%s2642 + $0x208] sm:$0xff] %v2903
        %v2905 = vld [vmem:[%s2641 + $0x21c] sm:$0xff]
        %2906 = vst [vmem:[%s2642 + $0x20c] sm:$0xff] %v2905
        %v2907 = vld [vmem:[%s2641 + $0x20c] sm:$0xff]
        %2908 = vst [vmem:[%s2642 + $0x210] sm:$0xff] %v2907
        %v2909 = vld [vmem:[%s2641 + $0x220] sm:$0xff]
        %2910 = vst [vmem:[%s2642 + $0x214] sm:$0xff] %v2909
        %v2911 = vld [vmem:[%s2641 + $0x210] sm:$0xff]
        %2912 = vst [vmem:[%s2642 + $0x218] sm:$0xff] %v2911
        %v2913 = vld [vmem:[%s2641 + $0x224] sm:$0xff]
        %2914 = vst [vmem:[%s2642 + $0x21c] sm:$0xff] %v2913
        %v2915 = vld [vmem:[%s2641 + $0x214] sm:$0xff]
        %2916 = vst [vmem:[%s2642 + $0x220] sm:$0xff] %v2915
        %v2917 = vld [vmem:[%s2641 + $0x228] sm:$0xff]
        %2918 = vst [vmem:[%s2642 + $0x224] sm:$0xff] %v2917
        %v2919 = vld [vmem:[%s2641 + $0x218] sm:$0xff]
        %2920 = vst [vmem:[%s2642 + $0x228] sm:$0xff] %v2919
        %v2921 = vld [vmem:[%s2641 + $0x22c] sm:$0xff]
        %2922 = vst [vmem:[%s2642 + $0x22c] sm:$0xff] %v2921
        %v2923 = vld [vmem:[%s2641 + $0x230] sm:$0xff]
        %2924 = vst [vmem:[%s2642 + $0x230] sm:$0xff] %v2923
        %v2925 = vld [vmem:[%s2641 + $0x244] sm:$0xff]
        %2926 = vst [vmem:[%s2642 + $0x234] sm:$0xff] %v2925
        %v2927 = vld [vmem:[%s2641 + $0x234] sm:$0xff]
        %2928 = vst [vmem:[%s2642 + $0x238] sm:$0xff] %v2927
        %v2929 = vld [vmem:[%s2641 + $0x248] sm:$0xff]
        %2930 = vst [vmem:[%s2642 + $0x23c] sm:$0xff] %v2929
        %v2931 = vld [vmem:[%s2641 + $0x238] sm:$0xff]
        %2932 = vst [vmem:[%s2642 + $0x240] sm:$0xff] %v2931
        %v2933 = vld [vmem:[%s2641 + $0x24c] sm:$0xff]
        %2934 = vst [vmem:[%s2642 + $0x244] sm:$0xff] %v2933
        %v2935 = vld [vmem:[%s2641 + $0x23c] sm:$0xff]
        %2936 = vst [vmem:[%s2642 + $0x248] sm:$0xff] %v2935
        %v2937 = vld [vmem:[%s2641 + $0x250] sm:$0xff]
        %2938 = vst [vmem:[%s2642 + $0x24c] sm:$0xff] %v2937
        %v2939 = vld [vmem:[%s2641 + $0x240] sm:$0xff]
        %2940 = vst [vmem:[%s2642 + $0x250] sm:$0xff] %v2939
        %v2941 = vld [vmem:[%s2641 + $0x254] sm:$0xff]
        %2942 = vst [vmem:[%s2642 + $0x254] sm:$0xff] %v2941
        %v2943 = vld [vmem:[%s2641 + $0x258] sm:$0xff]
        %2944 = vst [vmem:[%s2642 + $0x258] sm:$0xff] %v2943
        %v2945 = vld [vmem:[%s2641 + $0x26c] sm:$0xff]
        %2946 = vst [vmem:[%s2642 + $0x25c] sm:$0xff] %v2945
        %v2947 = vld [vmem:[%s2641 + $0x25c] sm:$0xff]
        %2948 = vst [vmem:[%s2642 + $0x260] sm:$0xff] %v2947
        %v2949 = vld [vmem:[%s2641 + $0x270] sm:$0xff]
        %2950 = vst [vmem:[%s2642 + $0x264] sm:$0xff] %v2949
        %v2951 = vld [vmem:[%s2641 + $0x260] sm:$0xff]
        %2952 = vst [vmem:[%s2642 + $0x268] sm:$0xff] %v2951
        %v2953 = vld [vmem:[%s2641 + $0x274] sm:$0xff]
        %2954 = vst [vmem:[%s2642 + $0x26c] sm:$0xff] %v2953
        %v2955 = vld [vmem:[%s2641 + $0x264] sm:$0xff]
        %2956 = vst [vmem:[%s2642 + $0x270] sm:$0xff] %v2955
        %v2957 = vld [vmem:[%s2641 + $0x278] sm:$0xff]
        %2958 = vst [vmem:[%s2642 + $0x274] sm:$0xff] %v2957
        %v2959 = vld [vmem:[%s2641 + $0x268] sm:$0xff]
        %2960 = vst [vmem:[%s2642 + $0x278] sm:$0xff] %v2959
        %v2961 = vld [vmem:[%s2641 + $0x27c] sm:$0xff]
        %2962 = vst [vmem:[%s2642 + $0x27c] sm:$0xff] %v2961
        %v2963 = vld [vmem:[%s2641 + $0x280] sm:$0xff]
        %2964 = vst [vmem:[%s2642 + $0x280] sm:$0xff] %v2963
        %v2965 = vld [vmem:[%s2641 + $0x294] sm:$0xff]
        %2966 = vst [vmem:[%s2642 + $0x284] sm:$0xff] %v2965
        %v2967 = vld [vmem:[%s2641 + $0x284] sm:$0xff]
        %2968 = vst [vmem:[%s2642 + $0x288] sm:$0xff] %v2967
        %v2969 = vld [vmem:[%s2641 + $0x298] sm:$0xff]
        %2970 = vst [vmem:[%s2642 + $0x28c] sm:$0xff] %v2969
        %v2971 = vld [vmem:[%s2641 + $0x288] sm:$0xff]
        %2972 = vst [vmem:[%s2642 + $0x290] sm:$0xff] %v2971
        %v2973 = vld [vmem:[%s2641 + $0x29c] sm:$0xff]
        %2974 = vst [vmem:[%s2642 + $0x294] sm:$0xff] %v2973
        %v2975 = vld [vmem:[%s2641 + $0x28c] sm:$0xff]
        %2976 = vst [vmem:[%s2642 + $0x298] sm:$0xff] %v2975
        %v2977 = vld [vmem:[%s2641 + $0x2a0] sm:$0xff]
        %2978 = vst [vmem:[%s2642 + $0x29c] sm:$0xff] %v2977
        %v2979 = vld [vmem:[%s2641 + $0x290] sm:$0xff]
        %2980 = vst [vmem:[%s2642 + $0x2a0] sm:$0xff] %v2979
        %v2981 = vld [vmem:[%s2641 + $0x2a4] sm:$0xff]
        %2982 = vst [vmem:[%s2642 + $0x2a4] sm:$0xff] %v2981
        %v2983 = vld [vmem:[%s2641 + $0x2a8] sm:$0xff]
        %2984 = vst [vmem:[%s2642 + $0x2a8] sm:$0xff] %v2983
        %v2985 = vld [vmem:[%s2641 + $0x2bc] sm:$0xff]
        %2986 = vst [vmem:[%s2642 + $0x2ac] sm:$0xff] %v2985
        %v2987 = vld [vmem:[%s2641 + $0x2ac] sm:$0xff]
        %2988 = vst [vmem:[%s2642 + $0x2b0] sm:$0xff] %v2987
        %v2989 = vld [vmem:[%s2641 + $0x2c0] sm:$0xff]
        %2990 = vst [vmem:[%s2642 + $0x2b4] sm:$0xff] %v2989
        %v2991 = vld [vmem:[%s2641 + $0x2b0] sm:$0xff]
        %2992 = vst [vmem:[%s2642 + $0x2b8] sm:$0xff] %v2991
        %v2993 = vld [vmem:[%s2641 + $0x2c4] sm:$0xff]
        %2994 = vst [vmem:[%s2642 + $0x2bc] sm:$0xff] %v2993
        %v2995 = vld [vmem:[%s2641 + $0x2b4] sm:$0xff]
        %2996 = vst [vmem:[%s2642 + $0x2c0] sm:$0xff] %v2995
        %v2997 = vld [vmem:[%s2641 + $0x2c8] sm:$0xff]
        %2998 = vst [vmem:[%s2642 + $0x2c4] sm:$0xff] %v2997
        %v2999 = vld [vmem:[%s2641 + $0x2b8] sm:$0xff]
        %3000 = vst [vmem:[%s2642 + $0x2c8] sm:$0xff] %v2999
        %v3001 = vld [vmem:[%s2641 + $0x2cc] sm:$0xff]
        %3002 = vst [vmem:[%s2642 + $0x2cc] sm:$0xff] %v3001
        %v3003 = vld [vmem:[%s2641 + $0x2d0] sm:$0xff]
        %3004 = vst [vmem:[%s2642 + $0x2d0] sm:$0xff] %v3003
        %v3005 = vld [vmem:[%s2641 + $0x2e4] sm:$0xff]
        %3006 = vst [vmem:[%s2642 + $0x2d4] sm:$0xff] %v3005
        %v3007 = vld [vmem:[%s2641 + $0x2d4] sm:$0xff]
        %3008 = vst [vmem:[%s2642 + $0x2d8] sm:$0xff] %v3007
        %v3009 = vld [vmem:[%s2641 + $0x2e8] sm:$0xff]
        %3010 = vst [vmem:[%s2642 + $0x2dc] sm:$0xff] %v3009
        %v3011 = vld [vmem:[%s2641 + $0x2d8] sm:$0xff]
        %3012 = vst [vmem:[%s2642 + $0x2e0] sm:$0xff] %v3011
        %v3013 = vld [vmem:[%s2641 + $0x2ec] sm:$0xff]
        %3014 = vst [vmem:[%s2642 + $0x2e4] sm:$0xff] %v3013
        %v3015 = vld [vmem:[%s2641 + $0x2dc] sm:$0xff]
        %3016 = vst [vmem:[%s2642 + $0x2e8] sm:$0xff] %v3015
        %v3017 = vld [vmem:[%s2641 + $0x2f0] sm:$0xff]
        %3018 = vst [vmem:[%s2642 + $0x2ec] sm:$0xff] %v3017
        %v3019 = vld [vmem:[%s2641 + $0x2e0] sm:$0xff]
        %3020 = vst [vmem:[%s2642 + $0x2f0] sm:$0xff] %v3019
        %v3021 = vld [vmem:[%s2641 + $0x2f4] sm:$0xff]
        %3022 = vst [vmem:[%s2642 + $0x2f4] sm:$0xff] %v3021
        %v3023 = vld [vmem:[%s2641 + $0x2f8] sm:$0xff]
        %3024 = vst [vmem:[%s2642 + $0x2f8] sm:$0xff] %v3023
        %v3025 = vld [vmem:[%s2641 + $0x30c] sm:$0xff]
        %3026 = vst [vmem:[%s2642 + $0x2fc] sm:$0xff] %v3025
        %v3027 = vld [vmem:[%s2641 + $0x2fc] sm:$0xff]
        %3028 = vst [vmem:[%s2642 + $0x300] sm:$0xff] %v3027
        %v3029 = vld [vmem:[%s2641 + $0x310] sm:$0xff]
        %3030 = vst [vmem:[%s2642 + $0x304] sm:$0xff] %v3029
        %v3031 = vld [vmem:[%s2641 + $0x300] sm:$0xff]
        %3032 = vst [vmem:[%s2642 + $0x308] sm:$0xff] %v3031
        %v3033 = vld [vmem:[%s2641 + $0x314] sm:$0xff]
        %3034 = vst [vmem:[%s2642 + $0x30c] sm:$0xff] %v3033
        %v3035 = vld [vmem:[%s2641 + $0x304] sm:$0xff]
        %3036 = vst [vmem:[%s2642 + $0x310] sm:$0xff] %v3035
        %v3037 = vld [vmem:[%s2641 + $0x318] sm:$0xff]
        %3038 = vst [vmem:[%s2642 + $0x314] sm:$0xff] %v3037
        %v3039 = vld [vmem:[%s2641 + $0x308] sm:$0xff]
        %3040 = vst [vmem:[%s2642 + $0x318] sm:$0xff] %v3039
        %v3041 = vld [vmem:[%s2641 + $0x31c] sm:$0xff]
        %3042 = vst [vmem:[%s2642 + $0x31c] sm:$0xff] %v3041
        %v3043 = vld [vmem:[%s2641 + $0x320] sm:$0xff]
        %3044 = vst [vmem:[%s2642 + $0x320] sm:$0xff] %v3043
        %v3045 = vld [vmem:[%s2641 + $0x334] sm:$0xff]
        %3046 = vst [vmem:[%s2642 + $0x324] sm:$0xff] %v3045
        %v3047 = vld [vmem:[%s2641 + $0x324] sm:$0xff]
        %3048 = vst [vmem:[%s2642 + $0x328] sm:$0xff] %v3047
        %v3049 = vld [vmem:[%s2641 + $0x338] sm:$0xff]
        %3050 = vst [vmem:[%s2642 + $0x32c] sm:$0xff] %v3049
        %v3051 = vld [vmem:[%s2641 + $0x328] sm:$0xff]
        %3052 = vst [vmem:[%s2642 + $0x330] sm:$0xff] %v3051
        %v3053 = vld [vmem:[%s2641 + $0x33c] sm:$0xff]
        %3054 = vst [vmem:[%s2642 + $0x334] sm:$0xff] %v3053
        %v3055 = vld [vmem:[%s2641 + $0x32c] sm:$0xff]
        %3056 = vst [vmem:[%s2642 + $0x338] sm:$0xff] %v3055
        %v3057 = vld [vmem:[%s2641 + $0x340] sm:$0xff]
        %3058 = vst [vmem:[%s2642 + $0x33c] sm:$0xff] %v3057
        %v3059 = vld [vmem:[%s2641 + $0x330] sm:$0xff]
        %3060 = vst [vmem:[%s2642 + $0x340] sm:$0xff] %v3059
        %v3061 = vld [vmem:[%s2641 + $0x344] sm:$0xff]
        %3062 = vst [vmem:[%s2642 + $0x344] sm:$0xff] %v3061
        %v3063 = vld [vmem:[%s2641 + $0x348] sm:$0xff]
        %3064 = vst [vmem:[%s2642 + $0x348] sm:$0xff] %v3063
        %v3065 = vld [vmem:[%s2641 + $0x35c] sm:$0xff]
        %3066 = vst [vmem:[%s2642 + $0x34c] sm:$0xff] %v3065
        %v3067 = vld [vmem:[%s2641 + $0x34c] sm:$0xff]
        %3068 = vst [vmem:[%s2642 + $0x350] sm:$0xff] %v3067
        %v3069 = vld [vmem:[%s2641 + $0x360] sm:$0xff]
        %3070 = vst [vmem:[%s2642 + $0x354] sm:$0xff] %v3069
        %v3071 = vld [vmem:[%s2641 + $0x350] sm:$0xff]
        %3072 = vst [vmem:[%s2642 + $0x358] sm:$0xff] %v3071
        %v3073 = vld [vmem:[%s2641 + $0x364] sm:$0xff]
        %3074 = vst [vmem:[%s2642 + $0x35c] sm:$0xff] %v3073
        %v3075 = vld [vmem:[%s2641 + $0x354] sm:$0xff]
        %3076 = vst [vmem:[%s2642 + $0x360] sm:$0xff] %v3075
        %v3077 = vld [vmem:[%s2641 + $0x368] sm:$0xff]
        %3078 = vst [vmem:[%s2642 + $0x364] sm:$0xff] %v3077
        %v3079 = vld [vmem:[%s2641 + $0x358] sm:$0xff]
        %3080 = vst [vmem:[%s2642 + $0x368] sm:$0xff] %v3079
        %v3081 = vld [vmem:[%s2641 + $0x36c] sm:$0xff]
        %3082 = vst [vmem:[%s2642 + $0x36c] sm:$0xff] %v3081
        %v3083 = vld [vmem:[%s2641 + $0x370] sm:$0xff]
        %3084 = vst [vmem:[%s2642 + $0x370] sm:$0xff] %v3083
        %v3085 = vld [vmem:[%s2641 + $0x384] sm:$0xff]
        %3086 = vst [vmem:[%s2642 + $0x374] sm:$0xff] %v3085
        %v3087 = vld [vmem:[%s2641 + $0x374] sm:$0xff]
        %3088 = vst [vmem:[%s2642 + $0x378] sm:$0xff] %v3087
        %v3089 = vld [vmem:[%s2641 + $0x388] sm:$0xff]
        %3090 = vst [vmem:[%s2642 + $0x37c] sm:$0xff] %v3089
        %v3091 = vld [vmem:[%s2641 + $0x378] sm:$0xff]
        %3092 = vst [vmem:[%s2642 + $0x380] sm:$0xff] %v3091
        %v3093 = vld [vmem:[%s2641 + $0x38c] sm:$0xff]
        %3094 = vst [vmem:[%s2642 + $0x384] sm:$0xff] %v3093
        %v3095 = vld [vmem:[%s2641 + $0x37c] sm:$0xff]
        %3096 = vst [vmem:[%s2642 + $0x388] sm:$0xff] %v3095
        %v3097 = vld [vmem:[%s2641 + $0x390] sm:$0xff]
        %3098 = vst [vmem:[%s2642 + $0x38c] sm:$0xff] %v3097
        %v3099 = vld [vmem:[%s2641 + $0x380] sm:$0xff]
        %3100 = vst [vmem:[%s2642 + $0x390] sm:$0xff] %v3099
        %v3101 = vld [vmem:[%s2641 + $0x394] sm:$0xff]
        %3102 = vst [vmem:[%s2642 + $0x394] sm:$0xff] %v3101
        %v3103 = vld [vmem:[%s2641 + $0x398] sm:$0xff]
        %3104 = vst [vmem:[%s2642 + $0x398] sm:$0xff] %v3103
        %v3105 = vld [vmem:[%s2641 + $0x3ac] sm:$0xff]
        %3106 = vst [vmem:[%s2642 + $0x39c] sm:$0xff] %v3105
        %v3107 = vld [vmem:[%s2641 + $0x39c] sm:$0xff]
        %3108 = vst [vmem:[%s2642 + $0x3a0] sm:$0xff] %v3107
        %v3109 = vld [vmem:[%s2641 + $0x3b0] sm:$0xff]
        %3110 = vst [vmem:[%s2642 + $0x3a4] sm:$0xff] %v3109
        %v3111 = vld [vmem:[%s2641 + $0x3a0] sm:$0xff]
        %3112 = vst [vmem:[%s2642 + $0x3a8] sm:$0xff] %v3111
        %v3113 = vld [vmem:[%s2641 + $0x3b4] sm:$0xff]
        %3114 = vst [vmem:[%s2642 + $0x3ac] sm:$0xff] %v3113
        %v3115 = vld [vmem:[%s2641 + $0x3a4] sm:$0xff]
        %3116 = vst [vmem:[%s2642 + $0x3b0] sm:$0xff] %v3115
        %v3117 = vld [vmem:[%s2641 + $0x3b8] sm:$0xff]
        %3118 = vst [vmem:[%s2642 + $0x3b4] sm:$0xff] %v3117
        %v3119 = vld [vmem:[%s2641 + $0x3a8] sm:$0xff]
        %3120 = vst [vmem:[%s2642 + $0x3b8] sm:$0xff] %v3119
        %v3121 = vld [vmem:[%s2641 + $0x3bc] sm:$0xff]
        %3122 = vst [vmem:[%s2642 + $0x3bc] sm:$0xff] %v3121
        %v3123 = vld [vmem:[%s2641 + $0x3c0] sm:$0xff]
        %3124 = vst [vmem:[%s2642 + $0x3c0] sm:$0xff] %v3123
        %v3125 = vld [vmem:[%s2641 + $0x3d4] sm:$0xff]
        %3126 = vst [vmem:[%s2642 + $0x3c4] sm:$0xff] %v3125
        %v3127 = vld [vmem:[%s2641 + $0x3c4] sm:$0xff]
        %3128 = vst [vmem:[%s2642 + $0x3c8] sm:$0xff] %v3127
        %v3129 = vld [vmem:[%s2641 + $0x3d8] sm:$0xff]
        %3130 = vst [vmem:[%s2642 + $0x3cc] sm:$0xff] %v3129
        %v3131 = vld [vmem:[%s2641 + $0x3c8] sm:$0xff]
        %3132 = vst [vmem:[%s2642 + $0x3d0] sm:$0xff] %v3131
        %v3133 = vld [vmem:[%s2641 + $0x3dc] sm:$0xff]
        %3134 = vst [vmem:[%s2642 + $0x3d4] sm:$0xff] %v3133
        %v3135 = vld [vmem:[%s2641 + $0x3cc] sm:$0xff]
        %3136 = vst [vmem:[%s2642 + $0x3d8] sm:$0xff] %v3135
        %v3137 = vld [vmem:[%s2641 + $0x3e0] sm:$0xff]
        %3138 = vst [vmem:[%s2642 + $0x3dc] sm:$0xff] %v3137
        %v3139 = vld [vmem:[%s2641 + $0x3d0] sm:$0xff]
        %3140 = vst [vmem:[%s2642 + $0x3e0] sm:$0xff] %v3139
        %v3141 = vld [vmem:[%s2641 + $0x3e4] sm:$0xff]
        %3142 = vst [vmem:[%s2642 + $0x3e4] sm:$0xff] %v3141
        %v3143 = vld [vmem:[%s2641 + $0x3e8] sm:$0xff]
        %3144 = vst [vmem:[%s2642 + $0x3e8] sm:$0xff] %v3143
        %v3145 = vld [vmem:[%s2641 + $0x3fc] sm:$0xff]
        %3146 = vst [vmem:[%s2642 + $0x3ec] sm:$0xff] %v3145
        %v3147 = vld [vmem:[%s2641 + $0x3ec] sm:$0xff]
        %3148 = vst [vmem:[%s2642 + $0x3f0] sm:$0xff] %v3147
        %v3149 = vld [vmem:[%s2641 + $0x400] sm:$0xff]
        %3150 = vst [vmem:[%s2642 + $0x3f4] sm:$0xff] %v3149
        %v3151 = vld [vmem:[%s2641 + $0x3f0] sm:$0xff]
        %3152 = vst [vmem:[%s2642 + $0x3f8] sm:$0xff] %v3151
        %v3153 = vld [vmem:[%s2641 + $0x404] sm:$0xff]
        %3154 = vst [vmem:[%s2642 + $0x3fc] sm:$0xff] %v3153
        %v3155 = vld [vmem:[%s2641 + $0x3f4] sm:$0xff]
        %3156 = vst [vmem:[%s2642 + $0x400] sm:$0xff] %v3155
        %v3157 = vld [vmem:[%s2641 + $0x408] sm:$0xff]
        %3158 = vst [vmem:[%s2642 + $0x404] sm:$0xff] %v3157
        %v3159 = vld [vmem:[%s2641 + $0x3f8] sm:$0xff]
        %3160 = vst [vmem:[%s2642 + $0x408] sm:$0xff] %v3159
        %v3161 = vld [vmem:[%s2641 + $0x40c] sm:$0xff]
        %3162 = vst [vmem:[%s2642 + $0x40c] sm:$0xff] %v3161
        %v3163 = vld [vmem:[%s2641 + $0x410] sm:$0xff]
        %3164 = vst [vmem:[%s2642 + $0x410] sm:$0xff] %v3163
        %v3165 = vld [vmem:[%s2641 + $0x424] sm:$0xff]
        %3166 = vst [vmem:[%s2642 + $0x414] sm:$0xff] %v3165
        %v3167 = vld [vmem:[%s2641 + $0x414] sm:$0xff]
        %3168 = vst [vmem:[%s2642 + $0x418] sm:$0xff] %v3167
        %v3169 = vld [vmem:[%s2641 + $0x428] sm:$0xff]
        %3170 = vst [vmem:[%s2642 + $0x41c] sm:$0xff] %v3169
        %v3171 = vld [vmem:[%s2641 + $0x418] sm:$0xff]
        %3172 = vst [vmem:[%s2642 + $0x420] sm:$0xff] %v3171
        %v3173 = vld [vmem:[%s2641 + $0x42c] sm:$0xff]
        %3174 = vst [vmem:[%s2642 + $0x424] sm:$0xff] %v3173
        %v3175 = vld [vmem:[%s2641 + $0x41c] sm:$0xff]
        %3176 = vst [vmem:[%s2642 + $0x428] sm:$0xff] %v3175
        %v3177 = vld [vmem:[%s2641 + $0x430] sm:$0xff]
        %3178 = vst [vmem:[%s2642 + $0x42c] sm:$0xff] %v3177
        %v3179 = vld [vmem:[%s2641 + $0x420] sm:$0xff]
        %3180 = vst [vmem:[%s2642 + $0x430] sm:$0xff] %v3179
        %v3181 = vld [vmem:[%s2641 + $0x434] sm:$0xff]
        %3182 = vst [vmem:[%s2642 + $0x434] sm:$0xff] %v3181
        %v3183 = vld [vmem:[%s2641 + $0x438] sm:$0xff]
        %3184 = vst [vmem:[%s2642 + $0x438] sm:$0xff] %v3183
        %v3185 = vld [vmem:[%s2641 + $0x44c] sm:$0xff]
        %3186 = vst [vmem:[%s2642 + $0x43c] sm:$0xff] %v3185
        %v3187 = vld [vmem:[%s2641 + $0x43c] sm:$0xff]
        %3188 = vst [vmem:[%s2642 + $0x440] sm:$0xff] %v3187
        %v3189 = vld [vmem:[%s2641 + $0x450] sm:$0xff]
        %3190 = vst [vmem:[%s2642 + $0x444] sm:$0xff] %v3189
        %v3191 = vld [vmem:[%s2641 + $0x440] sm:$0xff]
        %3192 = vst [vmem:[%s2642 + $0x448] sm:$0xff] %v3191
        %v3193 = vld [vmem:[%s2641 + $0x454] sm:$0xff]
        %3194 = vst [vmem:[%s2642 + $0x44c] sm:$0xff] %v3193
        %v3195 = vld [vmem:[%s2641 + $0x444] sm:$0xff]
        %3196 = vst [vmem:[%s2642 + $0x450] sm:$0xff] %v3195
        %v3197 = vld [vmem:[%s2641 + $0x458] sm:$0xff]
        %3198 = vst [vmem:[%s2642 + $0x454] sm:$0xff] %v3197
        %v3199 = vld [vmem:[%s2641 + $0x448] sm:$0xff]
        %3200 = vst [vmem:[%s2642 + $0x458] sm:$0xff] %v3199
        %v3201 = vld [vmem:[%s2641 + $0x45c] sm:$0xff]
        %3202 = vst [vmem:[%s2642 + $0x45c] sm:$0xff] %v3201
        %v3203 = vld [vmem:[%s2641 + $0x460] sm:$0xff]
        %3204 = vst [vmem:[%s2642 + $0x460] sm:$0xff] %v3203
        %v3205 = vld [vmem:[%s2641 + $0x474] sm:$0xff]
        %3206 = vst [vmem:[%s2642 + $0x464] sm:$0xff] %v3205
        %v3207 = vld [vmem:[%s2641 + $0x464] sm:$0xff]
        %3208 = vst [vmem:[%s2642 + $0x468] sm:$0xff] %v3207
        %v3209 = vld [vmem:[%s2641 + $0x478] sm:$0xff]
        %3210 = vst [vmem:[%s2642 + $0x46c] sm:$0xff] %v3209
        %v3211 = vld [vmem:[%s2641 + $0x468] sm:$0xff]
        %3212 = vst [vmem:[%s2642 + $0x470] sm:$0xff] %v3211
        %v3213 = vld [vmem:[%s2641 + $0x47c] sm:$0xff]
        %3214 = vst [vmem:[%s2642 + $0x474] sm:$0xff] %v3213
        %v3215 = vld [vmem:[%s2641 + $0x46c] sm:$0xff]
        %3216 = vst [vmem:[%s2642 + $0x478] sm:$0xff] %v3215
        %v3217 = vld [vmem:[%s2641 + $0x480] sm:$0xff]
        %3218 = vst [vmem:[%s2642 + $0x47c] sm:$0xff] %v3217
        %v3219 = vld [vmem:[%s2641 + $0x470] sm:$0xff]
        %3220 = vst [vmem:[%s2642 + $0x480] sm:$0xff] %v3219
        %v3221 = vld [vmem:[%s2641 + $0x484] sm:$0xff]
        %3222 = vst [vmem:[%s2642 + $0x484] sm:$0xff] %v3221
        %v3223 = vld [vmem:[%s2641 + $0x488] sm:$0xff]
        %3224 = vst [vmem:[%s2642 + $0x488] sm:$0xff] %v3223
        %v3225 = vld [vmem:[%s2641 + $0x49c] sm:$0xff]
        %3226 = vst [vmem:[%s2642 + $0x48c] sm:$0xff] %v3225
        %v3227 = vld [vmem:[%s2641 + $0x48c] sm:$0xff]
        %3228 = vst [vmem:[%s2642 + $0x490] sm:$0xff] %v3227
        %v3229 = vld [vmem:[%s2641 + $0x4a0] sm:$0xff]
        %3230 = vst [vmem:[%s2642 + $0x494] sm:$0xff] %v3229
        %v3231 = vld [vmem:[%s2641 + $0x490] sm:$0xff]
        %3232 = vst [vmem:[%s2642 + $0x498] sm:$0xff] %v3231
        %v3233 = vld [vmem:[%s2641 + $0x4a4] sm:$0xff]
        %3234 = vst [vmem:[%s2642 + $0x49c] sm:$0xff] %v3233
        %v3235 = vld [vmem:[%s2641 + $0x494] sm:$0xff]
        %3236 = vst [vmem:[%s2642 + $0x4a0] sm:$0xff] %v3235
        %v3237 = vld [vmem:[%s2641 + $0x4a8] sm:$0xff]
        %3238 = vst [vmem:[%s2642 + $0x4a4] sm:$0xff] %v3237
        %v3239 = vld [vmem:[%s2641 + $0x498] sm:$0xff]
        %3240 = vst [vmem:[%s2642 + $0x4a8] sm:$0xff] %v3239
        %v3241 = vld [vmem:[%s2641 + $0x4ac] sm:$0xff]
        %3242 = vst [vmem:[%s2642 + $0x4ac] sm:$0xff] %v3241
        %v3243 = vld [vmem:[%s2641 + $0x4b0] sm:$0xff]
        %3244 = vst [vmem:[%s2642 + $0x4b0] sm:$0xff] %v3243
        %v3245 = vld [vmem:[%s2641 + $0x4c4] sm:$0xff]
        %3246 = vst [vmem:[%s2642 + $0x4b4] sm:$0xff] %v3245
        %v3247 = vld [vmem:[%s2641 + $0x4b4] sm:$0xff]
        %3248 = vst [vmem:[%s2642 + $0x4b8] sm:$0xff] %v3247
        %v3249 = vld [vmem:[%s2641 + $0x4c8] sm:$0xff]
        %3250 = vst [vmem:[%s2642 + $0x4bc] sm:$0xff] %v3249
        %v3251 = vld [vmem:[%s2641 + $0x4b8] sm:$0xff]
        %3252 = vst [vmem:[%s2642 + $0x4c0] sm:$0xff] %v3251
        %v3253 = vld [vmem:[%s2641 + $0x4cc] sm:$0xff]
        %3254 = vst [vmem:[%s2642 + $0x4c4] sm:$0xff] %v3253
        %v3255 = vld [vmem:[%s2641 + $0x4bc] sm:$0xff]
        %3256 = vst [vmem:[%s2642 + $0x4c8] sm:$0xff] %v3255
        %v3257 = vld [vmem:[%s2641 + $0x4d0] sm:$0xff]
        %3258 = vst [vmem:[%s2642 + $0x4cc] sm:$0xff] %v3257
        %v3259 = vld [vmem:[%s2641 + $0x4c0] sm:$0xff]
        %3260 = vst [vmem:[%s2642 + $0x4d0] sm:$0xff] %v3259
        %v3261 = vld [vmem:[%s2641 + $0x4d4] sm:$0xff]
        %3262 = vst [vmem:[%s2642 + $0x4d4] sm:$0xff] %v3261
        %v3263 = vld [vmem:[%s2641 + $0x4d8] sm:$0xff]
        %3264 = vst [vmem:[%s2642 + $0x4d8] sm:$0xff] %v3263
        %v3265 = vld [vmem:[%s2641 + $0x4ec] sm:$0xff]
        %3266 = vst [vmem:[%s2642 + $0x4dc] sm:$0xff] %v3265
        %v3267 = vld [vmem:[%s2641 + $0x4dc] sm:$0xff]
        %3268 = vst [vmem:[%s2642 + $0x4e0] sm:$0xff] %v3267
        %v3269 = vld [vmem:[%s2641 + $0x4f0] sm:$0xff]
        %3270 = vst [vmem:[%s2642 + $0x4e4] sm:$0xff] %v3269
        %v3271 = vld [vmem:[%s2641 + $0x4e0] sm:$0xff]
        %3272 = vst [vmem:[%s2642 + $0x4e8] sm:$0xff] %v3271
        %v3273 = vld [vmem:[%s2641 + $0x4f4] sm:$0xff]
        %3274 = vst [vmem:[%s2642 + $0x4ec] sm:$0xff] %v3273
        %v3275 = vld [vmem:[%s2641 + $0x4e4] sm:$0xff]
        %3276 = vst [vmem:[%s2642 + $0x4f0] sm:$0xff] %v3275
        %v3277 = vld [vmem:[%s2641 + $0x4f8] sm:$0xff]
        %3278 = vst [vmem:[%s2642 + $0x4f4] sm:$0xff] %v3277
        %v3279 = vld [vmem:[%s2641 + $0x4e8] sm:$0xff]
        %3280 = vst [vmem:[%s2642 + $0x4f8] sm:$0xff] %v3279
        %v3281 = vld [vmem:[%s2641 + $0x4fc] sm:$0xff]
        %3282 = vst [vmem:[%s2642 + $0x4fc] sm:$0xff] %v3281
        %v3283 = vld [vmem:[%s2641 + $0x500] sm:$0xff]
        %3284 = vst [vmem:[%s2642 + $0x500] sm:$0xff] %v3283
        %v3285 = vld [vmem:[%s2641 + $0x514] sm:$0xff]
        %3286 = vst [vmem:[%s2642 + $0x504] sm:$0xff] %v3285
        %v3287 = vld [vmem:[%s2641 + $0x504] sm:$0xff]
        %3288 = vst [vmem:[%s2642 + $0x508] sm:$0xff] %v3287
        %v3289 = vld [vmem:[%s2641 + $0x518] sm:$0xff]
        %3290 = vst [vmem:[%s2642 + $0x50c] sm:$0xff] %v3289
        %v3291 = vld [vmem:[%s2641 + $0x508] sm:$0xff]
        %3292 = vst [vmem:[%s2642 + $0x510] sm:$0xff] %v3291
        %v3293 = vld [vmem:[%s2641 + $0x51c] sm:$0xff]
        %3294 = vst [vmem:[%s2642 + $0x514] sm:$0xff] %v3293
        %v3295 = vld [vmem:[%s2641 + $0x50c] sm:$0xff]
        %3296 = vst [vmem:[%s2642 + $0x518] sm:$0xff] %v3295
        %v3297 = vld [vmem:[%s2641 + $0x520] sm:$0xff]
        %3298 = vst [vmem:[%s2642 + $0x51c] sm:$0xff] %v3297
        %v3299 = vld [vmem:[%s2641 + $0x510] sm:$0xff]
        %3300 = vst [vmem:[%s2642 + $0x520] sm:$0xff] %v3299
        %v3301 = vld [vmem:[%s2641 + $0x524] sm:$0xff]
        %3302 = vst [vmem:[%s2642 + $0x524] sm:$0xff] %v3301
        %v3303 = vld [vmem:[%s2641 + $0x528] sm:$0xff]
        %3304 = vst [vmem:[%s2642 + $0x528] sm:$0xff] %v3303
        %v3305 = vld [vmem:[%s2641 + $0x53c] sm:$0xff]
        %3306 = vst [vmem:[%s2642 + $0x52c] sm:$0xff] %v3305
        %v3307 = vld [vmem:[%s2641 + $0x52c] sm:$0xff]
        %3308 = vst [vmem:[%s2642 + $0x530] sm:$0xff] %v3307
        %v3309 = vld [vmem:[%s2641 + $0x540] sm:$0xff]
        %3310 = vst [vmem:[%s2642 + $0x534] sm:$0xff] %v3309
        %v3311 = vld [vmem:[%s2641 + $0x530] sm:$0xff]
        %3312 = vst [vmem:[%s2642 + $0x538] sm:$0xff] %v3311
        %v3313 = vld [vmem:[%s2641 + $0x544] sm:$0xff]
        %3314 = vst [vmem:[%s2642 + $0x53c] sm:$0xff] %v3313
        %v3315 = vld [vmem:[%s2641 + $0x534] sm:$0xff]
        %3316 = vst [vmem:[%s2642 + $0x540] sm:$0xff] %v3315
        %v3317 = vld [vmem:[%s2641 + $0x548] sm:$0xff]
        %3318 = vst [vmem:[%s2642 + $0x544] sm:$0xff] %v3317
        %v3319 = vld [vmem:[%s2641 + $0x538] sm:$0xff]
        %3320 = vst [vmem:[%s2642 + $0x548] sm:$0xff] %v3319
        %v3321 = vld [vmem:[%s2641 + $0x54c] sm:$0xff]
        %3322 = vst [vmem:[%s2642 + $0x54c] sm:$0xff] %v3321
        %v3323 = vld [vmem:[%s2641 + $0x550] sm:$0xff]
        %3324 = vst [vmem:[%s2642 + $0x550] sm:$0xff] %v3323
        %v3325 = vld [vmem:[%s2641 + $0x564] sm:$0xff]
        %3326 = vst [vmem:[%s2642 + $0x554] sm:$0xff] %v3325
        %v3327 = vld [vmem:[%s2641 + $0x554] sm:$0xff]
        %3328 = vst [vmem:[%s2642 + $0x558] sm:$0xff] %v3327
        %v3329 = vld [vmem:[%s2641 + $0x568] sm:$0xff]
        %3330 = vst [vmem:[%s2642 + $0x55c] sm:$0xff] %v3329
        %v3331 = vld [vmem:[%s2641 + $0x558] sm:$0xff]
        %3332 = vst [vmem:[%s2642 + $0x560] sm:$0xff] %v3331
        %v3333 = vld [vmem:[%s2641 + $0x56c] sm:$0xff]
        %3334 = vst [vmem:[%s2642 + $0x564] sm:$0xff] %v3333
        %v3335 = vld [vmem:[%s2641 + $0x55c] sm:$0xff]
        %3336 = vst [vmem:[%s2642 + $0x568] sm:$0xff] %v3335
        %v3337 = vld [vmem:[%s2641 + $0x570] sm:$0xff]
        %3338 = vst [vmem:[%s2642 + $0x56c] sm:$0xff] %v3337
        %v3339 = vld [vmem:[%s2641 + $0x560] sm:$0xff]
        %3340 = vst [vmem:[%s2642 + $0x570] sm:$0xff] %v3339
        %v3341 = vld [vmem:[%s2641 + $0x574] sm:$0xff]
        %3342 = vst [vmem:[%s2642 + $0x574] sm:$0xff] %v3341
        %v3343 = vld [vmem:[%s2641 + $0x578] sm:$0xff]
        %3344 = vst [vmem:[%s2642 + $0x578] sm:$0xff] %v3343
        %v3345 = vld [vmem:[%s2641 + $0x58c] sm:$0xff]
        %3346 = vst [vmem:[%s2642 + $0x57c] sm:$0xff] %v3345
        %v3347 = vld [vmem:[%s2641 + $0x57c] sm:$0xff]
        %3348 = vst [vmem:[%s2642 + $0x580] sm:$0xff] %v3347
        %v3349 = vld [vmem:[%s2641 + $0x590] sm:$0xff]
        %3350 = vst [vmem:[%s2642 + $0x584] sm:$0xff] %v3349
        %v3351 = vld [vmem:[%s2641 + $0x580] sm:$0xff]
        %3352 = vst [vmem:[%s2642 + $0x588] sm:$0xff] %v3351
        %v3353 = vld [vmem:[%s2641 + $0x594] sm:$0xff]
        %3354 = vst [vmem:[%s2642 + $0x58c] sm:$0xff] %v3353
        %v3355 = vld [vmem:[%s2641 + $0x584] sm:$0xff]
        %3356 = vst [vmem:[%s2642 + $0x590] sm:$0xff] %v3355
        %v3357 = vld [vmem:[%s2641 + $0x598] sm:$0xff]
        %3358 = vst [vmem:[%s2642 + $0x594] sm:$0xff] %v3357
        %v3359 = vld [vmem:[%s2641 + $0x588] sm:$0xff]
        %3360 = vst [vmem:[%s2642 + $0x598] sm:$0xff] %v3359
        %v3361 = vld [vmem:[%s2641 + $0x59c] sm:$0xff]
        %3362 = vst [vmem:[%s2642 + $0x59c] sm:$0xff] %v3361
        %v3363 = vld [vmem:[%s2641 + $0x5a0] sm:$0xff]
        %3364 = vst [vmem:[%s2642 + $0x5a0] sm:$0xff] %v3363
        %v3365 = vld [vmem:[%s2641 + $0x5b4] sm:$0xff]
        %3366 = vst [vmem:[%s2642 + $0x5a4] sm:$0xff] %v3365
        %v3367 = vld [vmem:[%s2641 + $0x5a4] sm:$0xff]
        %3368 = vst [vmem:[%s2642 + $0x5a8] sm:$0xff] %v3367
        %v3369 = vld [vmem:[%s2641 + $0x5b8] sm:$0xff]
        %3370 = vst [vmem:[%s2642 + $0x5ac] sm:$0xff] %v3369
        %v3371 = vld [vmem:[%s2641 + $0x5a8] sm:$0xff]
        %3372 = vst [vmem:[%s2642 + $0x5b0] sm:$0xff] %v3371
        %v3373 = vld [vmem:[%s2641 + $0x5bc] sm:$0xff]
        %3374 = vst [vmem:[%s2642 + $0x5b4] sm:$0xff] %v3373
        %v3375 = vld [vmem:[%s2641 + $0x5ac] sm:$0xff]
        %3376 = vst [vmem:[%s2642 + $0x5b8] sm:$0xff] %v3375
        %v3377 = vld [vmem:[%s2641 + $0x5c0] sm:$0xff]
        %3378 = vst [vmem:[%s2642 + $0x5bc] sm:$0xff] %v3377
        %v3379 = vld [vmem:[%s2641 + $0x5b0] sm:$0xff]
        %3380 = vst [vmem:[%s2642 + $0x5c0] sm:$0xff] %v3379
        %v3381 = vld [vmem:[%s2641 + $0x5c4] sm:$0xff]
        %3382 = vst [vmem:[%s2642 + $0x5c4] sm:$0xff] %v3381
        %v3383 = vld [vmem:[%s2641 + $0x5c8] sm:$0xff]
        %3384 = vst [vmem:[%s2642 + $0x5c8] sm:$0xff] %v3383
        %v3385 = vld [vmem:[%s2641 + $0x5dc] sm:$0xff]
        %3386 = vst [vmem:[%s2642 + $0x5cc] sm:$0xff] %v3385
        %v3387 = vld [vmem:[%s2641 + $0x5cc] sm:$0xff]
        %3388 = vst [vmem:[%s2642 + $0x5d0] sm:$0xff] %v3387
        %v3389 = vld [vmem:[%s2641 + $0x5e0] sm:$0xff]
        %3390 = vst [vmem:[%s2642 + $0x5d4] sm:$0xff] %v3389
        %v3391 = vld [vmem:[%s2641 + $0x5d0] sm:$0xff]
        %3392 = vst [vmem:[%s2642 + $0x5d8] sm:$0xff] %v3391
        %v3393 = vld [vmem:[%s2641 + $0x5e4] sm:$0xff]
        %3394 = vst [vmem:[%s2642 + $0x5dc] sm:$0xff] %v3393
        %v3395 = vld [vmem:[%s2641 + $0x5d4] sm:$0xff]
        %3396 = vst [vmem:[%s2642 + $0x5e0] sm:$0xff] %v3395
        %v3397 = vld [vmem:[%s2641 + $0x5e8] sm:$0xff]
        %3398 = vst [vmem:[%s2642 + $0x5e4] sm:$0xff] %v3397
        %v3399 = vld [vmem:[%s2641 + $0x5d8] sm:$0xff]
        %3400 = vst [vmem:[%s2642 + $0x5e8] sm:$0xff] %v3399
        %v3401 = vld [vmem:[%s2641 + $0x5ec] sm:$0xff]
        %3402 = vst [vmem:[%s2642 + $0x5ec] sm:$0xff] %v3401
        %v3403 = vld [vmem:[%s2641 + $0x5f0] sm:$0xff]
        %3404 = vst [vmem:[%s2642 + $0x5f0] sm:$0xff] %v3403
        %v3405 = vld [vmem:[%s2641 + $0x604] sm:$0xff]
        %3406 = vst [vmem:[%s2642 + $0x5f4] sm:$0xff] %v3405
        %v3407 = vld [vmem:[%s2641 + $0x5f4] sm:$0xff]
        %3408 = vst [vmem:[%s2642 + $0x5f8] sm:$0xff] %v3407
        %v3409 = vld [vmem:[%s2641 + $0x608] sm:$0xff]
        %3410 = vst [vmem:[%s2642 + $0x5fc] sm:$0xff] %v3409
        %v3411 = vld [vmem:[%s2641 + $0x5f8] sm:$0xff]
        %3412 = vst [vmem:[%s2642 + $0x600] sm:$0xff] %v3411
        %v3413 = vld [vmem:[%s2641 + $0x60c] sm:$0xff]
        %3414 = vst [vmem:[%s2642 + $0x604] sm:$0xff] %v3413
        %v3415 = vld [vmem:[%s2641 + $0x5fc] sm:$0xff]
        %3416 = vst [vmem:[%s2642 + $0x608] sm:$0xff] %v3415
        %v3417 = vld [vmem:[%s2641 + $0x610] sm:$0xff]
        %3418 = vst [vmem:[%s2642 + $0x60c] sm:$0xff] %v3417
        %v3419 = vld [vmem:[%s2641 + $0x600] sm:$0xff]
        %3420 = vst [vmem:[%s2642 + $0x610] sm:$0xff] %v3419
        %v3421 = vld [vmem:[%s2641 + $0x614] sm:$0xff]
        %3422 = vst [vmem:[%s2642 + $0x614] sm:$0xff] %v3421
        %v3423 = vld [vmem:[%s2641 + $0x618] sm:$0xff]
        %3424 = vst [vmem:[%s2642 + $0x618] sm:$0xff] %v3423
        %v3425 = vld [vmem:[%s2641 + $0x62c] sm:$0xff]
        %3426 = vst [vmem:[%s2642 + $0x61c] sm:$0xff] %v3425
        %v3427 = vld [vmem:[%s2641 + $0x61c] sm:$0xff]
        %3428 = vst [vmem:[%s2642 + $0x620] sm:$0xff] %v3427
        %v3429 = vld [vmem:[%s2641 + $0x630] sm:$0xff]
        %3430 = vst [vmem:[%s2642 + $0x624] sm:$0xff] %v3429
        %v3431 = vld [vmem:[%s2641 + $0x620] sm:$0xff]
        %3432 = vst [vmem:[%s2642 + $0x628] sm:$0xff] %v3431
        %v3433 = vld [vmem:[%s2641 + $0x634] sm:$0xff]
        %3434 = vst [vmem:[%s2642 + $0x62c] sm:$0xff] %v3433
        %v3435 = vld [vmem:[%s2641 + $0x624] sm:$0xff]
        %3436 = vst [vmem:[%s2642 + $0x630] sm:$0xff] %v3435
        %v3437 = vld [vmem:[%s2641 + $0x638] sm:$0xff]
        %3438 = vst [vmem:[%s2642 + $0x634] sm:$0xff] %v3437
        %v3439 = vld [vmem:[%s2641 + $0x628] sm:$0xff]
        %3440 = vst [vmem:[%s2642 + $0x638] sm:$0xff] %v3439
        %v3441 = vld [vmem:[%s2641 + $0x63c] sm:$0xff]
        %3442 = vst [vmem:[%s2642 + $0x63c] sm:$0xff] %v3441
        %v3443 = vld [vmem:[%s2641 + $0x640] sm:$0xff]
        %3444 = vst [vmem:[%s2642 + $0x640] sm:$0xff] %v3443
        %v3445 = vld [vmem:[%s2641 + $0x654] sm:$0xff]
        %3446 = vst [vmem:[%s2642 + $0x644] sm:$0xff] %v3445
        %v3447 = vld [vmem:[%s2641 + $0x644] sm:$0xff]
        %3448 = vst [vmem:[%s2642 + $0x648] sm:$0xff] %v3447
        %v3449 = vld [vmem:[%s2641 + $0x658] sm:$0xff]
        %3450 = vst [vmem:[%s2642 + $0x64c] sm:$0xff] %v3449
        %v3451 = vld [vmem:[%s2641 + $0x648] sm:$0xff]
        %3452 = vst [vmem:[%s2642 + $0x650] sm:$0xff] %v3451
        %v3453 = vld [vmem:[%s2641 + $0x65c] sm:$0xff]
        %3454 = vst [vmem:[%s2642 + $0x654] sm:$0xff] %v3453
        %v3455 = vld [vmem:[%s2641 + $0x64c] sm:$0xff]
        %3456 = vst [vmem:[%s2642 + $0x658] sm:$0xff] %v3455
        %v3457 = vld [vmem:[%s2641 + $0x660] sm:$0xff]
        %3458 = vst [vmem:[%s2642 + $0x65c] sm:$0xff] %v3457
        %v3459 = vld [vmem:[%s2641 + $0x650] sm:$0xff]
        %3460 = vst [vmem:[%s2642 + $0x660] sm:$0xff] %v3459
        %v3461 = vld [vmem:[%s2641 + $0x664] sm:$0xff]
        %3462 = vst [vmem:[%s2642 + $0x664] sm:$0xff] %v3461
        %v3463 = vld [vmem:[%s2641 + $0x668] sm:$0xff]
        %3464 = vst [vmem:[%s2642 + $0x668] sm:$0xff] %v3463
        %v3465 = vld [vmem:[%s2641 + $0x67c] sm:$0xff]
        %3466 = vst [vmem:[%s2642 + $0x66c] sm:$0xff] %v3465
        %v3467 = vld [vmem:[%s2641 + $0x66c] sm:$0xff]
        %3468 = vst [vmem:[%s2642 + $0x670] sm:$0xff] %v3467
        %v3469 = vld [vmem:[%s2641 + $0x680] sm:$0xff]
        %3470 = vst [vmem:[%s2642 + $0x674] sm:$0xff] %v3469
        %v3471 = vld [vmem:[%s2641 + $0x670] sm:$0xff]
        %3472 = vst [vmem:[%s2642 + $0x678] sm:$0xff] %v3471
        %v3473 = vld [vmem:[%s2641 + $0x684] sm:$0xff]
        %3474 = vst [vmem:[%s2642 + $0x67c] sm:$0xff] %v3473
        %v3475 = vld [vmem:[%s2641 + $0x674] sm:$0xff]
        %3476 = vst [vmem:[%s2642 + $0x680] sm:$0xff] %v3475
        %v3477 = vld [vmem:[%s2641 + $0x688] sm:$0xff]
        %3478 = vst [vmem:[%s2642 + $0x684] sm:$0xff] %v3477
        %v3479 = vld [vmem:[%s2641 + $0x678] sm:$0xff]
        %3480 = vst [vmem:[%s2642 + $0x688] sm:$0xff] %v3479
        %v3481 = vld [vmem:[%s2641 + $0x68c] sm:$0xff]
        %3482 = vst [vmem:[%s2642 + $0x68c] sm:$0xff] %v3481
        %v3483 = vld [vmem:[%s2641 + $0x690] sm:$0xff]
        %3484 = vst [vmem:[%s2642 + $0x690] sm:$0xff] %v3483
        %v3485 = vld [vmem:[%s2641 + $0x6a4] sm:$0xff]
        %3486 = vst [vmem:[%s2642 + $0x694] sm:$0xff] %v3485
        %v3487 = vld [vmem:[%s2641 + $0x694] sm:$0xff]
        %3488 = vst [vmem:[%s2642 + $0x698] sm:$0xff] %v3487
        %v3489 = vld [vmem:[%s2641 + $0x6a8] sm:$0xff]
        %3490 = vst [vmem:[%s2642 + $0x69c] sm:$0xff] %v3489
        %v3491 = vld [vmem:[%s2641 + $0x698] sm:$0xff]
        %3492 = vst [vmem:[%s2642 + $0x6a0] sm:$0xff] %v3491
        %v3493 = vld [vmem:[%s2641 + $0x6ac] sm:$0xff]
        %3494 = vst [vmem:[%s2642 + $0x6a4] sm:$0xff] %v3493
        %v3495 = vld [vmem:[%s2641 + $0x69c] sm:$0xff]
        %3496 = vst [vmem:[%s2642 + $0x6a8] sm:$0xff] %v3495
        %v3497 = vld [vmem:[%s2641 + $0x6b0] sm:$0xff]
        %3498 = vst [vmem:[%s2642 + $0x6ac] sm:$0xff] %v3497
        %v3499 = vld [vmem:[%s2641 + $0x6a0] sm:$0xff]
        %3500 = vst [vmem:[%s2642 + $0x6b0] sm:$0xff] %v3499
        %v3501 = vld [vmem:[%s2641 + $0x6b4] sm:$0xff]
        %3502 = vst [vmem:[%s2642 + $0x6b4] sm:$0xff] %v3501
        %v3503 = vld [vmem:[%s2641 + $0x6b8] sm:$0xff]
        %3504 = vst [vmem:[%s2642 + $0x6b8] sm:$0xff] %v3503
        %v3505 = vld [vmem:[%s2641 + $0x6cc] sm:$0xff]
        %3506 = vst [vmem:[%s2642 + $0x6bc] sm:$0xff] %v3505
        %v3507 = vld [vmem:[%s2641 + $0x6bc] sm:$0xff]
        %3508 = vst [vmem:[%s2642 + $0x6c0] sm:$0xff] %v3507
        %v3509 = vld [vmem:[%s2641 + $0x6d0] sm:$0xff]
        %3510 = vst [vmem:[%s2642 + $0x6c4] sm:$0xff] %v3509
        %v3511 = vld [vmem:[%s2641 + $0x6c0] sm:$0xff]
        %3512 = vst [vmem:[%s2642 + $0x6c8] sm:$0xff] %v3511
        %v3513 = vld [vmem:[%s2641 + $0x6d4] sm:$0xff]
        %3514 = vst [vmem:[%s2642 + $0x6cc] sm:$0xff] %v3513
        %v3515 = vld [vmem:[%s2641 + $0x6c4] sm:$0xff]
        %3516 = vst [vmem:[%s2642 + $0x6d0] sm:$0xff] %v3515
        %v3517 = vld [vmem:[%s2641 + $0x6d8] sm:$0xff]
        %3518 = vst [vmem:[%s2642 + $0x6d4] sm:$0xff] %v3517
        %v3519 = vld [vmem:[%s2641 + $0x6c8] sm:$0xff]
        %3520 = vst [vmem:[%s2642 + $0x6d8] sm:$0xff] %v3519
        %v3521 = vld [vmem:[%s2641 + $0x6dc] sm:$0xff]
        %3522 = vst [vmem:[%s2642 + $0x6dc] sm:$0xff] %v3521
        %v3523 = vld [vmem:[%s2641 + $0x6e0] sm:$0xff]
        %3524 = vst [vmem:[%s2642 + $0x6e0] sm:$0xff] %v3523
        %v3525 = vld [vmem:[%s2641 + $0x6f4] sm:$0xff]
        %3526 = vst [vmem:[%s2642 + $0x6e4] sm:$0xff] %v3525
        %v3527 = vld [vmem:[%s2641 + $0x6e4] sm:$0xff]
        %3528 = vst [vmem:[%s2642 + $0x6e8] sm:$0xff] %v3527
        %v3529 = vld [vmem:[%s2641 + $0x6f8] sm:$0xff]
        %3530 = vst [vmem:[%s2642 + $0x6ec] sm:$0xff] %v3529
        %v3531 = vld [vmem:[%s2641 + $0x6e8] sm:$0xff]
        %3532 = vst [vmem:[%s2642 + $0x6f0] sm:$0xff] %v3531
        %v3533 = vld [vmem:[%s2641 + $0x6fc] sm:$0xff]
        %3534 = vst [vmem:[%s2642 + $0x6f4] sm:$0xff] %v3533
        %v3535 = vld [vmem:[%s2641 + $0x6ec] sm:$0xff]
        %3536 = vst [vmem:[%s2642 + $0x6f8] sm:$0xff] %v3535
        %v3537 = vld [vmem:[%s2641 + $0x700] sm:$0xff]
        %3538 = vst [vmem:[%s2642 + $0x6fc] sm:$0xff] %v3537
        %v3539 = vld [vmem:[%s2641 + $0x6f0] sm:$0xff]
        %3540 = vst [vmem:[%s2642 + $0x700] sm:$0xff] %v3539
        %v3541 = vld [vmem:[%s2641 + $0x704] sm:$0xff]
        %3542 = vst [vmem:[%s2642 + $0x704] sm:$0xff] %v3541
        %v3543 = vld [vmem:[%s2641 + $0x708] sm:$0xff]
        %3544 = vst [vmem:[%s2642 + $0x708] sm:$0xff] %v3543
        %v3545 = vld [vmem:[%s2641 + $0x71c] sm:$0xff]
        %3546 = vst [vmem:[%s2642 + $0x70c] sm:$0xff] %v3545
        %v3547 = vld [vmem:[%s2641 + $0x70c] sm:$0xff]
        %3548 = vst [vmem:[%s2642 + $0x710] sm:$0xff] %v3547
        %v3549 = vld [vmem:[%s2641 + $0x720] sm:$0xff]
        %3550 = vst [vmem:[%s2642 + $0x714] sm:$0xff] %v3549
        %v3551 = vld [vmem:[%s2641 + $0x710] sm:$0xff]
        %3552 = vst [vmem:[%s2642 + $0x718] sm:$0xff] %v3551
        %v3553 = vld [vmem:[%s2641 + $0x724] sm:$0xff]
        %3554 = vst [vmem:[%s2642 + $0x71c] sm:$0xff] %v3553
        %v3555 = vld [vmem:[%s2641 + $0x714] sm:$0xff]
        %3556 = vst [vmem:[%s2642 + $0x720] sm:$0xff] %v3555
        %v3557 = vld [vmem:[%s2641 + $0x728] sm:$0xff]
        %3558 = vst [vmem:[%s2642 + $0x724] sm:$0xff] %v3557
        %v3559 = vld [vmem:[%s2641 + $0x718] sm:$0xff]
        %3560 = vst [vmem:[%s2642 + $0x728] sm:$0xff] %v3559
        %v3561 = vld [vmem:[%s2641 + $0x72c] sm:$0xff]
        %3562 = vst [vmem:[%s2642 + $0x72c] sm:$0xff] %v3561
        %v3563 = vld [vmem:[%s2641 + $0x730] sm:$0xff]
        %3564 = vst [vmem:[%s2642 + $0x730] sm:$0xff] %v3563
        %v3565 = vld [vmem:[%s2641 + $0x744] sm:$0xff]
        %3566 = vst [vmem:[%s2642 + $0x734] sm:$0xff] %v3565
        %v3567 = vld [vmem:[%s2641 + $0x734] sm:$0xff]
        %3568 = vst [vmem:[%s2642 + $0x738] sm:$0xff] %v3567
        %v3569 = vld [vmem:[%s2641 + $0x748] sm:$0xff]
        %3570 = vst [vmem:[%s2642 + $0x73c] sm:$0xff] %v3569
        %v3571 = vld [vmem:[%s2641 + $0x738] sm:$0xff]
        %3572 = vst [vmem:[%s2642 + $0x740] sm:$0xff] %v3571
        %v3573 = vld [vmem:[%s2641 + $0x74c] sm:$0xff]
        %3574 = vst [vmem:[%s2642 + $0x744] sm:$0xff] %v3573
        %v3575 = vld [vmem:[%s2641 + $0x73c] sm:$0xff]
        %3576 = vst [vmem:[%s2642 + $0x748] sm:$0xff] %v3575
        %v3577 = vld [vmem:[%s2641 + $0x750] sm:$0xff]
        %3578 = vst [vmem:[%s2642 + $0x74c] sm:$0xff] %v3577
        %v3579 = vld [vmem:[%s2641 + $0x740] sm:$0xff]
        %3580 = vst [vmem:[%s2642 + $0x750] sm:$0xff] %v3579
        %v3581 = vld [vmem:[%s2641 + $0x754] sm:$0xff]
        %3582 = vst [vmem:[%s2642 + $0x754] sm:$0xff] %v3581
        %v3583 = vld [vmem:[%s2641 + $0x758] sm:$0xff]
        %3584 = vst [vmem:[%s2642 + $0x758] sm:$0xff] %v3583
        %v3585 = vld [vmem:[%s2641 + $0x76c] sm:$0xff]
        %3586 = vst [vmem:[%s2642 + $0x75c] sm:$0xff] %v3585
        %v3587 = vld [vmem:[%s2641 + $0x75c] sm:$0xff]
        %3588 = vst [vmem:[%s2642 + $0x760] sm:$0xff] %v3587
        %v3589 = vld [vmem:[%s2641 + $0x770] sm:$0xff]
        %3590 = vst [vmem:[%s2642 + $0x764] sm:$0xff] %v3589
        %v3591 = vld [vmem:[%s2641 + $0x760] sm:$0xff]
        %3592 = vst [vmem:[%s2642 + $0x768] sm:$0xff] %v3591
        %v3593 = vld [vmem:[%s2641 + $0x774] sm:$0xff]
        %3594 = vst [vmem:[%s2642 + $0x76c] sm:$0xff] %v3593
        %v3595 = vld [vmem:[%s2641 + $0x764] sm:$0xff]
        %3596 = vst [vmem:[%s2642 + $0x770] sm:$0xff] %v3595
        %v3597 = vld [vmem:[%s2641 + $0x778] sm:$0xff]
        %3598 = vst [vmem:[%s2642 + $0x774] sm:$0xff] %v3597
        %v3599 = vld [vmem:[%s2641 + $0x768] sm:$0xff]
        %3600 = vst [vmem:[%s2642 + $0x778] sm:$0xff] %v3599
        %v3601 = vld [vmem:[%s2641 + $0x77c] sm:$0xff]
        %3602 = vst [vmem:[%s2642 + $0x77c] sm:$0xff] %v3601
        %v3603 = vld [vmem:[%s2641 + $0x780] sm:$0xff]
        %3604 = vst [vmem:[%s2642 + $0x780] sm:$0xff] %v3603
        %v3605 = vld [vmem:[%s2641 + $0x794] sm:$0xff]
        %3606 = vst [vmem:[%s2642 + $0x784] sm:$0xff] %v3605
        %v3607 = vld [vmem:[%s2641 + $0x784] sm:$0xff]
        %3608 = vst [vmem:[%s2642 + $0x788] sm:$0xff] %v3607
        %v3609 = vld [vmem:[%s2641 + $0x798] sm:$0xff]
        %3610 = vst [vmem:[%s2642 + $0x78c] sm:$0xff] %v3609
        %v3611 = vld [vmem:[%s2641 + $0x788] sm:$0xff]
        %3612 = vst [vmem:[%s2642 + $0x790] sm:$0xff] %v3611
        %v3613 = vld [vmem:[%s2641 + $0x79c] sm:$0xff]
        %3614 = vst [vmem:[%s2642 + $0x794] sm:$0xff] %v3613
        %v3615 = vld [vmem:[%s2641 + $0x78c] sm:$0xff]
        %3616 = vst [vmem:[%s2642 + $0x798] sm:$0xff] %v3615
        %v3617 = vld [vmem:[%s2641 + $0x7a0] sm:$0xff]
        %3618 = vst [vmem:[%s2642 + $0x79c] sm:$0xff] %v3617
        %v3619 = vld [vmem:[%s2641 + $0x790] sm:$0xff]
        %3620 = vst [vmem:[%s2642 + $0x7a0] sm:$0xff] %v3619
        %v3621 = vld [vmem:[%s2641 + $0x7a4] sm:$0xff]
        %3622 = vst [vmem:[%s2642 + $0x7a4] sm:$0xff] %v3621
        %v3623 = vld [vmem:[%s2641 + $0x7a8] sm:$0xff]
        %3624 = vst [vmem:[%s2642 + $0x7a8] sm:$0xff] %v3623
        %v3625 = vld [vmem:[%s2641 + $0x7bc] sm:$0xff]
        %3626 = vst [vmem:[%s2642 + $0x7ac] sm:$0xff] %v3625
        %v3627 = vld [vmem:[%s2641 + $0x7ac] sm:$0xff]
        %3628 = vst [vmem:[%s2642 + $0x7b0] sm:$0xff] %v3627
        %v3629 = vld [vmem:[%s2641 + $0x7c0] sm:$0xff]
        %3630 = vst [vmem:[%s2642 + $0x7b4] sm:$0xff] %v3629
        %v3631 = vld [vmem:[%s2641 + $0x7b0] sm:$0xff]
        %3632 = vst [vmem:[%s2642 + $0x7b8] sm:$0xff] %v3631
        %v3633 = vld [vmem:[%s2641 + $0x7c4] sm:$0xff]
        %3634 = vst [vmem:[%s2642 + $0x7bc] sm:$0xff] %v3633
        %v3635 = vld [vmem:[%s2641 + $0x7b4] sm:$0xff]
        %3636 = vst [vmem:[%s2642 + $0x7c0] sm:$0xff] %v3635
        %v3637 = vld [vmem:[%s2641 + $0x7c8] sm:$0xff]
        %3638 = vst [vmem:[%s2642 + $0x7c4] sm:$0xff] %v3637
        %v3639 = vld [vmem:[%s2641 + $0x7b8] sm:$0xff]
        %3640 = vst [vmem:[%s2642 + $0x7c8] sm:$0xff] %v3639
        %v3641 = vld [vmem:[%s2641 + $0x7cc] sm:$0xff]
        %3642 = vst [vmem:[%s2642 + $0x7cc] sm:$0xff] %v3641
        %v3643 = vld [vmem:[%s2641 + $0x7d0] sm:$0xff]
        %3644 = vst [vmem:[%s2642 + $0x7d0] sm:$0xff] %v3643
        %v3645 = vld [vmem:[%s2641 + $0x7e4] sm:$0xff]
        %3646 = vst [vmem:[%s2642 + $0x7d4] sm:$0xff] %v3645
        %v3647 = vld [vmem:[%s2641 + $0x7d4] sm:$0xff]
        %3648 = vst [vmem:[%s2642 + $0x7d8] sm:$0xff] %v3647
        %v3649 = vld [vmem:[%s2641 + $0x7e8] sm:$0xff]
        %3650 = vst [vmem:[%s2642 + $0x7dc] sm:$0xff] %v3649
        %v3651 = vld [vmem:[%s2641 + $0x7d8] sm:$0xff]
        %3652 = vst [vmem:[%s2642 + $0x7e0] sm:$0xff] %v3651
        %v3653 = vld [vmem:[%s2641 + $0x7ec] sm:$0xff]
        %3654 = vst [vmem:[%s2642 + $0x7e4] sm:$0xff] %v3653
        %v3655 = vld [vmem:[%s2641 + $0x7dc] sm:$0xff]
        %3656 = vst [vmem:[%s2642 + $0x7e8] sm:$0xff] %v3655
        %v3657 = vld [vmem:[%s2641 + $0x7f0] sm:$0xff]
        %3658 = vst [vmem:[%s2642 + $0x7ec] sm:$0xff] %v3657
        %v3659 = vld [vmem:[%s2641 + $0x7e0] sm:$0xff]
        %3660 = vst [vmem:[%s2642 + $0x7f0] sm:$0xff] %v3659
        %v3661 = vld [vmem:[%s2641 + $0x7f4] sm:$0xff]
        %3662 = vst [vmem:[%s2642 + $0x7f4] sm:$0xff] %v3661
        %v3663 = vld [vmem:[%s2641 + $0x7f8] sm:$0xff]
        %3664 = vst [vmem:[%s2642 + $0x7f8] sm:$0xff] %v3663
        %v3665 = vld [vmem:[%s2641 + $0x80c] sm:$0xff]
        %3666 = vst [vmem:[%s2642 + $0x7fc] sm:$0xff] %v3665
        %v3667 = vld [vmem:[%s2641 + $0x7fc] sm:$0xff]
        %3668 = vst [vmem:[%s2642 + $0x800] sm:$0xff] %v3667
        %v3669 = vld [vmem:[%s2641 + $0x810] sm:$0xff]
        %3670 = vst [vmem:[%s2642 + $0x804] sm:$0xff] %v3669
        %v3671 = vld [vmem:[%s2641 + $0x800] sm:$0xff]
        %3672 = vst [vmem:[%s2642 + $0x808] sm:$0xff] %v3671
        %v3673 = vld [vmem:[%s2641 + $0x814] sm:$0xff]
        %3674 = vst [vmem:[%s2642 + $0x80c] sm:$0xff] %v3673
        %v3675 = vld [vmem:[%s2641 + $0x804] sm:$0xff]
        %3676 = vst [vmem:[%s2642 + $0x810] sm:$0xff] %v3675
        %v3677 = vld [vmem:[%s2641 + $0x818] sm:$0xff]
        %3678 = vst [vmem:[%s2642 + $0x814] sm:$0xff] %v3677
        %v3679 = vld [vmem:[%s2641 + $0x808] sm:$0xff]
        %3680 = vst [vmem:[%s2642 + $0x818] sm:$0xff] %v3679
        %v3681 = vld [vmem:[%s2641 + $0x81c] sm:$0xff]
        %3682 = vst [vmem:[%s2642 + $0x81c] sm:$0xff] %v3681
        %v3683 = vld [vmem:[%s2641 + $0x820] sm:$0xff]
        %3684 = vst [vmem:[%s2642 + $0x820] sm:$0xff] %v3683
        %v3685 = vld [vmem:[%s2641 + $0x834] sm:$0xff]
        %3686 = vst [vmem:[%s2642 + $0x824] sm:$0xff] %v3685
        %v3687 = vld [vmem:[%s2641 + $0x824] sm:$0xff]
        %3688 = vst [vmem:[%s2642 + $0x828] sm:$0xff] %v3687
        %v3689 = vld [vmem:[%s2641 + $0x838] sm:$0xff]
        %3690 = vst [vmem:[%s2642 + $0x82c] sm:$0xff] %v3689
        %v3691 = vld [vmem:[%s2641 + $0x828] sm:$0xff]
        %3692 = vst [vmem:[%s2642 + $0x830] sm:$0xff] %v3691
        %v3693 = vld [vmem:[%s2641 + $0x83c] sm:$0xff]
        %3694 = vst [vmem:[%s2642 + $0x834] sm:$0xff] %v3693
        %v3695 = vld [vmem:[%s2641 + $0x82c] sm:$0xff]
        %3696 = vst [vmem:[%s2642 + $0x838] sm:$0xff] %v3695
        %v3697 = vld [vmem:[%s2641 + $0x840] sm:$0xff]
        %3698 = vst [vmem:[%s2642 + $0x83c] sm:$0xff] %v3697
        %v3699 = vld [vmem:[%s2641 + $0x830] sm:$0xff]
        %3700 = vst [vmem:[%s2642 + $0x840] sm:$0xff] %v3699
        %v3701 = vld [vmem:[%s2641 + $0x844] sm:$0xff]
        %3702 = vst [vmem:[%s2642 + $0x844] sm:$0xff] %v3701
        %v3703 = vld [vmem:[%s2641 + $0x848] sm:$0xff]
        %3704 = vst [vmem:[%s2642 + $0x848] sm:$0xff] %v3703
        %v3705 = vld [vmem:[%s2641 + $0x85c] sm:$0xff]
        %3706 = vst [vmem:[%s2642 + $0x84c] sm:$0xff] %v3705
        %v3707 = vld [vmem:[%s2641 + $0x84c] sm:$0xff]
        %3708 = vst [vmem:[%s2642 + $0x850] sm:$0xff] %v3707
        %v3709 = vld [vmem:[%s2641 + $0x860] sm:$0xff]
        %3710 = vst [vmem:[%s2642 + $0x854] sm:$0xff] %v3709
        %v3711 = vld [vmem:[%s2641 + $0x850] sm:$0xff]
        %3712 = vst [vmem:[%s2642 + $0x858] sm:$0xff] %v3711
        %v3713 = vld [vmem:[%s2641 + $0x864] sm:$0xff]
        %3714 = vst [vmem:[%s2642 + $0x85c] sm:$0xff] %v3713
        %v3715 = vld [vmem:[%s2641 + $0x854] sm:$0xff]
        %3716 = vst [vmem:[%s2642 + $0x860] sm:$0xff] %v3715
        %v3717 = vld [vmem:[%s2641 + $0x868] sm:$0xff]
        %3718 = vst [vmem:[%s2642 + $0x864] sm:$0xff] %v3717
        %v3719 = vld [vmem:[%s2641 + $0x858] sm:$0xff]
        %3720 = vst [vmem:[%s2642 + $0x868] sm:$0xff] %v3719
        %v3721 = vld [vmem:[%s2641 + $0x86c] sm:$0xff]
        %3722 = vst [vmem:[%s2642 + $0x86c] sm:$0xff] %v3721
        %v3723 = vld [vmem:[%s2641 + $0x870] sm:$0xff]
        %3724 = vst [vmem:[%s2642 + $0x870] sm:$0xff] %v3723
        %v3725 = vld [vmem:[%s2641 + $0x884] sm:$0xff]
        %3726 = vst [vmem:[%s2642 + $0x874] sm:$0xff] %v3725
        %v3727 = vld [vmem:[%s2641 + $0x874] sm:$0xff]
        %3728 = vst [vmem:[%s2642 + $0x878] sm:$0xff] %v3727
        %v3729 = vld [vmem:[%s2641 + $0x888] sm:$0xff]
        %3730 = vst [vmem:[%s2642 + $0x87c] sm:$0xff] %v3729
        %v3731 = vld [vmem:[%s2641 + $0x878] sm:$0xff]
        %3732 = vst [vmem:[%s2642 + $0x880] sm:$0xff] %v3731
        %v3733 = vld [vmem:[%s2641 + $0x88c] sm:$0xff]
        %3734 = vst [vmem:[%s2642 + $0x884] sm:$0xff] %v3733
        %v3735 = vld [vmem:[%s2641 + $0x87c] sm:$0xff]
        %3736 = vst [vmem:[%s2642 + $0x888] sm:$0xff] %v3735
        %v3737 = vld [vmem:[%s2641 + $0x890] sm:$0xff]
        %3738 = vst [vmem:[%s2642 + $0x88c] sm:$0xff] %v3737
        %v3739 = vld [vmem:[%s2641 + $0x880] sm:$0xff]
        %3740 = vst [vmem:[%s2642 + $0x890] sm:$0xff] %v3739
        %v3741 = vld [vmem:[%s2641 + $0x894] sm:$0xff]
        %3742 = vst [vmem:[%s2642 + $0x894] sm:$0xff] %v3741
        %v3743 = vld [vmem:[%s2641 + $0x898] sm:$0xff]
        %3744 = vst [vmem:[%s2642 + $0x898] sm:$0xff] %v3743
        %v3745 = vld [vmem:[%s2641 + $0x8ac] sm:$0xff]
        %3746 = vst [vmem:[%s2642 + $0x89c] sm:$0xff] %v3745
        %v3747 = vld [vmem:[%s2641 + $0x89c] sm:$0xff]
        %3748 = vst [vmem:[%s2642 + $0x8a0] sm:$0xff] %v3747
        %v3749 = vld [vmem:[%s2641 + $0x8b0] sm:$0xff]
        %3750 = vst [vmem:[%s2642 + $0x8a4] sm:$0xff] %v3749
        %v3751 = vld [vmem:[%s2641 + $0x8a0] sm:$0xff]
        %3752 = vst [vmem:[%s2642 + $0x8a8] sm:$0xff] %v3751
        %v3753 = vld [vmem:[%s2641 + $0x8b4] sm:$0xff]
        %3754 = vst [vmem:[%s2642 + $0x8ac] sm:$0xff] %v3753
        %v3755 = vld [vmem:[%s2641 + $0x8a4] sm:$0xff]
        %3756 = vst [vmem:[%s2642 + $0x8b0] sm:$0xff] %v3755
        %v3757 = vld [vmem:[%s2641 + $0x8b8] sm:$0xff]
        %3758 = vst [vmem:[%s2642 + $0x8b4] sm:$0xff] %v3757
        %v3759 = vld [vmem:[%s2641 + $0x8a8] sm:$0xff]
        %3760 = vst [vmem:[%s2642 + $0x8b8] sm:$0xff] %v3759
        %v3761 = vld [vmem:[%s2641 + $0x8bc] sm:$0xff]
        %3762 = vst [vmem:[%s2642 + $0x8bc] sm:$0xff] %v3761
        %v3763 = vld [vmem:[%s2641 + $0x8c0] sm:$0xff]
        %3764 = vst [vmem:[%s2642 + $0x8c0] sm:$0xff] %v3763
        %v3765 = vld [vmem:[%s2641 + $0x8d4] sm:$0xff]
        %3766 = vst [vmem:[%s2642 + $0x8c4] sm:$0xff] %v3765
        %v3767 = vld [vmem:[%s2641 + $0x8c4] sm:$0xff]
        %3768 = vst [vmem:[%s2642 + $0x8c8] sm:$0xff] %v3767
        %v3769 = vld [vmem:[%s2641 + $0x8d8] sm:$0xff]
        %3770 = vst [vmem:[%s2642 + $0x8cc] sm:$0xff] %v3769
        %v3771 = vld [vmem:[%s2641 + $0x8c8] sm:$0xff]
        %3772 = vst [vmem:[%s2642 + $0x8d0] sm:$0xff] %v3771
        %v3773 = vld [vmem:[%s2641 + $0x8dc] sm:$0xff]
        %3774 = vst [vmem:[%s2642 + $0x8d4] sm:$0xff] %v3773
        %v3775 = vld [vmem:[%s2641 + $0x8cc] sm:$0xff]
        %3776 = vst [vmem:[%s2642 + $0x8d8] sm:$0xff] %v3775
        %v3777 = vld [vmem:[%s2641 + $0x8e0] sm:$0xff]
        %3778 = vst [vmem:[%s2642 + $0x8dc] sm:$0xff] %v3777
        %v3779 = vld [vmem:[%s2641 + $0x8d0] sm:$0xff]
        %3780 = vst [vmem:[%s2642 + $0x8e0] sm:$0xff] %v3779
        %v3781 = vld [vmem:[%s2641 + $0x8e4] sm:$0xff]
        %3782 = vst [vmem:[%s2642 + $0x8e4] sm:$0xff] %v3781
        %v3783 = vld [vmem:[%s2641 + $0x8e8] sm:$0xff]
        %3784 = vst [vmem:[%s2642 + $0x8e8] sm:$0xff] %v3783
        %v3785 = vld [vmem:[%s2641 + $0x8fc] sm:$0xff]
        %3786 = vst [vmem:[%s2642 + $0x8ec] sm:$0xff] %v3785
        %v3787 = vld [vmem:[%s2641 + $0x8ec] sm:$0xff]
        %3788 = vst [vmem:[%s2642 + $0x8f0] sm:$0xff] %v3787
        %v3789 = vld [vmem:[%s2641 + $0x900] sm:$0xff]
        %3790 = vst [vmem:[%s2642 + $0x8f4] sm:$0xff] %v3789
        %v3791 = vld [vmem:[%s2641 + $0x8f0] sm:$0xff]
        %3792 = vst [vmem:[%s2642 + $0x8f8] sm:$0xff] %v3791
        %v3793 = vld [vmem:[%s2641 + $0x904] sm:$0xff]
        %3794 = vst [vmem:[%s2642 + $0x8fc] sm:$0xff] %v3793
        %v3795 = vld [vmem:[%s2641 + $0x8f4] sm:$0xff]
        %3796 = vst [vmem:[%s2642 + $0x900] sm:$0xff] %v3795
        %v3797 = vld [vmem:[%s2641 + $0x908] sm:$0xff]
        %3798 = vst [vmem:[%s2642 + $0x904] sm:$0xff] %v3797
        %v3799 = vld [vmem:[%s2641 + $0x8f8] sm:$0xff]
        %3800 = vst [vmem:[%s2642 + $0x908] sm:$0xff] %v3799
        %v3801 = vld [vmem:[%s2641 + $0x90c] sm:$0xff]
        %3802 = vst [vmem:[%s2642 + $0x90c] sm:$0xff] %v3801
        %v3803 = vld [vmem:[%s2641 + $0x910] sm:$0xff]
        %3804 = vst [vmem:[%s2642 + $0x910] sm:$0xff] %v3803
        %v3805 = vld [vmem:[%s2641 + $0x924] sm:$0xff]
        %3806 = vst [vmem:[%s2642 + $0x914] sm:$0xff] %v3805
        %v3807 = vld [vmem:[%s2641 + $0x914] sm:$0xff]
        %3808 = vst [vmem:[%s2642 + $0x918] sm:$0xff] %v3807
        %v3809 = vld [vmem:[%s2641 + $0x928] sm:$0xff]
        %3810 = vst [vmem:[%s2642 + $0x91c] sm:$0xff] %v3809
        %v3811 = vld [vmem:[%s2641 + $0x918] sm:$0xff]
        %3812 = vst [vmem:[%s2642 + $0x920] sm:$0xff] %v3811
        %v3813 = vld [vmem:[%s2641 + $0x92c] sm:$0xff]
        %3814 = vst [vmem:[%s2642 + $0x924] sm:$0xff] %v3813
        %v3815 = vld [vmem:[%s2641 + $0x91c] sm:$0xff]
        %3816 = vst [vmem:[%s2642 + $0x928] sm:$0xff] %v3815
        %v3817 = vld [vmem:[%s2641 + $0x930] sm:$0xff]
        %3818 = vst [vmem:[%s2642 + $0x92c] sm:$0xff] %v3817
        %v3819 = vld [vmem:[%s2641 + $0x920] sm:$0xff]
        %3820 = vst [vmem:[%s2642 + $0x930] sm:$0xff] %v3819
        %v3821 = vld [vmem:[%s2641 + $0x934] sm:$0xff]
        %3822 = vst [vmem:[%s2642 + $0x934] sm:$0xff] %v3821
        %v3823 = vld [vmem:[%s2641 + $0x938] sm:$0xff]
        %3824 = vst [vmem:[%s2642 + $0x938] sm:$0xff] %v3823
        %v3825 = vld [vmem:[%s2641 + $0x94c] sm:$0xff]
        %3826 = vst [vmem:[%s2642 + $0x93c] sm:$0xff] %v3825
        %v3827 = vld [vmem:[%s2641 + $0x93c] sm:$0xff]
        %3828 = vst [vmem:[%s2642 + $0x940] sm:$0xff] %v3827
        %v3829 = vld [vmem:[%s2641 + $0x950] sm:$0xff]
        %3830 = vst [vmem:[%s2642 + $0x944] sm:$0xff] %v3829
        %v3831 = vld [vmem:[%s2641 + $0x940] sm:$0xff]
        %3832 = vst [vmem:[%s2642 + $0x948] sm:$0xff] %v3831
        %v3833 = vld [vmem:[%s2641 + $0x954] sm:$0xff]
        %3834 = vst [vmem:[%s2642 + $0x94c] sm:$0xff] %v3833
        %v3835 = vld [vmem:[%s2641 + $0x944] sm:$0xff]
        %3836 = vst [vmem:[%s2642 + $0x950] sm:$0xff] %v3835
        %v3837 = vld [vmem:[%s2641 + $0x958] sm:$0xff]
        %3838 = vst [vmem:[%s2642 + $0x954] sm:$0xff] %v3837
        %v3839 = vld [vmem:[%s2641 + $0x948] sm:$0xff]
        %3840 = vst [vmem:[%s2642 + $0x958] sm:$0xff] %v3839
        %v3841 = vld [vmem:[%s2641 + $0x95c] sm:$0xff]
        %3842 = vst [vmem:[%s2642 + $0x95c] sm:$0xff] %v3841
        %v3843 = vld [vmem:[%s2641 + $0x960] sm:$0xff]
        %3844 = vst [vmem:[%s2642 + $0x960] sm:$0xff] %v3843
        %v3845 = vld [vmem:[%s2641 + $0x974] sm:$0xff]
        %3846 = vst [vmem:[%s2642 + $0x964] sm:$0xff] %v3845
        %v3847 = vld [vmem:[%s2641 + $0x964] sm:$0xff]
        %3848 = vst [vmem:[%s2642 + $0x968] sm:$0xff] %v3847
        %v3849 = vld [vmem:[%s2641 + $0x978] sm:$0xff]
        %3850 = vst [vmem:[%s2642 + $0x96c] sm:$0xff] %v3849
        %v3851 = vld [vmem:[%s2641 + $0x968] sm:$0xff]
        %3852 = vst [vmem:[%s2642 + $0x970] sm:$0xff] %v3851
        %v3853 = vld [vmem:[%s2641 + $0x97c] sm:$0xff]
        %3854 = vst [vmem:[%s2642 + $0x974] sm:$0xff] %v3853
        %v3855 = vld [vmem:[%s2641 + $0x96c] sm:$0xff]
        %3856 = vst [vmem:[%s2642 + $0x978] sm:$0xff] %v3855
        %v3857 = vld [vmem:[%s2641 + $0x980] sm:$0xff]
        %3858 = vst [vmem:[%s2642 + $0x97c] sm:$0xff] %v3857
        %v3859 = vld [vmem:[%s2641 + $0x970] sm:$0xff]
        %3860 = vst [vmem:[%s2642 + $0x980] sm:$0xff] %v3859
        %v3861 = vld [vmem:[%s2641 + $0x984] sm:$0xff]
        %3862 = vst [vmem:[%s2642 + $0x984] sm:$0xff] %v3861
        %v3863 = vld [vmem:[%s2641 + $0x988] sm:$0xff]
        %3864 = vst [vmem:[%s2642 + $0x988] sm:$0xff] %v3863
        %v3865 = vld [vmem:[%s2641 + $0x99c] sm:$0xff]
        %3866 = vst [vmem:[%s2642 + $0x98c] sm:$0xff] %v3865
        %v3867 = vld [vmem:[%s2641 + $0x98c] sm:$0xff]
        %3868 = vst [vmem:[%s2642 + $0x990] sm:$0xff] %v3867
        %v3869 = vld [vmem:[%s2641 + $0x9a0] sm:$0xff]
        %3870 = vst [vmem:[%s2642 + $0x994] sm:$0xff] %v3869
        %v3871 = vld [vmem:[%s2641 + $0x990] sm:$0xff]
        %3872 = vst [vmem:[%s2642 + $0x998] sm:$0xff] %v3871
        %v3873 = vld [vmem:[%s2641 + $0x9a4] sm:$0xff]
        %3874 = vst [vmem:[%s2642 + $0x99c] sm:$0xff] %v3873
        %v3875 = vld [vmem:[%s2641 + $0x994] sm:$0xff]
        %3876 = vst [vmem:[%s2642 + $0x9a0] sm:$0xff] %v3875
        %v3877 = vld [vmem:[%s2641 + $0x9a8] sm:$0xff]
        %3878 = vst [vmem:[%s2642 + $0x9a4] sm:$0xff] %v3877
        %v3879 = vld [vmem:[%s2641 + $0x998] sm:$0xff]
        %3880 = vst [vmem:[%s2642 + $0x9a8] sm:$0xff] %v3879
        %v3881 = vld [vmem:[%s2641 + $0x9ac] sm:$0xff]
        %3882 = vst [vmem:[%s2642 + $0x9ac] sm:$0xff] %v3881
        %v3883 = vld [vmem:[%s2641 + $0x9b0] sm:$0xff]
        %3884 = vst [vmem:[%s2642 + $0x9b0] sm:$0xff] %v3883
        %v3885 = vld [vmem:[%s2641 + $0x9c4] sm:$0xff]
        %3886 = vst [vmem:[%s2642 + $0x9b4] sm:$0xff] %v3885
        %v3887 = vld [vmem:[%s2641 + $0x9b4] sm:$0xff]
        %3888 = vst [vmem:[%s2642 + $0x9b8] sm:$0xff] %v3887
        %v3889 = vld [vmem:[%s2641 + $0x9c8] sm:$0xff]
        %3890 = vst [vmem:[%s2642 + $0x9bc] sm:$0xff] %v3889
        %v3891 = vld [vmem:[%s2641 + $0x9b8] sm:$0xff]
        %3892 = vst [vmem:[%s2642 + $0x9c0] sm:$0xff] %v3891
        %v3893 = vld [vmem:[%s2641 + $0x9cc] sm:$0xff]
        %3894 = vst [vmem:[%s2642 + $0x9c4] sm:$0xff] %v3893
        %v3895 = vld [vmem:[%s2641 + $0x9bc] sm:$0xff]
        %3896 = vst [vmem:[%s2642 + $0x9c8] sm:$0xff] %v3895
        %v3897 = vld [vmem:[%s2641 + $0x9d0] sm:$0xff]
        %3898 = vst [vmem:[%s2642 + $0x9cc] sm:$0xff] %v3897
        %v3899 = vld [vmem:[%s2641 + $0x9c0] sm:$0xff]
        %3900 = vst [vmem:[%s2642 + $0x9d0] sm:$0xff] %v3899
        %v3901 = vld [vmem:[%s2641 + $0x9d4] sm:$0xff]
        %3902 = vst [vmem:[%s2642 + $0x9d4] sm:$0xff] %v3901
        %v3903 = vld [vmem:[%s2641 + $0x9d8] sm:$0xff]
        %3904 = vst [vmem:[%s2642 + $0x9d8] sm:$0xff] %v3903
        %v3905 = vld [vmem:[%s2641 + $0x9ec] sm:$0xff]
        %3906 = vst [vmem:[%s2642 + $0x9dc] sm:$0xff] %v3905
        %v3907 = vld [vmem:[%s2641 + $0x9dc] sm:$0xff]
        %3908 = vst [vmem:[%s2642 + $0x9e0] sm:$0xff] %v3907
        %v3909 = vld [vmem:[%s2641 + $0x9f0] sm:$0xff]
        %3910 = vst [vmem:[%s2642 + $0x9e4] sm:$0xff] %v3909
        %v3911 = vld [vmem:[%s2641 + $0x9e0] sm:$0xff]
        %3912 = vst [vmem:[%s2642 + $0x9e8] sm:$0xff] %v3911
        %v3913 = vld [vmem:[%s2641 + $0x9f4] sm:$0xff]
        %3914 = vst [vmem:[%s2642 + $0x9ec] sm:$0xff] %v3913
        %v3915 = vld [vmem:[%s2641 + $0x9e4] sm:$0xff]
        %3916 = vst [vmem:[%s2642 + $0x9f0] sm:$0xff] %v3915
        %v3917 = vld [vmem:[%s2641 + $0x9f8] sm:$0xff]
        %3918 = vst [vmem:[%s2642 + $0x9f4] sm:$0xff] %v3917
        %v3919 = vld [vmem:[%s2641 + $0x9e8] sm:$0xff]
        %3920 = vst [vmem:[%s2642 + $0x9f8] sm:$0xff] %v3919
        %v3921 = vld [vmem:[%s2641 + $0x9fc] sm:$0xff]
        %3922 = vst [vmem:[%s2642 + $0x9fc] sm:$0xff] %v3921
        %s3923 = sadd.s32 1, %s2640
        %p3924 = scmp.ge.s32.totalorder %s3923, %s2631
        %s3925 = scalar_select %p3924, 0, %s3923
        %s3926 = smul.u32 %s3925, 8
        %s3927 = smul.u32 %s3925, 8
        %s3928 = scalar_lea.vmem %s5, %s3926
        %s3929 = scalar_lea.vmem [#allocation3], %s3927
      $region56: #{cnn_1d_forward.1} parent=50 // loop_footer
        %s2637 = sadd.s32 %s2635, 1
      $region57: #{cnn_1d_forward.1} parent=50 // loop_footer_branch
        %2634 = sbr.rel target = $region53
      $region58: #{cnn_1d_forward.1} parent=50 // loop_exit
        _
      %s3930 = sshllo.u32 0, %s2626
      loop: start=0, step=1, limit=1
      $region59: #{cnn_1d_forward.1} parent=50 // loop_pre_header
        _
      $region60: #{cnn_1d_forward.1} parent=50 // loop_header
        %s3932 = sphi 0, %s3936
        %p3933 = scmp.ge.s32.totalorder %s3932, 1
        %s3937 = sphi %s2628, %s2628
        %s3938 = sphi %s2630, %s2630
      $region61: #{cnn_1d_forward.1} parent=50 // loop_header_branch
        %3935 = sbr.rel (%p3933) target = $region65
      $region62: #{cnn_1d_forward.1} parent=50 // loop_body
        %v3939 = vld [vmem:[%s3937] sm:%s3930]
        %3940 = vst [vmem:[%s3938] sm:%s3930] %v3939
        %v3941 = vld [vmem:[%s3937 + $0x14] sm:%s3930]
        %3942 = vst [vmem:[%s3938 + $0x4] sm:%s3930] %v3941
        %v3943 = vld [vmem:[%s3937 + $0x4] sm:%s3930]
        %3944 = vst [vmem:[%s3938 + $0x8] sm:%s3930] %v3943
        %v3945 = vld [vmem:[%s3937 + $0x18] sm:%s3930]
        %3946 = vst [vmem:[%s3938 + $0xc] sm:%s3930] %v3945
        %v3947 = vld [vmem:[%s3937 + $0x8] sm:%s3930]
        %3948 = vst [vmem:[%s3938 + $0x10] sm:%s3930] %v3947
        %v3949 = vld [vmem:[%s3937 + $0x1c] sm:%s3930]
        %3950 = vst [vmem:[%s3938 + $0x14] sm:%s3930] %v3949
        %v3951 = vld [vmem:[%s3937 + $0xc] sm:%s3930]
        %3952 = vst [vmem:[%s3938 + $0x18] sm:%s3930] %v3951
        %v3953 = vld [vmem:[%s3937 + $0x20] sm:%s3930]
        %3954 = vst [vmem:[%s3938 + $0x1c] sm:%s3930] %v3953
        %v3955 = vld [vmem:[%s3937 + $0x10] sm:%s3930]
        %3956 = vst [vmem:[%s3938 + $0x20] sm:%s3930] %v3955
        %v3957 = vld [vmem:[%s3937 + $0x24] sm:%s3930]
        %3958 = vst [vmem:[%s3938 + $0x24] sm:%s3930] %v3957
        %v3959 = vld [vmem:[%s3937 + $0x28] sm:%s3930]
        %3960 = vst [vmem:[%s3938 + $0x28] sm:%s3930] %v3959
        %v3961 = vld [vmem:[%s3937 + $0x3c] sm:%s3930]
        %3962 = vst [vmem:[%s3938 + $0x2c] sm:%s3930] %v3961
        %v3963 = vld [vmem:[%s3937 + $0x2c] sm:%s3930]
        %3964 = vst [vmem:[%s3938 + $0x30] sm:%s3930] %v3963
        %v3965 = vld [vmem:[%s3937 + $0x40] sm:%s3930]
        %3966 = vst [vmem:[%s3938 + $0x34] sm:%s3930] %v3965
        %v3967 = vld [vmem:[%s3937 + $0x30] sm:%s3930]
        %3968 = vst [vmem:[%s3938 + $0x38] sm:%s3930] %v3967
        %v3969 = vld [vmem:[%s3937 + $0x44] sm:%s3930]
        %3970 = vst [vmem:[%s3938 + $0x3c] sm:%s3930] %v3969
        %v3971 = vld [vmem:[%s3937 + $0x34] sm:%s3930]
        %3972 = vst [vmem:[%s3938 + $0x40] sm:%s3930] %v3971
        %v3973 = vld [vmem:[%s3937 + $0x48] sm:%s3930]
        %3974 = vst [vmem:[%s3938 + $0x44] sm:%s3930] %v3973
        %v3975 = vld [vmem:[%s3937 + $0x38] sm:%s3930]
        %3976 = vst [vmem:[%s3938 + $0x48] sm:%s3930] %v3975
        %v3977 = vld [vmem:[%s3937 + $0x4c] sm:%s3930]
        %3978 = vst [vmem:[%s3938 + $0x4c] sm:%s3930] %v3977
        %v3979 = vld [vmem:[%s3937 + $0x50] sm:%s3930]
        %3980 = vst [vmem:[%s3938 + $0x50] sm:%s3930] %v3979
        %v3981 = vld [vmem:[%s3937 + $0x64] sm:%s3930]
        %3982 = vst [vmem:[%s3938 + $0x54] sm:%s3930] %v3981
        %v3983 = vld [vmem:[%s3937 + $0x54] sm:%s3930]
        %3984 = vst [vmem:[%s3938 + $0x58] sm:%s3930] %v3983
        %v3985 = vld [vmem:[%s3937 + $0x68] sm:%s3930]
        %3986 = vst [vmem:[%s3938 + $0x5c] sm:%s3930] %v3985
        %v3987 = vld [vmem:[%s3937 + $0x58] sm:%s3930]
        %3988 = vst [vmem:[%s3938 + $0x60] sm:%s3930] %v3987
        %v3989 = vld [vmem:[%s3937 + $0x6c] sm:%s3930]
        %3990 = vst [vmem:[%s3938 + $0x64] sm:%s3930] %v3989
        %v3991 = vld [vmem:[%s3937 + $0x5c] sm:%s3930]
        %3992 = vst [vmem:[%s3938 + $0x68] sm:%s3930] %v3991
        %v3993 = vld [vmem:[%s3937 + $0x70] sm:%s3930]
        %3994 = vst [vmem:[%s3938 + $0x6c] sm:%s3930] %v3993
        %v3995 = vld [vmem:[%s3937 + $0x60] sm:%s3930]
        %3996 = vst [vmem:[%s3938 + $0x70] sm:%s3930] %v3995
        %v3997 = vld [vmem:[%s3937 + $0x74] sm:%s3930]
        %3998 = vst [vmem:[%s3938 + $0x74] sm:%s3930] %v3997
        %v3999 = vld [vmem:[%s3937 + $0x78] sm:%s3930]
        %4000 = vst [vmem:[%s3938 + $0x78] sm:%s3930] %v3999
        %v4001 = vld [vmem:[%s3937 + $0x8c] sm:%s3930]
        %4002 = vst [vmem:[%s3938 + $0x7c] sm:%s3930] %v4001
        %v4003 = vld [vmem:[%s3937 + $0x7c] sm:%s3930]
        %4004 = vst [vmem:[%s3938 + $0x80] sm:%s3930] %v4003
        %v4005 = vld [vmem:[%s3937 + $0x90] sm:%s3930]
        %4006 = vst [vmem:[%s3938 + $0x84] sm:%s3930] %v4005
        %v4007 = vld [vmem:[%s3937 + $0x80] sm:%s3930]
        %4008 = vst [vmem:[%s3938 + $0x88] sm:%s3930] %v4007
        %v4009 = vld [vmem:[%s3937 + $0x94] sm:%s3930]
        %4010 = vst [vmem:[%s3938 + $0x8c] sm:%s3930] %v4009
        %v4011 = vld [vmem:[%s3937 + $0x84] sm:%s3930]
        %4012 = vst [vmem:[%s3938 + $0x90] sm:%s3930] %v4011
        %v4013 = vld [vmem:[%s3937 + $0x98] sm:%s3930]
        %4014 = vst [vmem:[%s3938 + $0x94] sm:%s3930] %v4013
        %v4015 = vld [vmem:[%s3937 + $0x88] sm:%s3930]
        %4016 = vst [vmem:[%s3938 + $0x98] sm:%s3930] %v4015
        %v4017 = vld [vmem:[%s3937 + $0x9c] sm:%s3930]
        %4018 = vst [vmem:[%s3938 + $0x9c] sm:%s3930] %v4017
        %v4019 = vld [vmem:[%s3937 + $0xa0] sm:%s3930]
        %4020 = vst [vmem:[%s3938 + $0xa0] sm:%s3930] %v4019
        %v4021 = vld [vmem:[%s3937 + $0xb4] sm:%s3930]
        %4022 = vst [vmem:[%s3938 + $0xa4] sm:%s3930] %v4021
        %v4023 = vld [vmem:[%s3937 + $0xa4] sm:%s3930]
        %4024 = vst [vmem:[%s3938 + $0xa8] sm:%s3930] %v4023
        %v4025 = vld [vmem:[%s3937 + $0xb8] sm:%s3930]
        %4026 = vst [vmem:[%s3938 + $0xac] sm:%s3930] %v4025
        %v4027 = vld [vmem:[%s3937 + $0xa8] sm:%s3930]
        %4028 = vst [vmem:[%s3938 + $0xb0] sm:%s3930] %v4027
        %v4029 = vld [vmem:[%s3937 + $0xbc] sm:%s3930]
        %4030 = vst [vmem:[%s3938 + $0xb4] sm:%s3930] %v4029
        %v4031 = vld [vmem:[%s3937 + $0xac] sm:%s3930]
        %4032 = vst [vmem:[%s3938 + $0xb8] sm:%s3930] %v4031
        %v4033 = vld [vmem:[%s3937 + $0xc0] sm:%s3930]
        %4034 = vst [vmem:[%s3938 + $0xbc] sm:%s3930] %v4033
        %v4035 = vld [vmem:[%s3937 + $0xb0] sm:%s3930]
        %4036 = vst [vmem:[%s3938 + $0xc0] sm:%s3930] %v4035
        %v4037 = vld [vmem:[%s3937 + $0xc4] sm:%s3930]
        %4038 = vst [vmem:[%s3938 + $0xc4] sm:%s3930] %v4037
        %v4039 = vld [vmem:[%s3937 + $0xc8] sm:%s3930]
        %4040 = vst [vmem:[%s3938 + $0xc8] sm:%s3930] %v4039
        %v4041 = vld [vmem:[%s3937 + $0xdc] sm:%s3930]
        %4042 = vst [vmem:[%s3938 + $0xcc] sm:%s3930] %v4041
        %v4043 = vld [vmem:[%s3937 + $0xcc] sm:%s3930]
        %4044 = vst [vmem:[%s3938 + $0xd0] sm:%s3930] %v4043
        %v4045 = vld [vmem:[%s3937 + $0xe0] sm:%s3930]
        %4046 = vst [vmem:[%s3938 + $0xd4] sm:%s3930] %v4045
        %v4047 = vld [vmem:[%s3937 + $0xd0] sm:%s3930]
        %4048 = vst [vmem:[%s3938 + $0xd8] sm:%s3930] %v4047
        %v4049 = vld [vmem:[%s3937 + $0xe4] sm:%s3930]
        %4050 = vst [vmem:[%s3938 + $0xdc] sm:%s3930] %v4049
        %v4051 = vld [vmem:[%s3937 + $0xd4] sm:%s3930]
        %4052 = vst [vmem:[%s3938 + $0xe0] sm:%s3930] %v4051
        %v4053 = vld [vmem:[%s3937 + $0xe8] sm:%s3930]
        %4054 = vst [vmem:[%s3938 + $0xe4] sm:%s3930] %v4053
        %v4055 = vld [vmem:[%s3937 + $0xd8] sm:%s3930]
        %4056 = vst [vmem:[%s3938 + $0xe8] sm:%s3930] %v4055
        %v4057 = vld [vmem:[%s3937 + $0xec] sm:%s3930]
        %4058 = vst [vmem:[%s3938 + $0xec] sm:%s3930] %v4057
        %v4059 = vld [vmem:[%s3937 + $0xf0] sm:%s3930]
        %4060 = vst [vmem:[%s3938 + $0xf0] sm:%s3930] %v4059
        %v4061 = vld [vmem:[%s3937 + $0x104] sm:%s3930]
        %4062 = vst [vmem:[%s3938 + $0xf4] sm:%s3930] %v4061
        %v4063 = vld [vmem:[%s3937 + $0xf4] sm:%s3930]
        %4064 = vst [vmem:[%s3938 + $0xf8] sm:%s3930] %v4063
        %v4065 = vld [vmem:[%s3937 + $0x108] sm:%s3930]
        %4066 = vst [vmem:[%s3938 + $0xfc] sm:%s3930] %v4065
        %v4067 = vld [vmem:[%s3937 + $0xf8] sm:%s3930]
        %4068 = vst [vmem:[%s3938 + $0x100] sm:%s3930] %v4067
        %v4069 = vld [vmem:[%s3937 + $0x10c] sm:%s3930]
        %4070 = vst [vmem:[%s3938 + $0x104] sm:%s3930] %v4069
        %v4071 = vld [vmem:[%s3937 + $0xfc] sm:%s3930]
        %4072 = vst [vmem:[%s3938 + $0x108] sm:%s3930] %v4071
        %v4073 = vld [vmem:[%s3937 + $0x110] sm:%s3930]
        %4074 = vst [vmem:[%s3938 + $0x10c] sm:%s3930] %v4073
        %v4075 = vld [vmem:[%s3937 + $0x100] sm:%s3930]
        %4076 = vst [vmem:[%s3938 + $0x110] sm:%s3930] %v4075
        %v4077 = vld [vmem:[%s3937 + $0x114] sm:%s3930]
        %4078 = vst [vmem:[%s3938 + $0x114] sm:%s3930] %v4077
        %v4079 = vld [vmem:[%s3937 + $0x118] sm:%s3930]
        %4080 = vst [vmem:[%s3938 + $0x118] sm:%s3930] %v4079
        %v4081 = vld [vmem:[%s3937 + $0x12c] sm:%s3930]
        %4082 = vst [vmem:[%s3938 + $0x11c] sm:%s3930] %v4081
        %v4083 = vld [vmem:[%s3937 + $0x11c] sm:%s3930]
        %4084 = vst [vmem:[%s3938 + $0x120] sm:%s3930] %v4083
        %v4085 = vld [vmem:[%s3937 + $0x130] sm:%s3930]
        %4086 = vst [vmem:[%s3938 + $0x124] sm:%s3930] %v4085
        %v4087 = vld [vmem:[%s3937 + $0x120] sm:%s3930]
        %4088 = vst [vmem:[%s3938 + $0x128] sm:%s3930] %v4087
        %v4089 = vld [vmem:[%s3937 + $0x134] sm:%s3930]
        %4090 = vst [vmem:[%s3938 + $0x12c] sm:%s3930] %v4089
        %v4091 = vld [vmem:[%s3937 + $0x124] sm:%s3930]
        %4092 = vst [vmem:[%s3938 + $0x130] sm:%s3930] %v4091
        %v4093 = vld [vmem:[%s3937 + $0x138] sm:%s3930]
        %4094 = vst [vmem:[%s3938 + $0x134] sm:%s3930] %v4093
        %v4095 = vld [vmem:[%s3937 + $0x128] sm:%s3930]
        %4096 = vst [vmem:[%s3938 + $0x138] sm:%s3930] %v4095
        %v4097 = vld [vmem:[%s3937 + $0x13c] sm:%s3930]
        %4098 = vst [vmem:[%s3938 + $0x13c] sm:%s3930] %v4097
        %v4099 = vld [vmem:[%s3937 + $0x140] sm:%s3930]
        %4100 = vst [vmem:[%s3938 + $0x140] sm:%s3930] %v4099
        %v4101 = vld [vmem:[%s3937 + $0x154] sm:%s3930]
        %4102 = vst [vmem:[%s3938 + $0x144] sm:%s3930] %v4101
        %v4103 = vld [vmem:[%s3937 + $0x144] sm:%s3930]
        %4104 = vst [vmem:[%s3938 + $0x148] sm:%s3930] %v4103
        %v4105 = vld [vmem:[%s3937 + $0x158] sm:%s3930]
        %4106 = vst [vmem:[%s3938 + $0x14c] sm:%s3930] %v4105
        %v4107 = vld [vmem:[%s3937 + $0x148] sm:%s3930]
        %4108 = vst [vmem:[%s3938 + $0x150] sm:%s3930] %v4107
        %v4109 = vld [vmem:[%s3937 + $0x15c] sm:%s3930]
        %4110 = vst [vmem:[%s3938 + $0x154] sm:%s3930] %v4109
        %v4111 = vld [vmem:[%s3937 + $0x14c] sm:%s3930]
        %4112 = vst [vmem:[%s3938 + $0x158] sm:%s3930] %v4111
        %v4113 = vld [vmem:[%s3937 + $0x160] sm:%s3930]
        %4114 = vst [vmem:[%s3938 + $0x15c] sm:%s3930] %v4113
        %v4115 = vld [vmem:[%s3937 + $0x150] sm:%s3930]
        %4116 = vst [vmem:[%s3938 + $0x160] sm:%s3930] %v4115
        %v4117 = vld [vmem:[%s3937 + $0x164] sm:%s3930]
        %4118 = vst [vmem:[%s3938 + $0x164] sm:%s3930] %v4117
        %v4119 = vld [vmem:[%s3937 + $0x168] sm:%s3930]
        %4120 = vst [vmem:[%s3938 + $0x168] sm:%s3930] %v4119
        %v4121 = vld [vmem:[%s3937 + $0x17c] sm:%s3930]
        %4122 = vst [vmem:[%s3938 + $0x16c] sm:%s3930] %v4121
        %v4123 = vld [vmem:[%s3937 + $0x16c] sm:%s3930]
        %4124 = vst [vmem:[%s3938 + $0x170] sm:%s3930] %v4123
        %v4125 = vld [vmem:[%s3937 + $0x180] sm:%s3930]
        %4126 = vst [vmem:[%s3938 + $0x174] sm:%s3930] %v4125
        %v4127 = vld [vmem:[%s3937 + $0x170] sm:%s3930]
        %4128 = vst [vmem:[%s3938 + $0x178] sm:%s3930] %v4127
        %v4129 = vld [vmem:[%s3937 + $0x184] sm:%s3930]
        %4130 = vst [vmem:[%s3938 + $0x17c] sm:%s3930] %v4129
        %v4131 = vld [vmem:[%s3937 + $0x174] sm:%s3930]
        %4132 = vst [vmem:[%s3938 + $0x180] sm:%s3930] %v4131
        %v4133 = vld [vmem:[%s3937 + $0x188] sm:%s3930]
        %4134 = vst [vmem:[%s3938 + $0x184] sm:%s3930] %v4133
        %v4135 = vld [vmem:[%s3937 + $0x178] sm:%s3930]
        %4136 = vst [vmem:[%s3938 + $0x188] sm:%s3930] %v4135
        %v4137 = vld [vmem:[%s3937 + $0x18c] sm:%s3930]
        %4138 = vst [vmem:[%s3938 + $0x18c] sm:%s3930] %v4137
        %v4139 = vld [vmem:[%s3937 + $0x190] sm:%s3930]
        %4140 = vst [vmem:[%s3938 + $0x190] sm:%s3930] %v4139
        %v4141 = vld [vmem:[%s3937 + $0x1a4] sm:%s3930]
        %4142 = vst [vmem:[%s3938 + $0x194] sm:%s3930] %v4141
        %v4143 = vld [vmem:[%s3937 + $0x194] sm:%s3930]
        %4144 = vst [vmem:[%s3938 + $0x198] sm:%s3930] %v4143
        %v4145 = vld [vmem:[%s3937 + $0x1a8] sm:%s3930]
        %4146 = vst [vmem:[%s3938 + $0x19c] sm:%s3930] %v4145
        %v4147 = vld [vmem:[%s3937 + $0x198] sm:%s3930]
        %4148 = vst [vmem:[%s3938 + $0x1a0] sm:%s3930] %v4147
        %v4149 = vld [vmem:[%s3937 + $0x1ac] sm:%s3930]
        %4150 = vst [vmem:[%s3938 + $0x1a4] sm:%s3930] %v4149
        %v4151 = vld [vmem:[%s3937 + $0x19c] sm:%s3930]
        %4152 = vst [vmem:[%s3938 + $0x1a8] sm:%s3930] %v4151
        %v4153 = vld [vmem:[%s3937 + $0x1b0] sm:%s3930]
        %4154 = vst [vmem:[%s3938 + $0x1ac] sm:%s3930] %v4153
        %v4155 = vld [vmem:[%s3937 + $0x1a0] sm:%s3930]
        %4156 = vst [vmem:[%s3938 + $0x1b0] sm:%s3930] %v4155
        %v4157 = vld [vmem:[%s3937 + $0x1b4] sm:%s3930]
        %4158 = vst [vmem:[%s3938 + $0x1b4] sm:%s3930] %v4157
        %v4159 = vld [vmem:[%s3937 + $0x1b8] sm:%s3930]
        %4160 = vst [vmem:[%s3938 + $0x1b8] sm:%s3930] %v4159
        %v4161 = vld [vmem:[%s3937 + $0x1cc] sm:%s3930]
        %4162 = vst [vmem:[%s3938 + $0x1bc] sm:%s3930] %v4161
        %v4163 = vld [vmem:[%s3937 + $0x1bc] sm:%s3930]
        %4164 = vst [vmem:[%s3938 + $0x1c0] sm:%s3930] %v4163
        %v4165 = vld [vmem:[%s3937 + $0x1d0] sm:%s3930]
        %4166 = vst [vmem:[%s3938 + $0x1c4] sm:%s3930] %v4165
        %v4167 = vld [vmem:[%s3937 + $0x1c0] sm:%s3930]
        %4168 = vst [vmem:[%s3938 + $0x1c8] sm:%s3930] %v4167
        %v4169 = vld [vmem:[%s3937 + $0x1d4] sm:%s3930]
        %4170 = vst [vmem:[%s3938 + $0x1cc] sm:%s3930] %v4169
        %v4171 = vld [vmem:[%s3937 + $0x1c4] sm:%s3930]
        %4172 = vst [vmem:[%s3938 + $0x1d0] sm:%s3930] %v4171
        %v4173 = vld [vmem:[%s3937 + $0x1d8] sm:%s3930]
        %4174 = vst [vmem:[%s3938 + $0x1d4] sm:%s3930] %v4173
        %v4175 = vld [vmem:[%s3937 + $0x1c8] sm:%s3930]
        %4176 = vst [vmem:[%s3938 + $0x1d8] sm:%s3930] %v4175
        %v4177 = vld [vmem:[%s3937 + $0x1dc] sm:%s3930]
        %4178 = vst [vmem:[%s3938 + $0x1dc] sm:%s3930] %v4177
        %v4179 = vld [vmem:[%s3937 + $0x1e0] sm:%s3930]
        %4180 = vst [vmem:[%s3938 + $0x1e0] sm:%s3930] %v4179
        %v4181 = vld [vmem:[%s3937 + $0x1f4] sm:%s3930]
        %4182 = vst [vmem:[%s3938 + $0x1e4] sm:%s3930] %v4181
        %v4183 = vld [vmem:[%s3937 + $0x1e4] sm:%s3930]
        %4184 = vst [vmem:[%s3938 + $0x1e8] sm:%s3930] %v4183
        %v4185 = vld [vmem:[%s3937 + $0x1f8] sm:%s3930]
        %4186 = vst [vmem:[%s3938 + $0x1ec] sm:%s3930] %v4185
        %v4187 = vld [vmem:[%s3937 + $0x1e8] sm:%s3930]
        %4188 = vst [vmem:[%s3938 + $0x1f0] sm:%s3930] %v4187
        %v4189 = vld [vmem:[%s3937 + $0x1fc] sm:%s3930]
        %4190 = vst [vmem:[%s3938 + $0x1f4] sm:%s3930] %v4189
        %v4191 = vld [vmem:[%s3937 + $0x1ec] sm:%s3930]
        %4192 = vst [vmem:[%s3938 + $0x1f8] sm:%s3930] %v4191
        %v4193 = vld [vmem:[%s3937 + $0x200] sm:%s3930]
        %4194 = vst [vmem:[%s3938 + $0x1fc] sm:%s3930] %v4193
        %v4195 = vld [vmem:[%s3937 + $0x1f0] sm:%s3930]
        %4196 = vst [vmem:[%s3938 + $0x200] sm:%s3930] %v4195
        %v4197 = vld [vmem:[%s3937 + $0x204] sm:%s3930]
        %4198 = vst [vmem:[%s3938 + $0x204] sm:%s3930] %v4197
        %v4199 = vld [vmem:[%s3937 + $0x208] sm:%s3930]
        %4200 = vst [vmem:[%s3938 + $0x208] sm:%s3930] %v4199
        %v4201 = vld [vmem:[%s3937 + $0x21c] sm:%s3930]
        %4202 = vst [vmem:[%s3938 + $0x20c] sm:%s3930] %v4201
        %v4203 = vld [vmem:[%s3937 + $0x20c] sm:%s3930]
        %4204 = vst [vmem:[%s3938 + $0x210] sm:%s3930] %v4203
        %v4205 = vld [vmem:[%s3937 + $0x220] sm:%s3930]
        %4206 = vst [vmem:[%s3938 + $0x214] sm:%s3930] %v4205
        %v4207 = vld [vmem:[%s3937 + $0x210] sm:%s3930]
        %4208 = vst [vmem:[%s3938 + $0x218] sm:%s3930] %v4207
        %v4209 = vld [vmem:[%s3937 + $0x224] sm:%s3930]
        %4210 = vst [vmem:[%s3938 + $0x21c] sm:%s3930] %v4209
        %v4211 = vld [vmem:[%s3937 + $0x214] sm:%s3930]
        %4212 = vst [vmem:[%s3938 + $0x220] sm:%s3930] %v4211
        %v4213 = vld [vmem:[%s3937 + $0x228] sm:%s3930]
        %4214 = vst [vmem:[%s3938 + $0x224] sm:%s3930] %v4213
        %v4215 = vld [vmem:[%s3937 + $0x218] sm:%s3930]
        %4216 = vst [vmem:[%s3938 + $0x228] sm:%s3930] %v4215
        %v4217 = vld [vmem:[%s3937 + $0x22c] sm:%s3930]
        %4218 = vst [vmem:[%s3938 + $0x22c] sm:%s3930] %v4217
        %v4219 = vld [vmem:[%s3937 + $0x230] sm:%s3930]
        %4220 = vst [vmem:[%s3938 + $0x230] sm:%s3930] %v4219
        %v4221 = vld [vmem:[%s3937 + $0x244] sm:%s3930]
        %4222 = vst [vmem:[%s3938 + $0x234] sm:%s3930] %v4221
        %v4223 = vld [vmem:[%s3937 + $0x234] sm:%s3930]
        %4224 = vst [vmem:[%s3938 + $0x238] sm:%s3930] %v4223
        %v4225 = vld [vmem:[%s3937 + $0x248] sm:%s3930]
        %4226 = vst [vmem:[%s3938 + $0x23c] sm:%s3930] %v4225
        %v4227 = vld [vmem:[%s3937 + $0x238] sm:%s3930]
        %4228 = vst [vmem:[%s3938 + $0x240] sm:%s3930] %v4227
        %v4229 = vld [vmem:[%s3937 + $0x24c] sm:%s3930]
        %4230 = vst [vmem:[%s3938 + $0x244] sm:%s3930] %v4229
        %v4231 = vld [vmem:[%s3937 + $0x23c] sm:%s3930]
        %4232 = vst [vmem:[%s3938 + $0x248] sm:%s3930] %v4231
        %v4233 = vld [vmem:[%s3937 + $0x250] sm:%s3930]
        %4234 = vst [vmem:[%s3938 + $0x24c] sm:%s3930] %v4233
        %v4235 = vld [vmem:[%s3937 + $0x240] sm:%s3930]
        %4236 = vst [vmem:[%s3938 + $0x250] sm:%s3930] %v4235
        %v4237 = vld [vmem:[%s3937 + $0x254] sm:%s3930]
        %4238 = vst [vmem:[%s3938 + $0x254] sm:%s3930] %v4237
        %v4239 = vld [vmem:[%s3937 + $0x258] sm:%s3930]
        %4240 = vst [vmem:[%s3938 + $0x258] sm:%s3930] %v4239
        %v4241 = vld [vmem:[%s3937 + $0x26c] sm:%s3930]
        %4242 = vst [vmem:[%s3938 + $0x25c] sm:%s3930] %v4241
        %v4243 = vld [vmem:[%s3937 + $0x25c] sm:%s3930]
        %4244 = vst [vmem:[%s3938 + $0x260] sm:%s3930] %v4243
        %v4245 = vld [vmem:[%s3937 + $0x270] sm:%s3930]
        %4246 = vst [vmem:[%s3938 + $0x264] sm:%s3930] %v4245
        %v4247 = vld [vmem:[%s3937 + $0x260] sm:%s3930]
        %4248 = vst [vmem:[%s3938 + $0x268] sm:%s3930] %v4247
        %v4249 = vld [vmem:[%s3937 + $0x274] sm:%s3930]
        %4250 = vst [vmem:[%s3938 + $0x26c] sm:%s3930] %v4249
        %v4251 = vld [vmem:[%s3937 + $0x264] sm:%s3930]
        %4252 = vst [vmem:[%s3938 + $0x270] sm:%s3930] %v4251
        %v4253 = vld [vmem:[%s3937 + $0x278] sm:%s3930]
        %4254 = vst [vmem:[%s3938 + $0x274] sm:%s3930] %v4253
        %v4255 = vld [vmem:[%s3937 + $0x268] sm:%s3930]
        %4256 = vst [vmem:[%s3938 + $0x278] sm:%s3930] %v4255
        %v4257 = vld [vmem:[%s3937 + $0x27c] sm:%s3930]
        %4258 = vst [vmem:[%s3938 + $0x27c] sm:%s3930] %v4257
        %v4259 = vld [vmem:[%s3937 + $0x280] sm:%s3930]
        %4260 = vst [vmem:[%s3938 + $0x280] sm:%s3930] %v4259
        %v4261 = vld [vmem:[%s3937 + $0x294] sm:%s3930]
        %4262 = vst [vmem:[%s3938 + $0x284] sm:%s3930] %v4261
        %v4263 = vld [vmem:[%s3937 + $0x284] sm:%s3930]
        %4264 = vst [vmem:[%s3938 + $0x288] sm:%s3930] %v4263
        %v4265 = vld [vmem:[%s3937 + $0x298] sm:%s3930]
        %4266 = vst [vmem:[%s3938 + $0x28c] sm:%s3930] %v4265
        %v4267 = vld [vmem:[%s3937 + $0x288] sm:%s3930]
        %4268 = vst [vmem:[%s3938 + $0x290] sm:%s3930] %v4267
        %v4269 = vld [vmem:[%s3937 + $0x29c] sm:%s3930]
        %4270 = vst [vmem:[%s3938 + $0x294] sm:%s3930] %v4269
        %v4271 = vld [vmem:[%s3937 + $0x28c] sm:%s3930]
        %4272 = vst [vmem:[%s3938 + $0x298] sm:%s3930] %v4271
        %v4273 = vld [vmem:[%s3937 + $0x2a0] sm:%s3930]
        %4274 = vst [vmem:[%s3938 + $0x29c] sm:%s3930] %v4273
        %v4275 = vld [vmem:[%s3937 + $0x290] sm:%s3930]
        %4276 = vst [vmem:[%s3938 + $0x2a0] sm:%s3930] %v4275
        %v4277 = vld [vmem:[%s3937 + $0x2a4] sm:%s3930]
        %4278 = vst [vmem:[%s3938 + $0x2a4] sm:%s3930] %v4277
        %v4279 = vld [vmem:[%s3937 + $0x2a8] sm:%s3930]
        %4280 = vst [vmem:[%s3938 + $0x2a8] sm:%s3930] %v4279
        %v4281 = vld [vmem:[%s3937 + $0x2bc] sm:%s3930]
        %4282 = vst [vmem:[%s3938 + $0x2ac] sm:%s3930] %v4281
        %v4283 = vld [vmem:[%s3937 + $0x2ac] sm:%s3930]
        %4284 = vst [vmem:[%s3938 + $0x2b0] sm:%s3930] %v4283
        %v4285 = vld [vmem:[%s3937 + $0x2c0] sm:%s3930]
        %4286 = vst [vmem:[%s3938 + $0x2b4] sm:%s3930] %v4285
        %v4287 = vld [vmem:[%s3937 + $0x2b0] sm:%s3930]
        %4288 = vst [vmem:[%s3938 + $0x2b8] sm:%s3930] %v4287
        %v4289 = vld [vmem:[%s3937 + $0x2c4] sm:%s3930]
        %4290 = vst [vmem:[%s3938 + $0x2bc] sm:%s3930] %v4289
        %v4291 = vld [vmem:[%s3937 + $0x2b4] sm:%s3930]
        %4292 = vst [vmem:[%s3938 + $0x2c0] sm:%s3930] %v4291
        %v4293 = vld [vmem:[%s3937 + $0x2c8] sm:%s3930]
        %4294 = vst [vmem:[%s3938 + $0x2c4] sm:%s3930] %v4293
        %v4295 = vld [vmem:[%s3937 + $0x2b8] sm:%s3930]
        %4296 = vst [vmem:[%s3938 + $0x2c8] sm:%s3930] %v4295
        %v4297 = vld [vmem:[%s3937 + $0x2cc] sm:%s3930]
        %4298 = vst [vmem:[%s3938 + $0x2cc] sm:%s3930] %v4297
        %v4299 = vld [vmem:[%s3937 + $0x2d0] sm:%s3930]
        %4300 = vst [vmem:[%s3938 + $0x2d0] sm:%s3930] %v4299
        %v4301 = vld [vmem:[%s3937 + $0x2e4] sm:%s3930]
        %4302 = vst [vmem:[%s3938 + $0x2d4] sm:%s3930] %v4301
        %v4303 = vld [vmem:[%s3937 + $0x2d4] sm:%s3930]
        %4304 = vst [vmem:[%s3938 + $0x2d8] sm:%s3930] %v4303
        %v4305 = vld [vmem:[%s3937 + $0x2e8] sm:%s3930]
        %4306 = vst [vmem:[%s3938 + $0x2dc] sm:%s3930] %v4305
        %v4307 = vld [vmem:[%s3937 + $0x2d8] sm:%s3930]
        %4308 = vst [vmem:[%s3938 + $0x2e0] sm:%s3930] %v4307
        %v4309 = vld [vmem:[%s3937 + $0x2ec] sm:%s3930]
        %4310 = vst [vmem:[%s3938 + $0x2e4] sm:%s3930] %v4309
        %v4311 = vld [vmem:[%s3937 + $0x2dc] sm:%s3930]
        %4312 = vst [vmem:[%s3938 + $0x2e8] sm:%s3930] %v4311
        %v4313 = vld [vmem:[%s3937 + $0x2f0] sm:%s3930]
        %4314 = vst [vmem:[%s3938 + $0x2ec] sm:%s3930] %v4313
        %v4315 = vld [vmem:[%s3937 + $0x2e0] sm:%s3930]
        %4316 = vst [vmem:[%s3938 + $0x2f0] sm:%s3930] %v4315
        %v4317 = vld [vmem:[%s3937 + $0x2f4] sm:%s3930]
        %4318 = vst [vmem:[%s3938 + $0x2f4] sm:%s3930] %v4317
        %v4319 = vld [vmem:[%s3937 + $0x2f8] sm:%s3930]
        %4320 = vst [vmem:[%s3938 + $0x2f8] sm:%s3930] %v4319
        %v4321 = vld [vmem:[%s3937 + $0x30c] sm:%s3930]
        %4322 = vst [vmem:[%s3938 + $0x2fc] sm:%s3930] %v4321
        %v4323 = vld [vmem:[%s3937 + $0x2fc] sm:%s3930]
        %4324 = vst [vmem:[%s3938 + $0x300] sm:%s3930] %v4323
        %v4325 = vld [vmem:[%s3937 + $0x310] sm:%s3930]
        %4326 = vst [vmem:[%s3938 + $0x304] sm:%s3930] %v4325
        %v4327 = vld [vmem:[%s3937 + $0x300] sm:%s3930]
        %4328 = vst [vmem:[%s3938 + $0x308] sm:%s3930] %v4327
        %v4329 = vld [vmem:[%s3937 + $0x314] sm:%s3930]
        %4330 = vst [vmem:[%s3938 + $0x30c] sm:%s3930] %v4329
        %v4331 = vld [vmem:[%s3937 + $0x304] sm:%s3930]
        %4332 = vst [vmem:[%s3938 + $0x310] sm:%s3930] %v4331
        %v4333 = vld [vmem:[%s3937 + $0x318] sm:%s3930]
        %4334 = vst [vmem:[%s3938 + $0x314] sm:%s3930] %v4333
        %v4335 = vld [vmem:[%s3937 + $0x308] sm:%s3930]
        %4336 = vst [vmem:[%s3938 + $0x318] sm:%s3930] %v4335
        %v4337 = vld [vmem:[%s3937 + $0x31c] sm:%s3930]
        %4338 = vst [vmem:[%s3938 + $0x31c] sm:%s3930] %v4337
        %v4339 = vld [vmem:[%s3937 + $0x320] sm:%s3930]
        %4340 = vst [vmem:[%s3938 + $0x320] sm:%s3930] %v4339
        %v4341 = vld [vmem:[%s3937 + $0x334] sm:%s3930]
        %4342 = vst [vmem:[%s3938 + $0x324] sm:%s3930] %v4341
        %v4343 = vld [vmem:[%s3937 + $0x324] sm:%s3930]
        %4344 = vst [vmem:[%s3938 + $0x328] sm:%s3930] %v4343
        %v4345 = vld [vmem:[%s3937 + $0x338] sm:%s3930]
        %4346 = vst [vmem:[%s3938 + $0x32c] sm:%s3930] %v4345
        %v4347 = vld [vmem:[%s3937 + $0x328] sm:%s3930]
        %4348 = vst [vmem:[%s3938 + $0x330] sm:%s3930] %v4347
        %v4349 = vld [vmem:[%s3937 + $0x33c] sm:%s3930]
        %4350 = vst [vmem:[%s3938 + $0x334] sm:%s3930] %v4349
        %v4351 = vld [vmem:[%s3937 + $0x32c] sm:%s3930]
        %4352 = vst [vmem:[%s3938 + $0x338] sm:%s3930] %v4351
        %v4353 = vld [vmem:[%s3937 + $0x340] sm:%s3930]
        %4354 = vst [vmem:[%s3938 + $0x33c] sm:%s3930] %v4353
        %v4355 = vld [vmem:[%s3937 + $0x330] sm:%s3930]
        %4356 = vst [vmem:[%s3938 + $0x340] sm:%s3930] %v4355
        %v4357 = vld [vmem:[%s3937 + $0x344] sm:%s3930]
        %4358 = vst [vmem:[%s3938 + $0x344] sm:%s3930] %v4357
        %v4359 = vld [vmem:[%s3937 + $0x348] sm:%s3930]
        %4360 = vst [vmem:[%s3938 + $0x348] sm:%s3930] %v4359
        %v4361 = vld [vmem:[%s3937 + $0x35c] sm:%s3930]
        %4362 = vst [vmem:[%s3938 + $0x34c] sm:%s3930] %v4361
        %v4363 = vld [vmem:[%s3937 + $0x34c] sm:%s3930]
        %4364 = vst [vmem:[%s3938 + $0x350] sm:%s3930] %v4363
        %v4365 = vld [vmem:[%s3937 + $0x360] sm:%s3930]
        %4366 = vst [vmem:[%s3938 + $0x354] sm:%s3930] %v4365
        %v4367 = vld [vmem:[%s3937 + $0x350] sm:%s3930]
        %4368 = vst [vmem:[%s3938 + $0x358] sm:%s3930] %v4367
        %v4369 = vld [vmem:[%s3937 + $0x364] sm:%s3930]
        %4370 = vst [vmem:[%s3938 + $0x35c] sm:%s3930] %v4369
        %v4371 = vld [vmem:[%s3937 + $0x354] sm:%s3930]
        %4372 = vst [vmem:[%s3938 + $0x360] sm:%s3930] %v4371
        %v4373 = vld [vmem:[%s3937 + $0x368] sm:%s3930]
        %4374 = vst [vmem:[%s3938 + $0x364] sm:%s3930] %v4373
        %v4375 = vld [vmem:[%s3937 + $0x358] sm:%s3930]
        %4376 = vst [vmem:[%s3938 + $0x368] sm:%s3930] %v4375
        %v4377 = vld [vmem:[%s3937 + $0x36c] sm:%s3930]
        %4378 = vst [vmem:[%s3938 + $0x36c] sm:%s3930] %v4377
        %v4379 = vld [vmem:[%s3937 + $0x370] sm:%s3930]
        %4380 = vst [vmem:[%s3938 + $0x370] sm:%s3930] %v4379
        %v4381 = vld [vmem:[%s3937 + $0x384] sm:%s3930]
        %4382 = vst [vmem:[%s3938 + $0x374] sm:%s3930] %v4381
        %v4383 = vld [vmem:[%s3937 + $0x374] sm:%s3930]
        %4384 = vst [vmem:[%s3938 + $0x378] sm:%s3930] %v4383
        %v4385 = vld [vmem:[%s3937 + $0x388] sm:%s3930]
        %4386 = vst [vmem:[%s3938 + $0x37c] sm:%s3930] %v4385
        %v4387 = vld [vmem:[%s3937 + $0x378] sm:%s3930]
        %4388 = vst [vmem:[%s3938 + $0x380] sm:%s3930] %v4387
        %v4389 = vld [vmem:[%s3937 + $0x38c] sm:%s3930]
        %4390 = vst [vmem:[%s3938 + $0x384] sm:%s3930] %v4389
        %v4391 = vld [vmem:[%s3937 + $0x37c] sm:%s3930]
        %4392 = vst [vmem:[%s3938 + $0x388] sm:%s3930] %v4391
        %v4393 = vld [vmem:[%s3937 + $0x390] sm:%s3930]
        %4394 = vst [vmem:[%s3938 + $0x38c] sm:%s3930] %v4393
        %v4395 = vld [vmem:[%s3937 + $0x380] sm:%s3930]
        %4396 = vst [vmem:[%s3938 + $0x390] sm:%s3930] %v4395
        %v4397 = vld [vmem:[%s3937 + $0x394] sm:%s3930]
        %4398 = vst [vmem:[%s3938 + $0x394] sm:%s3930] %v4397
        %v4399 = vld [vmem:[%s3937 + $0x398] sm:%s3930]
        %4400 = vst [vmem:[%s3938 + $0x398] sm:%s3930] %v4399
        %v4401 = vld [vmem:[%s3937 + $0x3ac] sm:%s3930]
        %4402 = vst [vmem:[%s3938 + $0x39c] sm:%s3930] %v4401
        %v4403 = vld [vmem:[%s3937 + $0x39c] sm:%s3930]
        %4404 = vst [vmem:[%s3938 + $0x3a0] sm:%s3930] %v4403
        %v4405 = vld [vmem:[%s3937 + $0x3b0] sm:%s3930]
        %4406 = vst [vmem:[%s3938 + $0x3a4] sm:%s3930] %v4405
        %v4407 = vld [vmem:[%s3937 + $0x3a0] sm:%s3930]
        %4408 = vst [vmem:[%s3938 + $0x3a8] sm:%s3930] %v4407
        %v4409 = vld [vmem:[%s3937 + $0x3b4] sm:%s3930]
        %4410 = vst [vmem:[%s3938 + $0x3ac] sm:%s3930] %v4409
        %v4411 = vld [vmem:[%s3937 + $0x3a4] sm:%s3930]
        %4412 = vst [vmem:[%s3938 + $0x3b0] sm:%s3930] %v4411
        %v4413 = vld [vmem:[%s3937 + $0x3b8] sm:%s3930]
        %4414 = vst [vmem:[%s3938 + $0x3b4] sm:%s3930] %v4413
        %v4415 = vld [vmem:[%s3937 + $0x3a8] sm:%s3930]
        %4416 = vst [vmem:[%s3938 + $0x3b8] sm:%s3930] %v4415
        %v4417 = vld [vmem:[%s3937 + $0x3bc] sm:%s3930]
        %4418 = vst [vmem:[%s3938 + $0x3bc] sm:%s3930] %v4417
        %v4419 = vld [vmem:[%s3937 + $0x3c0] sm:%s3930]
        %4420 = vst [vmem:[%s3938 + $0x3c0] sm:%s3930] %v4419
        %v4421 = vld [vmem:[%s3937 + $0x3d4] sm:%s3930]
        %4422 = vst [vmem:[%s3938 + $0x3c4] sm:%s3930] %v4421
        %v4423 = vld [vmem:[%s3937 + $0x3c4] sm:%s3930]
        %4424 = vst [vmem:[%s3938 + $0x3c8] sm:%s3930] %v4423
        %v4425 = vld [vmem:[%s3937 + $0x3d8] sm:%s3930]
        %4426 = vst [vmem:[%s3938 + $0x3cc] sm:%s3930] %v4425
        %v4427 = vld [vmem:[%s3937 + $0x3c8] sm:%s3930]
        %4428 = vst [vmem:[%s3938 + $0x3d0] sm:%s3930] %v4427
        %v4429 = vld [vmem:[%s3937 + $0x3dc] sm:%s3930]
        %4430 = vst [vmem:[%s3938 + $0x3d4] sm:%s3930] %v4429
        %v4431 = vld [vmem:[%s3937 + $0x3cc] sm:%s3930]
        %4432 = vst [vmem:[%s3938 + $0x3d8] sm:%s3930] %v4431
        %v4433 = vld [vmem:[%s3937 + $0x3e0] sm:%s3930]
        %4434 = vst [vmem:[%s3938 + $0x3dc] sm:%s3930] %v4433
        %v4435 = vld [vmem:[%s3937 + $0x3d0] sm:%s3930]
        %4436 = vst [vmem:[%s3938 + $0x3e0] sm:%s3930] %v4435
        %v4437 = vld [vmem:[%s3937 + $0x3e4] sm:%s3930]
        %4438 = vst [vmem:[%s3938 + $0x3e4] sm:%s3930] %v4437
        %v4439 = vld [vmem:[%s3937 + $0x3e8] sm:%s3930]
        %4440 = vst [vmem:[%s3938 + $0x3e8] sm:%s3930] %v4439
        %v4441 = vld [vmem:[%s3937 + $0x3fc] sm:%s3930]
        %4442 = vst [vmem:[%s3938 + $0x3ec] sm:%s3930] %v4441
        %v4443 = vld [vmem:[%s3937 + $0x3ec] sm:%s3930]
        %4444 = vst [vmem:[%s3938 + $0x3f0] sm:%s3930] %v4443
        %v4445 = vld [vmem:[%s3937 + $0x400] sm:%s3930]
        %4446 = vst [vmem:[%s3938 + $0x3f4] sm:%s3930] %v4445
        %v4447 = vld [vmem:[%s3937 + $0x3f0] sm:%s3930]
        %4448 = vst [vmem:[%s3938 + $0x3f8] sm:%s3930] %v4447
        %v4449 = vld [vmem:[%s3937 + $0x404] sm:%s3930]
        %4450 = vst [vmem:[%s3938 + $0x3fc] sm:%s3930] %v4449
        %v4451 = vld [vmem:[%s3937 + $0x3f4] sm:%s3930]
        %4452 = vst [vmem:[%s3938 + $0x400] sm:%s3930] %v4451
        %v4453 = vld [vmem:[%s3937 + $0x408] sm:%s3930]
        %4454 = vst [vmem:[%s3938 + $0x404] sm:%s3930] %v4453
        %v4455 = vld [vmem:[%s3937 + $0x3f8] sm:%s3930]
        %4456 = vst [vmem:[%s3938 + $0x408] sm:%s3930] %v4455
        %v4457 = vld [vmem:[%s3937 + $0x40c] sm:%s3930]
        %4458 = vst [vmem:[%s3938 + $0x40c] sm:%s3930] %v4457
        %v4459 = vld [vmem:[%s3937 + $0x410] sm:%s3930]
        %4460 = vst [vmem:[%s3938 + $0x410] sm:%s3930] %v4459
        %v4461 = vld [vmem:[%s3937 + $0x424] sm:%s3930]
        %4462 = vst [vmem:[%s3938 + $0x414] sm:%s3930] %v4461
        %v4463 = vld [vmem:[%s3937 + $0x414] sm:%s3930]
        %4464 = vst [vmem:[%s3938 + $0x418] sm:%s3930] %v4463
        %v4465 = vld [vmem:[%s3937 + $0x428] sm:%s3930]
        %4466 = vst [vmem:[%s3938 + $0x41c] sm:%s3930] %v4465
        %v4467 = vld [vmem:[%s3937 + $0x418] sm:%s3930]
        %4468 = vst [vmem:[%s3938 + $0x420] sm:%s3930] %v4467
        %v4469 = vld [vmem:[%s3937 + $0x42c] sm:%s3930]
        %4470 = vst [vmem:[%s3938 + $0x424] sm:%s3930] %v4469
        %v4471 = vld [vmem:[%s3937 + $0x41c] sm:%s3930]
        %4472 = vst [vmem:[%s3938 + $0x428] sm:%s3930] %v4471
        %v4473 = vld [vmem:[%s3937 + $0x430] sm:%s3930]
        %4474 = vst [vmem:[%s3938 + $0x42c] sm:%s3930] %v4473
        %v4475 = vld [vmem:[%s3937 + $0x420] sm:%s3930]
        %4476 = vst [vmem:[%s3938 + $0x430] sm:%s3930] %v4475
        %v4477 = vld [vmem:[%s3937 + $0x434] sm:%s3930]
        %4478 = vst [vmem:[%s3938 + $0x434] sm:%s3930] %v4477
        %v4479 = vld [vmem:[%s3937 + $0x438] sm:%s3930]
        %4480 = vst [vmem:[%s3938 + $0x438] sm:%s3930] %v4479
        %v4481 = vld [vmem:[%s3937 + $0x44c] sm:%s3930]
        %4482 = vst [vmem:[%s3938 + $0x43c] sm:%s3930] %v4481
        %v4483 = vld [vmem:[%s3937 + $0x43c] sm:%s3930]
        %4484 = vst [vmem:[%s3938 + $0x440] sm:%s3930] %v4483
        %v4485 = vld [vmem:[%s3937 + $0x450] sm:%s3930]
        %4486 = vst [vmem:[%s3938 + $0x444] sm:%s3930] %v4485
        %v4487 = vld [vmem:[%s3937 + $0x440] sm:%s3930]
        %4488 = vst [vmem:[%s3938 + $0x448] sm:%s3930] %v4487
        %v4489 = vld [vmem:[%s3937 + $0x454] sm:%s3930]
        %4490 = vst [vmem:[%s3938 + $0x44c] sm:%s3930] %v4489
        %v4491 = vld [vmem:[%s3937 + $0x444] sm:%s3930]
        %4492 = vst [vmem:[%s3938 + $0x450] sm:%s3930] %v4491
        %v4493 = vld [vmem:[%s3937 + $0x458] sm:%s3930]
        %4494 = vst [vmem:[%s3938 + $0x454] sm:%s3930] %v4493
        %v4495 = vld [vmem:[%s3937 + $0x448] sm:%s3930]
        %4496 = vst [vmem:[%s3938 + $0x458] sm:%s3930] %v4495
        %v4497 = vld [vmem:[%s3937 + $0x45c] sm:%s3930]
        %4498 = vst [vmem:[%s3938 + $0x45c] sm:%s3930] %v4497
        %v4499 = vld [vmem:[%s3937 + $0x460] sm:%s3930]
        %4500 = vst [vmem:[%s3938 + $0x460] sm:%s3930] %v4499
        %v4501 = vld [vmem:[%s3937 + $0x474] sm:%s3930]
        %4502 = vst [vmem:[%s3938 + $0x464] sm:%s3930] %v4501
        %v4503 = vld [vmem:[%s3937 + $0x464] sm:%s3930]
        %4504 = vst [vmem:[%s3938 + $0x468] sm:%s3930] %v4503
        %v4505 = vld [vmem:[%s3937 + $0x478] sm:%s3930]
        %4506 = vst [vmem:[%s3938 + $0x46c] sm:%s3930] %v4505
        %v4507 = vld [vmem:[%s3937 + $0x468] sm:%s3930]
        %4508 = vst [vmem:[%s3938 + $0x470] sm:%s3930] %v4507
        %v4509 = vld [vmem:[%s3937 + $0x47c] sm:%s3930]
        %4510 = vst [vmem:[%s3938 + $0x474] sm:%s3930] %v4509
        %v4511 = vld [vmem:[%s3937 + $0x46c] sm:%s3930]
        %4512 = vst [vmem:[%s3938 + $0x478] sm:%s3930] %v4511
        %v4513 = vld [vmem:[%s3937 + $0x480] sm:%s3930]
        %4514 = vst [vmem:[%s3938 + $0x47c] sm:%s3930] %v4513
        %v4515 = vld [vmem:[%s3937 + $0x470] sm:%s3930]
        %4516 = vst [vmem:[%s3938 + $0x480] sm:%s3930] %v4515
        %v4517 = vld [vmem:[%s3937 + $0x484] sm:%s3930]
        %4518 = vst [vmem:[%s3938 + $0x484] sm:%s3930] %v4517
        %v4519 = vld [vmem:[%s3937 + $0x488] sm:%s3930]
        %4520 = vst [vmem:[%s3938 + $0x488] sm:%s3930] %v4519
        %v4521 = vld [vmem:[%s3937 + $0x49c] sm:%s3930]
        %4522 = vst [vmem:[%s3938 + $0x48c] sm:%s3930] %v4521
        %v4523 = vld [vmem:[%s3937 + $0x48c] sm:%s3930]
        %4524 = vst [vmem:[%s3938 + $0x490] sm:%s3930] %v4523
        %v4525 = vld [vmem:[%s3937 + $0x4a0] sm:%s3930]
        %4526 = vst [vmem:[%s3938 + $0x494] sm:%s3930] %v4525
        %v4527 = vld [vmem:[%s3937 + $0x490] sm:%s3930]
        %4528 = vst [vmem:[%s3938 + $0x498] sm:%s3930] %v4527
        %v4529 = vld [vmem:[%s3937 + $0x4a4] sm:%s3930]
        %4530 = vst [vmem:[%s3938 + $0x49c] sm:%s3930] %v4529
        %v4531 = vld [vmem:[%s3937 + $0x494] sm:%s3930]
        %4532 = vst [vmem:[%s3938 + $0x4a0] sm:%s3930] %v4531
        %v4533 = vld [vmem:[%s3937 + $0x4a8] sm:%s3930]
        %4534 = vst [vmem:[%s3938 + $0x4a4] sm:%s3930] %v4533
        %v4535 = vld [vmem:[%s3937 + $0x498] sm:%s3930]
        %4536 = vst [vmem:[%s3938 + $0x4a8] sm:%s3930] %v4535
        %v4537 = vld [vmem:[%s3937 + $0x4ac] sm:%s3930]
        %4538 = vst [vmem:[%s3938 + $0x4ac] sm:%s3930] %v4537
        %v4539 = vld [vmem:[%s3937 + $0x4b0] sm:%s3930]
        %4540 = vst [vmem:[%s3938 + $0x4b0] sm:%s3930] %v4539
        %v4541 = vld [vmem:[%s3937 + $0x4c4] sm:%s3930]
        %4542 = vst [vmem:[%s3938 + $0x4b4] sm:%s3930] %v4541
        %v4543 = vld [vmem:[%s3937 + $0x4b4] sm:%s3930]
        %4544 = vst [vmem:[%s3938 + $0x4b8] sm:%s3930] %v4543
        %v4545 = vld [vmem:[%s3937 + $0x4c8] sm:%s3930]
        %4546 = vst [vmem:[%s3938 + $0x4bc] sm:%s3930] %v4545
        %v4547 = vld [vmem:[%s3937 + $0x4b8] sm:%s3930]
        %4548 = vst [vmem:[%s3938 + $0x4c0] sm:%s3930] %v4547
        %v4549 = vld [vmem:[%s3937 + $0x4cc] sm:%s3930]
        %4550 = vst [vmem:[%s3938 + $0x4c4] sm:%s3930] %v4549
        %v4551 = vld [vmem:[%s3937 + $0x4bc] sm:%s3930]
        %4552 = vst [vmem:[%s3938 + $0x4c8] sm:%s3930] %v4551
        %v4553 = vld [vmem:[%s3937 + $0x4d0] sm:%s3930]
        %4554 = vst [vmem:[%s3938 + $0x4cc] sm:%s3930] %v4553
        %v4555 = vld [vmem:[%s3937 + $0x4c0] sm:%s3930]
        %4556 = vst [vmem:[%s3938 + $0x4d0] sm:%s3930] %v4555
        %v4557 = vld [vmem:[%s3937 + $0x4d4] sm:%s3930]
        %4558 = vst [vmem:[%s3938 + $0x4d4] sm:%s3930] %v4557
        %v4559 = vld [vmem:[%s3937 + $0x4d8] sm:%s3930]
        %4560 = vst [vmem:[%s3938 + $0x4d8] sm:%s3930] %v4559
        %v4561 = vld [vmem:[%s3937 + $0x4ec] sm:%s3930]
        %4562 = vst [vmem:[%s3938 + $0x4dc] sm:%s3930] %v4561
        %v4563 = vld [vmem:[%s3937 + $0x4dc] sm:%s3930]
        %4564 = vst [vmem:[%s3938 + $0x4e0] sm:%s3930] %v4563
        %v4565 = vld [vmem:[%s3937 + $0x4f0] sm:%s3930]
        %4566 = vst [vmem:[%s3938 + $0x4e4] sm:%s3930] %v4565
        %v4567 = vld [vmem:[%s3937 + $0x4e0] sm:%s3930]
        %4568 = vst [vmem:[%s3938 + $0x4e8] sm:%s3930] %v4567
        %v4569 = vld [vmem:[%s3937 + $0x4f4] sm:%s3930]
        %4570 = vst [vmem:[%s3938 + $0x4ec] sm:%s3930] %v4569
        %v4571 = vld [vmem:[%s3937 + $0x4e4] sm:%s3930]
        %4572 = vst [vmem:[%s3938 + $0x4f0] sm:%s3930] %v4571
        %v4573 = vld [vmem:[%s3937 + $0x4f8] sm:%s3930]
        %4574 = vst [vmem:[%s3938 + $0x4f4] sm:%s3930] %v4573
        %v4575 = vld [vmem:[%s3937 + $0x4e8] sm:%s3930]
        %4576 = vst [vmem:[%s3938 + $0x4f8] sm:%s3930] %v4575
        %v4577 = vld [vmem:[%s3937 + $0x4fc] sm:%s3930]
        %4578 = vst [vmem:[%s3938 + $0x4fc] sm:%s3930] %v4577
        %v4579 = vld [vmem:[%s3937 + $0x500] sm:%s3930]
        %4580 = vst [vmem:[%s3938 + $0x500] sm:%s3930] %v4579
        %v4581 = vld [vmem:[%s3937 + $0x514] sm:%s3930]
        %4582 = vst [vmem:[%s3938 + $0x504] sm:%s3930] %v4581
        %v4583 = vld [vmem:[%s3937 + $0x504] sm:%s3930]
        %4584 = vst [vmem:[%s3938 + $0x508] sm:%s3930] %v4583
        %v4585 = vld [vmem:[%s3937 + $0x518] sm:%s3930]
        %4586 = vst [vmem:[%s3938 + $0x50c] sm:%s3930] %v4585
        %v4587 = vld [vmem:[%s3937 + $0x508] sm:%s3930]
        %4588 = vst [vmem:[%s3938 + $0x510] sm:%s3930] %v4587
        %v4589 = vld [vmem:[%s3937 + $0x51c] sm:%s3930]
        %4590 = vst [vmem:[%s3938 + $0x514] sm:%s3930] %v4589
        %v4591 = vld [vmem:[%s3937 + $0x50c] sm:%s3930]
        %4592 = vst [vmem:[%s3938 + $0x518] sm:%s3930] %v4591
        %v4593 = vld [vmem:[%s3937 + $0x520] sm:%s3930]
        %4594 = vst [vmem:[%s3938 + $0x51c] sm:%s3930] %v4593
        %v4595 = vld [vmem:[%s3937 + $0x510] sm:%s3930]
        %4596 = vst [vmem:[%s3938 + $0x520] sm:%s3930] %v4595
        %v4597 = vld [vmem:[%s3937 + $0x524] sm:%s3930]
        %4598 = vst [vmem:[%s3938 + $0x524] sm:%s3930] %v4597
        %v4599 = vld [vmem:[%s3937 + $0x528] sm:%s3930]
        %4600 = vst [vmem:[%s3938 + $0x528] sm:%s3930] %v4599
        %v4601 = vld [vmem:[%s3937 + $0x53c] sm:%s3930]
        %4602 = vst [vmem:[%s3938 + $0x52c] sm:%s3930] %v4601
        %v4603 = vld [vmem:[%s3937 + $0x52c] sm:%s3930]
        %4604 = vst [vmem:[%s3938 + $0x530] sm:%s3930] %v4603
        %v4605 = vld [vmem:[%s3937 + $0x540] sm:%s3930]
        %4606 = vst [vmem:[%s3938 + $0x534] sm:%s3930] %v4605
        %v4607 = vld [vmem:[%s3937 + $0x530] sm:%s3930]
        %4608 = vst [vmem:[%s3938 + $0x538] sm:%s3930] %v4607
        %v4609 = vld [vmem:[%s3937 + $0x544] sm:%s3930]
        %4610 = vst [vmem:[%s3938 + $0x53c] sm:%s3930] %v4609
        %v4611 = vld [vmem:[%s3937 + $0x534] sm:%s3930]
        %4612 = vst [vmem:[%s3938 + $0x540] sm:%s3930] %v4611
        %v4613 = vld [vmem:[%s3937 + $0x548] sm:%s3930]
        %4614 = vst [vmem:[%s3938 + $0x544] sm:%s3930] %v4613
        %v4615 = vld [vmem:[%s3937 + $0x538] sm:%s3930]
        %4616 = vst [vmem:[%s3938 + $0x548] sm:%s3930] %v4615
        %v4617 = vld [vmem:[%s3937 + $0x54c] sm:%s3930]
        %4618 = vst [vmem:[%s3938 + $0x54c] sm:%s3930] %v4617
        %v4619 = vld [vmem:[%s3937 + $0x550] sm:%s3930]
        %4620 = vst [vmem:[%s3938 + $0x550] sm:%s3930] %v4619
        %v4621 = vld [vmem:[%s3937 + $0x564] sm:%s3930]
        %4622 = vst [vmem:[%s3938 + $0x554] sm:%s3930] %v4621
        %v4623 = vld [vmem:[%s3937 + $0x554] sm:%s3930]
        %4624 = vst [vmem:[%s3938 + $0x558] sm:%s3930] %v4623
        %v4625 = vld [vmem:[%s3937 + $0x568] sm:%s3930]
        %4626 = vst [vmem:[%s3938 + $0x55c] sm:%s3930] %v4625
        %v4627 = vld [vmem:[%s3937 + $0x558] sm:%s3930]
        %4628 = vst [vmem:[%s3938 + $0x560] sm:%s3930] %v4627
        %v4629 = vld [vmem:[%s3937 + $0x56c] sm:%s3930]
        %4630 = vst [vmem:[%s3938 + $0x564] sm:%s3930] %v4629
        %v4631 = vld [vmem:[%s3937 + $0x55c] sm:%s3930]
        %4632 = vst [vmem:[%s3938 + $0x568] sm:%s3930] %v4631
        %v4633 = vld [vmem:[%s3937 + $0x570] sm:%s3930]
        %4634 = vst [vmem:[%s3938 + $0x56c] sm:%s3930] %v4633
        %v4635 = vld [vmem:[%s3937 + $0x560] sm:%s3930]
        %4636 = vst [vmem:[%s3938 + $0x570] sm:%s3930] %v4635
        %v4637 = vld [vmem:[%s3937 + $0x574] sm:%s3930]
        %4638 = vst [vmem:[%s3938 + $0x574] sm:%s3930] %v4637
        %v4639 = vld [vmem:[%s3937 + $0x578] sm:%s3930]
        %4640 = vst [vmem:[%s3938 + $0x578] sm:%s3930] %v4639
        %v4641 = vld [vmem:[%s3937 + $0x58c] sm:%s3930]
        %4642 = vst [vmem:[%s3938 + $0x57c] sm:%s3930] %v4641
        %v4643 = vld [vmem:[%s3937 + $0x57c] sm:%s3930]
        %4644 = vst [vmem:[%s3938 + $0x580] sm:%s3930] %v4643
        %v4645 = vld [vmem:[%s3937 + $0x590] sm:%s3930]
        %4646 = vst [vmem:[%s3938 + $0x584] sm:%s3930] %v4645
        %v4647 = vld [vmem:[%s3937 + $0x580] sm:%s3930]
        %4648 = vst [vmem:[%s3938 + $0x588] sm:%s3930] %v4647
        %v4649 = vld [vmem:[%s3937 + $0x594] sm:%s3930]
        %4650 = vst [vmem:[%s3938 + $0x58c] sm:%s3930] %v4649
        %v4651 = vld [vmem:[%s3937 + $0x584] sm:%s3930]
        %4652 = vst [vmem:[%s3938 + $0x590] sm:%s3930] %v4651
        %v4653 = vld [vmem:[%s3937 + $0x598] sm:%s3930]
        %4654 = vst [vmem:[%s3938 + $0x594] sm:%s3930] %v4653
        %v4655 = vld [vmem:[%s3937 + $0x588] sm:%s3930]
        %4656 = vst [vmem:[%s3938 + $0x598] sm:%s3930] %v4655
        %v4657 = vld [vmem:[%s3937 + $0x59c] sm:%s3930]
        %4658 = vst [vmem:[%s3938 + $0x59c] sm:%s3930] %v4657
        %v4659 = vld [vmem:[%s3937 + $0x5a0] sm:%s3930]
        %4660 = vst [vmem:[%s3938 + $0x5a0] sm:%s3930] %v4659
        %v4661 = vld [vmem:[%s3937 + $0x5b4] sm:%s3930]
        %4662 = vst [vmem:[%s3938 + $0x5a4] sm:%s3930] %v4661
        %v4663 = vld [vmem:[%s3937 + $0x5a4] sm:%s3930]
        %4664 = vst [vmem:[%s3938 + $0x5a8] sm:%s3930] %v4663
        %v4665 = vld [vmem:[%s3937 + $0x5b8] sm:%s3930]
        %4666 = vst [vmem:[%s3938 + $0x5ac] sm:%s3930] %v4665
        %v4667 = vld [vmem:[%s3937 + $0x5a8] sm:%s3930]
        %4668 = vst [vmem:[%s3938 + $0x5b0] sm:%s3930] %v4667
        %v4669 = vld [vmem:[%s3937 + $0x5bc] sm:%s3930]
        %4670 = vst [vmem:[%s3938 + $0x5b4] sm:%s3930] %v4669
        %v4671 = vld [vmem:[%s3937 + $0x5ac] sm:%s3930]
        %4672 = vst [vmem:[%s3938 + $0x5b8] sm:%s3930] %v4671
        %v4673 = vld [vmem:[%s3937 + $0x5c0] sm:%s3930]
        %4674 = vst [vmem:[%s3938 + $0x5bc] sm:%s3930] %v4673
        %v4675 = vld [vmem:[%s3937 + $0x5b0] sm:%s3930]
        %4676 = vst [vmem:[%s3938 + $0x5c0] sm:%s3930] %v4675
        %v4677 = vld [vmem:[%s3937 + $0x5c4] sm:%s3930]
        %4678 = vst [vmem:[%s3938 + $0x5c4] sm:%s3930] %v4677
        %v4679 = vld [vmem:[%s3937 + $0x5c8] sm:%s3930]
        %4680 = vst [vmem:[%s3938 + $0x5c8] sm:%s3930] %v4679
        %v4681 = vld [vmem:[%s3937 + $0x5dc] sm:%s3930]
        %4682 = vst [vmem:[%s3938 + $0x5cc] sm:%s3930] %v4681
        %v4683 = vld [vmem:[%s3937 + $0x5cc] sm:%s3930]
        %4684 = vst [vmem:[%s3938 + $0x5d0] sm:%s3930] %v4683
        %v4685 = vld [vmem:[%s3937 + $0x5e0] sm:%s3930]
        %4686 = vst [vmem:[%s3938 + $0x5d4] sm:%s3930] %v4685
        %v4687 = vld [vmem:[%s3937 + $0x5d0] sm:%s3930]
        %4688 = vst [vmem:[%s3938 + $0x5d8] sm:%s3930] %v4687
        %v4689 = vld [vmem:[%s3937 + $0x5e4] sm:%s3930]
        %4690 = vst [vmem:[%s3938 + $0x5dc] sm:%s3930] %v4689
        %v4691 = vld [vmem:[%s3937 + $0x5d4] sm:%s3930]
        %4692 = vst [vmem:[%s3938 + $0x5e0] sm:%s3930] %v4691
        %v4693 = vld [vmem:[%s3937 + $0x5e8] sm:%s3930]
        %4694 = vst [vmem:[%s3938 + $0x5e4] sm:%s3930] %v4693
        %v4695 = vld [vmem:[%s3937 + $0x5d8] sm:%s3930]
        %4696 = vst [vmem:[%s3938 + $0x5e8] sm:%s3930] %v4695
        %v4697 = vld [vmem:[%s3937 + $0x5ec] sm:%s3930]
        %4698 = vst [vmem:[%s3938 + $0x5ec] sm:%s3930] %v4697
        %v4699 = vld [vmem:[%s3937 + $0x5f0] sm:%s3930]
        %4700 = vst [vmem:[%s3938 + $0x5f0] sm:%s3930] %v4699
        %v4701 = vld [vmem:[%s3937 + $0x604] sm:%s3930]
        %4702 = vst [vmem:[%s3938 + $0x5f4] sm:%s3930] %v4701
        %v4703 = vld [vmem:[%s3937 + $0x5f4] sm:%s3930]
        %4704 = vst [vmem:[%s3938 + $0x5f8] sm:%s3930] %v4703
        %v4705 = vld [vmem:[%s3937 + $0x608] sm:%s3930]
        %4706 = vst [vmem:[%s3938 + $0x5fc] sm:%s3930] %v4705
        %v4707 = vld [vmem:[%s3937 + $0x5f8] sm:%s3930]
        %4708 = vst [vmem:[%s3938 + $0x600] sm:%s3930] %v4707
        %v4709 = vld [vmem:[%s3937 + $0x60c] sm:%s3930]
        %4710 = vst [vmem:[%s3938 + $0x604] sm:%s3930] %v4709
        %v4711 = vld [vmem:[%s3937 + $0x5fc] sm:%s3930]
        %4712 = vst [vmem:[%s3938 + $0x608] sm:%s3930] %v4711
        %v4713 = vld [vmem:[%s3937 + $0x610] sm:%s3930]
        %4714 = vst [vmem:[%s3938 + $0x60c] sm:%s3930] %v4713
        %v4715 = vld [vmem:[%s3937 + $0x600] sm:%s3930]
        %4716 = vst [vmem:[%s3938 + $0x610] sm:%s3930] %v4715
        %v4717 = vld [vmem:[%s3937 + $0x614] sm:%s3930]
        %4718 = vst [vmem:[%s3938 + $0x614] sm:%s3930] %v4717
        %v4719 = vld [vmem:[%s3937 + $0x618] sm:%s3930]
        %4720 = vst [vmem:[%s3938 + $0x618] sm:%s3930] %v4719
        %v4721 = vld [vmem:[%s3937 + $0x62c] sm:%s3930]
        %4722 = vst [vmem:[%s3938 + $0x61c] sm:%s3930] %v4721
        %v4723 = vld [vmem:[%s3937 + $0x61c] sm:%s3930]
        %4724 = vst [vmem:[%s3938 + $0x620] sm:%s3930] %v4723
        %v4725 = vld [vmem:[%s3937 + $0x630] sm:%s3930]
        %4726 = vst [vmem:[%s3938 + $0x624] sm:%s3930] %v4725
        %v4727 = vld [vmem:[%s3937 + $0x620] sm:%s3930]
        %4728 = vst [vmem:[%s3938 + $0x628] sm:%s3930] %v4727
        %v4729 = vld [vmem:[%s3937 + $0x634] sm:%s3930]
        %4730 = vst [vmem:[%s3938 + $0x62c] sm:%s3930] %v4729
        %v4731 = vld [vmem:[%s3937 + $0x624] sm:%s3930]
        %4732 = vst [vmem:[%s3938 + $0x630] sm:%s3930] %v4731
        %v4733 = vld [vmem:[%s3937 + $0x638] sm:%s3930]
        %4734 = vst [vmem:[%s3938 + $0x634] sm:%s3930] %v4733
        %v4735 = vld [vmem:[%s3937 + $0x628] sm:%s3930]
        %4736 = vst [vmem:[%s3938 + $0x638] sm:%s3930] %v4735
        %v4737 = vld [vmem:[%s3937 + $0x63c] sm:%s3930]
        %4738 = vst [vmem:[%s3938 + $0x63c] sm:%s3930] %v4737
        %v4739 = vld [vmem:[%s3937 + $0x640] sm:%s3930]
        %4740 = vst [vmem:[%s3938 + $0x640] sm:%s3930] %v4739
        %v4741 = vld [vmem:[%s3937 + $0x654] sm:%s3930]
        %4742 = vst [vmem:[%s3938 + $0x644] sm:%s3930] %v4741
        %v4743 = vld [vmem:[%s3937 + $0x644] sm:%s3930]
        %4744 = vst [vmem:[%s3938 + $0x648] sm:%s3930] %v4743
        %v4745 = vld [vmem:[%s3937 + $0x658] sm:%s3930]
        %4746 = vst [vmem:[%s3938 + $0x64c] sm:%s3930] %v4745
        %v4747 = vld [vmem:[%s3937 + $0x648] sm:%s3930]
        %4748 = vst [vmem:[%s3938 + $0x650] sm:%s3930] %v4747
        %v4749 = vld [vmem:[%s3937 + $0x65c] sm:%s3930]
        %4750 = vst [vmem:[%s3938 + $0x654] sm:%s3930] %v4749
        %v4751 = vld [vmem:[%s3937 + $0x64c] sm:%s3930]
        %4752 = vst [vmem:[%s3938 + $0x658] sm:%s3930] %v4751
        %v4753 = vld [vmem:[%s3937 + $0x660] sm:%s3930]
        %4754 = vst [vmem:[%s3938 + $0x65c] sm:%s3930] %v4753
        %v4755 = vld [vmem:[%s3937 + $0x650] sm:%s3930]
        %4756 = vst [vmem:[%s3938 + $0x660] sm:%s3930] %v4755
        %v4757 = vld [vmem:[%s3937 + $0x664] sm:%s3930]
        %4758 = vst [vmem:[%s3938 + $0x664] sm:%s3930] %v4757
        %v4759 = vld [vmem:[%s3937 + $0x668] sm:%s3930]
        %4760 = vst [vmem:[%s3938 + $0x668] sm:%s3930] %v4759
        %v4761 = vld [vmem:[%s3937 + $0x67c] sm:%s3930]
        %4762 = vst [vmem:[%s3938 + $0x66c] sm:%s3930] %v4761
        %v4763 = vld [vmem:[%s3937 + $0x66c] sm:%s3930]
        %4764 = vst [vmem:[%s3938 + $0x670] sm:%s3930] %v4763
        %v4765 = vld [vmem:[%s3937 + $0x680] sm:%s3930]
        %4766 = vst [vmem:[%s3938 + $0x674] sm:%s3930] %v4765
        %v4767 = vld [vmem:[%s3937 + $0x670] sm:%s3930]
        %4768 = vst [vmem:[%s3938 + $0x678] sm:%s3930] %v4767
        %v4769 = vld [vmem:[%s3937 + $0x684] sm:%s3930]
        %4770 = vst [vmem:[%s3938 + $0x67c] sm:%s3930] %v4769
        %v4771 = vld [vmem:[%s3937 + $0x674] sm:%s3930]
        %4772 = vst [vmem:[%s3938 + $0x680] sm:%s3930] %v4771
        %v4773 = vld [vmem:[%s3937 + $0x688] sm:%s3930]
        %4774 = vst [vmem:[%s3938 + $0x684] sm:%s3930] %v4773
        %v4775 = vld [vmem:[%s3937 + $0x678] sm:%s3930]
        %4776 = vst [vmem:[%s3938 + $0x688] sm:%s3930] %v4775
        %v4777 = vld [vmem:[%s3937 + $0x68c] sm:%s3930]
        %4778 = vst [vmem:[%s3938 + $0x68c] sm:%s3930] %v4777
        %v4779 = vld [vmem:[%s3937 + $0x690] sm:%s3930]
        %4780 = vst [vmem:[%s3938 + $0x690] sm:%s3930] %v4779
        %v4781 = vld [vmem:[%s3937 + $0x6a4] sm:%s3930]
        %4782 = vst [vmem:[%s3938 + $0x694] sm:%s3930] %v4781
        %v4783 = vld [vmem:[%s3937 + $0x694] sm:%s3930]
        %4784 = vst [vmem:[%s3938 + $0x698] sm:%s3930] %v4783
        %v4785 = vld [vmem:[%s3937 + $0x6a8] sm:%s3930]
        %4786 = vst [vmem:[%s3938 + $0x69c] sm:%s3930] %v4785
        %v4787 = vld [vmem:[%s3937 + $0x698] sm:%s3930]
        %4788 = vst [vmem:[%s3938 + $0x6a0] sm:%s3930] %v4787
        %v4789 = vld [vmem:[%s3937 + $0x6ac] sm:%s3930]
        %4790 = vst [vmem:[%s3938 + $0x6a4] sm:%s3930] %v4789
        %v4791 = vld [vmem:[%s3937 + $0x69c] sm:%s3930]
        %4792 = vst [vmem:[%s3938 + $0x6a8] sm:%s3930] %v4791
        %v4793 = vld [vmem:[%s3937 + $0x6b0] sm:%s3930]
        %4794 = vst [vmem:[%s3938 + $0x6ac] sm:%s3930] %v4793
        %v4795 = vld [vmem:[%s3937 + $0x6a0] sm:%s3930]
        %4796 = vst [vmem:[%s3938 + $0x6b0] sm:%s3930] %v4795
        %v4797 = vld [vmem:[%s3937 + $0x6b4] sm:%s3930]
        %4798 = vst [vmem:[%s3938 + $0x6b4] sm:%s3930] %v4797
        %v4799 = vld [vmem:[%s3937 + $0x6b8] sm:%s3930]
        %4800 = vst [vmem:[%s3938 + $0x6b8] sm:%s3930] %v4799
        %v4801 = vld [vmem:[%s3937 + $0x6cc] sm:%s3930]
        %4802 = vst [vmem:[%s3938 + $0x6bc] sm:%s3930] %v4801
        %v4803 = vld [vmem:[%s3937 + $0x6bc] sm:%s3930]
        %4804 = vst [vmem:[%s3938 + $0x6c0] sm:%s3930] %v4803
        %v4805 = vld [vmem:[%s3937 + $0x6d0] sm:%s3930]
        %4806 = vst [vmem:[%s3938 + $0x6c4] sm:%s3930] %v4805
        %v4807 = vld [vmem:[%s3937 + $0x6c0] sm:%s3930]
        %4808 = vst [vmem:[%s3938 + $0x6c8] sm:%s3930] %v4807
        %v4809 = vld [vmem:[%s3937 + $0x6d4] sm:%s3930]
        %4810 = vst [vmem:[%s3938 + $0x6cc] sm:%s3930] %v4809
        %v4811 = vld [vmem:[%s3937 + $0x6c4] sm:%s3930]
        %4812 = vst [vmem:[%s3938 + $0x6d0] sm:%s3930] %v4811
        %v4813 = vld [vmem:[%s3937 + $0x6d8] sm:%s3930]
        %4814 = vst [vmem:[%s3938 + $0x6d4] sm:%s3930] %v4813
        %v4815 = vld [vmem:[%s3937 + $0x6c8] sm:%s3930]
        %4816 = vst [vmem:[%s3938 + $0x6d8] sm:%s3930] %v4815
        %v4817 = vld [vmem:[%s3937 + $0x6dc] sm:%s3930]
        %4818 = vst [vmem:[%s3938 + $0x6dc] sm:%s3930] %v4817
        %v4819 = vld [vmem:[%s3937 + $0x6e0] sm:%s3930]
        %4820 = vst [vmem:[%s3938 + $0x6e0] sm:%s3930] %v4819
        %v4821 = vld [vmem:[%s3937 + $0x6f4] sm:%s3930]
        %4822 = vst [vmem:[%s3938 + $0x6e4] sm:%s3930] %v4821
        %v4823 = vld [vmem:[%s3937 + $0x6e4] sm:%s3930]
        %4824 = vst [vmem:[%s3938 + $0x6e8] sm:%s3930] %v4823
        %v4825 = vld [vmem:[%s3937 + $0x6f8] sm:%s3930]
        %4826 = vst [vmem:[%s3938 + $0x6ec] sm:%s3930] %v4825
        %v4827 = vld [vmem:[%s3937 + $0x6e8] sm:%s3930]
        %4828 = vst [vmem:[%s3938 + $0x6f0] sm:%s3930] %v4827
        %v4829 = vld [vmem:[%s3937 + $0x6fc] sm:%s3930]
        %4830 = vst [vmem:[%s3938 + $0x6f4] sm:%s3930] %v4829
        %v4831 = vld [vmem:[%s3937 + $0x6ec] sm:%s3930]
        %4832 = vst [vmem:[%s3938 + $0x6f8] sm:%s3930] %v4831
        %v4833 = vld [vmem:[%s3937 + $0x700] sm:%s3930]
        %4834 = vst [vmem:[%s3938 + $0x6fc] sm:%s3930] %v4833
        %v4835 = vld [vmem:[%s3937 + $0x6f0] sm:%s3930]
        %4836 = vst [vmem:[%s3938 + $0x700] sm:%s3930] %v4835
        %v4837 = vld [vmem:[%s3937 + $0x704] sm:%s3930]
        %4838 = vst [vmem:[%s3938 + $0x704] sm:%s3930] %v4837
        %v4839 = vld [vmem:[%s3937 + $0x708] sm:%s3930]
        %4840 = vst [vmem:[%s3938 + $0x708] sm:%s3930] %v4839
        %v4841 = vld [vmem:[%s3937 + $0x71c] sm:%s3930]
        %4842 = vst [vmem:[%s3938 + $0x70c] sm:%s3930] %v4841
        %v4843 = vld [vmem:[%s3937 + $0x70c] sm:%s3930]
        %4844 = vst [vmem:[%s3938 + $0x710] sm:%s3930] %v4843
        %v4845 = vld [vmem:[%s3937 + $0x720] sm:%s3930]
        %4846 = vst [vmem:[%s3938 + $0x714] sm:%s3930] %v4845
        %v4847 = vld [vmem:[%s3937 + $0x710] sm:%s3930]
        %4848 = vst [vmem:[%s3938 + $0x718] sm:%s3930] %v4847
        %v4849 = vld [vmem:[%s3937 + $0x724] sm:%s3930]
        %4850 = vst [vmem:[%s3938 + $0x71c] sm:%s3930] %v4849
        %v4851 = vld [vmem:[%s3937 + $0x714] sm:%s3930]
        %4852 = vst [vmem:[%s3938 + $0x720] sm:%s3930] %v4851
        %v4853 = vld [vmem:[%s3937 + $0x728] sm:%s3930]
        %4854 = vst [vmem:[%s3938 + $0x724] sm:%s3930] %v4853
        %v4855 = vld [vmem:[%s3937 + $0x718] sm:%s3930]
        %4856 = vst [vmem:[%s3938 + $0x728] sm:%s3930] %v4855
        %v4857 = vld [vmem:[%s3937 + $0x72c] sm:%s3930]
        %4858 = vst [vmem:[%s3938 + $0x72c] sm:%s3930] %v4857
        %v4859 = vld [vmem:[%s3937 + $0x730] sm:%s3930]
        %4860 = vst [vmem:[%s3938 + $0x730] sm:%s3930] %v4859
        %v4861 = vld [vmem:[%s3937 + $0x744] sm:%s3930]
        %4862 = vst [vmem:[%s3938 + $0x734] sm:%s3930] %v4861
        %v4863 = vld [vmem:[%s3937 + $0x734] sm:%s3930]
        %4864 = vst [vmem:[%s3938 + $0x738] sm:%s3930] %v4863
        %v4865 = vld [vmem:[%s3937 + $0x748] sm:%s3930]
        %4866 = vst [vmem:[%s3938 + $0x73c] sm:%s3930] %v4865
        %v4867 = vld [vmem:[%s3937 + $0x738] sm:%s3930]
        %4868 = vst [vmem:[%s3938 + $0x740] sm:%s3930] %v4867
        %v4869 = vld [vmem:[%s3937 + $0x74c] sm:%s3930]
        %4870 = vst [vmem:[%s3938 + $0x744] sm:%s3930] %v4869
        %v4871 = vld [vmem:[%s3937 + $0x73c] sm:%s3930]
        %4872 = vst [vmem:[%s3938 + $0x748] sm:%s3930] %v4871
        %v4873 = vld [vmem:[%s3937 + $0x750] sm:%s3930]
        %4874 = vst [vmem:[%s3938 + $0x74c] sm:%s3930] %v4873
        %v4875 = vld [vmem:[%s3937 + $0x740] sm:%s3930]
        %4876 = vst [vmem:[%s3938 + $0x750] sm:%s3930] %v4875
        %v4877 = vld [vmem:[%s3937 + $0x754] sm:%s3930]
        %4878 = vst [vmem:[%s3938 + $0x754] sm:%s3930] %v4877
        %v4879 = vld [vmem:[%s3937 + $0x758] sm:%s3930]
        %4880 = vst [vmem:[%s3938 + $0x758] sm:%s3930] %v4879
        %v4881 = vld [vmem:[%s3937 + $0x76c] sm:%s3930]
        %4882 = vst [vmem:[%s3938 + $0x75c] sm:%s3930] %v4881
        %v4883 = vld [vmem:[%s3937 + $0x75c] sm:%s3930]
        %4884 = vst [vmem:[%s3938 + $0x760] sm:%s3930] %v4883
        %v4885 = vld [vmem:[%s3937 + $0x770] sm:%s3930]
        %4886 = vst [vmem:[%s3938 + $0x764] sm:%s3930] %v4885
        %v4887 = vld [vmem:[%s3937 + $0x760] sm:%s3930]
        %4888 = vst [vmem:[%s3938 + $0x768] sm:%s3930] %v4887
        %v4889 = vld [vmem:[%s3937 + $0x774] sm:%s3930]
        %4890 = vst [vmem:[%s3938 + $0x76c] sm:%s3930] %v4889
        %v4891 = vld [vmem:[%s3937 + $0x764] sm:%s3930]
        %4892 = vst [vmem:[%s3938 + $0x770] sm:%s3930] %v4891
        %v4893 = vld [vmem:[%s3937 + $0x778] sm:%s3930]
        %4894 = vst [vmem:[%s3938 + $0x774] sm:%s3930] %v4893
        %v4895 = vld [vmem:[%s3937 + $0x768] sm:%s3930]
        %4896 = vst [vmem:[%s3938 + $0x778] sm:%s3930] %v4895
        %v4897 = vld [vmem:[%s3937 + $0x77c] sm:%s3930]
        %4898 = vst [vmem:[%s3938 + $0x77c] sm:%s3930] %v4897
        %v4899 = vld [vmem:[%s3937 + $0x780] sm:%s3930]
        %4900 = vst [vmem:[%s3938 + $0x780] sm:%s3930] %v4899
        %v4901 = vld [vmem:[%s3937 + $0x794] sm:%s3930]
        %4902 = vst [vmem:[%s3938 + $0x784] sm:%s3930] %v4901
        %v4903 = vld [vmem:[%s3937 + $0x784] sm:%s3930]
        %4904 = vst [vmem:[%s3938 + $0x788] sm:%s3930] %v4903
        %v4905 = vld [vmem:[%s3937 + $0x798] sm:%s3930]
        %4906 = vst [vmem:[%s3938 + $0x78c] sm:%s3930] %v4905
        %v4907 = vld [vmem:[%s3937 + $0x788] sm:%s3930]
        %4908 = vst [vmem:[%s3938 + $0x790] sm:%s3930] %v4907
        %v4909 = vld [vmem:[%s3937 + $0x79c] sm:%s3930]
        %4910 = vst [vmem:[%s3938 + $0x794] sm:%s3930] %v4909
        %v4911 = vld [vmem:[%s3937 + $0x78c] sm:%s3930]
        %4912 = vst [vmem:[%s3938 + $0x798] sm:%s3930] %v4911
        %v4913 = vld [vmem:[%s3937 + $0x7a0] sm:%s3930]
        %4914 = vst [vmem:[%s3938 + $0x79c] sm:%s3930] %v4913
        %v4915 = vld [vmem:[%s3937 + $0x790] sm:%s3930]
        %4916 = vst [vmem:[%s3938 + $0x7a0] sm:%s3930] %v4915
        %v4917 = vld [vmem:[%s3937 + $0x7a4] sm:%s3930]
        %4918 = vst [vmem:[%s3938 + $0x7a4] sm:%s3930] %v4917
        %v4919 = vld [vmem:[%s3937 + $0x7a8] sm:%s3930]
        %4920 = vst [vmem:[%s3938 + $0x7a8] sm:%s3930] %v4919
        %v4921 = vld [vmem:[%s3937 + $0x7bc] sm:%s3930]
        %4922 = vst [vmem:[%s3938 + $0x7ac] sm:%s3930] %v4921
        %v4923 = vld [vmem:[%s3937 + $0x7ac] sm:%s3930]
        %4924 = vst [vmem:[%s3938 + $0x7b0] sm:%s3930] %v4923
        %v4925 = vld [vmem:[%s3937 + $0x7c0] sm:%s3930]
        %4926 = vst [vmem:[%s3938 + $0x7b4] sm:%s3930] %v4925
        %v4927 = vld [vmem:[%s3937 + $0x7b0] sm:%s3930]
        %4928 = vst [vmem:[%s3938 + $0x7b8] sm:%s3930] %v4927
        %v4929 = vld [vmem:[%s3937 + $0x7c4] sm:%s3930]
        %4930 = vst [vmem:[%s3938 + $0x7bc] sm:%s3930] %v4929
        %v4931 = vld [vmem:[%s3937 + $0x7b4] sm:%s3930]
        %4932 = vst [vmem:[%s3938 + $0x7c0] sm:%s3930] %v4931
        %v4933 = vld [vmem:[%s3937 + $0x7c8] sm:%s3930]
        %4934 = vst [vmem:[%s3938 + $0x7c4] sm:%s3930] %v4933
        %v4935 = vld [vmem:[%s3937 + $0x7b8] sm:%s3930]
        %4936 = vst [vmem:[%s3938 + $0x7c8] sm:%s3930] %v4935
        %v4937 = vld [vmem:[%s3937 + $0x7cc] sm:%s3930]
        %4938 = vst [vmem:[%s3938 + $0x7cc] sm:%s3930] %v4937
        %v4939 = vld [vmem:[%s3937 + $0x7d0] sm:%s3930]
        %4940 = vst [vmem:[%s3938 + $0x7d0] sm:%s3930] %v4939
        %v4941 = vld [vmem:[%s3937 + $0x7e4] sm:%s3930]
        %4942 = vst [vmem:[%s3938 + $0x7d4] sm:%s3930] %v4941
        %v4943 = vld [vmem:[%s3937 + $0x7d4] sm:%s3930]
        %4944 = vst [vmem:[%s3938 + $0x7d8] sm:%s3930] %v4943
        %v4945 = vld [vmem:[%s3937 + $0x7e8] sm:%s3930]
        %4946 = vst [vmem:[%s3938 + $0x7dc] sm:%s3930] %v4945
        %v4947 = vld [vmem:[%s3937 + $0x7d8] sm:%s3930]
        %4948 = vst [vmem:[%s3938 + $0x7e0] sm:%s3930] %v4947
        %v4949 = vld [vmem:[%s3937 + $0x7ec] sm:%s3930]
        %4950 = vst [vmem:[%s3938 + $0x7e4] sm:%s3930] %v4949
        %v4951 = vld [vmem:[%s3937 + $0x7dc] sm:%s3930]
        %4952 = vst [vmem:[%s3938 + $0x7e8] sm:%s3930] %v4951
        %v4953 = vld [vmem:[%s3937 + $0x7f0] sm:%s3930]
        %4954 = vst [vmem:[%s3938 + $0x7ec] sm:%s3930] %v4953
        %v4955 = vld [vmem:[%s3937 + $0x7e0] sm:%s3930]
        %4956 = vst [vmem:[%s3938 + $0x7f0] sm:%s3930] %v4955
        %v4957 = vld [vmem:[%s3937 + $0x7f4] sm:%s3930]
        %4958 = vst [vmem:[%s3938 + $0x7f4] sm:%s3930] %v4957
        %v4959 = vld [vmem:[%s3937 + $0x7f8] sm:%s3930]
        %4960 = vst [vmem:[%s3938 + $0x7f8] sm:%s3930] %v4959
        %v4961 = vld [vmem:[%s3937 + $0x80c] sm:%s3930]
        %4962 = vst [vmem:[%s3938 + $0x7fc] sm:%s3930] %v4961
        %v4963 = vld [vmem:[%s3937 + $0x7fc] sm:%s3930]
        %4964 = vst [vmem:[%s3938 + $0x800] sm:%s3930] %v4963
        %v4965 = vld [vmem:[%s3937 + $0x810] sm:%s3930]
        %4966 = vst [vmem:[%s3938 + $0x804] sm:%s3930] %v4965
        %v4967 = vld [vmem:[%s3937 + $0x800] sm:%s3930]
        %4968 = vst [vmem:[%s3938 + $0x808] sm:%s3930] %v4967
        %v4969 = vld [vmem:[%s3937 + $0x814] sm:%s3930]
        %4970 = vst [vmem:[%s3938 + $0x80c] sm:%s3930] %v4969
        %v4971 = vld [vmem:[%s3937 + $0x804] sm:%s3930]
        %4972 = vst [vmem:[%s3938 + $0x810] sm:%s3930] %v4971
        %v4973 = vld [vmem:[%s3937 + $0x818] sm:%s3930]
        %4974 = vst [vmem:[%s3938 + $0x814] sm:%s3930] %v4973
        %v4975 = vld [vmem:[%s3937 + $0x808] sm:%s3930]
        %4976 = vst [vmem:[%s3938 + $0x818] sm:%s3930] %v4975
        %v4977 = vld [vmem:[%s3937 + $0x81c] sm:%s3930]
        %4978 = vst [vmem:[%s3938 + $0x81c] sm:%s3930] %v4977
        %v4979 = vld [vmem:[%s3937 + $0x820] sm:%s3930]
        %4980 = vst [vmem:[%s3938 + $0x820] sm:%s3930] %v4979
        %v4981 = vld [vmem:[%s3937 + $0x834] sm:%s3930]
        %4982 = vst [vmem:[%s3938 + $0x824] sm:%s3930] %v4981
        %v4983 = vld [vmem:[%s3937 + $0x824] sm:%s3930]
        %4984 = vst [vmem:[%s3938 + $0x828] sm:%s3930] %v4983
        %v4985 = vld [vmem:[%s3937 + $0x838] sm:%s3930]
        %4986 = vst [vmem:[%s3938 + $0x82c] sm:%s3930] %v4985
        %v4987 = vld [vmem:[%s3937 + $0x828] sm:%s3930]
        %4988 = vst [vmem:[%s3938 + $0x830] sm:%s3930] %v4987
        %v4989 = vld [vmem:[%s3937 + $0x83c] sm:%s3930]
        %4990 = vst [vmem:[%s3938 + $0x834] sm:%s3930] %v4989
        %v4991 = vld [vmem:[%s3937 + $0x82c] sm:%s3930]
        %4992 = vst [vmem:[%s3938 + $0x838] sm:%s3930] %v4991
        %v4993 = vld [vmem:[%s3937 + $0x840] sm:%s3930]
        %4994 = vst [vmem:[%s3938 + $0x83c] sm:%s3930] %v4993
        %v4995 = vld [vmem:[%s3937 + $0x830] sm:%s3930]
        %4996 = vst [vmem:[%s3938 + $0x840] sm:%s3930] %v4995
        %v4997 = vld [vmem:[%s3937 + $0x844] sm:%s3930]
        %4998 = vst [vmem:[%s3938 + $0x844] sm:%s3930] %v4997
        %v4999 = vld [vmem:[%s3937 + $0x848] sm:%s3930]
        %5000 = vst [vmem:[%s3938 + $0x848] sm:%s3930] %v4999
        %v5001 = vld [vmem:[%s3937 + $0x85c] sm:%s3930]
        %5002 = vst [vmem:[%s3938 + $0x84c] sm:%s3930] %v5001
        %v5003 = vld [vmem:[%s3937 + $0x84c] sm:%s3930]
        %5004 = vst [vmem:[%s3938 + $0x850] sm:%s3930] %v5003
        %v5005 = vld [vmem:[%s3937 + $0x860] sm:%s3930]
        %5006 = vst [vmem:[%s3938 + $0x854] sm:%s3930] %v5005
        %v5007 = vld [vmem:[%s3937 + $0x850] sm:%s3930]
        %5008 = vst [vmem:[%s3938 + $0x858] sm:%s3930] %v5007
        %v5009 = vld [vmem:[%s3937 + $0x864] sm:%s3930]
        %5010 = vst [vmem:[%s3938 + $0x85c] sm:%s3930] %v5009
        %v5011 = vld [vmem:[%s3937 + $0x854] sm:%s3930]
        %5012 = vst [vmem:[%s3938 + $0x860] sm:%s3930] %v5011
        %v5013 = vld [vmem:[%s3937 + $0x868] sm:%s3930]
        %5014 = vst [vmem:[%s3938 + $0x864] sm:%s3930] %v5013
        %v5015 = vld [vmem:[%s3937 + $0x858] sm:%s3930]
        %5016 = vst [vmem:[%s3938 + $0x868] sm:%s3930] %v5015
        %v5017 = vld [vmem:[%s3937 + $0x86c] sm:%s3930]
        %5018 = vst [vmem:[%s3938 + $0x86c] sm:%s3930] %v5017
        %v5019 = vld [vmem:[%s3937 + $0x870] sm:%s3930]
        %5020 = vst [vmem:[%s3938 + $0x870] sm:%s3930] %v5019
        %v5021 = vld [vmem:[%s3937 + $0x884] sm:%s3930]
        %5022 = vst [vmem:[%s3938 + $0x874] sm:%s3930] %v5021
        %v5023 = vld [vmem:[%s3937 + $0x874] sm:%s3930]
        %5024 = vst [vmem:[%s3938 + $0x878] sm:%s3930] %v5023
        %v5025 = vld [vmem:[%s3937 + $0x888] sm:%s3930]
        %5026 = vst [vmem:[%s3938 + $0x87c] sm:%s3930] %v5025
        %v5027 = vld [vmem:[%s3937 + $0x878] sm:%s3930]
        %5028 = vst [vmem:[%s3938 + $0x880] sm:%s3930] %v5027
        %v5029 = vld [vmem:[%s3937 + $0x88c] sm:%s3930]
        %5030 = vst [vmem:[%s3938 + $0x884] sm:%s3930] %v5029
        %v5031 = vld [vmem:[%s3937 + $0x87c] sm:%s3930]
        %5032 = vst [vmem:[%s3938 + $0x888] sm:%s3930] %v5031
        %v5033 = vld [vmem:[%s3937 + $0x890] sm:%s3930]
        %5034 = vst [vmem:[%s3938 + $0x88c] sm:%s3930] %v5033
        %v5035 = vld [vmem:[%s3937 + $0x880] sm:%s3930]
        %5036 = vst [vmem:[%s3938 + $0x890] sm:%s3930] %v5035
        %v5037 = vld [vmem:[%s3937 + $0x894] sm:%s3930]
        %5038 = vst [vmem:[%s3938 + $0x894] sm:%s3930] %v5037
        %v5039 = vld [vmem:[%s3937 + $0x898] sm:%s3930]
        %5040 = vst [vmem:[%s3938 + $0x898] sm:%s3930] %v5039
        %v5041 = vld [vmem:[%s3937 + $0x8ac] sm:%s3930]
        %5042 = vst [vmem:[%s3938 + $0x89c] sm:%s3930] %v5041
        %v5043 = vld [vmem:[%s3937 + $0x89c] sm:%s3930]
        %5044 = vst [vmem:[%s3938 + $0x8a0] sm:%s3930] %v5043
        %v5045 = vld [vmem:[%s3937 + $0x8b0] sm:%s3930]
        %5046 = vst [vmem:[%s3938 + $0x8a4] sm:%s3930] %v5045
        %v5047 = vld [vmem:[%s3937 + $0x8a0] sm:%s3930]
        %5048 = vst [vmem:[%s3938 + $0x8a8] sm:%s3930] %v5047
        %v5049 = vld [vmem:[%s3937 + $0x8b4] sm:%s3930]
        %5050 = vst [vmem:[%s3938 + $0x8ac] sm:%s3930] %v5049
        %v5051 = vld [vmem:[%s3937 + $0x8a4] sm:%s3930]
        %5052 = vst [vmem:[%s3938 + $0x8b0] sm:%s3930] %v5051
        %v5053 = vld [vmem:[%s3937 + $0x8b8] sm:%s3930]
        %5054 = vst [vmem:[%s3938 + $0x8b4] sm:%s3930] %v5053
        %v5055 = vld [vmem:[%s3937 + $0x8a8] sm:%s3930]
        %5056 = vst [vmem:[%s3938 + $0x8b8] sm:%s3930] %v5055
        %v5057 = vld [vmem:[%s3937 + $0x8bc] sm:%s3930]
        %5058 = vst [vmem:[%s3938 + $0x8bc] sm:%s3930] %v5057
        %v5059 = vld [vmem:[%s3937 + $0x8c0] sm:%s3930]
        %5060 = vst [vmem:[%s3938 + $0x8c0] sm:%s3930] %v5059
        %v5061 = vld [vmem:[%s3937 + $0x8d4] sm:%s3930]
        %5062 = vst [vmem:[%s3938 + $0x8c4] sm:%s3930] %v5061
        %v5063 = vld [vmem:[%s3937 + $0x8c4] sm:%s3930]
        %5064 = vst [vmem:[%s3938 + $0x8c8] sm:%s3930] %v5063
        %v5065 = vld [vmem:[%s3937 + $0x8d8] sm:%s3930]
        %5066 = vst [vmem:[%s3938 + $0x8cc] sm:%s3930] %v5065
        %v5067 = vld [vmem:[%s3937 + $0x8c8] sm:%s3930]
        %5068 = vst [vmem:[%s3938 + $0x8d0] sm:%s3930] %v5067
        %v5069 = vld [vmem:[%s3937 + $0x8dc] sm:%s3930]
        %5070 = vst [vmem:[%s3938 + $0x8d4] sm:%s3930] %v5069
        %v5071 = vld [vmem:[%s3937 + $0x8cc] sm:%s3930]
        %5072 = vst [vmem:[%s3938 + $0x8d8] sm:%s3930] %v5071
        %v5073 = vld [vmem:[%s3937 + $0x8e0] sm:%s3930]
        %5074 = vst [vmem:[%s3938 + $0x8dc] sm:%s3930] %v5073
        %v5075 = vld [vmem:[%s3937 + $0x8d0] sm:%s3930]
        %5076 = vst [vmem:[%s3938 + $0x8e0] sm:%s3930] %v5075
        %v5077 = vld [vmem:[%s3937 + $0x8e4] sm:%s3930]
        %5078 = vst [vmem:[%s3938 + $0x8e4] sm:%s3930] %v5077
        %v5079 = vld [vmem:[%s3937 + $0x8e8] sm:%s3930]
        %5080 = vst [vmem:[%s3938 + $0x8e8] sm:%s3930] %v5079
        %v5081 = vld [vmem:[%s3937 + $0x8fc] sm:%s3930]
        %5082 = vst [vmem:[%s3938 + $0x8ec] sm:%s3930] %v5081
        %v5083 = vld [vmem:[%s3937 + $0x8ec] sm:%s3930]
        %5084 = vst [vmem:[%s3938 + $0x8f0] sm:%s3930] %v5083
        %v5085 = vld [vmem:[%s3937 + $0x900] sm:%s3930]
        %5086 = vst [vmem:[%s3938 + $0x8f4] sm:%s3930] %v5085
        %v5087 = vld [vmem:[%s3937 + $0x8f0] sm:%s3930]
        %5088 = vst [vmem:[%s3938 + $0x8f8] sm:%s3930] %v5087
        %v5089 = vld [vmem:[%s3937 + $0x904] sm:%s3930]
        %5090 = vst [vmem:[%s3938 + $0x8fc] sm:%s3930] %v5089
        %v5091 = vld [vmem:[%s3937 + $0x8f4] sm:%s3930]
        %5092 = vst [vmem:[%s3938 + $0x900] sm:%s3930] %v5091
        %v5093 = vld [vmem:[%s3937 + $0x908] sm:%s3930]
        %5094 = vst [vmem:[%s3938 + $0x904] sm:%s3930] %v5093
        %v5095 = vld [vmem:[%s3937 + $0x8f8] sm:%s3930]
        %5096 = vst [vmem:[%s3938 + $0x908] sm:%s3930] %v5095
        %v5097 = vld [vmem:[%s3937 + $0x90c] sm:%s3930]
        %5098 = vst [vmem:[%s3938 + $0x90c] sm:%s3930] %v5097
        %v5099 = vld [vmem:[%s3937 + $0x910] sm:%s3930]
        %5100 = vst [vmem:[%s3938 + $0x910] sm:%s3930] %v5099
        %v5101 = vld [vmem:[%s3937 + $0x924] sm:%s3930]
        %5102 = vst [vmem:[%s3938 + $0x914] sm:%s3930] %v5101
        %v5103 = vld [vmem:[%s3937 + $0x914] sm:%s3930]
        %5104 = vst [vmem:[%s3938 + $0x918] sm:%s3930] %v5103
        %v5105 = vld [vmem:[%s3937 + $0x928] sm:%s3930]
        %5106 = vst [vmem:[%s3938 + $0x91c] sm:%s3930] %v5105
        %v5107 = vld [vmem:[%s3937 + $0x918] sm:%s3930]
        %5108 = vst [vmem:[%s3938 + $0x920] sm:%s3930] %v5107
        %v5109 = vld [vmem:[%s3937 + $0x92c] sm:%s3930]
        %5110 = vst [vmem:[%s3938 + $0x924] sm:%s3930] %v5109
        %v5111 = vld [vmem:[%s3937 + $0x91c] sm:%s3930]
        %5112 = vst [vmem:[%s3938 + $0x928] sm:%s3930] %v5111
        %v5113 = vld [vmem:[%s3937 + $0x930] sm:%s3930]
        %5114 = vst [vmem:[%s3938 + $0x92c] sm:%s3930] %v5113
        %v5115 = vld [vmem:[%s3937 + $0x920] sm:%s3930]
        %5116 = vst [vmem:[%s3938 + $0x930] sm:%s3930] %v5115
        %v5117 = vld [vmem:[%s3937 + $0x934] sm:%s3930]
        %5118 = vst [vmem:[%s3938 + $0x934] sm:%s3930] %v5117
        %v5119 = vld [vmem:[%s3937 + $0x938] sm:%s3930]
        %5120 = vst [vmem:[%s3938 + $0x938] sm:%s3930] %v5119
        %v5121 = vld [vmem:[%s3937 + $0x94c] sm:%s3930]
        %5122 = vst [vmem:[%s3938 + $0x93c] sm:%s3930] %v5121
        %v5123 = vld [vmem:[%s3937 + $0x93c] sm:%s3930]
        %5124 = vst [vmem:[%s3938 + $0x940] sm:%s3930] %v5123
        %v5125 = vld [vmem:[%s3937 + $0x950] sm:%s3930]
        %5126 = vst [vmem:[%s3938 + $0x944] sm:%s3930] %v5125
        %v5127 = vld [vmem:[%s3937 + $0x940] sm:%s3930]
        %5128 = vst [vmem:[%s3938 + $0x948] sm:%s3930] %v5127
        %v5129 = vld [vmem:[%s3937 + $0x954] sm:%s3930]
        %5130 = vst [vmem:[%s3938 + $0x94c] sm:%s3930] %v5129
        %v5131 = vld [vmem:[%s3937 + $0x944] sm:%s3930]
        %5132 = vst [vmem:[%s3938 + $0x950] sm:%s3930] %v5131
        %v5133 = vld [vmem:[%s3937 + $0x958] sm:%s3930]
        %5134 = vst [vmem:[%s3938 + $0x954] sm:%s3930] %v5133
        %v5135 = vld [vmem:[%s3937 + $0x948] sm:%s3930]
        %5136 = vst [vmem:[%s3938 + $0x958] sm:%s3930] %v5135
        %v5137 = vld [vmem:[%s3937 + $0x95c] sm:%s3930]
        %5138 = vst [vmem:[%s3938 + $0x95c] sm:%s3930] %v5137
        %v5139 = vld [vmem:[%s3937 + $0x960] sm:%s3930]
        %5140 = vst [vmem:[%s3938 + $0x960] sm:%s3930] %v5139
        %v5141 = vld [vmem:[%s3937 + $0x974] sm:%s3930]
        %5142 = vst [vmem:[%s3938 + $0x964] sm:%s3930] %v5141
        %v5143 = vld [vmem:[%s3937 + $0x964] sm:%s3930]
        %5144 = vst [vmem:[%s3938 + $0x968] sm:%s3930] %v5143
        %v5145 = vld [vmem:[%s3937 + $0x978] sm:%s3930]
        %5146 = vst [vmem:[%s3938 + $0x96c] sm:%s3930] %v5145
        %v5147 = vld [vmem:[%s3937 + $0x968] sm:%s3930]
        %5148 = vst [vmem:[%s3938 + $0x970] sm:%s3930] %v5147
        %v5149 = vld [vmem:[%s3937 + $0x97c] sm:%s3930]
        %5150 = vst [vmem:[%s3938 + $0x974] sm:%s3930] %v5149
        %v5151 = vld [vmem:[%s3937 + $0x96c] sm:%s3930]
        %5152 = vst [vmem:[%s3938 + $0x978] sm:%s3930] %v5151
        %v5153 = vld [vmem:[%s3937 + $0x980] sm:%s3930]
        %5154 = vst [vmem:[%s3938 + $0x97c] sm:%s3930] %v5153
        %v5155 = vld [vmem:[%s3937 + $0x970] sm:%s3930]
        %5156 = vst [vmem:[%s3938 + $0x980] sm:%s3930] %v5155
        %v5157 = vld [vmem:[%s3937 + $0x984] sm:%s3930]
        %5158 = vst [vmem:[%s3938 + $0x984] sm:%s3930] %v5157
        %v5159 = vld [vmem:[%s3937 + $0x988] sm:%s3930]
        %5160 = vst [vmem:[%s3938 + $0x988] sm:%s3930] %v5159
        %v5161 = vld [vmem:[%s3937 + $0x99c] sm:%s3930]
        %5162 = vst [vmem:[%s3938 + $0x98c] sm:%s3930] %v5161
        %v5163 = vld [vmem:[%s3937 + $0x98c] sm:%s3930]
        %5164 = vst [vmem:[%s3938 + $0x990] sm:%s3930] %v5163
        %v5165 = vld [vmem:[%s3937 + $0x9a0] sm:%s3930]
        %5166 = vst [vmem:[%s3938 + $0x994] sm:%s3930] %v5165
        %v5167 = vld [vmem:[%s3937 + $0x990] sm:%s3930]
        %5168 = vst [vmem:[%s3938 + $0x998] sm:%s3930] %v5167
        %v5169 = vld [vmem:[%s3937 + $0x9a4] sm:%s3930]
        %5170 = vst [vmem:[%s3938 + $0x99c] sm:%s3930] %v5169
        %v5171 = vld [vmem:[%s3937 + $0x994] sm:%s3930]
        %5172 = vst [vmem:[%s3938 + $0x9a0] sm:%s3930] %v5171
        %v5173 = vld [vmem:[%s3937 + $0x9a8] sm:%s3930]
        %5174 = vst [vmem:[%s3938 + $0x9a4] sm:%s3930] %v5173
        %v5175 = vld [vmem:[%s3937 + $0x998] sm:%s3930]
        %5176 = vst [vmem:[%s3938 + $0x9a8] sm:%s3930] %v5175
        %v5177 = vld [vmem:[%s3937 + $0x9ac] sm:%s3930]
        %5178 = vst [vmem:[%s3938 + $0x9ac] sm:%s3930] %v5177
        %v5179 = vld [vmem:[%s3937 + $0x9b0] sm:%s3930]
        %5180 = vst [vmem:[%s3938 + $0x9b0] sm:%s3930] %v5179
        %v5181 = vld [vmem:[%s3937 + $0x9c4] sm:%s3930]
        %5182 = vst [vmem:[%s3938 + $0x9b4] sm:%s3930] %v5181
        %v5183 = vld [vmem:[%s3937 + $0x9b4] sm:%s3930]
        %5184 = vst [vmem:[%s3938 + $0x9b8] sm:%s3930] %v5183
        %v5185 = vld [vmem:[%s3937 + $0x9c8] sm:%s3930]
        %5186 = vst [vmem:[%s3938 + $0x9bc] sm:%s3930] %v5185
        %v5187 = vld [vmem:[%s3937 + $0x9b8] sm:%s3930]
        %5188 = vst [vmem:[%s3938 + $0x9c0] sm:%s3930] %v5187
        %v5189 = vld [vmem:[%s3937 + $0x9cc] sm:%s3930]
        %5190 = vst [vmem:[%s3938 + $0x9c4] sm:%s3930] %v5189
        %v5191 = vld [vmem:[%s3937 + $0x9bc] sm:%s3930]
        %5192 = vst [vmem:[%s3938 + $0x9c8] sm:%s3930] %v5191
        %v5193 = vld [vmem:[%s3937 + $0x9d0] sm:%s3930]
        %5194 = vst [vmem:[%s3938 + $0x9cc] sm:%s3930] %v5193
        %v5195 = vld [vmem:[%s3937 + $0x9c0] sm:%s3930]
        %5196 = vst [vmem:[%s3938 + $0x9d0] sm:%s3930] %v5195
        %v5197 = vld [vmem:[%s3937 + $0x9d4] sm:%s3930]
        %5198 = vst [vmem:[%s3938 + $0x9d4] sm:%s3930] %v5197
        %v5199 = vld [vmem:[%s3937 + $0x9d8] sm:%s3930]
        %5200 = vst [vmem:[%s3938 + $0x9d8] sm:%s3930] %v5199
        %v5201 = vld [vmem:[%s3937 + $0x9ec] sm:%s3930]
        %5202 = vst [vmem:[%s3938 + $0x9dc] sm:%s3930] %v5201
        %v5203 = vld [vmem:[%s3937 + $0x9dc] sm:%s3930]
        %5204 = vst [vmem:[%s3938 + $0x9e0] sm:%s3930] %v5203
        %v5205 = vld [vmem:[%s3937 + $0x9f0] sm:%s3930]
        %5206 = vst [vmem:[%s3938 + $0x9e4] sm:%s3930] %v5205
        %v5207 = vld [vmem:[%s3937 + $0x9e0] sm:%s3930]
        %5208 = vst [vmem:[%s3938 + $0x9e8] sm:%s3930] %v5207
        %v5209 = vld [vmem:[%s3937 + $0x9f4] sm:%s3930]
        %5210 = vst [vmem:[%s3938 + $0x9ec] sm:%s3930] %v5209
        %v5211 = vld [vmem:[%s3937 + $0x9e4] sm:%s3930]
        %5212 = vst [vmem:[%s3938 + $0x9f0] sm:%s3930] %v5211
        %v5213 = vld [vmem:[%s3937 + $0x9f8] sm:%s3930]
        %5214 = vst [vmem:[%s3938 + $0x9f4] sm:%s3930] %v5213
        %v5215 = vld [vmem:[%s3937 + $0x9e8] sm:%s3930]
        %5216 = vst [vmem:[%s3938 + $0x9f8] sm:%s3930] %v5215
        %v5217 = vld [vmem:[%s3937 + $0x9fc] sm:%s3930]
        %5218 = vst [vmem:[%s3938 + $0x9fc] sm:%s3930] %v5217
      $region63: #{cnn_1d_forward.1} parent=50 // loop_footer
        %s3936 = sadd.s32 1, %s3932
      $region64: #{cnn_1d_forward.1} parent=50 // loop_footer_branch
        %3931 = sbr.rel target = $region60
      $region65: #{cnn_1d_forward.1} parent=50 // loop_exit
        _
    $region51: #{cnn_1d_forward.1} parent=24 // pred_fallthru
      _
  $region25: #{cnn_1d_forward.1} parent=0 // pred_fallthru
    _
  // Predicated region
  $region26: #{cnn_1d_forward.1} parent=0 // pred_check
    %p27 = pneg %p23
  $region27: #{cnn_1d_forward.1} parent=0 // pred_check_branch
    %29 = sbr.rel (%p27) target = $region29
  $region28: #{cnn_1d_forward.1} parent=0 // pred_region
    %s30 = sshllo.u32 0, 4
    loop: start=0, step=1, limit=1
    $region30: #{cnn_1d_forward.1} parent=28 // loop_pre_header
      _
    $region31: #{cnn_1d_forward.1} parent=28 // loop_header
      %s32 = sphi 0, %s36
      %p33 = scmp.ge.s32.totalorder %s32, 1
      %s37 = sphi %s5, %s5
      %s38 = sphi [#allocation3], [#allocation3]
    $region32: #{cnn_1d_forward.1} parent=28 // loop_header_branch
      %35 = sbr.rel (%p33) target = $region36
    $region33: #{cnn_1d_forward.1} parent=28 // loop_body
      %v39 = vld [vmem:[%s37] sm:%s30]
      %40 = vst [vmem:[%s38] sm:%s30] %v39
      %v41 = vld [vmem:[%s37 + $0x14] sm:%s30]
      %42 = vst [vmem:[%s38 + $0x4] sm:%s30] %v41
      %v43 = vld [vmem:[%s37 + $0x4] sm:%s30]
      %44 = vst [vmem:[%s38 + $0x8] sm:%s30] %v43
      %v45 = vld [vmem:[%s37 + $0x18] sm:%s30]
      %46 = vst [vmem:[%s38 + $0xc] sm:%s30] %v45
      %v47 = vld [vmem:[%s37 + $0x8] sm:%s30]
      %48 = vst [vmem:[%s38 + $0x10] sm:%s30] %v47
      %v49 = vld [vmem:[%s37 + $0x1c] sm:%s30]
      %50 = vst [vmem:[%s38 + $0x14] sm:%s30] %v49
      %v51 = vld [vmem:[%s37 + $0xc] sm:%s30]
      %52 = vst [vmem:[%s38 + $0x18] sm:%s30] %v51
      %v53 = vld [vmem:[%s37 + $0x20] sm:%s30]
      %54 = vst [vmem:[%s38 + $0x1c] sm:%s30] %v53
      %v55 = vld [vmem:[%s37 + $0x10] sm:%s30]
      %56 = vst [vmem:[%s38 + $0x20] sm:%s30] %v55
      %v57 = vld [vmem:[%s37 + $0x24] sm:%s30]
      %58 = vst [vmem:[%s38 + $0x24] sm:%s30] %v57
      %v59 = vld [vmem:[%s37 + $0x28] sm:%s30]
      %60 = vst [vmem:[%s38 + $0x28] sm:%s30] %v59
      %v61 = vld [vmem:[%s37 + $0x3c] sm:%s30]
      %62 = vst [vmem:[%s38 + $0x2c] sm:%s30] %v61
      %v63 = vld [vmem:[%s37 + $0x2c] sm:%s30]
      %64 = vst [vmem:[%s38 + $0x30] sm:%s30] %v63
      %v65 = vld [vmem:[%s37 + $0x40] sm:%s30]
      %66 = vst [vmem:[%s38 + $0x34] sm:%s30] %v65
      %v67 = vld [vmem:[%s37 + $0x30] sm:%s30]
      %68 = vst [vmem:[%s38 + $0x38] sm:%s30] %v67
      %v69 = vld [vmem:[%s37 + $0x44] sm:%s30]
      %70 = vst [vmem:[%s38 + $0x3c] sm:%s30] %v69
      %v71 = vld [vmem:[%s37 + $0x34] sm:%s30]
      %72 = vst [vmem:[%s38 + $0x40] sm:%s30] %v71
      %v73 = vld [vmem:[%s37 + $0x48] sm:%s30]
      %74 = vst [vmem:[%s38 + $0x44] sm:%s30] %v73
      %v75 = vld [vmem:[%s37 + $0x38] sm:%s30]
      %76 = vst [vmem:[%s38 + $0x48] sm:%s30] %v75
      %v77 = vld [vmem:[%s37 + $0x4c] sm:%s30]
      %78 = vst [vmem:[%s38 + $0x4c] sm:%s30] %v77
      %v79 = vld [vmem:[%s37 + $0x50] sm:%s30]
      %80 = vst [vmem:[%s38 + $0x50] sm:%s30] %v79
      %v81 = vld [vmem:[%s37 + $0x64] sm:%s30]
      %82 = vst [vmem:[%s38 + $0x54] sm:%s30] %v81
      %v83 = vld [vmem:[%s37 + $0x54] sm:%s30]
      %84 = vst [vmem:[%s38 + $0x58] sm:%s30] %v83
      %v85 = vld [vmem:[%s37 + $0x68] sm:%s30]
      %86 = vst [vmem:[%s38 + $0x5c] sm:%s30] %v85
      %v87 = vld [vmem:[%s37 + $0x58] sm:%s30]
      %88 = vst [vmem:[%s38 + $0x60] sm:%s30] %v87
      %v89 = vld [vmem:[%s37 + $0x6c] sm:%s30]
      %90 = vst [vmem:[%s38 + $0x64] sm:%s30] %v89
      %v91 = vld [vmem:[%s37 + $0x5c] sm:%s30]
      %92 = vst [vmem:[%s38 + $0x68] sm:%s30] %v91
      %v93 = vld [vmem:[%s37 + $0x70] sm:%s30]
      %94 = vst [vmem:[%s38 + $0x6c] sm:%s30] %v93
      %v95 = vld [vmem:[%s37 + $0x60] sm:%s30]
      %96 = vst [vmem:[%s38 + $0x70] sm:%s30] %v95
      %v97 = vld [vmem:[%s37 + $0x74] sm:%s30]
      %98 = vst [vmem:[%s38 + $0x74] sm:%s30] %v97
      %v99 = vld [vmem:[%s37 + $0x78] sm:%s30]
      %100 = vst [vmem:[%s38 + $0x78] sm:%s30] %v99
      %v101 = vld [vmem:[%s37 + $0x8c] sm:%s30]
      %102 = vst [vmem:[%s38 + $0x7c] sm:%s30] %v101
      %v103 = vld [vmem:[%s37 + $0x7c] sm:%s30]
      %104 = vst [vmem:[%s38 + $0x80] sm:%s30] %v103
      %v105 = vld [vmem:[%s37 + $0x90] sm:%s30]
      %106 = vst [vmem:[%s38 + $0x84] sm:%s30] %v105
      %v107 = vld [vmem:[%s37 + $0x80] sm:%s30]
      %108 = vst [vmem:[%s38 + $0x88] sm:%s30] %v107
      %v109 = vld [vmem:[%s37 + $0x94] sm:%s30]
      %110 = vst [vmem:[%s38 + $0x8c] sm:%s30] %v109
      %v111 = vld [vmem:[%s37 + $0x84] sm:%s30]
      %112 = vst [vmem:[%s38 + $0x90] sm:%s30] %v111
      %v113 = vld [vmem:[%s37 + $0x98] sm:%s30]
      %114 = vst [vmem:[%s38 + $0x94] sm:%s30] %v113
      %v115 = vld [vmem:[%s37 + $0x88] sm:%s30]
      %116 = vst [vmem:[%s38 + $0x98] sm:%s30] %v115
      %v117 = vld [vmem:[%s37 + $0x9c] sm:%s30]
      %118 = vst [vmem:[%s38 + $0x9c] sm:%s30] %v117
      %v119 = vld [vmem:[%s37 + $0xa0] sm:%s30]
      %120 = vst [vmem:[%s38 + $0xa0] sm:%s30] %v119
      %v121 = vld [vmem:[%s37 + $0xb4] sm:%s30]
      %122 = vst [vmem:[%s38 + $0xa4] sm:%s30] %v121
      %v123 = vld [vmem:[%s37 + $0xa4] sm:%s30]
      %124 = vst [vmem:[%s38 + $0xa8] sm:%s30] %v123
      %v125 = vld [vmem:[%s37 + $0xb8] sm:%s30]
      %126 = vst [vmem:[%s38 + $0xac] sm:%s30] %v125
      %v127 = vld [vmem:[%s37 + $0xa8] sm:%s30]
      %128 = vst [vmem:[%s38 + $0xb0] sm:%s30] %v127
      %v129 = vld [vmem:[%s37 + $0xbc] sm:%s30]
      %130 = vst [vmem:[%s38 + $0xb4] sm:%s30] %v129
      %v131 = vld [vmem:[%s37 + $0xac] sm:%s30]
      %132 = vst [vmem:[%s38 + $0xb8] sm:%s30] %v131
      %v133 = vld [vmem:[%s37 + $0xc0] sm:%s30]
      %134 = vst [vmem:[%s38 + $0xbc] sm:%s30] %v133
      %v135 = vld [vmem:[%s37 + $0xb0] sm:%s30]
      %136 = vst [vmem:[%s38 + $0xc0] sm:%s30] %v135
      %v137 = vld [vmem:[%s37 + $0xc4] sm:%s30]
      %138 = vst [vmem:[%s38 + $0xc4] sm:%s30] %v137
      %v139 = vld [vmem:[%s37 + $0xc8] sm:%s30]
      %140 = vst [vmem:[%s38 + $0xc8] sm:%s30] %v139
      %v141 = vld [vmem:[%s37 + $0xdc] sm:%s30]
      %142 = vst [vmem:[%s38 + $0xcc] sm:%s30] %v141
      %v143 = vld [vmem:[%s37 + $0xcc] sm:%s30]
      %144 = vst [vmem:[%s38 + $0xd0] sm:%s30] %v143
      %v145 = vld [vmem:[%s37 + $0xe0] sm:%s30]
      %146 = vst [vmem:[%s38 + $0xd4] sm:%s30] %v145
      %v147 = vld [vmem:[%s37 + $0xd0] sm:%s30]
      %148 = vst [vmem:[%s38 + $0xd8] sm:%s30] %v147
      %v149 = vld [vmem:[%s37 + $0xe4] sm:%s30]
      %150 = vst [vmem:[%s38 + $0xdc] sm:%s30] %v149
      %v151 = vld [vmem:[%s37 + $0xd4] sm:%s30]
      %152 = vst [vmem:[%s38 + $0xe0] sm:%s30] %v151
      %v153 = vld [vmem:[%s37 + $0xe8] sm:%s30]
      %154 = vst [vmem:[%s38 + $0xe4] sm:%s30] %v153
      %v155 = vld [vmem:[%s37 + $0xd8] sm:%s30]
      %156 = vst [vmem:[%s38 + $0xe8] sm:%s30] %v155
      %v157 = vld [vmem:[%s37 + $0xec] sm:%s30]
      %158 = vst [vmem:[%s38 + $0xec] sm:%s30] %v157
      %v159 = vld [vmem:[%s37 + $0xf0] sm:%s30]
      %160 = vst [vmem:[%s38 + $0xf0] sm:%s30] %v159
      %v161 = vld [vmem:[%s37 + $0x104] sm:%s30]
      %162 = vst [vmem:[%s38 + $0xf4] sm:%s30] %v161
      %v163 = vld [vmem:[%s37 + $0xf4] sm:%s30]
      %164 = vst [vmem:[%s38 + $0xf8] sm:%s30] %v163
      %v165 = vld [vmem:[%s37 + $0x108] sm:%s30]
      %166 = vst [vmem:[%s38 + $0xfc] sm:%s30] %v165
      %v167 = vld [vmem:[%s37 + $0xf8] sm:%s30]
      %168 = vst [vmem:[%s38 + $0x100] sm:%s30] %v167
      %v169 = vld [vmem:[%s37 + $0x10c] sm:%s30]
      %170 = vst [vmem:[%s38 + $0x104] sm:%s30] %v169
      %v171 = vld [vmem:[%s37 + $0xfc] sm:%s30]
      %172 = vst [vmem:[%s38 + $0x108] sm:%s30] %v171
      %v173 = vld [vmem:[%s37 + $0x110] sm:%s30]
      %174 = vst [vmem:[%s38 + $0x10c] sm:%s30] %v173
      %v175 = vld [vmem:[%s37 + $0x100] sm:%s30]
      %176 = vst [vmem:[%s38 + $0x110] sm:%s30] %v175
      %v177 = vld [vmem:[%s37 + $0x114] sm:%s30]
      %178 = vst [vmem:[%s38 + $0x114] sm:%s30] %v177
      %v179 = vld [vmem:[%s37 + $0x118] sm:%s30]
      %180 = vst [vmem:[%s38 + $0x118] sm:%s30] %v179
      %v181 = vld [vmem:[%s37 + $0x12c] sm:%s30]
      %182 = vst [vmem:[%s38 + $0x11c] sm:%s30] %v181
      %v183 = vld [vmem:[%s37 + $0x11c] sm:%s30]
      %184 = vst [vmem:[%s38 + $0x120] sm:%s30] %v183
      %v185 = vld [vmem:[%s37 + $0x130] sm:%s30]
      %186 = vst [vmem:[%s38 + $0x124] sm:%s30] %v185
      %v187 = vld [vmem:[%s37 + $0x120] sm:%s30]
      %188 = vst [vmem:[%s38 + $0x128] sm:%s30] %v187
      %v189 = vld [vmem:[%s37 + $0x134] sm:%s30]
      %190 = vst [vmem:[%s38 + $0x12c] sm:%s30] %v189
      %v191 = vld [vmem:[%s37 + $0x124] sm:%s30]
      %192 = vst [vmem:[%s38 + $0x130] sm:%s30] %v191
      %v193 = vld [vmem:[%s37 + $0x138] sm:%s30]
      %194 = vst [vmem:[%s38 + $0x134] sm:%s30] %v193
      %v195 = vld [vmem:[%s37 + $0x128] sm:%s30]
      %196 = vst [vmem:[%s38 + $0x138] sm:%s30] %v195
      %v197 = vld [vmem:[%s37 + $0x13c] sm:%s30]
      %198 = vst [vmem:[%s38 + $0x13c] sm:%s30] %v197
      %v199 = vld [vmem:[%s37 + $0x140] sm:%s30]
      %200 = vst [vmem:[%s38 + $0x140] sm:%s30] %v199
      %v201 = vld [vmem:[%s37 + $0x154] sm:%s30]
      %202 = vst [vmem:[%s38 + $0x144] sm:%s30] %v201
      %v203 = vld [vmem:[%s37 + $0x144] sm:%s30]
      %204 = vst [vmem:[%s38 + $0x148] sm:%s30] %v203
      %v205 = vld [vmem:[%s37 + $0x158] sm:%s30]
      %206 = vst [vmem:[%s38 + $0x14c] sm:%s30] %v205
      %v207 = vld [vmem:[%s37 + $0x148] sm:%s30]
      %208 = vst [vmem:[%s38 + $0x150] sm:%s30] %v207
      %v209 = vld [vmem:[%s37 + $0x15c] sm:%s30]
      %210 = vst [vmem:[%s38 + $0x154] sm:%s30] %v209
      %v211 = vld [vmem:[%s37 + $0x14c] sm:%s30]
      %212 = vst [vmem:[%s38 + $0x158] sm:%s30] %v211
      %v213 = vld [vmem:[%s37 + $0x160] sm:%s30]
      %214 = vst [vmem:[%s38 + $0x15c] sm:%s30] %v213
      %v215 = vld [vmem:[%s37 + $0x150] sm:%s30]
      %216 = vst [vmem:[%s38 + $0x160] sm:%s30] %v215
      %v217 = vld [vmem:[%s37 + $0x164] sm:%s30]
      %218 = vst [vmem:[%s38 + $0x164] sm:%s30] %v217
      %v219 = vld [vmem:[%s37 + $0x168] sm:%s30]
      %220 = vst [vmem:[%s38 + $0x168] sm:%s30] %v219
      %v221 = vld [vmem:[%s37 + $0x17c] sm:%s30]
      %222 = vst [vmem:[%s38 + $0x16c] sm:%s30] %v221
      %v223 = vld [vmem:[%s37 + $0x16c] sm:%s30]
      %224 = vst [vmem:[%s38 + $0x170] sm:%s30] %v223
      %v225 = vld [vmem:[%s37 + $0x180] sm:%s30]
      %226 = vst [vmem:[%s38 + $0x174] sm:%s30] %v225
      %v227 = vld [vmem:[%s37 + $0x170] sm:%s30]
      %228 = vst [vmem:[%s38 + $0x178] sm:%s30] %v227
      %v229 = vld [vmem:[%s37 + $0x184] sm:%s30]
      %230 = vst [vmem:[%s38 + $0x17c] sm:%s30] %v229
      %v231 = vld [vmem:[%s37 + $0x174] sm:%s30]
      %232 = vst [vmem:[%s38 + $0x180] sm:%s30] %v231
      %v233 = vld [vmem:[%s37 + $0x188] sm:%s30]
      %234 = vst [vmem:[%s38 + $0x184] sm:%s30] %v233
      %v235 = vld [vmem:[%s37 + $0x178] sm:%s30]
      %236 = vst [vmem:[%s38 + $0x188] sm:%s30] %v235
      %v237 = vld [vmem:[%s37 + $0x18c] sm:%s30]
      %238 = vst [vmem:[%s38 + $0x18c] sm:%s30] %v237
      %v239 = vld [vmem:[%s37 + $0x190] sm:%s30]
      %240 = vst [vmem:[%s38 + $0x190] sm:%s30] %v239
      %v241 = vld [vmem:[%s37 + $0x1a4] sm:%s30]
      %242 = vst [vmem:[%s38 + $0x194] sm:%s30] %v241
      %v243 = vld [vmem:[%s37 + $0x194] sm:%s30]
      %244 = vst [vmem:[%s38 + $0x198] sm:%s30] %v243
      %v245 = vld [vmem:[%s37 + $0x1a8] sm:%s30]
      %246 = vst [vmem:[%s38 + $0x19c] sm:%s30] %v245
      %v247 = vld [vmem:[%s37 + $0x198] sm:%s30]
      %248 = vst [vmem:[%s38 + $0x1a0] sm:%s30] %v247
      %v249 = vld [vmem:[%s37 + $0x1ac] sm:%s30]
      %250 = vst [vmem:[%s38 + $0x1a4] sm:%s30] %v249
      %v251 = vld [vmem:[%s37 + $0x19c] sm:%s30]
      %252 = vst [vmem:[%s38 + $0x1a8] sm:%s30] %v251
      %v253 = vld [vmem:[%s37 + $0x1b0] sm:%s30]
      %254 = vst [vmem:[%s38 + $0x1ac] sm:%s30] %v253
      %v255 = vld [vmem:[%s37 + $0x1a0] sm:%s30]
      %256 = vst [vmem:[%s38 + $0x1b0] sm:%s30] %v255
      %v257 = vld [vmem:[%s37 + $0x1b4] sm:%s30]
      %258 = vst [vmem:[%s38 + $0x1b4] sm:%s30] %v257
      %v259 = vld [vmem:[%s37 + $0x1b8] sm:%s30]
      %260 = vst [vmem:[%s38 + $0x1b8] sm:%s30] %v259
      %v261 = vld [vmem:[%s37 + $0x1cc] sm:%s30]
      %262 = vst [vmem:[%s38 + $0x1bc] sm:%s30] %v261
      %v263 = vld [vmem:[%s37 + $0x1bc] sm:%s30]
      %264 = vst [vmem:[%s38 + $0x1c0] sm:%s30] %v263
      %v265 = vld [vmem:[%s37 + $0x1d0] sm:%s30]
      %266 = vst [vmem:[%s38 + $0x1c4] sm:%s30] %v265
      %v267 = vld [vmem:[%s37 + $0x1c0] sm:%s30]
      %268 = vst [vmem:[%s38 + $0x1c8] sm:%s30] %v267
      %v269 = vld [vmem:[%s37 + $0x1d4] sm:%s30]
      %270 = vst [vmem:[%s38 + $0x1cc] sm:%s30] %v269
      %v271 = vld [vmem:[%s37 + $0x1c4] sm:%s30]
      %272 = vst [vmem:[%s38 + $0x1d0] sm:%s30] %v271
      %v273 = vld [vmem:[%s37 + $0x1d8] sm:%s30]
      %274 = vst [vmem:[%s38 + $0x1d4] sm:%s30] %v273
      %v275 = vld [vmem:[%s37 + $0x1c8] sm:%s30]
      %276 = vst [vmem:[%s38 + $0x1d8] sm:%s30] %v275
      %v277 = vld [vmem:[%s37 + $0x1dc] sm:%s30]
      %278 = vst [vmem:[%s38 + $0x1dc] sm:%s30] %v277
      %v279 = vld [vmem:[%s37 + $0x1e0] sm:%s30]
      %280 = vst [vmem:[%s38 + $0x1e0] sm:%s30] %v279
      %v281 = vld [vmem:[%s37 + $0x1f4] sm:%s30]
      %282 = vst [vmem:[%s38 + $0x1e4] sm:%s30] %v281
      %v283 = vld [vmem:[%s37 + $0x1e4] sm:%s30]
      %284 = vst [vmem:[%s38 + $0x1e8] sm:%s30] %v283
      %v285 = vld [vmem:[%s37 + $0x1f8] sm:%s30]
      %286 = vst [vmem:[%s38 + $0x1ec] sm:%s30] %v285
      %v287 = vld [vmem:[%s37 + $0x1e8] sm:%s30]
      %288 = vst [vmem:[%s38 + $0x1f0] sm:%s30] %v287
      %v289 = vld [vmem:[%s37 + $0x1fc] sm:%s30]
      %290 = vst [vmem:[%s38 + $0x1f4] sm:%s30] %v289
      %v291 = vld [vmem:[%s37 + $0x1ec] sm:%s30]
      %292 = vst [vmem:[%s38 + $0x1f8] sm:%s30] %v291
      %v293 = vld [vmem:[%s37 + $0x200] sm:%s30]
      %294 = vst [vmem:[%s38 + $0x1fc] sm:%s30] %v293
      %v295 = vld [vmem:[%s37 + $0x1f0] sm:%s30]
      %296 = vst [vmem:[%s38 + $0x200] sm:%s30] %v295
      %v297 = vld [vmem:[%s37 + $0x204] sm:%s30]
      %298 = vst [vmem:[%s38 + $0x204] sm:%s30] %v297
      %v299 = vld [vmem:[%s37 + $0x208] sm:%s30]
      %300 = vst [vmem:[%s38 + $0x208] sm:%s30] %v299
      %v301 = vld [vmem:[%s37 + $0x21c] sm:%s30]
      %302 = vst [vmem:[%s38 + $0x20c] sm:%s30] %v301
      %v303 = vld [vmem:[%s37 + $0x20c] sm:%s30]
      %304 = vst [vmem:[%s38 + $0x210] sm:%s30] %v303
      %v305 = vld [vmem:[%s37 + $0x220] sm:%s30]
      %306 = vst [vmem:[%s38 + $0x214] sm:%s30] %v305
      %v307 = vld [vmem:[%s37 + $0x210] sm:%s30]
      %308 = vst [vmem:[%s38 + $0x218] sm:%s30] %v307
      %v309 = vld [vmem:[%s37 + $0x224] sm:%s30]
      %310 = vst [vmem:[%s38 + $0x21c] sm:%s30] %v309
      %v311 = vld [vmem:[%s37 + $0x214] sm:%s30]
      %312 = vst [vmem:[%s38 + $0x220] sm:%s30] %v311
      %v313 = vld [vmem:[%s37 + $0x228] sm:%s30]
      %314 = vst [vmem:[%s38 + $0x224] sm:%s30] %v313
      %v315 = vld [vmem:[%s37 + $0x218] sm:%s30]
      %316 = vst [vmem:[%s38 + $0x228] sm:%s30] %v315
      %v317 = vld [vmem:[%s37 + $0x22c] sm:%s30]
      %318 = vst [vmem:[%s38 + $0x22c] sm:%s30] %v317
      %v319 = vld [vmem:[%s37 + $0x230] sm:%s30]
      %320 = vst [vmem:[%s38 + $0x230] sm:%s30] %v319
      %v321 = vld [vmem:[%s37 + $0x244] sm:%s30]
      %322 = vst [vmem:[%s38 + $0x234] sm:%s30] %v321
      %v323 = vld [vmem:[%s37 + $0x234] sm:%s30]
      %324 = vst [vmem:[%s38 + $0x238] sm:%s30] %v323
      %v325 = vld [vmem:[%s37 + $0x248] sm:%s30]
      %326 = vst [vmem:[%s38 + $0x23c] sm:%s30] %v325
      %v327 = vld [vmem:[%s37 + $0x238] sm:%s30]
      %328 = vst [vmem:[%s38 + $0x240] sm:%s30] %v327
      %v329 = vld [vmem:[%s37 + $0x24c] sm:%s30]
      %330 = vst [vmem:[%s38 + $0x244] sm:%s30] %v329
      %v331 = vld [vmem:[%s37 + $0x23c] sm:%s30]
      %332 = vst [vmem:[%s38 + $0x248] sm:%s30] %v331
      %v333 = vld [vmem:[%s37 + $0x250] sm:%s30]
      %334 = vst [vmem:[%s38 + $0x24c] sm:%s30] %v333
      %v335 = vld [vmem:[%s37 + $0x240] sm:%s30]
      %336 = vst [vmem:[%s38 + $0x250] sm:%s30] %v335
      %v337 = vld [vmem:[%s37 + $0x254] sm:%s30]
      %338 = vst [vmem:[%s38 + $0x254] sm:%s30] %v337
      %v339 = vld [vmem:[%s37 + $0x258] sm:%s30]
      %340 = vst [vmem:[%s38 + $0x258] sm:%s30] %v339
      %v341 = vld [vmem:[%s37 + $0x26c] sm:%s30]
      %342 = vst [vmem:[%s38 + $0x25c] sm:%s30] %v341
      %v343 = vld [vmem:[%s37 + $0x25c] sm:%s30]
      %344 = vst [vmem:[%s38 + $0x260] sm:%s30] %v343
      %v345 = vld [vmem:[%s37 + $0x270] sm:%s30]
      %346 = vst [vmem:[%s38 + $0x264] sm:%s30] %v345
      %v347 = vld [vmem:[%s37 + $0x260] sm:%s30]
      %348 = vst [vmem:[%s38 + $0x268] sm:%s30] %v347
      %v349 = vld [vmem:[%s37 + $0x274] sm:%s30]
      %350 = vst [vmem:[%s38 + $0x26c] sm:%s30] %v349
      %v351 = vld [vmem:[%s37 + $0x264] sm:%s30]
      %352 = vst [vmem:[%s38 + $0x270] sm:%s30] %v351
      %v353 = vld [vmem:[%s37 + $0x278] sm:%s30]
      %354 = vst [vmem:[%s38 + $0x274] sm:%s30] %v353
      %v355 = vld [vmem:[%s37 + $0x268] sm:%s30]
      %356 = vst [vmem:[%s38 + $0x278] sm:%s30] %v355
      %v357 = vld [vmem:[%s37 + $0x27c] sm:%s30]
      %358 = vst [vmem:[%s38 + $0x27c] sm:%s30] %v357
      %v359 = vld [vmem:[%s37 + $0x280] sm:%s30]
      %360 = vst [vmem:[%s38 + $0x280] sm:%s30] %v359
      %v361 = vld [vmem:[%s37 + $0x294] sm:%s30]
      %362 = vst [vmem:[%s38 + $0x284] sm:%s30] %v361
      %v363 = vld [vmem:[%s37 + $0x284] sm:%s30]
      %364 = vst [vmem:[%s38 + $0x288] sm:%s30] %v363
      %v365 = vld [vmem:[%s37 + $0x298] sm:%s30]
      %366 = vst [vmem:[%s38 + $0x28c] sm:%s30] %v365
      %v367 = vld [vmem:[%s37 + $0x288] sm:%s30]
      %368 = vst [vmem:[%s38 + $0x290] sm:%s30] %v367
      %v369 = vld [vmem:[%s37 + $0x29c] sm:%s30]
      %370 = vst [vmem:[%s38 + $0x294] sm:%s30] %v369
      %v371 = vld [vmem:[%s37 + $0x28c] sm:%s30]
      %372 = vst [vmem:[%s38 + $0x298] sm:%s30] %v371
      %v373 = vld [vmem:[%s37 + $0x2a0] sm:%s30]
      %374 = vst [vmem:[%s38 + $0x29c] sm:%s30] %v373
      %v375 = vld [vmem:[%s37 + $0x290] sm:%s30]
      %376 = vst [vmem:[%s38 + $0x2a0] sm:%s30] %v375
      %v377 = vld [vmem:[%s37 + $0x2a4] sm:%s30]
      %378 = vst [vmem:[%s38 + $0x2a4] sm:%s30] %v377
      %v379 = vld [vmem:[%s37 + $0x2a8] sm:%s30]
      %380 = vst [vmem:[%s38 + $0x2a8] sm:%s30] %v379
      %v381 = vld [vmem:[%s37 + $0x2bc] sm:%s30]
      %382 = vst [vmem:[%s38 + $0x2ac] sm:%s30] %v381
      %v383 = vld [vmem:[%s37 + $0x2ac] sm:%s30]
      %384 = vst [vmem:[%s38 + $0x2b0] sm:%s30] %v383
      %v385 = vld [vmem:[%s37 + $0x2c0] sm:%s30]
      %386 = vst [vmem:[%s38 + $0x2b4] sm:%s30] %v385
      %v387 = vld [vmem:[%s37 + $0x2b0] sm:%s30]
      %388 = vst [vmem:[%s38 + $0x2b8] sm:%s30] %v387
      %v389 = vld [vmem:[%s37 + $0x2c4] sm:%s30]
      %390 = vst [vmem:[%s38 + $0x2bc] sm:%s30] %v389
      %v391 = vld [vmem:[%s37 + $0x2b4] sm:%s30]
      %392 = vst [vmem:[%s38 + $0x2c0] sm:%s30] %v391
      %v393 = vld [vmem:[%s37 + $0x2c8] sm:%s30]
      %394 = vst [vmem:[%s38 + $0x2c4] sm:%s30] %v393
      %v395 = vld [vmem:[%s37 + $0x2b8] sm:%s30]
      %396 = vst [vmem:[%s38 + $0x2c8] sm:%s30] %v395
      %v397 = vld [vmem:[%s37 + $0x2cc] sm:%s30]
      %398 = vst [vmem:[%s38 + $0x2cc] sm:%s30] %v397
      %v399 = vld [vmem:[%s37 + $0x2d0] sm:%s30]
      %400 = vst [vmem:[%s38 + $0x2d0] sm:%s30] %v399
      %v401 = vld [vmem:[%s37 + $0x2e4] sm:%s30]
      %402 = vst [vmem:[%s38 + $0x2d4] sm:%s30] %v401
      %v403 = vld [vmem:[%s37 + $0x2d4] sm:%s30]
      %404 = vst [vmem:[%s38 + $0x2d8] sm:%s30] %v403
      %v405 = vld [vmem:[%s37 + $0x2e8] sm:%s30]
      %406 = vst [vmem:[%s38 + $0x2dc] sm:%s30] %v405
      %v407 = vld [vmem:[%s37 + $0x2d8] sm:%s30]
      %408 = vst [vmem:[%s38 + $0x2e0] sm:%s30] %v407
      %v409 = vld [vmem:[%s37 + $0x2ec] sm:%s30]
      %410 = vst [vmem:[%s38 + $0x2e4] sm:%s30] %v409
      %v411 = vld [vmem:[%s37 + $0x2dc] sm:%s30]
      %412 = vst [vmem:[%s38 + $0x2e8] sm:%s30] %v411
      %v413 = vld [vmem:[%s37 + $0x2f0] sm:%s30]
      %414 = vst [vmem:[%s38 + $0x2ec] sm:%s30] %v413
      %v415 = vld [vmem:[%s37 + $0x2e0] sm:%s30]
      %416 = vst [vmem:[%s38 + $0x2f0] sm:%s30] %v415
      %v417 = vld [vmem:[%s37 + $0x2f4] sm:%s30]
      %418 = vst [vmem:[%s38 + $0x2f4] sm:%s30] %v417
      %v419 = vld [vmem:[%s37 + $0x2f8] sm:%s30]
      %420 = vst [vmem:[%s38 + $0x2f8] sm:%s30] %v419
      %v421 = vld [vmem:[%s37 + $0x30c] sm:%s30]
      %422 = vst [vmem:[%s38 + $0x2fc] sm:%s30] %v421
      %v423 = vld [vmem:[%s37 + $0x2fc] sm:%s30]
      %424 = vst [vmem:[%s38 + $0x300] sm:%s30] %v423
      %v425 = vld [vmem:[%s37 + $0x310] sm:%s30]
      %426 = vst [vmem:[%s38 + $0x304] sm:%s30] %v425
      %v427 = vld [vmem:[%s37 + $0x300] sm:%s30]
      %428 = vst [vmem:[%s38 + $0x308] sm:%s30] %v427
      %v429 = vld [vmem:[%s37 + $0x314] sm:%s30]
      %430 = vst [vmem:[%s38 + $0x30c] sm:%s30] %v429
      %v431 = vld [vmem:[%s37 + $0x304] sm:%s30]
      %432 = vst [vmem:[%s38 + $0x310] sm:%s30] %v431
      %v433 = vld [vmem:[%s37 + $0x318] sm:%s30]
      %434 = vst [vmem:[%s38 + $0x314] sm:%s30] %v433
      %v435 = vld [vmem:[%s37 + $0x308] sm:%s30]
      %436 = vst [vmem:[%s38 + $0x318] sm:%s30] %v435
      %v437 = vld [vmem:[%s37 + $0x31c] sm:%s30]
      %438 = vst [vmem:[%s38 + $0x31c] sm:%s30] %v437
      %v439 = vld [vmem:[%s37 + $0x320] sm:%s30]
      %440 = vst [vmem:[%s38 + $0x320] sm:%s30] %v439
      %v441 = vld [vmem:[%s37 + $0x334] sm:%s30]
      %442 = vst [vmem:[%s38 + $0x324] sm:%s30] %v441
      %v443 = vld [vmem:[%s37 + $0x324] sm:%s30]
      %444 = vst [vmem:[%s38 + $0x328] sm:%s30] %v443
      %v445 = vld [vmem:[%s37 + $0x338] sm:%s30]
      %446 = vst [vmem:[%s38 + $0x32c] sm:%s30] %v445
      %v447 = vld [vmem:[%s37 + $0x328] sm:%s30]
      %448 = vst [vmem:[%s38 + $0x330] sm:%s30] %v447
      %v449 = vld [vmem:[%s37 + $0x33c] sm:%s30]
      %450 = vst [vmem:[%s38 + $0x334] sm:%s30] %v449
      %v451 = vld [vmem:[%s37 + $0x32c] sm:%s30]
      %452 = vst [vmem:[%s38 + $0x338] sm:%s30] %v451
      %v453 = vld [vmem:[%s37 + $0x340] sm:%s30]
      %454 = vst [vmem:[%s38 + $0x33c] sm:%s30] %v453
      %v455 = vld [vmem:[%s37 + $0x330] sm:%s30]
      %456 = vst [vmem:[%s38 + $0x340] sm:%s30] %v455
      %v457 = vld [vmem:[%s37 + $0x344] sm:%s30]
      %458 = vst [vmem:[%s38 + $0x344] sm:%s30] %v457
      %v459 = vld [vmem:[%s37 + $0x348] sm:%s30]
      %460 = vst [vmem:[%s38 + $0x348] sm:%s30] %v459
      %v461 = vld [vmem:[%s37 + $0x35c] sm:%s30]
      %462 = vst [vmem:[%s38 + $0x34c] sm:%s30] %v461
      %v463 = vld [vmem:[%s37 + $0x34c] sm:%s30]
      %464 = vst [vmem:[%s38 + $0x350] sm:%s30] %v463
      %v465 = vld [vmem:[%s37 + $0x360] sm:%s30]
      %466 = vst [vmem:[%s38 + $0x354] sm:%s30] %v465
      %v467 = vld [vmem:[%s37 + $0x350] sm:%s30]
      %468 = vst [vmem:[%s38 + $0x358] sm:%s30] %v467
      %v469 = vld [vmem:[%s37 + $0x364] sm:%s30]
      %470 = vst [vmem:[%s38 + $0x35c] sm:%s30] %v469
      %v471 = vld [vmem:[%s37 + $0x354] sm:%s30]
      %472 = vst [vmem:[%s38 + $0x360] sm:%s30] %v471
      %v473 = vld [vmem:[%s37 + $0x368] sm:%s30]
      %474 = vst [vmem:[%s38 + $0x364] sm:%s30] %v473
      %v475 = vld [vmem:[%s37 + $0x358] sm:%s30]
      %476 = vst [vmem:[%s38 + $0x368] sm:%s30] %v475
      %v477 = vld [vmem:[%s37 + $0x36c] sm:%s30]
      %478 = vst [vmem:[%s38 + $0x36c] sm:%s30] %v477
      %v479 = vld [vmem:[%s37 + $0x370] sm:%s30]
      %480 = vst [vmem:[%s38 + $0x370] sm:%s30] %v479
      %v481 = vld [vmem:[%s37 + $0x384] sm:%s30]
      %482 = vst [vmem:[%s38 + $0x374] sm:%s30] %v481
      %v483 = vld [vmem:[%s37 + $0x374] sm:%s30]
      %484 = vst [vmem:[%s38 + $0x378] sm:%s30] %v483
      %v485 = vld [vmem:[%s37 + $0x388] sm:%s30]
      %486 = vst [vmem:[%s38 + $0x37c] sm:%s30] %v485
      %v487 = vld [vmem:[%s37 + $0x378] sm:%s30]
      %488 = vst [vmem:[%s38 + $0x380] sm:%s30] %v487
      %v489 = vld [vmem:[%s37 + $0x38c] sm:%s30]
      %490 = vst [vmem:[%s38 + $0x384] sm:%s30] %v489
      %v491 = vld [vmem:[%s37 + $0x37c] sm:%s30]
      %492 = vst [vmem:[%s38 + $0x388] sm:%s30] %v491
      %v493 = vld [vmem:[%s37 + $0x390] sm:%s30]
      %494 = vst [vmem:[%s38 + $0x38c] sm:%s30] %v493
      %v495 = vld [vmem:[%s37 + $0x380] sm:%s30]
      %496 = vst [vmem:[%s38 + $0x390] sm:%s30] %v495
      %v497 = vld [vmem:[%s37 + $0x394] sm:%s30]
      %498 = vst [vmem:[%s38 + $0x394] sm:%s30] %v497
      %v499 = vld [vmem:[%s37 + $0x398] sm:%s30]
      %500 = vst [vmem:[%s38 + $0x398] sm:%s30] %v499
      %v501 = vld [vmem:[%s37 + $0x3ac] sm:%s30]
      %502 = vst [vmem:[%s38 + $0x39c] sm:%s30] %v501
      %v503 = vld [vmem:[%s37 + $0x39c] sm:%s30]
      %504 = vst [vmem:[%s38 + $0x3a0] sm:%s30] %v503
      %v505 = vld [vmem:[%s37 + $0x3b0] sm:%s30]
      %506 = vst [vmem:[%s38 + $0x3a4] sm:%s30] %v505
      %v507 = vld [vmem:[%s37 + $0x3a0] sm:%s30]
      %508 = vst [vmem:[%s38 + $0x3a8] sm:%s30] %v507
      %v509 = vld [vmem:[%s37 + $0x3b4] sm:%s30]
      %510 = vst [vmem:[%s38 + $0x3ac] sm:%s30] %v509
      %v511 = vld [vmem:[%s37 + $0x3a4] sm:%s30]
      %512 = vst [vmem:[%s38 + $0x3b0] sm:%s30] %v511
      %v513 = vld [vmem:[%s37 + $0x3b8] sm:%s30]
      %514 = vst [vmem:[%s38 + $0x3b4] sm:%s30] %v513
      %v515 = vld [vmem:[%s37 + $0x3a8] sm:%s30]
      %516 = vst [vmem:[%s38 + $0x3b8] sm:%s30] %v515
      %v517 = vld [vmem:[%s37 + $0x3bc] sm:%s30]
      %518 = vst [vmem:[%s38 + $0x3bc] sm:%s30] %v517
      %v519 = vld [vmem:[%s37 + $0x3c0] sm:%s30]
      %520 = vst [vmem:[%s38 + $0x3c0] sm:%s30] %v519
      %v521 = vld [vmem:[%s37 + $0x3d4] sm:%s30]
      %522 = vst [vmem:[%s38 + $0x3c4] sm:%s30] %v521
      %v523 = vld [vmem:[%s37 + $0x3c4] sm:%s30]
      %524 = vst [vmem:[%s38 + $0x3c8] sm:%s30] %v523
      %v525 = vld [vmem:[%s37 + $0x3d8] sm:%s30]
      %526 = vst [vmem:[%s38 + $0x3cc] sm:%s30] %v525
      %v527 = vld [vmem:[%s37 + $0x3c8] sm:%s30]
      %528 = vst [vmem:[%s38 + $0x3d0] sm:%s30] %v527
      %v529 = vld [vmem:[%s37 + $0x3dc] sm:%s30]
      %530 = vst [vmem:[%s38 + $0x3d4] sm:%s30] %v529
      %v531 = vld [vmem:[%s37 + $0x3cc] sm:%s30]
      %532 = vst [vmem:[%s38 + $0x3d8] sm:%s30] %v531
      %v533 = vld [vmem:[%s37 + $0x3e0] sm:%s30]
      %534 = vst [vmem:[%s38 + $0x3dc] sm:%s30] %v533
      %v535 = vld [vmem:[%s37 + $0x3d0] sm:%s30]
      %536 = vst [vmem:[%s38 + $0x3e0] sm:%s30] %v535
      %v537 = vld [vmem:[%s37 + $0x3e4] sm:%s30]
      %538 = vst [vmem:[%s38 + $0x3e4] sm:%s30] %v537
      %v539 = vld [vmem:[%s37 + $0x3e8] sm:%s30]
      %540 = vst [vmem:[%s38 + $0x3e8] sm:%s30] %v539
      %v541 = vld [vmem:[%s37 + $0x3fc] sm:%s30]
      %542 = vst [vmem:[%s38 + $0x3ec] sm:%s30] %v541
      %v543 = vld [vmem:[%s37 + $0x3ec] sm:%s30]
      %544 = vst [vmem:[%s38 + $0x3f0] sm:%s30] %v543
      %v545 = vld [vmem:[%s37 + $0x400] sm:%s30]
      %546 = vst [vmem:[%s38 + $0x3f4] sm:%s30] %v545
      %v547 = vld [vmem:[%s37 + $0x3f0] sm:%s30]
      %548 = vst [vmem:[%s38 + $0x3f8] sm:%s30] %v547
      %v549 = vld [vmem:[%s37 + $0x404] sm:%s30]
      %550 = vst [vmem:[%s38 + $0x3fc] sm:%s30] %v549
      %v551 = vld [vmem:[%s37 + $0x3f4] sm:%s30]
      %552 = vst [vmem:[%s38 + $0x400] sm:%s30] %v551
      %v553 = vld [vmem:[%s37 + $0x408] sm:%s30]
      %554 = vst [vmem:[%s38 + $0x404] sm:%s30] %v553
      %v555 = vld [vmem:[%s37 + $0x3f8] sm:%s30]
      %556 = vst [vmem:[%s38 + $0x408] sm:%s30] %v555
      %v557 = vld [vmem:[%s37 + $0x40c] sm:%s30]
      %558 = vst [vmem:[%s38 + $0x40c] sm:%s30] %v557
      %v559 = vld [vmem:[%s37 + $0x410] sm:%s30]
      %560 = vst [vmem:[%s38 + $0x410] sm:%s30] %v559
      %v561 = vld [vmem:[%s37 + $0x424] sm:%s30]
      %562 = vst [vmem:[%s38 + $0x414] sm:%s30] %v561
      %v563 = vld [vmem:[%s37 + $0x414] sm:%s30]
      %564 = vst [vmem:[%s38 + $0x418] sm:%s30] %v563
      %v565 = vld [vmem:[%s37 + $0x428] sm:%s30]
      %566 = vst [vmem:[%s38 + $0x41c] sm:%s30] %v565
      %v567 = vld [vmem:[%s37 + $0x418] sm:%s30]
      %568 = vst [vmem:[%s38 + $0x420] sm:%s30] %v567
      %v569 = vld [vmem:[%s37 + $0x42c] sm:%s30]
      %570 = vst [vmem:[%s38 + $0x424] sm:%s30] %v569
      %v571 = vld [vmem:[%s37 + $0x41c] sm:%s30]
      %572 = vst [vmem:[%s38 + $0x428] sm:%s30] %v571
      %v573 = vld [vmem:[%s37 + $0x430] sm:%s30]
      %574 = vst [vmem:[%s38 + $0x42c] sm:%s30] %v573
      %v575 = vld [vmem:[%s37 + $0x420] sm:%s30]
      %576 = vst [vmem:[%s38 + $0x430] sm:%s30] %v575
      %v577 = vld [vmem:[%s37 + $0x434] sm:%s30]
      %578 = vst [vmem:[%s38 + $0x434] sm:%s30] %v577
      %v579 = vld [vmem:[%s37 + $0x438] sm:%s30]
      %580 = vst [vmem:[%s38 + $0x438] sm:%s30] %v579
      %v581 = vld [vmem:[%s37 + $0x44c] sm:%s30]
      %582 = vst [vmem:[%s38 + $0x43c] sm:%s30] %v581
      %v583 = vld [vmem:[%s37 + $0x43c] sm:%s30]
      %584 = vst [vmem:[%s38 + $0x440] sm:%s30] %v583
      %v585 = vld [vmem:[%s37 + $0x450] sm:%s30]
      %586 = vst [vmem:[%s38 + $0x444] sm:%s30] %v585
      %v587 = vld [vmem:[%s37 + $0x440] sm:%s30]
      %588 = vst [vmem:[%s38 + $0x448] sm:%s30] %v587
      %v589 = vld [vmem:[%s37 + $0x454] sm:%s30]
      %590 = vst [vmem:[%s38 + $0x44c] sm:%s30] %v589
      %v591 = vld [vmem:[%s37 + $0x444] sm:%s30]
      %592 = vst [vmem:[%s38 + $0x450] sm:%s30] %v591
      %v593 = vld [vmem:[%s37 + $0x458] sm:%s30]
      %594 = vst [vmem:[%s38 + $0x454] sm:%s30] %v593
      %v595 = vld [vmem:[%s37 + $0x448] sm:%s30]
      %596 = vst [vmem:[%s38 + $0x458] sm:%s30] %v595
      %v597 = vld [vmem:[%s37 + $0x45c] sm:%s30]
      %598 = vst [vmem:[%s38 + $0x45c] sm:%s30] %v597
      %v599 = vld [vmem:[%s37 + $0x460] sm:%s30]
      %600 = vst [vmem:[%s38 + $0x460] sm:%s30] %v599
      %v601 = vld [vmem:[%s37 + $0x474] sm:%s30]
      %602 = vst [vmem:[%s38 + $0x464] sm:%s30] %v601
      %v603 = vld [vmem:[%s37 + $0x464] sm:%s30]
      %604 = vst [vmem:[%s38 + $0x468] sm:%s30] %v603
      %v605 = vld [vmem:[%s37 + $0x478] sm:%s30]
      %606 = vst [vmem:[%s38 + $0x46c] sm:%s30] %v605
      %v607 = vld [vmem:[%s37 + $0x468] sm:%s30]
      %608 = vst [vmem:[%s38 + $0x470] sm:%s30] %v607
      %v609 = vld [vmem:[%s37 + $0x47c] sm:%s30]
      %610 = vst [vmem:[%s38 + $0x474] sm:%s30] %v609
      %v611 = vld [vmem:[%s37 + $0x46c] sm:%s30]
      %612 = vst [vmem:[%s38 + $0x478] sm:%s30] %v611
      %v613 = vld [vmem:[%s37 + $0x480] sm:%s30]
      %614 = vst [vmem:[%s38 + $0x47c] sm:%s30] %v613
      %v615 = vld [vmem:[%s37 + $0x470] sm:%s30]
      %616 = vst [vmem:[%s38 + $0x480] sm:%s30] %v615
      %v617 = vld [vmem:[%s37 + $0x484] sm:%s30]
      %618 = vst [vmem:[%s38 + $0x484] sm:%s30] %v617
      %v619 = vld [vmem:[%s37 + $0x488] sm:%s30]
      %620 = vst [vmem:[%s38 + $0x488] sm:%s30] %v619
      %v621 = vld [vmem:[%s37 + $0x49c] sm:%s30]
      %622 = vst [vmem:[%s38 + $0x48c] sm:%s30] %v621
      %v623 = vld [vmem:[%s37 + $0x48c] sm:%s30]
      %624 = vst [vmem:[%s38 + $0x490] sm:%s30] %v623
      %v625 = vld [vmem:[%s37 + $0x4a0] sm:%s30]
      %626 = vst [vmem:[%s38 + $0x494] sm:%s30] %v625
      %v627 = vld [vmem:[%s37 + $0x490] sm:%s30]
      %628 = vst [vmem:[%s38 + $0x498] sm:%s30] %v627
      %v629 = vld [vmem:[%s37 + $0x4a4] sm:%s30]
      %630 = vst [vmem:[%s38 + $0x49c] sm:%s30] %v629
      %v631 = vld [vmem:[%s37 + $0x494] sm:%s30]
      %632 = vst [vmem:[%s38 + $0x4a0] sm:%s30] %v631
      %v633 = vld [vmem:[%s37 + $0x4a8] sm:%s30]
      %634 = vst [vmem:[%s38 + $0x4a4] sm:%s30] %v633
      %v635 = vld [vmem:[%s37 + $0x498] sm:%s30]
      %636 = vst [vmem:[%s38 + $0x4a8] sm:%s30] %v635
      %v637 = vld [vmem:[%s37 + $0x4ac] sm:%s30]
      %638 = vst [vmem:[%s38 + $0x4ac] sm:%s30] %v637
      %v639 = vld [vmem:[%s37 + $0x4b0] sm:%s30]
      %640 = vst [vmem:[%s38 + $0x4b0] sm:%s30] %v639
      %v641 = vld [vmem:[%s37 + $0x4c4] sm:%s30]
      %642 = vst [vmem:[%s38 + $0x4b4] sm:%s30] %v641
      %v643 = vld [vmem:[%s37 + $0x4b4] sm:%s30]
      %644 = vst [vmem:[%s38 + $0x4b8] sm:%s30] %v643
      %v645 = vld [vmem:[%s37 + $0x4c8] sm:%s30]
      %646 = vst [vmem:[%s38 + $0x4bc] sm:%s30] %v645
      %v647 = vld [vmem:[%s37 + $0x4b8] sm:%s30]
      %648 = vst [vmem:[%s38 + $0x4c0] sm:%s30] %v647
      %v649 = vld [vmem:[%s37 + $0x4cc] sm:%s30]
      %650 = vst [vmem:[%s38 + $0x4c4] sm:%s30] %v649
      %v651 = vld [vmem:[%s37 + $0x4bc] sm:%s30]
      %652 = vst [vmem:[%s38 + $0x4c8] sm:%s30] %v651
      %v653 = vld [vmem:[%s37 + $0x4d0] sm:%s30]
      %654 = vst [vmem:[%s38 + $0x4cc] sm:%s30] %v653
      %v655 = vld [vmem:[%s37 + $0x4c0] sm:%s30]
      %656 = vst [vmem:[%s38 + $0x4d0] sm:%s30] %v655
      %v657 = vld [vmem:[%s37 + $0x4d4] sm:%s30]
      %658 = vst [vmem:[%s38 + $0x4d4] sm:%s30] %v657
      %v659 = vld [vmem:[%s37 + $0x4d8] sm:%s30]
      %660 = vst [vmem:[%s38 + $0x4d8] sm:%s30] %v659
      %v661 = vld [vmem:[%s37 + $0x4ec] sm:%s30]
      %662 = vst [vmem:[%s38 + $0x4dc] sm:%s30] %v661
      %v663 = vld [vmem:[%s37 + $0x4dc] sm:%s30]
      %664 = vst [vmem:[%s38 + $0x4e0] sm:%s30] %v663
      %v665 = vld [vmem:[%s37 + $0x4f0] sm:%s30]
      %666 = vst [vmem:[%s38 + $0x4e4] sm:%s30] %v665
      %v667 = vld [vmem:[%s37 + $0x4e0] sm:%s30]
      %668 = vst [vmem:[%s38 + $0x4e8] sm:%s30] %v667
      %v669 = vld [vmem:[%s37 + $0x4f4] sm:%s30]
      %670 = vst [vmem:[%s38 + $0x4ec] sm:%s30] %v669
      %v671 = vld [vmem:[%s37 + $0x4e4] sm:%s30]
      %672 = vst [vmem:[%s38 + $0x4f0] sm:%s30] %v671
      %v673 = vld [vmem:[%s37 + $0x4f8] sm:%s30]
      %674 = vst [vmem:[%s38 + $0x4f4] sm:%s30] %v673
      %v675 = vld [vmem:[%s37 + $0x4e8] sm:%s30]
      %676 = vst [vmem:[%s38 + $0x4f8] sm:%s30] %v675
      %v677 = vld [vmem:[%s37 + $0x4fc] sm:%s30]
      %678 = vst [vmem:[%s38 + $0x4fc] sm:%s30] %v677
      %v679 = vld [vmem:[%s37 + $0x500] sm:%s30]
      %680 = vst [vmem:[%s38 + $0x500] sm:%s30] %v679
      %v681 = vld [vmem:[%s37 + $0x514] sm:%s30]
      %682 = vst [vmem:[%s38 + $0x504] sm:%s30] %v681
      %v683 = vld [vmem:[%s37 + $0x504] sm:%s30]
      %684 = vst [vmem:[%s38 + $0x508] sm:%s30] %v683
      %v685 = vld [vmem:[%s37 + $0x518] sm:%s30]
      %686 = vst [vmem:[%s38 + $0x50c] sm:%s30] %v685
      %v687 = vld [vmem:[%s37 + $0x508] sm:%s30]
      %688 = vst [vmem:[%s38 + $0x510] sm:%s30] %v687
      %v689 = vld [vmem:[%s37 + $0x51c] sm:%s30]
      %690 = vst [vmem:[%s38 + $0x514] sm:%s30] %v689
      %v691 = vld [vmem:[%s37 + $0x50c] sm:%s30]
      %692 = vst [vmem:[%s38 + $0x518] sm:%s30] %v691
      %v693 = vld [vmem:[%s37 + $0x520] sm:%s30]
      %694 = vst [vmem:[%s38 + $0x51c] sm:%s30] %v693
      %v695 = vld [vmem:[%s37 + $0x510] sm:%s30]
      %696 = vst [vmem:[%s38 + $0x520] sm:%s30] %v695
      %v697 = vld [vmem:[%s37 + $0x524] sm:%s30]
      %698 = vst [vmem:[%s38 + $0x524] sm:%s30] %v697
      %v699 = vld [vmem:[%s37 + $0x528] sm:%s30]
      %700 = vst [vmem:[%s38 + $0x528] sm:%s30] %v699
      %v701 = vld [vmem:[%s37 + $0x53c] sm:%s30]
      %702 = vst [vmem:[%s38 + $0x52c] sm:%s30] %v701
      %v703 = vld [vmem:[%s37 + $0x52c] sm:%s30]
      %704 = vst [vmem:[%s38 + $0x530] sm:%s30] %v703
      %v705 = vld [vmem:[%s37 + $0x540] sm:%s30]
      %706 = vst [vmem:[%s38 + $0x534] sm:%s30] %v705
      %v707 = vld [vmem:[%s37 + $0x530] sm:%s30]
      %708 = vst [vmem:[%s38 + $0x538] sm:%s30] %v707
      %v709 = vld [vmem:[%s37 + $0x544] sm:%s30]
      %710 = vst [vmem:[%s38 + $0x53c] sm:%s30] %v709
      %v711 = vld [vmem:[%s37 + $0x534] sm:%s30]
      %712 = vst [vmem:[%s38 + $0x540] sm:%s30] %v711
      %v713 = vld [vmem:[%s37 + $0x548] sm:%s30]
      %714 = vst [vmem:[%s38 + $0x544] sm:%s30] %v713
      %v715 = vld [vmem:[%s37 + $0x538] sm:%s30]
      %716 = vst [vmem:[%s38 + $0x548] sm:%s30] %v715
      %v717 = vld [vmem:[%s37 + $0x54c] sm:%s30]
      %718 = vst [vmem:[%s38 + $0x54c] sm:%s30] %v717
      %v719 = vld [vmem:[%s37 + $0x550] sm:%s30]
      %720 = vst [vmem:[%s38 + $0x550] sm:%s30] %v719
      %v721 = vld [vmem:[%s37 + $0x564] sm:%s30]
      %722 = vst [vmem:[%s38 + $0x554] sm:%s30] %v721
      %v723 = vld [vmem:[%s37 + $0x554] sm:%s30]
      %724 = vst [vmem:[%s38 + $0x558] sm:%s30] %v723
      %v725 = vld [vmem:[%s37 + $0x568] sm:%s30]
      %726 = vst [vmem:[%s38 + $0x55c] sm:%s30] %v725
      %v727 = vld [vmem:[%s37 + $0x558] sm:%s30]
      %728 = vst [vmem:[%s38 + $0x560] sm:%s30] %v727
      %v729 = vld [vmem:[%s37 + $0x56c] sm:%s30]
      %730 = vst [vmem:[%s38 + $0x564] sm:%s30] %v729
      %v731 = vld [vmem:[%s37 + $0x55c] sm:%s30]
      %732 = vst [vmem:[%s38 + $0x568] sm:%s30] %v731
      %v733 = vld [vmem:[%s37 + $0x570] sm:%s30]
      %734 = vst [vmem:[%s38 + $0x56c] sm:%s30] %v733
      %v735 = vld [vmem:[%s37 + $0x560] sm:%s30]
      %736 = vst [vmem:[%s38 + $0x570] sm:%s30] %v735
      %v737 = vld [vmem:[%s37 + $0x574] sm:%s30]
      %738 = vst [vmem:[%s38 + $0x574] sm:%s30] %v737
      %v739 = vld [vmem:[%s37 + $0x578] sm:%s30]
      %740 = vst [vmem:[%s38 + $0x578] sm:%s30] %v739
      %v741 = vld [vmem:[%s37 + $0x58c] sm:%s30]
      %742 = vst [vmem:[%s38 + $0x57c] sm:%s30] %v741
      %v743 = vld [vmem:[%s37 + $0x57c] sm:%s30]
      %744 = vst [vmem:[%s38 + $0x580] sm:%s30] %v743
      %v745 = vld [vmem:[%s37 + $0x590] sm:%s30]
      %746 = vst [vmem:[%s38 + $0x584] sm:%s30] %v745
      %v747 = vld [vmem:[%s37 + $0x580] sm:%s30]
      %748 = vst [vmem:[%s38 + $0x588] sm:%s30] %v747
      %v749 = vld [vmem:[%s37 + $0x594] sm:%s30]
      %750 = vst [vmem:[%s38 + $0x58c] sm:%s30] %v749
      %v751 = vld [vmem:[%s37 + $0x584] sm:%s30]
      %752 = vst [vmem:[%s38 + $0x590] sm:%s30] %v751
      %v753 = vld [vmem:[%s37 + $0x598] sm:%s30]
      %754 = vst [vmem:[%s38 + $0x594] sm:%s30] %v753
      %v755 = vld [vmem:[%s37 + $0x588] sm:%s30]
      %756 = vst [vmem:[%s38 + $0x598] sm:%s30] %v755
      %v757 = vld [vmem:[%s37 + $0x59c] sm:%s30]
      %758 = vst [vmem:[%s38 + $0x59c] sm:%s30] %v757
      %v759 = vld [vmem:[%s37 + $0x5a0] sm:%s30]
      %760 = vst [vmem:[%s38 + $0x5a0] sm:%s30] %v759
      %v761 = vld [vmem:[%s37 + $0x5b4] sm:%s30]
      %762 = vst [vmem:[%s38 + $0x5a4] sm:%s30] %v761
      %v763 = vld [vmem:[%s37 + $0x5a4] sm:%s30]
      %764 = vst [vmem:[%s38 + $0x5a8] sm:%s30] %v763
      %v765 = vld [vmem:[%s37 + $0x5b8] sm:%s30]
      %766 = vst [vmem:[%s38 + $0x5ac] sm:%s30] %v765
      %v767 = vld [vmem:[%s37 + $0x5a8] sm:%s30]
      %768 = vst [vmem:[%s38 + $0x5b0] sm:%s30] %v767
      %v769 = vld [vmem:[%s37 + $0x5bc] sm:%s30]
      %770 = vst [vmem:[%s38 + $0x5b4] sm:%s30] %v769
      %v771 = vld [vmem:[%s37 + $0x5ac] sm:%s30]
      %772 = vst [vmem:[%s38 + $0x5b8] sm:%s30] %v771
      %v773 = vld [vmem:[%s37 + $0x5c0] sm:%s30]
      %774 = vst [vmem:[%s38 + $0x5bc] sm:%s30] %v773
      %v775 = vld [vmem:[%s37 + $0x5b0] sm:%s30]
      %776 = vst [vmem:[%s38 + $0x5c0] sm:%s30] %v775
      %v777 = vld [vmem:[%s37 + $0x5c4] sm:%s30]
      %778 = vst [vmem:[%s38 + $0x5c4] sm:%s30] %v777
      %v779 = vld [vmem:[%s37 + $0x5c8] sm:%s30]
      %780 = vst [vmem:[%s38 + $0x5c8] sm:%s30] %v779
      %v781 = vld [vmem:[%s37 + $0x5dc] sm:%s30]
      %782 = vst [vmem:[%s38 + $0x5cc] sm:%s30] %v781
      %v783 = vld [vmem:[%s37 + $0x5cc] sm:%s30]
      %784 = vst [vmem:[%s38 + $0x5d0] sm:%s30] %v783
      %v785 = vld [vmem:[%s37 + $0x5e0] sm:%s30]
      %786 = vst [vmem:[%s38 + $0x5d4] sm:%s30] %v785
      %v787 = vld [vmem:[%s37 + $0x5d0] sm:%s30]
      %788 = vst [vmem:[%s38 + $0x5d8] sm:%s30] %v787
      %v789 = vld [vmem:[%s37 + $0x5e4] sm:%s30]
      %790 = vst [vmem:[%s38 + $0x5dc] sm:%s30] %v789
      %v791 = vld [vmem:[%s37 + $0x5d4] sm:%s30]
      %792 = vst [vmem:[%s38 + $0x5e0] sm:%s30] %v791
      %v793 = vld [vmem:[%s37 + $0x5e8] sm:%s30]
      %794 = vst [vmem:[%s38 + $0x5e4] sm:%s30] %v793
      %v795 = vld [vmem:[%s37 + $0x5d8] sm:%s30]
      %796 = vst [vmem:[%s38 + $0x5e8] sm:%s30] %v795
      %v797 = vld [vmem:[%s37 + $0x5ec] sm:%s30]
      %798 = vst [vmem:[%s38 + $0x5ec] sm:%s30] %v797
      %v799 = vld [vmem:[%s37 + $0x5f0] sm:%s30]
      %800 = vst [vmem:[%s38 + $0x5f0] sm:%s30] %v799
      %v801 = vld [vmem:[%s37 + $0x604] sm:%s30]
      %802 = vst [vmem:[%s38 + $0x5f4] sm:%s30] %v801
      %v803 = vld [vmem:[%s37 + $0x5f4] sm:%s30]
      %804 = vst [vmem:[%s38 + $0x5f8] sm:%s30] %v803
      %v805 = vld [vmem:[%s37 + $0x608] sm:%s30]
      %806 = vst [vmem:[%s38 + $0x5fc] sm:%s30] %v805
      %v807 = vld [vmem:[%s37 + $0x5f8] sm:%s30]
      %808 = vst [vmem:[%s38 + $0x600] sm:%s30] %v807
      %v809 = vld [vmem:[%s37 + $0x60c] sm:%s30]
      %810 = vst [vmem:[%s38 + $0x604] sm:%s30] %v809
      %v811 = vld [vmem:[%s37 + $0x5fc] sm:%s30]
      %812 = vst [vmem:[%s38 + $0x608] sm:%s30] %v811
      %v813 = vld [vmem:[%s37 + $0x610] sm:%s30]
      %814 = vst [vmem:[%s38 + $0x60c] sm:%s30] %v813
      %v815 = vld [vmem:[%s37 + $0x600] sm:%s30]
      %816 = vst [vmem:[%s38 + $0x610] sm:%s30] %v815
      %v817 = vld [vmem:[%s37 + $0x614] sm:%s30]
      %818 = vst [vmem:[%s38 + $0x614] sm:%s30] %v817
      %v819 = vld [vmem:[%s37 + $0x618] sm:%s30]
      %820 = vst [vmem:[%s38 + $0x618] sm:%s30] %v819
      %v821 = vld [vmem:[%s37 + $0x62c] sm:%s30]
      %822 = vst [vmem:[%s38 + $0x61c] sm:%s30] %v821
      %v823 = vld [vmem:[%s37 + $0x61c] sm:%s30]
      %824 = vst [vmem:[%s38 + $0x620] sm:%s30] %v823
      %v825 = vld [vmem:[%s37 + $0x630] sm:%s30]
      %826 = vst [vmem:[%s38 + $0x624] sm:%s30] %v825
      %v827 = vld [vmem:[%s37 + $0x620] sm:%s30]
      %828 = vst [vmem:[%s38 + $0x628] sm:%s30] %v827
      %v829 = vld [vmem:[%s37 + $0x634] sm:%s30]
      %830 = vst [vmem:[%s38 + $0x62c] sm:%s30] %v829
      %v831 = vld [vmem:[%s37 + $0x624] sm:%s30]
      %832 = vst [vmem:[%s38 + $0x630] sm:%s30] %v831
      %v833 = vld [vmem:[%s37 + $0x638] sm:%s30]
      %834 = vst [vmem:[%s38 + $0x634] sm:%s30] %v833
      %v835 = vld [vmem:[%s37 + $0x628] sm:%s30]
      %836 = vst [vmem:[%s38 + $0x638] sm:%s30] %v835
      %v837 = vld [vmem:[%s37 + $0x63c] sm:%s30]
      %838 = vst [vmem:[%s38 + $0x63c] sm:%s30] %v837
      %v839 = vld [vmem:[%s37 + $0x640] sm:%s30]
      %840 = vst [vmem:[%s38 + $0x640] sm:%s30] %v839
      %v841 = vld [vmem:[%s37 + $0x654] sm:%s30]
      %842 = vst [vmem:[%s38 + $0x644] sm:%s30] %v841
      %v843 = vld [vmem:[%s37 + $0x644] sm:%s30]
      %844 = vst [vmem:[%s38 + $0x648] sm:%s30] %v843
      %v845 = vld [vmem:[%s37 + $0x658] sm:%s30]
      %846 = vst [vmem:[%s38 + $0x64c] sm:%s30] %v845
      %v847 = vld [vmem:[%s37 + $0x648] sm:%s30]
      %848 = vst [vmem:[%s38 + $0x650] sm:%s30] %v847
      %v849 = vld [vmem:[%s37 + $0x65c] sm:%s30]
      %850 = vst [vmem:[%s38 + $0x654] sm:%s30] %v849
      %v851 = vld [vmem:[%s37 + $0x64c] sm:%s30]
      %852 = vst [vmem:[%s38 + $0x658] sm:%s30] %v851
      %v853 = vld [vmem:[%s37 + $0x660] sm:%s30]
      %854 = vst [vmem:[%s38 + $0x65c] sm:%s30] %v853
      %v855 = vld [vmem:[%s37 + $0x650] sm:%s30]
      %856 = vst [vmem:[%s38 + $0x660] sm:%s30] %v855
      %v857 = vld [vmem:[%s37 + $0x664] sm:%s30]
      %858 = vst [vmem:[%s38 + $0x664] sm:%s30] %v857
      %v859 = vld [vmem:[%s37 + $0x668] sm:%s30]
      %860 = vst [vmem:[%s38 + $0x668] sm:%s30] %v859
      %v861 = vld [vmem:[%s37 + $0x67c] sm:%s30]
      %862 = vst [vmem:[%s38 + $0x66c] sm:%s30] %v861
      %v863 = vld [vmem:[%s37 + $0x66c] sm:%s30]
      %864 = vst [vmem:[%s38 + $0x670] sm:%s30] %v863
      %v865 = vld [vmem:[%s37 + $0x680] sm:%s30]
      %866 = vst [vmem:[%s38 + $0x674] sm:%s30] %v865
      %v867 = vld [vmem:[%s37 + $0x670] sm:%s30]
      %868 = vst [vmem:[%s38 + $0x678] sm:%s30] %v867
      %v869 = vld [vmem:[%s37 + $0x684] sm:%s30]
      %870 = vst [vmem:[%s38 + $0x67c] sm:%s30] %v869
      %v871 = vld [vmem:[%s37 + $0x674] sm:%s30]
      %872 = vst [vmem:[%s38 + $0x680] sm:%s30] %v871
      %v873 = vld [vmem:[%s37 + $0x688] sm:%s30]
      %874 = vst [vmem:[%s38 + $0x684] sm:%s30] %v873
      %v875 = vld [vmem:[%s37 + $0x678] sm:%s30]
      %876 = vst [vmem:[%s38 + $0x688] sm:%s30] %v875
      %v877 = vld [vmem:[%s37 + $0x68c] sm:%s30]
      %878 = vst [vmem:[%s38 + $0x68c] sm:%s30] %v877
      %v879 = vld [vmem:[%s37 + $0x690] sm:%s30]
      %880 = vst [vmem:[%s38 + $0x690] sm:%s30] %v879
      %v881 = vld [vmem:[%s37 + $0x6a4] sm:%s30]
      %882 = vst [vmem:[%s38 + $0x694] sm:%s30] %v881
      %v883 = vld [vmem:[%s37 + $0x694] sm:%s30]
      %884 = vst [vmem:[%s38 + $0x698] sm:%s30] %v883
      %v885 = vld [vmem:[%s37 + $0x6a8] sm:%s30]
      %886 = vst [vmem:[%s38 + $0x69c] sm:%s30] %v885
      %v887 = vld [vmem:[%s37 + $0x698] sm:%s30]
      %888 = vst [vmem:[%s38 + $0x6a0] sm:%s30] %v887
      %v889 = vld [vmem:[%s37 + $0x6ac] sm:%s30]
      %890 = vst [vmem:[%s38 + $0x6a4] sm:%s30] %v889
      %v891 = vld [vmem:[%s37 + $0x69c] sm:%s30]
      %892 = vst [vmem:[%s38 + $0x6a8] sm:%s30] %v891
      %v893 = vld [vmem:[%s37 + $0x6b0] sm:%s30]
      %894 = vst [vmem:[%s38 + $0x6ac] sm:%s30] %v893
      %v895 = vld [vmem:[%s37 + $0x6a0] sm:%s30]
      %896 = vst [vmem:[%s38 + $0x6b0] sm:%s30] %v895
      %v897 = vld [vmem:[%s37 + $0x6b4] sm:%s30]
      %898 = vst [vmem:[%s38 + $0x6b4] sm:%s30] %v897
      %v899 = vld [vmem:[%s37 + $0x6b8] sm:%s30]
      %900 = vst [vmem:[%s38 + $0x6b8] sm:%s30] %v899
      %v901 = vld [vmem:[%s37 + $0x6cc] sm:%s30]
      %902 = vst [vmem:[%s38 + $0x6bc] sm:%s30] %v901
      %v903 = vld [vmem:[%s37 + $0x6bc] sm:%s30]
      %904 = vst [vmem:[%s38 + $0x6c0] sm:%s30] %v903
      %v905 = vld [vmem:[%s37 + $0x6d0] sm:%s30]
      %906 = vst [vmem:[%s38 + $0x6c4] sm:%s30] %v905
      %v907 = vld [vmem:[%s37 + $0x6c0] sm:%s30]
      %908 = vst [vmem:[%s38 + $0x6c8] sm:%s30] %v907
      %v909 = vld [vmem:[%s37 + $0x6d4] sm:%s30]
      %910 = vst [vmem:[%s38 + $0x6cc] sm:%s30] %v909
      %v911 = vld [vmem:[%s37 + $0x6c4] sm:%s30]
      %912 = vst [vmem:[%s38 + $0x6d0] sm:%s30] %v911
      %v913 = vld [vmem:[%s37 + $0x6d8] sm:%s30]
      %914 = vst [vmem:[%s38 + $0x6d4] sm:%s30] %v913
      %v915 = vld [vmem:[%s37 + $0x6c8] sm:%s30]
      %916 = vst [vmem:[%s38 + $0x6d8] sm:%s30] %v915
      %v917 = vld [vmem:[%s37 + $0x6dc] sm:%s30]
      %918 = vst [vmem:[%s38 + $0x6dc] sm:%s30] %v917
      %v919 = vld [vmem:[%s37 + $0x6e0] sm:%s30]
      %920 = vst [vmem:[%s38 + $0x6e0] sm:%s30] %v919
      %v921 = vld [vmem:[%s37 + $0x6f4] sm:%s30]
      %922 = vst [vmem:[%s38 + $0x6e4] sm:%s30] %v921
      %v923 = vld [vmem:[%s37 + $0x6e4] sm:%s30]
      %924 = vst [vmem:[%s38 + $0x6e8] sm:%s30] %v923
      %v925 = vld [vmem:[%s37 + $0x6f8] sm:%s30]
      %926 = vst [vmem:[%s38 + $0x6ec] sm:%s30] %v925
      %v927 = vld [vmem:[%s37 + $0x6e8] sm:%s30]
      %928 = vst [vmem:[%s38 + $0x6f0] sm:%s30] %v927
      %v929 = vld [vmem:[%s37 + $0x6fc] sm:%s30]
      %930 = vst [vmem:[%s38 + $0x6f4] sm:%s30] %v929
      %v931 = vld [vmem:[%s37 + $0x6ec] sm:%s30]
      %932 = vst [vmem:[%s38 + $0x6f8] sm:%s30] %v931
      %v933 = vld [vmem:[%s37 + $0x700] sm:%s30]
      %934 = vst [vmem:[%s38 + $0x6fc] sm:%s30] %v933
      %v935 = vld [vmem:[%s37 + $0x6f0] sm:%s30]
      %936 = vst [vmem:[%s38 + $0x700] sm:%s30] %v935
      %v937 = vld [vmem:[%s37 + $0x704] sm:%s30]
      %938 = vst [vmem:[%s38 + $0x704] sm:%s30] %v937
      %v939 = vld [vmem:[%s37 + $0x708] sm:%s30]
      %940 = vst [vmem:[%s38 + $0x708] sm:%s30] %v939
      %v941 = vld [vmem:[%s37 + $0x71c] sm:%s30]
      %942 = vst [vmem:[%s38 + $0x70c] sm:%s30] %v941
      %v943 = vld [vmem:[%s37 + $0x70c] sm:%s30]
      %944 = vst [vmem:[%s38 + $0x710] sm:%s30] %v943
      %v945 = vld [vmem:[%s37 + $0x720] sm:%s30]
      %946 = vst [vmem:[%s38 + $0x714] sm:%s30] %v945
      %v947 = vld [vmem:[%s37 + $0x710] sm:%s30]
      %948 = vst [vmem:[%s38 + $0x718] sm:%s30] %v947
      %v949 = vld [vmem:[%s37 + $0x724] sm:%s30]
      %950 = vst [vmem:[%s38 + $0x71c] sm:%s30] %v949
      %v951 = vld [vmem:[%s37 + $0x714] sm:%s30]
      %952 = vst [vmem:[%s38 + $0x720] sm:%s30] %v951
      %v953 = vld [vmem:[%s37 + $0x728] sm:%s30]
      %954 = vst [vmem:[%s38 + $0x724] sm:%s30] %v953
      %v955 = vld [vmem:[%s37 + $0x718] sm:%s30]
      %956 = vst [vmem:[%s38 + $0x728] sm:%s30] %v955
      %v957 = vld [vmem:[%s37 + $0x72c] sm:%s30]
      %958 = vst [vmem:[%s38 + $0x72c] sm:%s30] %v957
      %v959 = vld [vmem:[%s37 + $0x730] sm:%s30]
      %960 = vst [vmem:[%s38 + $0x730] sm:%s30] %v959
      %v961 = vld [vmem:[%s37 + $0x744] sm:%s30]
      %962 = vst [vmem:[%s38 + $0x734] sm:%s30] %v961
      %v963 = vld [vmem:[%s37 + $0x734] sm:%s30]
      %964 = vst [vmem:[%s38 + $0x738] sm:%s30] %v963
      %v965 = vld [vmem:[%s37 + $0x748] sm:%s30]
      %966 = vst [vmem:[%s38 + $0x73c] sm:%s30] %v965
      %v967 = vld [vmem:[%s37 + $0x738] sm:%s30]
      %968 = vst [vmem:[%s38 + $0x740] sm:%s30] %v967
      %v969 = vld [vmem:[%s37 + $0x74c] sm:%s30]
      %970 = vst [vmem:[%s38 + $0x744] sm:%s30] %v969
      %v971 = vld [vmem:[%s37 + $0x73c] sm:%s30]
      %972 = vst [vmem:[%s38 + $0x748] sm:%s30] %v971
      %v973 = vld [vmem:[%s37 + $0x750] sm:%s30]
      %974 = vst [vmem:[%s38 + $0x74c] sm:%s30] %v973
      %v975 = vld [vmem:[%s37 + $0x740] sm:%s30]
      %976 = vst [vmem:[%s38 + $0x750] sm:%s30] %v975
      %v977 = vld [vmem:[%s37 + $0x754] sm:%s30]
      %978 = vst [vmem:[%s38 + $0x754] sm:%s30] %v977
      %v979 = vld [vmem:[%s37 + $0x758] sm:%s30]
      %980 = vst [vmem:[%s38 + $0x758] sm:%s30] %v979
      %v981 = vld [vmem:[%s37 + $0x76c] sm:%s30]
      %982 = vst [vmem:[%s38 + $0x75c] sm:%s30] %v981
      %v983 = vld [vmem:[%s37 + $0x75c] sm:%s30]
      %984 = vst [vmem:[%s38 + $0x760] sm:%s30] %v983
      %v985 = vld [vmem:[%s37 + $0x770] sm:%s30]
      %986 = vst [vmem:[%s38 + $0x764] sm:%s30] %v985
      %v987 = vld [vmem:[%s37 + $0x760] sm:%s30]
      %988 = vst [vmem:[%s38 + $0x768] sm:%s30] %v987
      %v989 = vld [vmem:[%s37 + $0x774] sm:%s30]
      %990 = vst [vmem:[%s38 + $0x76c] sm:%s30] %v989
      %v991 = vld [vmem:[%s37 + $0x764] sm:%s30]
      %992 = vst [vmem:[%s38 + $0x770] sm:%s30] %v991
      %v993 = vld [vmem:[%s37 + $0x778] sm:%s30]
      %994 = vst [vmem:[%s38 + $0x774] sm:%s30] %v993
      %v995 = vld [vmem:[%s37 + $0x768] sm:%s30]
      %996 = vst [vmem:[%s38 + $0x778] sm:%s30] %v995
      %v997 = vld [vmem:[%s37 + $0x77c] sm:%s30]
      %998 = vst [vmem:[%s38 + $0x77c] sm:%s30] %v997
      %v999 = vld [vmem:[%s37 + $0x780] sm:%s30]
      %1000 = vst [vmem:[%s38 + $0x780] sm:%s30] %v999
      %v1001 = vld [vmem:[%s37 + $0x794] sm:%s30]
      %1002 = vst [vmem:[%s38 + $0x784] sm:%s30] %v1001
      %v1003 = vld [vmem:[%s37 + $0x784] sm:%s30]
      %1004 = vst [vmem:[%s38 + $0x788] sm:%s30] %v1003
      %v1005 = vld [vmem:[%s37 + $0x798] sm:%s30]
      %1006 = vst [vmem:[%s38 + $0x78c] sm:%s30] %v1005
      %v1007 = vld [vmem:[%s37 + $0x788] sm:%s30]
      %1008 = vst [vmem:[%s38 + $0x790] sm:%s30] %v1007
      %v1009 = vld [vmem:[%s37 + $0x79c] sm:%s30]
      %1010 = vst [vmem:[%s38 + $0x794] sm:%s30] %v1009
      %v1011 = vld [vmem:[%s37 + $0x78c] sm:%s30]
      %1012 = vst [vmem:[%s38 + $0x798] sm:%s30] %v1011
      %v1013 = vld [vmem:[%s37 + $0x7a0] sm:%s30]
      %1014 = vst [vmem:[%s38 + $0x79c] sm:%s30] %v1013
      %v1015 = vld [vmem:[%s37 + $0x790] sm:%s30]
      %1016 = vst [vmem:[%s38 + $0x7a0] sm:%s30] %v1015
      %v1017 = vld [vmem:[%s37 + $0x7a4] sm:%s30]
      %1018 = vst [vmem:[%s38 + $0x7a4] sm:%s30] %v1017
      %v1019 = vld [vmem:[%s37 + $0x7a8] sm:%s30]
      %1020 = vst [vmem:[%s38 + $0x7a8] sm:%s30] %v1019
      %v1021 = vld [vmem:[%s37 + $0x7bc] sm:%s30]
      %1022 = vst [vmem:[%s38 + $0x7ac] sm:%s30] %v1021
      %v1023 = vld [vmem:[%s37 + $0x7ac] sm:%s30]
      %1024 = vst [vmem:[%s38 + $0x7b0] sm:%s30] %v1023
      %v1025 = vld [vmem:[%s37 + $0x7c0] sm:%s30]
      %1026 = vst [vmem:[%s38 + $0x7b4] sm:%s30] %v1025
      %v1027 = vld [vmem:[%s37 + $0x7b0] sm:%s30]
      %1028 = vst [vmem:[%s38 + $0x7b8] sm:%s30] %v1027
      %v1029 = vld [vmem:[%s37 + $0x7c4] sm:%s30]
      %1030 = vst [vmem:[%s38 + $0x7bc] sm:%s30] %v1029
      %v1031 = vld [vmem:[%s37 + $0x7b4] sm:%s30]
      %1032 = vst [vmem:[%s38 + $0x7c0] sm:%s30] %v1031
      %v1033 = vld [vmem:[%s37 + $0x7c8] sm:%s30]
      %1034 = vst [vmem:[%s38 + $0x7c4] sm:%s30] %v1033
      %v1035 = vld [vmem:[%s37 + $0x7b8] sm:%s30]
      %1036 = vst [vmem:[%s38 + $0x7c8] sm:%s30] %v1035
      %v1037 = vld [vmem:[%s37 + $0x7cc] sm:%s30]
      %1038 = vst [vmem:[%s38 + $0x7cc] sm:%s30] %v1037
      %v1039 = vld [vmem:[%s37 + $0x7d0] sm:%s30]
      %1040 = vst [vmem:[%s38 + $0x7d0] sm:%s30] %v1039
      %v1041 = vld [vmem:[%s37 + $0x7e4] sm:%s30]
      %1042 = vst [vmem:[%s38 + $0x7d4] sm:%s30] %v1041
      %v1043 = vld [vmem:[%s37 + $0x7d4] sm:%s30]
      %1044 = vst [vmem:[%s38 + $0x7d8] sm:%s30] %v1043
      %v1045 = vld [vmem:[%s37 + $0x7e8] sm:%s30]
      %1046 = vst [vmem:[%s38 + $0x7dc] sm:%s30] %v1045
      %v1047 = vld [vmem:[%s37 + $0x7d8] sm:%s30]
      %1048 = vst [vmem:[%s38 + $0x7e0] sm:%s30] %v1047
      %v1049 = vld [vmem:[%s37 + $0x7ec] sm:%s30]
      %1050 = vst [vmem:[%s38 + $0x7e4] sm:%s30] %v1049
      %v1051 = vld [vmem:[%s37 + $0x7dc] sm:%s30]
      %1052 = vst [vmem:[%s38 + $0x7e8] sm:%s30] %v1051
      %v1053 = vld [vmem:[%s37 + $0x7f0] sm:%s30]
      %1054 = vst [vmem:[%s38 + $0x7ec] sm:%s30] %v1053
      %v1055 = vld [vmem:[%s37 + $0x7e0] sm:%s30]
      %1056 = vst [vmem:[%s38 + $0x7f0] sm:%s30] %v1055
      %v1057 = vld [vmem:[%s37 + $0x7f4] sm:%s30]
      %1058 = vst [vmem:[%s38 + $0x7f4] sm:%s30] %v1057
      %v1059 = vld [vmem:[%s37 + $0x7f8] sm:%s30]
      %1060 = vst [vmem:[%s38 + $0x7f8] sm:%s30] %v1059
      %v1061 = vld [vmem:[%s37 + $0x80c] sm:%s30]
      %1062 = vst [vmem:[%s38 + $0x7fc] sm:%s30] %v1061
      %v1063 = vld [vmem:[%s37 + $0x7fc] sm:%s30]
      %1064 = vst [vmem:[%s38 + $0x800] sm:%s30] %v1063
      %v1065 = vld [vmem:[%s37 + $0x810] sm:%s30]
      %1066 = vst [vmem:[%s38 + $0x804] sm:%s30] %v1065
      %v1067 = vld [vmem:[%s37 + $0x800] sm:%s30]
      %1068 = vst [vmem:[%s38 + $0x808] sm:%s30] %v1067
      %v1069 = vld [vmem:[%s37 + $0x814] sm:%s30]
      %1070 = vst [vmem:[%s38 + $0x80c] sm:%s30] %v1069
      %v1071 = vld [vmem:[%s37 + $0x804] sm:%s30]
      %1072 = vst [vmem:[%s38 + $0x810] sm:%s30] %v1071
      %v1073 = vld [vmem:[%s37 + $0x818] sm:%s30]
      %1074 = vst [vmem:[%s38 + $0x814] sm:%s30] %v1073
      %v1075 = vld [vmem:[%s37 + $0x808] sm:%s30]
      %1076 = vst [vmem:[%s38 + $0x818] sm:%s30] %v1075
      %v1077 = vld [vmem:[%s37 + $0x81c] sm:%s30]
      %1078 = vst [vmem:[%s38 + $0x81c] sm:%s30] %v1077
      %v1079 = vld [vmem:[%s37 + $0x820] sm:%s30]
      %1080 = vst [vmem:[%s38 + $0x820] sm:%s30] %v1079
      %v1081 = vld [vmem:[%s37 + $0x834] sm:%s30]
      %1082 = vst [vmem:[%s38 + $0x824] sm:%s30] %v1081
      %v1083 = vld [vmem:[%s37 + $0x824] sm:%s30]
      %1084 = vst [vmem:[%s38 + $0x828] sm:%s30] %v1083
      %v1085 = vld [vmem:[%s37 + $0x838] sm:%s30]
      %1086 = vst [vmem:[%s38 + $0x82c] sm:%s30] %v1085
      %v1087 = vld [vmem:[%s37 + $0x828] sm:%s30]
      %1088 = vst [vmem:[%s38 + $0x830] sm:%s30] %v1087
      %v1089 = vld [vmem:[%s37 + $0x83c] sm:%s30]
      %1090 = vst [vmem:[%s38 + $0x834] sm:%s30] %v1089
      %v1091 = vld [vmem:[%s37 + $0x82c] sm:%s30]
      %1092 = vst [vmem:[%s38 + $0x838] sm:%s30] %v1091
      %v1093 = vld [vmem:[%s37 + $0x840] sm:%s30]
      %1094 = vst [vmem:[%s38 + $0x83c] sm:%s30] %v1093
      %v1095 = vld [vmem:[%s37 + $0x830] sm:%s30]
      %1096 = vst [vmem:[%s38 + $0x840] sm:%s30] %v1095
      %v1097 = vld [vmem:[%s37 + $0x844] sm:%s30]
      %1098 = vst [vmem:[%s38 + $0x844] sm:%s30] %v1097
      %v1099 = vld [vmem:[%s37 + $0x848] sm:%s30]
      %1100 = vst [vmem:[%s38 + $0x848] sm:%s30] %v1099
      %v1101 = vld [vmem:[%s37 + $0x85c] sm:%s30]
      %1102 = vst [vmem:[%s38 + $0x84c] sm:%s30] %v1101
      %v1103 = vld [vmem:[%s37 + $0x84c] sm:%s30]
      %1104 = vst [vmem:[%s38 + $0x850] sm:%s30] %v1103
      %v1105 = vld [vmem:[%s37 + $0x860] sm:%s30]
      %1106 = vst [vmem:[%s38 + $0x854] sm:%s30] %v1105
      %v1107 = vld [vmem:[%s37 + $0x850] sm:%s30]
      %1108 = vst [vmem:[%s38 + $0x858] sm:%s30] %v1107
      %v1109 = vld [vmem:[%s37 + $0x864] sm:%s30]
      %1110 = vst [vmem:[%s38 + $0x85c] sm:%s30] %v1109
      %v1111 = vld [vmem:[%s37 + $0x854] sm:%s30]
      %1112 = vst [vmem:[%s38 + $0x860] sm:%s30] %v1111
      %v1113 = vld [vmem:[%s37 + $0x868] sm:%s30]
      %1114 = vst [vmem:[%s38 + $0x864] sm:%s30] %v1113
      %v1115 = vld [vmem:[%s37 + $0x858] sm:%s30]
      %1116 = vst [vmem:[%s38 + $0x868] sm:%s30] %v1115
      %v1117 = vld [vmem:[%s37 + $0x86c] sm:%s30]
      %1118 = vst [vmem:[%s38 + $0x86c] sm:%s30] %v1117
      %v1119 = vld [vmem:[%s37 + $0x870] sm:%s30]
      %1120 = vst [vmem:[%s38 + $0x870] sm:%s30] %v1119
      %v1121 = vld [vmem:[%s37 + $0x884] sm:%s30]
      %1122 = vst [vmem:[%s38 + $0x874] sm:%s30] %v1121
      %v1123 = vld [vmem:[%s37 + $0x874] sm:%s30]
      %1124 = vst [vmem:[%s38 + $0x878] sm:%s30] %v1123
      %v1125 = vld [vmem:[%s37 + $0x888] sm:%s30]
      %1126 = vst [vmem:[%s38 + $0x87c] sm:%s30] %v1125
      %v1127 = vld [vmem:[%s37 + $0x878] sm:%s30]
      %1128 = vst [vmem:[%s38 + $0x880] sm:%s30] %v1127
      %v1129 = vld [vmem:[%s37 + $0x88c] sm:%s30]
      %1130 = vst [vmem:[%s38 + $0x884] sm:%s30] %v1129
      %v1131 = vld [vmem:[%s37 + $0x87c] sm:%s30]
      %1132 = vst [vmem:[%s38 + $0x888] sm:%s30] %v1131
      %v1133 = vld [vmem:[%s37 + $0x890] sm:%s30]
      %1134 = vst [vmem:[%s38 + $0x88c] sm:%s30] %v1133
      %v1135 = vld [vmem:[%s37 + $0x880] sm:%s30]
      %1136 = vst [vmem:[%s38 + $0x890] sm:%s30] %v1135
      %v1137 = vld [vmem:[%s37 + $0x894] sm:%s30]
      %1138 = vst [vmem:[%s38 + $0x894] sm:%s30] %v1137
      %v1139 = vld [vmem:[%s37 + $0x898] sm:%s30]
      %1140 = vst [vmem:[%s38 + $0x898] sm:%s30] %v1139
      %v1141 = vld [vmem:[%s37 + $0x8ac] sm:%s30]
      %1142 = vst [vmem:[%s38 + $0x89c] sm:%s30] %v1141
      %v1143 = vld [vmem:[%s37 + $0x89c] sm:%s30]
      %1144 = vst [vmem:[%s38 + $0x8a0] sm:%s30] %v1143
      %v1145 = vld [vmem:[%s37 + $0x8b0] sm:%s30]
      %1146 = vst [vmem:[%s38 + $0x8a4] sm:%s30] %v1145
      %v1147 = vld [vmem:[%s37 + $0x8a0] sm:%s30]
      %1148 = vst [vmem:[%s38 + $0x8a8] sm:%s30] %v1147
      %v1149 = vld [vmem:[%s37 + $0x8b4] sm:%s30]
      %1150 = vst [vmem:[%s38 + $0x8ac] sm:%s30] %v1149
      %v1151 = vld [vmem:[%s37 + $0x8a4] sm:%s30]
      %1152 = vst [vmem:[%s38 + $0x8b0] sm:%s30] %v1151
      %v1153 = vld [vmem:[%s37 + $0x8b8] sm:%s30]
      %1154 = vst [vmem:[%s38 + $0x8b4] sm:%s30] %v1153
      %v1155 = vld [vmem:[%s37 + $0x8a8] sm:%s30]
      %1156 = vst [vmem:[%s38 + $0x8b8] sm:%s30] %v1155
      %v1157 = vld [vmem:[%s37 + $0x8bc] sm:%s30]
      %1158 = vst [vmem:[%s38 + $0x8bc] sm:%s30] %v1157
      %v1159 = vld [vmem:[%s37 + $0x8c0] sm:%s30]
      %1160 = vst [vmem:[%s38 + $0x8c0] sm:%s30] %v1159
      %v1161 = vld [vmem:[%s37 + $0x8d4] sm:%s30]
      %1162 = vst [vmem:[%s38 + $0x8c4] sm:%s30] %v1161
      %v1163 = vld [vmem:[%s37 + $0x8c4] sm:%s30]
      %1164 = vst [vmem:[%s38 + $0x8c8] sm:%s30] %v1163
      %v1165 = vld [vmem:[%s37 + $0x8d8] sm:%s30]
      %1166 = vst [vmem:[%s38 + $0x8cc] sm:%s30] %v1165
      %v1167 = vld [vmem:[%s37 + $0x8c8] sm:%s30]
      %1168 = vst [vmem:[%s38 + $0x8d0] sm:%s30] %v1167
      %v1169 = vld [vmem:[%s37 + $0x8dc] sm:%s30]
      %1170 = vst [vmem:[%s38 + $0x8d4] sm:%s30] %v1169
      %v1171 = vld [vmem:[%s37 + $0x8cc] sm:%s30]
      %1172 = vst [vmem:[%s38 + $0x8d8] sm:%s30] %v1171
      %v1173 = vld [vmem:[%s37 + $0x8e0] sm:%s30]
      %1174 = vst [vmem:[%s38 + $0x8dc] sm:%s30] %v1173
      %v1175 = vld [vmem:[%s37 + $0x8d0] sm:%s30]
      %1176 = vst [vmem:[%s38 + $0x8e0] sm:%s30] %v1175
      %v1177 = vld [vmem:[%s37 + $0x8e4] sm:%s30]
      %1178 = vst [vmem:[%s38 + $0x8e4] sm:%s30] %v1177
      %v1179 = vld [vmem:[%s37 + $0x8e8] sm:%s30]
      %1180 = vst [vmem:[%s38 + $0x8e8] sm:%s30] %v1179
      %v1181 = vld [vmem:[%s37 + $0x8fc] sm:%s30]
      %1182 = vst [vmem:[%s38 + $0x8ec] sm:%s30] %v1181
      %v1183 = vld [vmem:[%s37 + $0x8ec] sm:%s30]
      %1184 = vst [vmem:[%s38 + $0x8f0] sm:%s30] %v1183
      %v1185 = vld [vmem:[%s37 + $0x900] sm:%s30]
      %1186 = vst [vmem:[%s38 + $0x8f4] sm:%s30] %v1185
      %v1187 = vld [vmem:[%s37 + $0x8f0] sm:%s30]
      %1188 = vst [vmem:[%s38 + $0x8f8] sm:%s30] %v1187
      %v1189 = vld [vmem:[%s37 + $0x904] sm:%s30]
      %1190 = vst [vmem:[%s38 + $0x8fc] sm:%s30] %v1189
      %v1191 = vld [vmem:[%s37 + $0x8f4] sm:%s30]
      %1192 = vst [vmem:[%s38 + $0x900] sm:%s30] %v1191
      %v1193 = vld [vmem:[%s37 + $0x908] sm:%s30]
      %1194 = vst [vmem:[%s38 + $0x904] sm:%s30] %v1193
      %v1195 = vld [vmem:[%s37 + $0x8f8] sm:%s30]
      %1196 = vst [vmem:[%s38 + $0x908] sm:%s30] %v1195
      %v1197 = vld [vmem:[%s37 + $0x90c] sm:%s30]
      %1198 = vst [vmem:[%s38 + $0x90c] sm:%s30] %v1197
      %v1199 = vld [vmem:[%s37 + $0x910] sm:%s30]
      %1200 = vst [vmem:[%s38 + $0x910] sm:%s30] %v1199
      %v1201 = vld [vmem:[%s37 + $0x924] sm:%s30]
      %1202 = vst [vmem:[%s38 + $0x914] sm:%s30] %v1201
      %v1203 = vld [vmem:[%s37 + $0x914] sm:%s30]
      %1204 = vst [vmem:[%s38 + $0x918] sm:%s30] %v1203
      %v1205 = vld [vmem:[%s37 + $0x928] sm:%s30]
      %1206 = vst [vmem:[%s38 + $0x91c] sm:%s30] %v1205
      %v1207 = vld [vmem:[%s37 + $0x918] sm:%s30]
      %1208 = vst [vmem:[%s38 + $0x920] sm:%s30] %v1207
      %v1209 = vld [vmem:[%s37 + $0x92c] sm:%s30]
      %1210 = vst [vmem:[%s38 + $0x924] sm:%s30] %v1209
      %v1211 = vld [vmem:[%s37 + $0x91c] sm:%s30]
      %1212 = vst [vmem:[%s38 + $0x928] sm:%s30] %v1211
      %v1213 = vld [vmem:[%s37 + $0x930] sm:%s30]
      %1214 = vst [vmem:[%s38 + $0x92c] sm:%s30] %v1213
      %v1215 = vld [vmem:[%s37 + $0x920] sm:%s30]
      %1216 = vst [vmem:[%s38 + $0x930] sm:%s30] %v1215
      %v1217 = vld [vmem:[%s37 + $0x934] sm:%s30]
      %1218 = vst [vmem:[%s38 + $0x934] sm:%s30] %v1217
      %v1219 = vld [vmem:[%s37 + $0x938] sm:%s30]
      %1220 = vst [vmem:[%s38 + $0x938] sm:%s30] %v1219
      %v1221 = vld [vmem:[%s37 + $0x94c] sm:%s30]
      %1222 = vst [vmem:[%s38 + $0x93c] sm:%s30] %v1221
      %v1223 = vld [vmem:[%s37 + $0x93c] sm:%s30]
      %1224 = vst [vmem:[%s38 + $0x940] sm:%s30] %v1223
      %v1225 = vld [vmem:[%s37 + $0x950] sm:%s30]
      %1226 = vst [vmem:[%s38 + $0x944] sm:%s30] %v1225
      %v1227 = vld [vmem:[%s37 + $0x940] sm:%s30]
      %1228 = vst [vmem:[%s38 + $0x948] sm:%s30] %v1227
      %v1229 = vld [vmem:[%s37 + $0x954] sm:%s30]
      %1230 = vst [vmem:[%s38 + $0x94c] sm:%s30] %v1229
      %v1231 = vld [vmem:[%s37 + $0x944] sm:%s30]
      %1232 = vst [vmem:[%s38 + $0x950] sm:%s30] %v1231
      %v1233 = vld [vmem:[%s37 + $0x958] sm:%s30]
      %1234 = vst [vmem:[%s38 + $0x954] sm:%s30] %v1233
      %v1235 = vld [vmem:[%s37 + $0x948] sm:%s30]
      %1236 = vst [vmem:[%s38 + $0x958] sm:%s30] %v1235
      %v1237 = vld [vmem:[%s37 + $0x95c] sm:%s30]
      %1238 = vst [vmem:[%s38 + $0x95c] sm:%s30] %v1237
      %v1239 = vld [vmem:[%s37 + $0x960] sm:%s30]
      %1240 = vst [vmem:[%s38 + $0x960] sm:%s30] %v1239
      %v1241 = vld [vmem:[%s37 + $0x974] sm:%s30]
      %1242 = vst [vmem:[%s38 + $0x964] sm:%s30] %v1241
      %v1243 = vld [vmem:[%s37 + $0x964] sm:%s30]
      %1244 = vst [vmem:[%s38 + $0x968] sm:%s30] %v1243
      %v1245 = vld [vmem:[%s37 + $0x978] sm:%s30]
      %1246 = vst [vmem:[%s38 + $0x96c] sm:%s30] %v1245
      %v1247 = vld [vmem:[%s37 + $0x968] sm:%s30]
      %1248 = vst [vmem:[%s38 + $0x970] sm:%s30] %v1247
      %v1249 = vld [vmem:[%s37 + $0x97c] sm:%s30]
      %1250 = vst [vmem:[%s38 + $0x974] sm:%s30] %v1249
      %v1251 = vld [vmem:[%s37 + $0x96c] sm:%s30]
      %1252 = vst [vmem:[%s38 + $0x978] sm:%s30] %v1251
      %v1253 = vld [vmem:[%s37 + $0x980] sm:%s30]
      %1254 = vst [vmem:[%s38 + $0x97c] sm:%s30] %v1253
      %v1255 = vld [vmem:[%s37 + $0x970] sm:%s30]
      %1256 = vst [vmem:[%s38 + $0x980] sm:%s30] %v1255
      %v1257 = vld [vmem:[%s37 + $0x984] sm:%s30]
      %1258 = vst [vmem:[%s38 + $0x984] sm:%s30] %v1257
      %v1259 = vld [vmem:[%s37 + $0x988] sm:%s30]
      %1260 = vst [vmem:[%s38 + $0x988] sm:%s30] %v1259
      %v1261 = vld [vmem:[%s37 + $0x99c] sm:%s30]
      %1262 = vst [vmem:[%s38 + $0x98c] sm:%s30] %v1261
      %v1263 = vld [vmem:[%s37 + $0x98c] sm:%s30]
      %1264 = vst [vmem:[%s38 + $0x990] sm:%s30] %v1263
      %v1265 = vld [vmem:[%s37 + $0x9a0] sm:%s30]
      %1266 = vst [vmem:[%s38 + $0x994] sm:%s30] %v1265
      %v1267 = vld [vmem:[%s37 + $0x990] sm:%s30]
      %1268 = vst [vmem:[%s38 + $0x998] sm:%s30] %v1267
      %v1269 = vld [vmem:[%s37 + $0x9a4] sm:%s30]
      %1270 = vst [vmem:[%s38 + $0x99c] sm:%s30] %v1269
      %v1271 = vld [vmem:[%s37 + $0x994] sm:%s30]
      %1272 = vst [vmem:[%s38 + $0x9a0] sm:%s30] %v1271
      %v1273 = vld [vmem:[%s37 + $0x9a8] sm:%s30]
      %1274 = vst [vmem:[%s38 + $0x9a4] sm:%s30] %v1273
      %v1275 = vld [vmem:[%s37 + $0x998] sm:%s30]
      %1276 = vst [vmem:[%s38 + $0x9a8] sm:%s30] %v1275
      %v1277 = vld [vmem:[%s37 + $0x9ac] sm:%s30]
      %1278 = vst [vmem:[%s38 + $0x9ac] sm:%s30] %v1277
      %v1279 = vld [vmem:[%s37 + $0x9b0] sm:%s30]
      %1280 = vst [vmem:[%s38 + $0x9b0] sm:%s30] %v1279
      %v1281 = vld [vmem:[%s37 + $0x9c4] sm:%s30]
      %1282 = vst [vmem:[%s38 + $0x9b4] sm:%s30] %v1281
      %v1283 = vld [vmem:[%s37 + $0x9b4] sm:%s30]
      %1284 = vst [vmem:[%s38 + $0x9b8] sm:%s30] %v1283
      %v1285 = vld [vmem:[%s37 + $0x9c8] sm:%s30]
      %1286 = vst [vmem:[%s38 + $0x9bc] sm:%s30] %v1285
      %v1287 = vld [vmem:[%s37 + $0x9b8] sm:%s30]
      %1288 = vst [vmem:[%s38 + $0x9c0] sm:%s30] %v1287
      %v1289 = vld [vmem:[%s37 + $0x9cc] sm:%s30]
      %1290 = vst [vmem:[%s38 + $0x9c4] sm:%s30] %v1289
      %v1291 = vld [vmem:[%s37 + $0x9bc] sm:%s30]
      %1292 = vst [vmem:[%s38 + $0x9c8] sm:%s30] %v1291
      %v1293 = vld [vmem:[%s37 + $0x9d0] sm:%s30]
      %1294 = vst [vmem:[%s38 + $0x9cc] sm:%s30] %v1293
      %v1295 = vld [vmem:[%s37 + $0x9c0] sm:%s30]
      %1296 = vst [vmem:[%s38 + $0x9d0] sm:%s30] %v1295
      %v1297 = vld [vmem:[%s37 + $0x9d4] sm:%s30]
      %1298 = vst [vmem:[%s38 + $0x9d4] sm:%s30] %v1297
      %v1299 = vld [vmem:[%s37 + $0x9d8] sm:%s30]
      %1300 = vst [vmem:[%s38 + $0x9d8] sm:%s30] %v1299
      %v1301 = vld [vmem:[%s37 + $0x9ec] sm:%s30]
      %1302 = vst [vmem:[%s38 + $0x9dc] sm:%s30] %v1301
      %v1303 = vld [vmem:[%s37 + $0x9dc] sm:%s30]
      %1304 = vst [vmem:[%s38 + $0x9e0] sm:%s30] %v1303
      %v1305 = vld [vmem:[%s37 + $0x9f0] sm:%s30]
      %1306 = vst [vmem:[%s38 + $0x9e4] sm:%s30] %v1305
      %v1307 = vld [vmem:[%s37 + $0x9e0] sm:%s30]
      %1308 = vst [vmem:[%s38 + $0x9e8] sm:%s30] %v1307
      %v1309 = vld [vmem:[%s37 + $0x9f4] sm:%s30]
      %1310 = vst [vmem:[%s38 + $0x9ec] sm:%s30] %v1309
      %v1311 = vld [vmem:[%s37 + $0x9e4] sm:%s30]
      %1312 = vst [vmem:[%s38 + $0x9f0] sm:%s30] %v1311
      %v1313 = vld [vmem:[%s37 + $0x9f8] sm:%s30]
      %1314 = vst [vmem:[%s38 + $0x9f4] sm:%s30] %v1313
      %v1315 = vld [vmem:[%s37 + $0x9e8] sm:%s30]
      %1316 = vst [vmem:[%s38 + $0x9f8] sm:%s30] %v1315
      %v1317 = vld [vmem:[%s37 + $0x9fc] sm:%s30]
      %1318 = vst [vmem:[%s38 + $0x9fc] sm:%s30] %v1317
    $region34: #{cnn_1d_forward.1} parent=28 // loop_footer
      %s36 = sadd.s32 1, %s32
    $region35: #{cnn_1d_forward.1} parent=28 // loop_footer_branch
      %31 = sbr.rel target = $region31
    $region36: #{cnn_1d_forward.1} parent=28 // loop_exit
      _
  $region29: #{cnn_1d_forward.1} parent=0 // pred_fallthru
    _
  // Predicated region
  $region66: #{cnn_1d_forward.1} parent=0 // pred_check
    _
  $region67: #{cnn_1d_forward.1} parent=0 // pred_check_branch
    %5221 = sbr.rel (0) target = $region69
  $region68: #{cnn_1d_forward.1} parent=0 // pred_region
    %5222 = vsyncadd [#allocation4], 40960
  $region69: #{cnn_1d_forward.1} parent=0 // pred_fallthru
    _
  %v5223 = vld [vmem:[%s0] sm:$0xf]
  %v5224 = vlaneseq
  %v5225 = vand.u32 %v5224, 127
  %v5226 = vadd.s32 %v5225, 128
  %v5227 = vadd.s32 %v5225, 256
  %v5228 = vadd.s32 %v5225, 384
  %vm5229 = vcmp.lt.s32.totalorder %v5225, 0
  %v5230 = vsub.s32 0, %v5225
  %v5231 = vsel %vm5229, %v5230, %v5225
  %v5232 = vmul.u32.u64.compose %v5231, 2748779070
  %v5233 = vextract.low.u32 %v5232
  %v5234 = vextract.high.u32 %v5232
  %v5235 = vshrl.u32 %v5234, 7
  %v5236 = vmul.u32 %v5235, 200
  %v5237 = vsub.s32 %v5231, %v5236
  %v5238 = vsub.s32 0, %v5237
  %v5239 = vsel %vm5229, %v5238, %v5237
  %vm5240 = vcmp.lt.s32.totalorder %v5226, 0
  %v5241 = vsub.s32 0, %v5226
  %v5242 = vsel %vm5240, %v5241, %v5226
  %v5243 = vmul.u32.u64.compose %v5242, 2748779070
  %v5244 = vextract.low.u32 %v5243
  %v5245 = vextract.high.u32 %v5243
  %v5246 = vshrl.u32 %v5245, 7
  %v5247 = vmul.u32 %v5246, 200
  %v5248 = vsub.s32 %v5242, %v5247
  %v5249 = vsub.s32 0, %v5248
  %v5250 = vsel %vm5240, %v5249, %v5248
  %vm5251 = vcmp.lt.s32.totalorder %v5227, 0
  %v5252 = vsub.s32 0, %v5227
  %v5253 = vsel %vm5251, %v5252, %v5227
  %v5254 = vmul.u32.u64.compose %v5253, 2748779070
  %v5255 = vextract.low.u32 %v5254
  %v5256 = vextract.high.u32 %v5254
  %v5257 = vshrl.u32 %v5256, 7
  %v5258 = vmul.u32 %v5257, 200
  %v5259 = vsub.s32 %v5253, %v5258
  %v5260 = vsub.s32 0, %v5259
  %v5261 = vsel %vm5251, %v5260, %v5259
  %vm5262 = vcmp.lt.s32.totalorder %v5228, 0
  %v5263 = vsub.s32 0, %v5228
  %v5264 = vsel %vm5262, %v5263, %v5228
  %v5265 = vmul.u32.u64.compose %v5264, 2748779070
  %v5266 = vextract.low.u32 %v5265
  %v5267 = vextract.high.u32 %v5265
  %v5268 = vshrl.u32 %v5267, 7
  %v5269 = vmul.u32 %v5268, 200
  %v5270 = vsub.s32 %v5264, %v5269
  %v5271 = vsub.s32 0, %v5270
  %v5272 = vsel %vm5262, %v5271, %v5270
  %vm5273 = vcmp.ne.s32.totalorder %v5239, 0
  %vm5274 = vcmp.ne.s32.totalorder %v5250, 0
  %vm5275 = vcmp.ne.s32.totalorder %v5261, 0
  %vm5276 = vcmp.ne.s32.totalorder %v5272, 0
  %vm5277 = vcmp.lt.s32.totalorder %v5239, 0
  %vm5278 = vcmp.lt.s32.totalorder %v5250, 0
  %vm5279 = vcmp.lt.s32.totalorder %v5261, 0
  %vm5280 = vcmp.lt.s32.totalorder %v5272, 0
  %vm5281 = vmand %vm5277, %vm5273
  %vm5282 = vmand %vm5278, %vm5274
  %vm5283 = vmand %vm5279, %vm5275
  %vm5284 = vmand %vm5280, %vm5276
  %v5285 = vadd.s32 %v5239, 200
  %v5286 = vadd.s32 %v5250, 200
  %v5287 = vadd.s32 %v5261, 200
  %v5288 = vadd.s32 %v5272, 200
  %v5289 = vsel %vm5281, %v5285, %v5239
  %v5290 = vsel %vm5282, %v5286, %v5250
  %v5291 = vsel %vm5283, %v5287, %v5261
  %v5292 = vsel %vm5284, %v5288, %v5272
  %vm5293 = vcmp.eq.s32.totalorder %v5289, 0
  %vm5294 = vcmp.eq.s32.totalorder %v5290, 0
  %vm5295 = vcmp.eq.s32.totalorder %v5291, 0
  %vm5296 = vcmp.eq.s32.totalorder %v5292, 0
  %v5298 = vlaneseq
  %v5299 = vshrl.u32 %v5298, 7
  %v5300 = vsub.s32 0, %v5299
  %v5301 = vrot.slane %v5223, %v5300
  %v5302 = vlaneseq
  %v5303 = vshrl.u32 %v5302, 7
  %v5304 = vsub.s32 1, %v5303
  %v5305 = vrot.slane %v5223, %v5304
  %v5306 = vlaneseq
  %v5307 = vshrl.u32 %v5306, 7
  %v5308 = vsub.s32 2, %v5307
  %v5309 = vrot.slane %v5223, %v5308
  %v5310 = vlaneseq
  %v5311 = vshrl.u32 %v5310, 7
  %v5312 = vsub.s32 3, %v5311
  %v5313 = vrot.slane %v5223, %v5312
  %vm5318 = vcmask 1047680
  %5319 = vrot.lane.b32.xlu0 %v5301, 16
  %v5320 = vpop.permute.xlu0 %5319
  %v5321 = vsel %vm5318, %v5320, %v5313
  %5322 = vrot.lane.b32.xlu0 %v5305, 16
  %v5323 = vpop.permute.xlu0 %5322
  %5324 = vrot.lane.b32.xlu0 %v5309, 16
  %v5325 = vpop.permute.xlu0 %5324
  %5326 = vrot.lane.b32.xlu0 %v5321, 16
  %v5327 = vpop.permute.xlu0 %5326
  %v5328 = vsel %vm5318, %v5323, %v5320
  %v5329 = vsel %vm5318, %v5325, %v5323
  %v5330 = vsel %vm5318, %v5327, %v5325
  %5335 = vrot.lane.b32.xlu0 %v5321, 113
  %v5336 = vpop.permute.xlu0 %5335
  %5337 = vrot.lane.b32.xlu0 %v5328, 113
  %v5338 = vpop.permute.xlu0 %5337
  %5339 = vrot.lane.b32.xlu0 %v5329, 113
  %v5340 = vpop.permute.xlu0 %5339
  %5341 = vrot.lane.b32.xlu0 %v5330, 113
  %v5342 = vpop.permute.xlu0 %5341
  %vm5343 = vcmask 924672
  %v5344 = vsel %vm5343, %v5336, %v5338
  %v5345 = vsel %vm5343, %v5338, %v5340
  %v5346 = vsel %vm5343, %v5340, %v5342
  %v5351 = vsel %vm5293, 0.0, %v5344
  %v5352 = vsel %vm5294, 0.0, %v5345
  %v5353 = vsel %vm5295, 0.0, %v5346
  %v5354 = vsel %vm5296, 0.0, %v5342
  %vm5355 = vcmp.eq.s32.totalorder %v5289, 199
  %vm5356 = vcmp.eq.s32.totalorder %v5290, 199
  %vm5357 = vcmp.eq.s32.totalorder %v5291, 199
  %vm5358 = vcmp.eq.s32.totalorder %v5292, 199
  %5359 = vrot.lane.b32.xlu0 %v5301, 127
  %v5360 = vpop.permute.xlu0 %5359
  %5361 = vrot.lane.b32.xlu0 %v5305, 127
  %v5362 = vpop.permute.xlu0 %5361
  %5363 = vrot.lane.b32.xlu0 %v5309, 127
  %v5364 = vpop.permute.xlu0 %5363
  %5365 = vrot.lane.b32.xlu0 %v5321, 127
  %v5366 = vpop.permute.xlu0 %5365
  %vm5367 = vcmask 1039360
  %v5368 = vsel %vm5367, %v5360, %v5362
  %v5369 = vsel %vm5367, %v5362, %v5364
  %v5370 = vsel %vm5367, %v5364, %v5366
  %v5375 = vsel %vm5355, 0.0, %v5368
  %v5376 = vsel %vm5356, 0.0, %v5369
  %v5377 = vsel %vm5357, 0.0, %v5370
  %v5378 = vsel %vm5358, 0.0, %v5366
  %v5379 = vld [vmem:[%s1] sm:$0xff]
  %v5380 = vld [vmem:[%s1 + $0x8] sm:$0x3]
  %5382 = vset.pattern.permute.xlu0 0
  %5383 = vperm.xlu0 %5382, %v5379
  %v5384 = vpop.permute.xlu0 %5383
  %5387 = vset.pattern.permute.xlu0 0
  %5388 = vperm.xlu0 %5387, %v5380
  %v5389 = vpop.permute.xlu0 %5388
  %v5391 = vlaneseq
  %v5392 = vshrl.u32 %v5391, 7
  %v5393 = vsub.s32 0, %v5392
  %v5394 = vrot.slane %v5351, %v5393
  %v5395 = vlaneseq
  %v5396 = vshrl.u32 %v5395, 7
  %v5397 = vsub.s32 0, %v5396
  %v5398 = vrot.slane %v5352, %v5397
  %v5399 = vlaneseq
  %v5400 = vshrl.u32 %v5399, 7
  %v5401 = vsub.s32 0, %v5400
  %v5402 = vrot.slane %v5353, %v5401
  %v5403 = vlaneseq
  %v5404 = vshrl.u32 %v5403, 7
  %v5405 = vsub.s32 0, %v5404
  %v5406 = vrot.slane %v5354, %v5405
  %v5407 = vmul.f32 %v5384, %v5394
  %v5408 = vmul.f32 %v5384, %v5398
  %v5409 = vmul.f32 %v5384, %v5402
  %v5410 = vmul.f32 %v5384, %v5406
  %v5411 = vmul.f32 %v5389, %v5394
  %v5412 = vmul.f32 %v5389, %v5398
  %v5413 = vmul.f32 %v5389, %v5402
  %v5414 = vmul.f32 %v5389, %v5406
  %5415 = vset.pattern.permute.xlu0 1
  %5416 = vperm.xlu0 %5415, %v5379
  %v5417 = vpop.permute.xlu0 %5416
  %5419 = vset.pattern.permute.xlu0 1
  %5420 = vperm.xlu0 %5419, %v5380
  %v5421 = vpop.permute.xlu0 %5420
  %v5423 = vmul.f32 %v5417, %v5301
  %v5424 = vmul.f32 %v5417, %v5305
  %v5425 = vmul.f32 %v5417, %v5309
  %v5426 = vmul.f32 %v5417, %v5313
  %v5427 = vmul.f32 %v5421, %v5301
  %v5428 = vmul.f32 %v5421, %v5305
  %v5429 = vmul.f32 %v5421, %v5309
  %v5430 = vmul.f32 %v5421, %v5313
  %v5431 = vadd.f32 %v5407, %v5423
  %v5432 = vadd.f32 %v5408, %v5424
  %v5433 = vadd.f32 %v5409, %v5425
  %v5434 = vadd.f32 %v5410, %v5426
  %v5435 = vadd.f32 %v5411, %v5427
  %v5436 = vadd.f32 %v5412, %v5428
  %v5437 = vadd.f32 %v5413, %v5429
  %v5438 = vadd.f32 %v5414, %v5430
  %5439 = vset.pattern.permute.xlu0 2
  %5440 = vperm.xlu0 %5439, %v5379
  %v5441 = vpop.permute.xlu0 %5440
  %5443 = vset.pattern.permute.xlu0 2
  %5444 = vperm.xlu0 %5443, %v5380
  %v5445 = vpop.permute.xlu0 %5444
  %v5447 = vlaneseq
  %v5448 = vshrl.u32 %v5447, 7
  %v5449 = vsub.s32 0, %v5448
  %v5450 = vrot.slane %v5375, %v5449
  %v5451 = vlaneseq
  %v5452 = vshrl.u32 %v5451, 7
  %v5453 = vsub.s32 0, %v5452
  %v5454 = vrot.slane %v5376, %v5453
  %v5455 = vlaneseq
  %v5456 = vshrl.u32 %v5455, 7
  %v5457 = vsub.s32 0, %v5456
  %v5458 = vrot.slane %v5377, %v5457
  %v5459 = vlaneseq
  %v5460 = vshrl.u32 %v5459, 7
  %v5461 = vsub.s32 0, %v5460
  %v5462 = vrot.slane %v5378, %v5461
  %v5463 = vmul.f32 %v5441, %v5450
  %v5464 = vmul.f32 %v5441, %v5454
  %v5465 = vmul.f32 %v5441, %v5458
  %v5466 = vmul.f32 %v5441, %v5462
  %v5467 = vmul.f32 %v5445, %v5450
  %v5468 = vmul.f32 %v5445, %v5454
  %v5469 = vmul.f32 %v5445, %v5458
  %v5470 = vmul.f32 %v5445, %v5462
  %v5471 = vadd.f32 %v5431, %v5463
  %v5472 = vadd.f32 %v5432, %v5464
  %v5473 = vadd.f32 %v5433, %v5465
  %v5474 = vadd.f32 %v5434, %v5466
  %v5475 = vadd.f32 %v5435, %v5467
  %v5476 = vadd.f32 %v5436, %v5468
  %v5477 = vadd.f32 %v5437, %v5469
  %v5478 = vadd.f32 %v5438, %v5470
  %5479 = vset.pattern.permute.xlu0 3
  %5480 = vperm.xlu0 %5479, %v5379
  %v5481 = vpop.permute.xlu0 %5480
  %5483 = vset.pattern.permute.xlu0 3
  %5484 = vperm.xlu0 %5483, %v5380
  %v5485 = vpop.permute.xlu0 %5484
  %v5487 = vadd.f32 %v5471, %v5481
  %v5488 = vadd.f32 %v5472, %v5481
  %v5489 = vadd.f32 %v5473, %v5481
  %v5490 = vadd.f32 %v5474, %v5481
  %v5491 = vadd.f32 %v5475, %v5485
  %v5492 = vadd.f32 %v5476, %v5485
  %v5493 = vadd.f32 %v5477, %v5485
  %v5494 = vadd.f32 %v5478, %v5485
  %v5495 = vadd.f32 %v5487, %v5488
  %v5496 = vadd.f32 %v5495, %v5489
  %vm5497 = vcmask 130048
  %v5498 = vsel %vm5497, %v5490, 0.0
  %v5499 = vadd.f32 %v5496, %v5498
  %5500 = vadd.xlane.f32.xlu0 %v5499
  %v5501 = vpop.xlane.xlu0 %5500
  %vm5502 = vcmask 1041408
  %v5503 = vsel %vm5502, %v5491, 0.0
  %v5504 = vsel %vm5502, %v5492, 0.0
  %v5505 = vadd.f32 %v5503, %v5504
  %v5506 = vsel %vm5502, %v5493, 0.0
  %v5507 = vadd.f32 %v5505, %v5506
  %vm5508 = vcmask 123904
  %v5509 = vsel %vm5508, %v5494, 0.0
  %v5510 = vadd.f32 %v5507, %v5509
  %5511 = vadd.xlane.f32.xlu0 %v5510
  %v5512 = vpop.xlane.xlu0 %5511
  %v5513 = vrcp.pop 400.0
  %v5514 = vmul.f32 %v5501, %v5513
  %v5515 = vmul.f32 %v5512, %v5513
  %v5516 = vsub.f32 %v5487, %v5514
  %v5517 = vsub.f32 %v5488, %v5514
  %v5518 = vsub.f32 %v5489, %v5514
  %v5519 = vsub.f32 %v5490, %v5514
  %v5520 = vsub.f32 %v5491, %v5515
  %v5521 = vsub.f32 %v5492, %v5515
  %v5522 = vsub.f32 %v5493, %v5515
  %v5523 = vsub.f32 %v5494, %v5515
  %v5524 = vmul.f32 %v5516, %v5516
  %v5525 = vmul.f32 %v5517, %v5517
  %v5526 = vmul.f32 %v5518, %v5518
  %v5527 = vmul.f32 %v5519, %v5519
  %v5528 = vmul.f32 %v5520, %v5520
  %v5529 = vmul.f32 %v5521, %v5521
  %v5530 = vmul.f32 %v5522, %v5522
  %v5531 = vmul.f32 %v5523, %v5523
  %v5532 = vadd.f32 %v5524, %v5525
  %v5533 = vadd.f32 %v5532, %v5526
  %v5534 = vsel %vm5497, %v5527, 0.0
  %v5535 = vadd.f32 %v5533, %v5534
  %5536 = vadd.xlane.f32.xlu0 %v5535
  %v5537 = vpop.xlane.xlu0 %5536
  %v5538 = vsel %vm5502, %v5528, 0.0
  %v5539 = vsel %vm5502, %v5529, 0.0
  %v5540 = vadd.f32 %v5538, %v5539
  %v5541 = vsel %vm5502, %v5530, 0.0
  %v5542 = vadd.f32 %v5540, %v5541
  %v5543 = vsel %vm5508, %v5531, 0.0
  %v5544 = vadd.f32 %v5542, %v5543
  %5545 = vadd.xlane.f32.xlu0 %v5544
  %v5546 = vpop.xlane.xlu0 %5545
  %v5547 = vmul.f32 %v5537, %v5513
  %v5548 = vmul.f32 %v5546, %v5513
  %5549 = vset.pattern.permute.xlu0 4
  %5550 = vperm.xlu0 %5549, %v5379
  %v5551 = vpop.permute.xlu0 %5550
  %5553 = vset.pattern.permute.xlu0 4
  %5554 = vperm.xlu0 %5553, %v5380
  %v5555 = vpop.permute.xlu0 %5554
  %v5557 = vmul.f32 %v5551, %v5516
  %v5558 = vmul.f32 %v5551, %v5517
  %v5559 = vmul.f32 %v5551, %v5518
  %v5560 = vmul.f32 %v5551, %v5519
  %v5561 = vmul.f32 %v5555, %v5520
  %v5562 = vmul.f32 %v5555, %v5521
  %v5563 = vmul.f32 %v5555, %v5522
  %v5564 = vmul.f32 %v5555, %v5523
  %v5565 = vadd.f32 %v5547, 1e-05
  %v5566 = vadd.f32 %v5548, 1e-05
  %v5567 = vrsqrt.pop %v5565
  %v5568 = vrsqrt.pop %v5566
  %v5569 = vmul.f32 %v5557, %v5567
  %v5570 = vmul.f32 %v5558, %v5567
  %v5571 = vmul.f32 %v5559, %v5567
  %v5572 = vmul.f32 %v5560, %v5567
  %v5573 = vmul.f32 %v5561, %v5568
  %v5574 = vmul.f32 %v5562, %v5568
  %v5575 = vmul.f32 %v5563, %v5568
  %v5576 = vmul.f32 %v5564, %v5568
  %5577 = vset.pattern.permute.xlu0 5
  %5578 = vperm.xlu0 %5577, %v5379
  %v5579 = vpop.permute.xlu0 %5578
  %5581 = vset.pattern.permute.xlu0 5
  %5582 = vperm.xlu0 %5581, %v5380
  %v5583 = vpop.permute.xlu0 %5582
  %v5585 = vadd.f32 %v5569, %v5579
  %v5586 = vadd.f32 %v5570, %v5579
  %v5587 = vadd.f32 %v5571, %v5579
  %v5588 = vadd.f32 %v5572, %v5579
  %v5589 = vadd.f32 %v5573, %v5583
  %v5590 = vadd.f32 %v5574, %v5583
  %v5591 = vadd.f32 %v5575, %v5583
  %v5592 = vadd.f32 %v5576, %v5583
  %5593 = vrot.lane.b32.xlu0 %v5585, 16
  %v5594 = vpop.permute.xlu0 %5593
  %5595 = vrot.lane.b32.xlu0 %v5589, 16
  %v5596 = vpop.permute.xlu0 %5595
  %v5597 = vsel %vm5318, %v5594, %v5588
  %v5598 = vsel %vm5318, %v5596, %v5592
  %5607 = vrot.lane.b32.xlu0 %v5585, 127
  %v5608 = vpop.permute.xlu0 %5607
  %5609 = vrot.lane.b32.xlu0 %v5586, 127
  %v5610 = vpop.permute.xlu0 %5609
  %5611 = vrot.lane.b32.xlu0 %v5587, 127
  %v5612 = vpop.permute.xlu0 %5611
  %5613 = vrot.lane.b32.xlu0 %v5597, 127
  %v5614 = vpop.permute.xlu0 %5613
  %5615 = vrot.lane.b32.xlu0 %v5589, 127
  %v5616 = vpop.permute.xlu0 %5615
  %5617 = vrot.lane.b32.xlu0 %v5590, 127
  %v5618 = vpop.permute.xlu0 %5617
  %5619 = vrot.lane.b32.xlu0 %v5591, 127
  %v5620 = vpop.permute.xlu0 %5619
  %5621 = vrot.lane.b32.xlu0 %v5598, 127
  %v5622 = vpop.permute.xlu0 %5621
  %v5623 = vsel %vm5367, %v5608, %v5610
  %v5624 = vsel %vm5367, %v5610, %v5612
  %v5625 = vsel %vm5367, %v5612, %v5614
  %v5626 = vsel %vm5367, %v5616, %v5618
  %v5627 = vsel %vm5367, %v5618, %v5620
  %v5628 = vsel %vm5367, %v5620, %v5622
  %v5637 = vmax.f32 %v5585, %v5623
  %v5638 = vmax.f32 %v5586, %v5624
  %v5639 = vmax.f32 %v5587, %v5625
  %v5640 = vmax.f32 %v5588, %v5614
  %v5641 = vmax.f32 %v5589, %v5626
  %v5642 = vmax.f32 %v5590, %v5627
  %v5643 = vmax.f32 %v5591, %v5628
  %v5644 = vmax.f32 %v5592, %v5622
  %v5645 = vlaneseq
  %v5646 = vshrl.u32 %v5645, 7
  %v5647 = vadd.s32 %v5646, 8
  %v5648 = vadd.s32 %v5646, 16
  %v5649 = vadd.s32 %v5646, 24
  %v5650 = vadd.s32 %v5646, 32
  %v5651 = vadd.s32 %v5646, 40
  %v5652 = vadd.s32 %v5646, 48
  %v5653 = vadd.s32 %v5646, 56
  %v5654 = vadd.s32 %v5646, 64
  %v5655 = vadd.s32 %v5646, 72
  %v5656 = vadd.s32 %v5646, 80
  %v5657 = vadd.s32 %v5646, 88
  %v5658 = vadd.s32 %v5646, 96
  %v5659 = vadd.s32 %v5646, 104
  %v5660 = vadd.s32 %v5646, 112
  %v5661 = vadd.s32 %v5646, 120
  %v5662 = vadd.s32 %v5646, 128
  %v5663 = vadd.s32 %v5646, 136
  %v5664 = vadd.s32 %v5646, 144
  %v5665 = vadd.s32 %v5646, 152
  %v5666 = vadd.s32 %v5646, 160
  %v5667 = vadd.s32 %v5646, 168
  %v5668 = vadd.s32 %v5646, 176
  %v5669 = vadd.s32 %v5646, 184
  %v5670 = vadd.s32 %v5646, 192
  %v5671 = vadd.s32 %v5646, 200
  %v5672 = vadd.s32 %v5646, 208
  %v5673 = vadd.s32 %v5646, 216
  %v5674 = vadd.s32 %v5646, 224
  %v5675 = vadd.s32 %v5646, 232
  %v5676 = vadd.s32 %v5646, 240
  %v5677 = vadd.s32 %v5646, 248
  %v5678 = vadd.s32 %v5646, 256
  %v5679 = vadd.s32 %v5646, 264
  %v5680 = vadd.s32 %v5646, 272
  %v5681 = vadd.s32 %v5646, 280
  %v5682 = vadd.s32 %v5646, 288
  %v5683 = vadd.s32 %v5646, 296
  %v5684 = vadd.s32 %v5646, 304
  %v5685 = vadd.s32 %v5646, 312
  %v5686 = vadd.s32 %v5646, 320
  %v5687 = vadd.s32 %v5646, 328
  %v5688 = vadd.s32 %v5646, 336
  %v5689 = vadd.s32 %v5646, 344
  %v5690 = vadd.s32 %v5646, 352
  %v5691 = vadd.s32 %v5646, 360
  %v5692 = vadd.s32 %v5646, 368
  %v5693 = vadd.s32 %v5646, 376
  %v5694 = vadd.s32 %v5646, 384
  %v5695 = vadd.s32 %v5646, 392
  %v5696 = vmul.u32 %v5225, 2
  %v5697 = vmul.u32 %v5226, 2
  %vm5698 = vcmp.eq.s32.totalorder %v5646, %v5696
  %vm5699 = vcmp.eq.s32.totalorder %v5646, %v5697
  %vm5700 = vcmp.eq.s32.totalorder %v5647, %v5696
  %vm5701 = vcmp.eq.s32.totalorder %v5647, %v5697
  %vm5702 = vcmp.eq.s32.totalorder %v5648, %v5696
  %vm5703 = vcmp.eq.s32.totalorder %v5648, %v5697
  %vm5704 = vcmp.eq.s32.totalorder %v5649, %v5696
  %vm5705 = vcmp.eq.s32.totalorder %v5649, %v5697
  %vm5706 = vcmp.eq.s32.totalorder %v5650, %v5696
  %vm5707 = vcmp.eq.s32.totalorder %v5650, %v5697
  %vm5708 = vcmp.eq.s32.totalorder %v5651, %v5696
  %vm5709 = vcmp.eq.s32.totalorder %v5651, %v5697
  %vm5710 = vcmp.eq.s32.totalorder %v5652, %v5696
  %vm5711 = vcmp.eq.s32.totalorder %v5652, %v5697
  %vm5712 = vcmp.eq.s32.totalorder %v5653, %v5696
  %vm5713 = vcmp.eq.s32.totalorder %v5653, %v5697
  %vm5714 = vcmp.eq.s32.totalorder %v5654, %v5696
  %vm5715 = vcmp.eq.s32.totalorder %v5654, %v5697
  %vm5716 = vcmp.eq.s32.totalorder %v5655, %v5696
  %vm5717 = vcmp.eq.s32.totalorder %v5655, %v5697
  %vm5718 = vcmp.eq.s32.totalorder %v5656, %v5696
  %vm5719 = vcmp.eq.s32.totalorder %v5656, %v5697
  %vm5720 = vcmp.eq.s32.totalorder %v5657, %v5696
  %vm5721 = vcmp.eq.s32.totalorder %v5657, %v5697
  %vm5722 = vcmp.eq.s32.totalorder %v5658, %v5696
  %vm5723 = vcmp.eq.s32.totalorder %v5658, %v5697
  %vm5724 = vcmp.eq.s32.totalorder %v5659, %v5696
  %vm5725 = vcmp.eq.s32.totalorder %v5659, %v5697
  %vm5726 = vcmp.eq.s32.totalorder %v5660, %v5696
  %vm5727 = vcmp.eq.s32.totalorder %v5660, %v5697
  %vm5728 = vcmp.eq.s32.totalorder %v5661, %v5696
  %vm5729 = vcmp.eq.s32.totalorder %v5661, %v5697
  %vm5730 = vcmp.eq.s32.totalorder %v5662, %v5696
  %vm5731 = vcmp.eq.s32.totalorder %v5662, %v5697
  %vm5732 = vcmp.eq.s32.totalorder %v5663, %v5696
  %vm5733 = vcmp.eq.s32.totalorder %v5663, %v5697
  %vm5734 = vcmp.eq.s32.totalorder %v5664, %v5696
  %vm5735 = vcmp.eq.s32.totalorder %v5664, %v5697
  %vm5736 = vcmp.eq.s32.totalorder %v5665, %v5696
  %vm5737 = vcmp.eq.s32.totalorder %v5665, %v5697
  %vm5738 = vcmp.eq.s32.totalorder %v5666, %v5696
  %vm5739 = vcmp.eq.s32.totalorder %v5666, %v5697
  %vm5740 = vcmp.eq.s32.totalorder %v5667, %v5696
  %vm5741 = vcmp.eq.s32.totalorder %v5667, %v5697
  %vm5742 = vcmp.eq.s32.totalorder %v5668, %v5696
  %vm5743 = vcmp.eq.s32.totalorder %v5668, %v5697
  %vm5744 = vcmp.eq.s32.totalorder %v5669, %v5696
  %vm5745 = vcmp.eq.s32.totalorder %v5669, %v5697
  %vm5746 = vcmp.eq.s32.totalorder %v5670, %v5696
  %vm5747 = vcmp.eq.s32.totalorder %v5670, %v5697
  %vm5748 = vcmp.eq.s32.totalorder %v5671, %v5696
  %vm5749 = vcmp.eq.s32.totalorder %v5671, %v5697
  %vm5750 = vcmp.eq.s32.totalorder %v5672, %v5696
  %vm5751 = vcmp.eq.s32.totalorder %v5672, %v5697
  %vm5752 = vcmp.eq.s32.totalorder %v5673, %v5696
  %vm5753 = vcmp.eq.s32.totalorder %v5673, %v5697
  %vm5754 = vcmp.eq.s32.totalorder %v5674, %v5696
  %vm5755 = vcmp.eq.s32.totalorder %v5674, %v5697
  %vm5756 = vcmp.eq.s32.totalorder %v5675, %v5696
  %vm5757 = vcmp.eq.s32.totalorder %v5675, %v5697
  %vm5758 = vcmp.eq.s32.totalorder %v5676, %v5696
  %vm5759 = vcmp.eq.s32.totalorder %v5676, %v5697
  %vm5760 = vcmp.eq.s32.totalorder %v5677, %v5696
  %vm5761 = vcmp.eq.s32.totalorder %v5677, %v5697
  %vm5762 = vcmp.eq.s32.totalorder %v5678, %v5696
  %vm5763 = vcmp.eq.s32.totalorder %v5678, %v5697
  %vm5764 = vcmp.eq.s32.totalorder %v5679, %v5696
  %vm5765 = vcmp.eq.s32.totalorder %v5679, %v5697
  %vm5766 = vcmp.eq.s32.totalorder %v5680, %v5696
  %vm5767 = vcmp.eq.s32.totalorder %v5680, %v5697
  %vm5768 = vcmp.eq.s32.totalorder %v5681, %v5696
  %vm5769 = vcmp.eq.s32.totalorder %v5681, %v5697
  %vm5770 = vcmp.eq.s32.totalorder %v5682, %v5696
  %vm5771 = vcmp.eq.s32.totalorder %v5682, %v5697
  %vm5772 = vcmp.eq.s32.totalorder %v5683, %v5696
  %vm5773 = vcmp.eq.s32.totalorder %v5683, %v5697
  %vm5774 = vcmp.eq.s32.totalorder %v5684, %v5696
  %vm5775 = vcmp.eq.s32.totalorder %v5684, %v5697
  %vm5776 = vcmp.eq.s32.totalorder %v5685, %v5696
  %vm5777 = vcmp.eq.s32.totalorder %v5685, %v5697
  %vm5778 = vcmp.eq.s32.totalorder %v5686, %v5696
  %vm5779 = vcmp.eq.s32.totalorder %v5686, %v5697
  %vm5780 = vcmp.eq.s32.totalorder %v5687, %v5696
  %vm5781 = vcmp.eq.s32.totalorder %v5687, %v5697
  %vm5782 = vcmp.eq.s32.totalorder %v5688, %v5696
  %vm5783 = vcmp.eq.s32.totalorder %v5688, %v5697
  %vm5784 = vcmp.eq.s32.totalorder %v5689, %v5696
  %vm5785 = vcmp.eq.s32.totalorder %v5689, %v5697
  %vm5786 = vcmp.eq.s32.totalorder %v5690, %v5696
  %vm5787 = vcmp.eq.s32.totalorder %v5690, %v5697
  %vm5788 = vcmp.eq.s32.totalorder %v5691, %v5696
  %vm5789 = vcmp.eq.s32.totalorder %v5691, %v5697
  %vm5790 = vcmp.eq.s32.totalorder %v5692, %v5696
  %vm5791 = vcmp.eq.s32.totalorder %v5692, %v5697
  %vm5792 = vcmp.eq.s32.totalorder %v5693, %v5696
  %vm5793 = vcmp.eq.s32.totalorder %v5693, %v5697
  %vm5794 = vcmp.eq.s32.totalorder %v5694, %v5696
  %vm5795 = vcmp.eq.s32.totalorder %v5694, %v5697
  %vm5796 = vcmp.eq.s32.totalorder %v5695, %v5696
  %vm5797 = vcmp.eq.s32.totalorder %v5695, %v5697
  %v5798 = vsel %vm5698, 1, 0
  %v5799 = vsel %vm5699, 1, 0
  %v5800 = vsel %vm5700, 1, 0
  %v5801 = vsel %vm5701, 1, 0
  %v5802 = vsel %vm5702, 1, 0
  %v5803 = vsel %vm5703, 1, 0
  %v5804 = vsel %vm5704, 1, 0
  %v5805 = vsel %vm5705, 1, 0
  %v5806 = vsel %vm5706, 1, 0
  %v5807 = vsel %vm5707, 1, 0
  %v5808 = vsel %vm5708, 1, 0
  %v5809 = vsel %vm5709, 1, 0
  %v5810 = vsel %vm5710, 1, 0
  %v5811 = vsel %vm5711, 1, 0
  %v5812 = vsel %vm5712, 1, 0
  %v5813 = vsel %vm5713, 1, 0
  %v5814 = vsel %vm5714, 1, 0
  %v5815 = vsel %vm5715, 1, 0
  %v5816 = vsel %vm5716, 1, 0
  %v5817 = vsel %vm5717, 1, 0
  %v5818 = vsel %vm5718, 1, 0
  %v5819 = vsel %vm5719, 1, 0
  %v5820 = vsel %vm5720, 1, 0
  %v5821 = vsel %vm5721, 1, 0
  %v5822 = vsel %vm5722, 1, 0
  %v5823 = vsel %vm5723, 1, 0
  %v5824 = vsel %vm5724, 1, 0
  %v5825 = vsel %vm5725, 1, 0
  %v5826 = vsel %vm5726, 1, 0
  %v5827 = vsel %vm5727, 1, 0
  %v5828 = vsel %vm5728, 1, 0
  %v5829 = vsel %vm5729, 1, 0
  %v5830 = vsel %vm5730, 1, 0
  %v5831 = vsel %vm5731, 1, 0
  %v5832 = vsel %vm5732, 1, 0
  %v5833 = vsel %vm5733, 1, 0
  %v5834 = vsel %vm5734, 1, 0
  %v5835 = vsel %vm5735, 1, 0
  %v5836 = vsel %vm5736, 1, 0
  %v5837 = vsel %vm5737, 1, 0
  %v5838 = vsel %vm5738, 1, 0
  %v5839 = vsel %vm5739, 1, 0
  %v5840 = vsel %vm5740, 1, 0
  %v5841 = vsel %vm5741, 1, 0
  %v5842 = vsel %vm5742, 1, 0
  %v5843 = vsel %vm5743, 1, 0
  %v5844 = vsel %vm5744, 1, 0
  %v5845 = vsel %vm5745, 1, 0
  %v5846 = vsel %vm5746, 1, 0
  %v5847 = vsel %vm5747, 1, 0
  %v5848 = vsel %vm5748, 1, 0
  %v5849 = vsel %vm5749, 1, 0
  %v5850 = vsel %vm5750, 1, 0
  %v5851 = vsel %vm5751, 1, 0
  %v5852 = vsel %vm5752, 1, 0
  %v5853 = vsel %vm5753, 1, 0
  %v5854 = vsel %vm5754, 1, 0
  %v5855 = vsel %vm5755, 1, 0
  %v5856 = vsel %vm5756, 1, 0
  %v5857 = vsel %vm5757, 1, 0
  %v5858 = vsel %vm5758, 1, 0
  %v5859 = vsel %vm5759, 1, 0
  %v5860 = vsel %vm5760, 1, 0
  %v5861 = vsel %vm5761, 1, 0
  %v5862 = vsel %vm5762, 1, 0
  %v5863 = vsel %vm5763, 1, 0
  %v5864 = vsel %vm5764, 1, 0
  %v5865 = vsel %vm5765, 1, 0
  %v5866 = vsel %vm5766, 1, 0
  %v5867 = vsel %vm5767, 1, 0
  %v5868 = vsel %vm5768, 1, 0
  %v5869 = vsel %vm5769, 1, 0
  %v5870 = vsel %vm5770, 1, 0
  %v5871 = vsel %vm5771, 1, 0
  %v5872 = vsel %vm5772, 1, 0
  %v5873 = vsel %vm5773, 1, 0
  %v5874 = vsel %vm5774, 1, 0
  %v5875 = vsel %vm5775, 1, 0
  %v5876 = vsel %vm5776, 1, 0
  %v5877 = vsel %vm5777, 1, 0
  %v5878 = vsel %vm5778, 1, 0
  %v5879 = vsel %vm5779, 1, 0
  %v5880 = vsel %vm5780, 1, 0
  %v5881 = vsel %vm5781, 1, 0
  %v5882 = vsel %vm5782, 1, 0
  %v5883 = vsel %vm5783, 1, 0
  %v5884 = vsel %vm5784, 1, 0
  %v5885 = vsel %vm5785, 1, 0
  %v5886 = vsel %vm5786, 1, 0
  %v5887 = vsel %vm5787, 1, 0
  %v5888 = vsel %vm5788, 1, 0
  %v5889 = vsel %vm5789, 1, 0
  %v5890 = vsel %vm5790, 1, 0
  %v5891 = vsel %vm5791, 1, 0
  %v5892 = vsel %vm5792, 1, 0
  %v5893 = vsel %vm5793, 1, 0
  %v5894 = vsel %vm5794, 1, 0
  %v5895 = vsel %vm5795, 1, 0
  %v5896 = vsel %vm5796, 1, 0
  %v5897 = vsel %vm5797, 1, 0
  %v5898 = vcvt.s32.f32 %v5798
  %v5899 = vcvt.s32.f32 %v5799
  %v5900 = vcvt.s32.f32 %v5800
  %v5901 = vcvt.s32.f32 %v5801
  %v5902 = vcvt.s32.f32 %v5802
  %v5903 = vcvt.s32.f32 %v5803
  %v5904 = vcvt.s32.f32 %v5804
  %v5905 = vcvt.s32.f32 %v5805
  %v5906 = vcvt.s32.f32 %v5806
  %v5907 = vcvt.s32.f32 %v5807
  %v5908 = vcvt.s32.f32 %v5808
  %v5909 = vcvt.s32.f32 %v5809
  %v5910 = vcvt.s32.f32 %v5810
  %v5911 = vcvt.s32.f32 %v5811
  %v5912 = vcvt.s32.f32 %v5812
  %v5913 = vcvt.s32.f32 %v5813
  %v5914 = vcvt.s32.f32 %v5814
  %v5915 = vcvt.s32.f32 %v5815
  %v5916 = vcvt.s32.f32 %v5816
  %v5917 = vcvt.s32.f32 %v5817
  %v5918 = vcvt.s32.f32 %v5818
  %v5919 = vcvt.s32.f32 %v5819
  %v5920 = vcvt.s32.f32 %v5820
  %v5921 = vcvt.s32.f32 %v5821
  %v5922 = vcvt.s32.f32 %v5822
  %v5923 = vcvt.s32.f32 %v5823
  %v5924 = vcvt.s32.f32 %v5824
  %v5925 = vcvt.s32.f32 %v5825
  %v5926 = vcvt.s32.f32 %v5826
  %v5927 = vcvt.s32.f32 %v5827
  %v5928 = vcvt.s32.f32 %v5828
  %v5929 = vcvt.s32.f32 %v5829
  %v5930 = vcvt.s32.f32 %v5830
  %v5931 = vcvt.s32.f32 %v5831
  %v5932 = vcvt.s32.f32 %v5832
  %v5933 = vcvt.s32.f32 %v5833
  %v5934 = vcvt.s32.f32 %v5834
  %v5935 = vcvt.s32.f32 %v5835
  %v5936 = vcvt.s32.f32 %v5836
  %v5937 = vcvt.s32.f32 %v5837
  %v5938 = vcvt.s32.f32 %v5838
  %v5939 = vcvt.s32.f32 %v5839
  %v5940 = vcvt.s32.f32 %v5840
  %v5941 = vcvt.s32.f32 %v5841
  %v5942 = vcvt.s32.f32 %v5842
  %v5943 = vcvt.s32.f32 %v5843
  %v5944 = vcvt.s32.f32 %v5844
  %v5945 = vcvt.s32.f32 %v5845
  %v5946 = vcvt.s32.f32 %v5846
  %v5947 = vcvt.s32.f32 %v5847
  %v5948 = vcvt.s32.f32 %v5848
  %v5949 = vcvt.s32.f32 %v5849
  %v5950 = vcvt.s32.f32 %v5850
  %v5951 = vcvt.s32.f32 %v5851
  %v5952 = vcvt.s32.f32 %v5852
  %v5953 = vcvt.s32.f32 %v5853
  %v5954 = vcvt.s32.f32 %v5854
  %v5955 = vcvt.s32.f32 %v5855
  %v5956 = vcvt.s32.f32 %v5856
  %v5957 = vcvt.s32.f32 %v5857
  %v5958 = vcvt.s32.f32 %v5858
  %v5959 = vcvt.s32.f32 %v5859
  %v5960 = vcvt.s32.f32 %v5860
  %v5961 = vcvt.s32.f32 %v5861
  %v5962 = vcvt.s32.f32 %v5862
  %v5963 = vcvt.s32.f32 %v5863
  %v5964 = vcvt.s32.f32 %v5864
  %v5965 = vcvt.s32.f32 %v5865
  %v5966 = vcvt.s32.f32 %v5866
  %v5967 = vcvt.s32.f32 %v5867
  %v5968 = vcvt.s32.f32 %v5868
  %v5969 = vcvt.s32.f32 %v5869
  %v5970 = vcvt.s32.f32 %v5870
  %v5971 = vcvt.s32.f32 %v5871
  %v5972 = vcvt.s32.f32 %v5872
  %v5973 = vcvt.s32.f32 %v5873
  %v5974 = vcvt.s32.f32 %v5874
  %v5975 = vcvt.s32.f32 %v5875
  %v5976 = vcvt.s32.f32 %v5876
  %v5977 = vcvt.s32.f32 %v5877
  %v5978 = vcvt.s32.f32 %v5878
  %v5979 = vcvt.s32.f32 %v5879
  %v5980 = vcvt.s32.f32 %v5880
  %v5981 = vcvt.s32.f32 %v5881
  %v5982 = vcvt.s32.f32 %v5882
  %v5983 = vcvt.s32.f32 %v5883
  %v5984 = vcvt.s32.f32 %v5884
  %v5985 = vcvt.s32.f32 %v5885
  %v5986 = vcvt.s32.f32 %v5886
  %v5987 = vcvt.s32.f32 %v5887
  %v5988 = vcvt.s32.f32 %v5888
  %v5989 = vcvt.s32.f32 %v5889
  %v5990 = vcvt.s32.f32 %v5890
  %v5991 = vcvt.s32.f32 %v5891
  %v5992 = vcvt.s32.f32 %v5892
  %v5993 = vcvt.s32.f32 %v5893
  %v5994 = vcvt.s32.f32 %v5894
  %v5995 = vcvt.s32.f32 %v5895
  %v5996 = vcvt.s32.f32 %v5896
  %v5997 = vcvt.s32.f32 %v5897
  %v5999 = vsel %vm5497, %v5640, 0
  %v6002 = vsel %vm5497, %v5644, 0
  %6004 = vmatprep.subr.mxu0 %v5899
  %6005 = vmatpush1.msra.mxu0 %v5898
  %6006 = vmatprep.subr.mxu0 %v5901
  %6007 = vmatpush1.msra.mxu0 %v5900
  %6008 = vmatprep.subr.mxu0 %v5903
  %6009 = vmatpush1.msra.mxu0 %v5902
  %6010 = vmatprep.subr.mxu0 %v5905
  %6011 = vmatpush1.msra.mxu0 %v5904
  %6012 = vmatprep.subr.mxu0 %v5907
  %6013 = vmatpush1.msra.mxu0 %v5906
  %6014 = vmatprep.subr.mxu0 %v5909
  %6015 = vmatpush1.msra.mxu0 %v5908
  %6016 = vmatprep.subr.mxu0 %v5911
  %6017 = vmatpush1.msra.mxu0 %v5910
  %6018 = vmatprep.subr.mxu0 %v5913
  %6019 = vmatpush1.msra.mxu0 %v5912
  %6020 = vmatprep.subr.mxu0 %v5915
  %6021 = vmatpush1.msra.mxu0 %v5914
  %6022 = vmatprep.subr.mxu0 %v5917
  %6023 = vmatpush1.msra.mxu0 %v5916
  %6024 = vmatprep.subr.mxu0 %v5919
  %6025 = vmatpush1.msra.mxu0 %v5918
  %6026 = vmatprep.subr.mxu0 %v5921
  %6027 = vmatpush1.msra.mxu0 %v5920
  %6028 = vmatprep.subr.mxu0 %v5923
  %6029 = vmatpush1.msra.mxu0 %v5922
  %6030 = vmatprep.subr.mxu0 %v5925
  %6031 = vmatpush1.msra.mxu0 %v5924
  %6032 = vmatprep.subr.mxu0 %v5927
  %6033 = vmatpush1.msra.mxu0 %v5926
  %6034 = vmatprep.subr.mxu0 %v5929
  %6035 = vmatpush1.msra.mxu0 %v5928
  %6036 = vmatprep.subr.mxu0 %v5931
  %6037 = vmatpush1.msra.mxu0 %v5930
  %6038 = vmatprep.subr.mxu0 %v5933
  %6039 = vmatpush1.msra.mxu0 %v5932
  %6040 = vmatprep.subr.mxu0 %v5935
  %6041 = vmatpush1.msra.mxu0 %v5934
  %6042 = vmatprep.subr.mxu0 %v5937
  %6043 = vmatpush1.msra.mxu0 %v5936
  %6044 = vmatprep.subr.mxu0 %v5939
  %6045 = vmatpush1.msra.mxu0 %v5938
  %6046 = vmatprep.subr.mxu0 %v5941
  %6047 = vmatpush1.msra.mxu0 %v5940
  %6048 = vmatprep.subr.mxu0 %v5943
  %6049 = vmatpush1.msra.mxu0 %v5942
  %6050 = vmatprep.subr.mxu0 %v5945
  %6051 = vmatpush1.msra.mxu0 %v5944
  %6052 = vmatprep.subr.mxu0 %v5947
  %6053 = vmatpush1.msra.mxu0 %v5946
  %6054 = vmatprep.subr.mxu0 %v5949
  %6055 = vmatpush1.msra.mxu0 %v5948
  %6056 = vmatprep.subr.mxu0 %v5951
  %6057 = vmatpush1.msra.mxu0 %v5950
  %6058 = vmatprep.subr.mxu0 %v5953
  %6059 = vmatpush1.msra.mxu0 %v5952
  %6060 = vmatprep.subr.mxu0 %v5955
  %6061 = vmatpush1.msra.mxu0 %v5954
  %6062 = vmatprep.subr.mxu0 %v5957
  %6063 = vmatpush1.msra.mxu0 %v5956
  %6064 = vmatprep.subr.mxu0 %v5959
  %6065 = vmatpush1.msra.mxu0 %v5958
  %6066 = vmatprep.subr.mxu0 %v5961
  %6067 = vmatpush1.msra.mxu0 %v5960
  %6068 = vmatprep.mubr.f32.mxu0 %v5638
  %6069 = vmatmul.mubr.f32.gmra.mrb[0].mxu0 %v5637
  %v6070 = vpop.f32.mrb[0].mxu0
  %v6071 = vadd.f32 0.0, %v6070
  %v6072 = vpop.f32.mrb[0].mxu0
  %v6073 = vadd.f32 0.0, %v6072
  %6074 = vmatprep.mubr.f32.mxu0 %v5642
  %6075 = vmatmul.mubr.f32.gmra.mrb[0].mxu0 %v5641
  %v6076 = vpop.f32.mrb[0].mxu0
  %v6077 = vadd.f32 0.0, %v6076
  %v6078 = vpop.f32.mrb[0].mxu0
  %v6079 = vadd.f32 0.0, %v6078
  %6080 = vdwg.mxu0
  %6081 = vmatprep.subr.mxu0 %v5963
  %6082 = vmatpush1.msra.mxu0 %v5962
  %6083 = vmatprep.subr.mxu0 %v5965
  %6084 = vmatpush1.msra.mxu0 %v5964
  %6085 = vmatprep.subr.mxu0 %v5967
  %6086 = vmatpush1.msra.mxu0 %v5966
  %6087 = vmatprep.subr.mxu0 %v5969
  %6088 = vmatpush1.msra.mxu0 %v5968
  %6089 = vmatprep.subr.mxu0 %v5971
  %6090 = vmatpush1.msra.mxu0 %v5970
  %6091 = vmatprep.subr.mxu0 %v5973
  %6092 = vmatpush1.msra.mxu0 %v5972
  %6093 = vmatprep.subr.mxu0 %v5975
  %6094 = vmatpush1.msra.mxu0 %v5974
  %6095 = vmatprep.subr.mxu0 %v5977
  %6096 = vmatpush1.msra.mxu0 %v5976
  %6097 = vmatprep.subr.mxu0 %v5979
  %6098 = vmatpush1.msra.mxu0 %v5978
  %6099 = vmatprep.subr.mxu0 %v5981
  %6100 = vmatpush1.msra.mxu0 %v5980
  %6101 = vmatprep.subr.mxu0 %v5983
  %6102 = vmatpush1.msra.mxu0 %v5982
  %6103 = vmatprep.subr.mxu0 %v5985
  %6104 = vmatpush1.msra.mxu0 %v5984
  %6105 = vmatprep.subr.mxu0 %v5987
  %6106 = vmatpush1.msra.mxu0 %v5986
  %6107 = vmatprep.subr.mxu0 %v5989
  %6108 = vmatpush1.msra.mxu0 %v5988
  %6109 = vmatprep.subr.mxu0 %v5991
  %6110 = vmatpush1.msra.mxu0 %v5990
  %6111 = vmatprep.subr.mxu0 %v5993
  %6112 = vmatpush1.msra.mxu0 %v5992
  %6113 = vmatprep.subr.mxu0 %v5995
  %6114 = vmatpush1.msra.mxu0 %v5994
  %6115 = vmatprep.subr.mxu0 %v5997
  %6116 = vmatpush1.msra.mxu0 %v5996
  %6117 = vmatprep.subr.mxu0 0.0
  %6118 = vmatpush1.msra.mxu0 0.0
  %6119 = vmatprep.subr.mxu0 0.0
  %6120 = vmatpush1.msra.mxu0 0.0
  %6121 = vmatprep.subr.mxu0 0.0
  %6122 = vmatpush1.msra.mxu0 0.0
  %6123 = vmatprep.subr.mxu0 0.0
  %6124 = vmatpush1.msra.mxu0 0.0
  %6125 = vmatprep.subr.mxu0 0.0
  %6126 = vmatpush1.msra.mxu0 0.0
  %6127 = vmatprep.subr.mxu0 0.0
  %6128 = vmatpush1.msra.mxu0 0.0
  %6129 = vmatprep.subr.mxu0 0.0
  %6130 = vmatpush1.msra.mxu0 0.0
  %6131 = vmatprep.subr.mxu0 0.0
  %6132 = vmatpush1.msra.mxu0 0.0
  %6133 = vmatprep.subr.mxu0 0.0
  %6134 = vmatpush1.msra.mxu0 0.0
  %6135 = vmatprep.subr.mxu0 0.0
  %6136 = vmatpush1.msra.mxu0 0.0
  %6137 = vmatprep.subr.mxu0 0.0
  %6138 = vmatpush1.msra.mxu0 0.0
  %6139 = vmatprep.subr.mxu0 0.0
  %6140 = vmatpush1.msra.mxu0 0.0
  %6141 = vmatprep.subr.mxu0 0.0
  %6142 = vmatpush1.msra.mxu0 0.0
  %6143 = vmatprep.subr.mxu0 0.0
  %6144 = vmatpush1.msra.mxu0 0.0
  %6145 = vmatprep.mubr.f32.mxu0 %v5999
  %6146 = vmatmul.mubr.f32.gmra.mrb[0].mxu0 %v5639
  %v6147 = vpop.f32.mrb[0].mxu0
  %v6148 = vadd.f32 %v6071, %v6147
  %v6149 = vpop.f32.mrb[0].mxu0
  %v6150 = vadd.f32 %v6073, %v6149
  %6151 = vmatprep.mubr.f32.mxu0 %v6002
  %6152 = vmatmul.mubr.f32.gmra.mrb[0].mxu0 %v5643
  %v6153 = vpop.f32.mrb[0].mxu0
  %v6154 = vadd.f32 %v6077, %v6153
  %v6155 = vpop.f32.mrb[0].mxu0
  %v6156 = vadd.f32 %v6079, %v6155
  %6157 = vdwg.mxu0
  %v6158 = vtanh.pop %v6148
  %v6159 = vtanh.pop %v6150
  %v6160 = vtanh.pop %v6154
  %v6161 = vtanh.pop %v6156
  %vm6162 = vcmp.lt.s32.totalorder %v5225, 0
  %v6163 = vsub.s32 0, %v5225
  %v6164 = vsel %vm6162, %v6163, %v5225
  %v6165 = vmul.u32.u64.compose %v6164, 2748779070
  %v6166 = vextract.low.u32 %v6165
  %v6167 = vextract.high.u32 %v6165
  %v6168 = vshrl.u32 %v6167, 6
  %v6169 = vmul.u32 %v6168, 100
  %v6170 = vsub.s32 %v6164, %v6169
  %v6171 = vsub.s32 0, %v6170
  %v6172 = vsel %vm6162, %v6171, %v6170
  %vm6173 = vcmp.lt.s32.totalorder %v5226, 0
  %v6174 = vsub.s32 0, %v5226
  %v6175 = vsel %vm6173, %v6174, %v5226
  %v6176 = vmul.u32.u64.compose %v6175, 2748779070
  %v6177 = vextract.low.u32 %v6176
  %v6178 = vextract.high.u32 %v6176
  %v6179 = vshrl.u32 %v6178, 6
  %v6180 = vmul.u32 %v6179, 100
  %v6181 = vsub.s32 %v6175, %v6180
  %v6182 = vsub.s32 0, %v6181
  %v6183 = vsel %vm6173, %v6182, %v6181
  %vm6184 = vcmp.ne.s32.totalorder %v6172, 0
  %vm6185 = vcmp.ne.s32.totalorder %v6183, 0
  %vm6186 = vcmp.lt.s32.totalorder %v6172, 0
  %vm6187 = vcmp.lt.s32.totalorder %v6183, 0
  %vm6188 = vmand %vm6186, %vm6184
  %vm6189 = vmand %vm6187, %vm6185
  %v6190 = vadd.s32 %v6172, 100
  %v6191 = vadd.s32 %v6183, 100
  %v6192 = vsel %vm6188, %v6190, %v6172
  %v6193 = vsel %vm6189, %v6191, %v6183
  %vm6194 = vcmp.eq.s32.totalorder %v6192, 0
  %vm6195 = vcmp.eq.s32.totalorder %v6193, 0
  %vm6196 = vcmask 1048128
  %6197 = vrot.lane.b32.xlu0 %v6158, 72
  %v6198 = vpop.permute.xlu0 %6197
  %v6199 = vsel %vm6196, %v6198, %v6159
  %6200 = vrot.lane.b32.xlu0 %v6160, 72
  %v6201 = vpop.permute.xlu0 %6200
  %v6202 = vsel %vm6196, %v6201, %v6161
  %6203 = vrot.lane.b32.xlu0 %v6199, 72
  %v6204 = vpop.permute.xlu0 %6203
  %6205 = vrot.lane.b32.xlu0 %v6202, 72
  %v6206 = vpop.permute.xlu0 %6205
  %v6207 = vsel %vm6196, %v6204, %v6198
  %v6208 = vsel %vm6196, %v6206, %v6201
  %6215 = vrot.lane.b32.xlu0 %v6199, 57
  %v6216 = vpop.permute.xlu0 %6215
  %6217 = vrot.lane.b32.xlu0 %v6207, 57
  %v6218 = vpop.permute.xlu0 %6217
  %6219 = vrot.lane.b32.xlu0 %v6204, 57
  %v6220 = vpop.permute.xlu0 %6219
  %6221 = vrot.lane.b32.xlu0 %v6202, 57
  %v6222 = vpop.permute.xlu0 %6221
  %6223 = vrot.lane.b32.xlu0 %v6208, 57
  %v6224 = vpop.permute.xlu0 %6223
  %6225 = vrot.lane.b32.xlu0 %v6206, 57
  %v6226 = vpop.permute.xlu0 %6225
  %vm6227 = vcmask 465920
  %v6228 = vsel %vm6227, %v6216, %v6218
  %v6229 = vsel %vm6227, %v6218, %v6220
  %v6230 = vsel %vm6227, %v6222, %v6224
  %v6231 = vsel %vm6227, %v6224, %v6226
  %v6236 = vsel %vm6194, 0.0, %v6228
  %v6237 = vsel %vm6195, 0.0, %v6229
  %v6238 = vsel %vm6194, 0.0, %v6230
  %v6239 = vsel %vm6195, 0.0, %v6231
  %vm6240 = vcmp.eq.s32.totalorder %v6192, 99
  %vm6241 = vcmp.eq.s32.totalorder %v6193, 99
  %6244 = vrot.lane.b32.xlu0 %v6158, 127
  %v6245 = vpop.permute.xlu0 %6244
  %6246 = vrot.lane.b32.xlu0 %v6199, 127
  %v6247 = vpop.permute.xlu0 %6246
  %6248 = vrot.lane.b32.xlu0 %v6160, 127
  %v6249 = vpop.permute.xlu0 %6248
  %6250 = vrot.lane.b32.xlu0 %v6202, 127
  %v6251 = vpop.permute.xlu0 %6250
  %v6252 = vsel %vm5367, %v6245, %v6247
  %v6253 = vsel %vm5367, %v6249, %v6251
  %v6258 = vsel %vm6240, 0.0, %v6252
  %v6259 = vsel %vm6241, 0.0, %v6247
  %v6260 = vsel %vm6240, 0.0, %v6253
  %v6261 = vsel %vm6241, 0.0, %v6251
  %v6262 = vld [vmem:[%s3] sm:$0xff]
  %v6263 = vld [vmem:[%s3 + $0x8] sm:$0xff]
  %v6264 = vld [vmem:[%s3 + $0x10] sm:$0xf]
  %v6265 = vld [vmem:[%s2] sm:$0xf]
  %v6266 = vld [vmem:[%s2 + $0x4] sm:$0xf]
  %v6267 = vld [vmem:[%s2 + $0x8] sm:$0x3]
  %v6268 = vpack.c.bf16 %v6238, %v6236
  %v6269 = vpack.c.bf16 %v6239, %v6237
  %s6270 = scalar_lea.vmem %s2, 12
  %v6271 = vld [vmem:[%s6270] sm:$0xf]
  %v6272 = vld [vmem:[%s6270 + $0x4] sm:$0xf]
  %v6273 = vld [vmem:[%s6270 + $0x8] sm:$0x3]
  %v6274 = vpack.c.bf16 %v6160, %v6158
  %v6275 = vpack.c.bf16 %v6161, %v6159
  %v6279 = vunpack.c.l.b16 %v6271
  %v6280 = vunpack.c.l.b16 %v6272
  %v6281 = vunpack.c.l.b16 %v6273
  %v6282 = vpack.c.b16 %v6280, %v6279
  %v6283 = vpack.c.b16 %v6281, %v6281
  %vm6284 = vcmask 80896
  %v6286 = vsel %vm6284, %v6282, 0
  %v6289 = vsel %vm6284, %v6283, 0
  %vm6291 = vcmask 1044480
  %v6293 = vsel %vm6291, %v6274, 0
  %v6296 = vsel %vm6291, %v6275, 0
  %6298 = vmatprep.subr.bf16.mxu0 %v6296
  %6299 = vmatpush1.bf16.msra.mxu0 %v6293
  %6300 = vmatprep.subr.bf16.mxu0 0
  %6301 = vmatpush1.bf16.msra.mxu0 0
  %6302 = vmatprep.subr.bf16.mxu0 0
  %6303 = vmatpush1.bf16.msra.mxu0 0
  %6304 = vmatprep.subr.bf16.mxu0 0
  %6305 = vmatpush1.bf16.msra.mxu0 0
  %6306 = vmatprep.subr.bf16.mxu0 0
  %6307 = vmatpush1.bf16.msra.mxu0 0
  %6308 = vmatprep.subr.bf16.mxu0 0
  %6309 = vmatpush1.bf16.msra.mxu0 0
  %6310 = vmatprep.subr.bf16.mxu0 0
  %6311 = vmatpush1.bf16.msra.mxu0 0
  %6312 = vmatprep.subr.bf16.mxu0 0
  %6313 = vmatpush1.bf16.msra.mxu0 0
  %6314 = vmatprep.subr.bf16.mxu0 0
  %6315 = vmatpush1.bf16.msra.mxu0 0
  %6316 = vmatprep.subr.bf16.mxu0 0
  %6317 = vmatpush1.bf16.msra.mxu0 0
  %6318 = vmatprep.subr.bf16.mxu0 0
  %6319 = vmatpush1.bf16.msra.mxu0 0
  %6320 = vmatprep.subr.bf16.mxu0 0
  %6321 = vmatpush1.bf16.msra.mxu0 0
  %6322 = vmatprep.subr.bf16.mxu0 0
  %6323 = vmatpush1.bf16.msra.mxu0 0
  %6324 = vmatprep.subr.bf16.mxu0 0
  %6325 = vmatpush1.bf16.msra.mxu0 0
  %6326 = vmatprep.subr.bf16.mxu0 0
  %6327 = vmatpush1.bf16.msra.mxu0 0
  %6328 = vmatprep.subr.bf16.mxu0 0
  %6329 = vmatpush1.bf16.msra.mxu0 0
  %6330 = vmatprep.mubr.bf16.mxu0 0
  %6331 = vmatmul.mubr.bf16.gmra.mrb[0].mxu0 %v6286
  %v6332 = vpop.f32.mrb[0].mxu0
  %v6333 = vadd.f32 0.0, %v6332
  %v6334 = vpop.f32.mrb[0].mxu0
  %v6335 = vadd.f32 0.0, %v6334
  %v6336 = vpop.f32.mrb[0].mxu0
  %v6337 = vadd.f32 0.0, %v6336
  %v6338 = vpop.f32.mrb[0].mxu0
  %v6339 = vadd.f32 0.0, %v6338
  %6340 = vmatprep.mubr.bf16.mxu0 0
  %6341 = vmatmul.mubr.bf16.gmra.mrb[0].mxu0 %v6289
  %v6342 = vpop.f32.mrb[0].mxu0
  %v6343 = vadd.f32 0.0, %v6342
  %v6344 = vpop.f32.mrb[0].mxu0
  %v6345 = vadd.f32 0.0, %v6344
  %v6346 = vpop.f32.mrb[0].mxu0
  %v6347 = vpop.f32.mrb[0].mxu0
  %6348 = vdwg.mxu0
  %v6352 = vunpack.c.l.b16 %v6265
  %v6353 = vunpack.c.l.b16 %v6266
  %v6354 = vunpack.c.l.b16 %v6267
  %v6355 = vpack.c.b16 %v6353, %v6352
  %v6356 = vpack.c.b16 %v6354, %v6354
  %v6358 = vsel %vm6284, %v6355, 0
  %v6361 = vsel %vm6284, %v6356, 0
  %v6364 = vsel %vm6291, %v6268, 0
  %v6367 = vsel %vm6291, %v6269, 0
  %6369 = vmatprep.subr.bf16.mxu0 %v6367
  %6370 = vmatpush1.bf16.msra.mxu0 %v6364
  %6371 = vmatprep.subr.bf16.mxu0 0
  %6372 = vmatpush1.bf16.msra.mxu0 0
  %6373 = vmatprep.subr.bf16.mxu0 0
  %6374 = vmatpush1.bf16.msra.mxu0 0
  %6375 = vmatprep.subr.bf16.mxu0 0
  %6376 = vmatpush1.bf16.msra.mxu0 0
  %6377 = vmatprep.subr.bf16.mxu0 0
  %6378 = vmatpush1.bf16.msra.mxu0 0
  %6379 = vmatprep.subr.bf16.mxu0 0
  %6380 = vmatpush1.bf16.msra.mxu0 0
  %6381 = vmatprep.subr.bf16.mxu0 0
  %6382 = vmatpush1.bf16.msra.mxu0 0
  %6383 = vmatprep.subr.bf16.mxu0 0
  %6384 = vmatpush1.bf16.msra.mxu0 0
  %6385 = vmatprep.subr.bf16.mxu0 0
  %6386 = vmatpush1.bf16.msra.mxu0 0
  %6387 = vmatprep.subr.bf16.mxu0 0
  %6388 = vmatpush1.bf16.msra.mxu0 0
  %6389 = vmatprep.subr.bf16.mxu0 0
  %6390 = vmatpush1.bf16.msra.mxu0 0
  %6391 = vmatprep.subr.bf16.mxu0 0
  %6392 = vmatpush1.bf16.msra.mxu0 0
  %6393 = vmatprep.subr.bf16.mxu0 0
  %6394 = vmatpush1.bf16.msra.mxu0 0
  %6395 = vmatprep.subr.bf16.mxu0 0
  %6396 = vmatpush1.bf16.msra.mxu0 0
  %6397 = vmatprep.subr.bf16.mxu0 0
  %6398 = vmatpush1.bf16.msra.mxu0 0
  %6399 = vmatprep.subr.bf16.mxu0 0
  %6400 = vmatpush1.bf16.msra.mxu0 0
  %6401 = vmatprep.mubr.bf16.mxu0 0
  %6402 = vmatmul.mubr.bf16.gmra.mrb[0].mxu0 %v6358
  %v6403 = vpop.f32.mrb[0].mxu0
  %v6404 = vadd.f32 %v6333, %v6403
  %v6405 = vpop.f32.mrb[0].mxu0
  %v6406 = vadd.f32 %v6335, %v6405
  %v6407 = vpop.f32.mrb[0].mxu0
  %v6408 = vadd.f32 %v6337, %v6407
  %v6409 = vpop.f32.mrb[0].mxu0
  %v6410 = vadd.f32 %v6339, %v6409
  %6411 = vmatprep.mubr.bf16.mxu0 0
  %6412 = vmatmul.mubr.bf16.gmra.mrb[0].mxu0 %v6361
  %v6413 = vpop.f32.mrb[0].mxu0
  %v6414 = vadd.f32 %v6343, %v6413
  %v6415 = vpop.f32.mrb[0].mxu0
  %v6416 = vadd.f32 %v6345, %v6415
  %v6417 = vpop.f32.mrb[0].mxu0
  %v6418 = vpop.f32.mrb[0].mxu0
  %6419 = vdwg.mxu0
  %s6420 = scalar_lea.vmem %s2, 24
  %v6421 = vld [vmem:[%s6420] sm:$0xf]
  %v6422 = vld [vmem:[%s6420 + $0x4] sm:$0xf]
  %v6423 = vld [vmem:[%s6420 + $0x8] sm:$0x3]
  %v6424 = vpack.c.bf16 %v6260, %v6258
  %v6425 = vpack.c.bf16 %v6261, %v6259
  %v6429 = vunpack.c.l.b16 %v6421
  %v6430 = vunpack.c.l.b16 %v6422
  %v6431 = vunpack.c.l.b16 %v6423
  %v6432 = vpack.c.b16 %v6430, %v6429
  %v6433 = vpack.c.b16 %v6431, %v6431
  %v6435 = vsel %vm6284, %v6432, 0
  %v6438 = vsel %vm6284, %v6433, 0
  %v6441 = vsel %vm6291, %v6424, 0
  %v6444 = vsel %vm6291, %v6425, 0
  %6446 = vmatprep.subr.bf16.mxu0 %v6444
  %6447 = vmatpush1.bf16.msra.mxu0 %v6441
  %6448 = vmatprep.subr.bf16.mxu0 0
  %6449 = vmatpush1.bf16.msra.mxu0 0
  %6450 = vmatprep.subr.bf16.mxu0 0
  %6451 = vmatpush1.bf16.msra.mxu0 0
  %6452 = vmatprep.subr.bf16.mxu0 0
  %6453 = vmatpush1.bf16.msra.mxu0 0
  %6454 = vmatprep.subr.bf16.mxu0 0
  %6455 = vmatpush1.bf16.msra.mxu0 0
  %6456 = vmatprep.subr.bf16.mxu0 0
  %6457 = vmatpush1.bf16.msra.mxu0 0
  %6458 = vmatprep.subr.bf16.mxu0 0
  %6459 = vmatpush1.bf16.msra.mxu0 0
  %6460 = vmatprep.subr.bf16.mxu0 0
  %6461 = vmatpush1.bf16.msra.mxu0 0
  %6462 = vmatprep.subr.bf16.mxu0 0
  %6463 = vmatpush1.bf16.msra.mxu0 0
  %6464 = vmatprep.subr.bf16.mxu0 0
  %6465 = vmatpush1.bf16.msra.mxu0 0
  %6466 = vmatprep.subr.bf16.mxu0 0
  %6467 = vmatpush1.bf16.msra.mxu0 0
  %6468 = vmatprep.subr.bf16.mxu0 0
  %6469 = vmatpush1.bf16.msra.mxu0 0
  %6470 = vmatprep.subr.bf16.mxu0 0
  %6471 = vmatpush1.bf16.msra.mxu0 0
  %6472 = vmatprep.subr.bf16.mxu0 0
  %6473 = vmatpush1.bf16.msra.mxu0 0
  %6474 = vmatprep.subr.bf16.mxu0 0
  %6475 = vmatpush1.bf16.msra.mxu0 0
  %6476 = vmatprep.subr.bf16.mxu0 0
  %6477 = vmatpush1.bf16.msra.mxu0 0
  %6478 = vmatprep.mubr.bf16.mxu0 0
  %6479 = vmatmul.mubr.bf16.gmra.mrb[0].mxu0 %v6435
  %v6480 = vpop.f32.mrb[0].mxu0
  %v6481 = vadd.f32 0.0, %v6480
  %v6482 = vpop.f32.mrb[0].mxu0
  %v6483 = vadd.f32 0.0, %v6482
  %v6484 = vpop.f32.mrb[0].mxu0
  %v6485 = vadd.f32 0.0, %v6484
  %v6486 = vpop.f32.mrb[0].mxu0
  %v6487 = vadd.f32 0.0, %v6486
  %6488 = vmatprep.mubr.bf16.mxu0 0
  %6489 = vmatmul.mubr.bf16.gmra.mrb[0].mxu0 %v6438
  %v6490 = vpop.f32.mrb[0].mxu0
  %v6491 = vadd.f32 0.0, %v6490
  %v6492 = vpop.f32.mrb[0].mxu0
  %v6493 = vadd.f32 0.0, %v6492
  %v6494 = vpop.f32.mrb[0].mxu0
  %v6495 = vpop.f32.mrb[0].mxu0
  %6496 = vdwg.mxu0
  %v6497 = vadd.f32 %v6404, %v6481
  %v6498 = vadd.f32 %v6406, %v6483
  %v6499 = vadd.f32 %v6408, %v6485
  %v6500 = vadd.f32 %v6410, %v6487
  %v6501 = vadd.f32 %v6414, %v6491
  %v6502 = vadd.f32 %v6416, %v6493
  %6504 = vset.pattern.permute.xlu0 0
  %6505 = vperm.xlu0 %6504, %v6262
  %v6506 = vpop.permute.xlu0 %6505
  %6509 = vset.pattern.permute.xlu0 0
  %6510 = vperm.xlu0 %6509, %v6263
  %v6511 = vpop.permute.xlu0 %6510
  %6514 = vset.pattern.permute.xlu0 0
  %6515 = vperm.xlu0 %6514, %v6264
  %v6516 = vpop.permute.xlu0 %6515
  %v6518 = vadd.f32 %v6497, %v6506
  %v6519 = vadd.f32 %v6498, %v6506
  %v6520 = vadd.f32 %v6499, %v6511
  %v6521 = vadd.f32 %v6500, %v6511
  %v6522 = vadd.f32 %v6501, %v6516
  %v6523 = vadd.f32 %v6502, %v6516
  %vm6524 = vcmask 588800
  %v6525 = vsel %vm6524, %v6519, 0.0
  %v6526 = vadd.f32 %v6518, %v6525
  %6527 = vadd.xlane.f32.xlu0 %v6526
  %v6528 = vpop.xlane.xlu0 %6527
  %v6529 = vsel %vm6524, %v6521, 0.0
  %v6530 = vadd.f32 %v6520, %v6529
  %6531 = vadd.xlane.f32.xlu0 %v6530
  %v6532 = vpop.xlane.xlu0 %6531
  %vm6533 = vcmask 1043456
  %v6534 = vsel %vm6533, %v6522, 0.0
  %vm6535 = vcmask 584704
  %v6536 = vsel %vm6535, %v6523, 0.0
  %v6537 = vadd.f32 %v6534, %v6536
  %6538 = vadd.xlane.f32.xlu0 %v6537
  %v6539 = vpop.xlane.xlu0 %6538
  %v6540 = vrcp.pop 200.0
  %v6541 = vmul.f32 %v6528, %v6540
  %v6542 = vmul.f32 %v6532, %v6540
  %v6543 = vmul.f32 %v6539, %v6540
  %v6544 = vsub.f32 %v6518, %v6541
  %v6545 = vsub.f32 %v6519, %v6541
  %v6546 = vsub.f32 %v6520, %v6542
  %v6547 = vsub.f32 %v6521, %v6542
  %v6548 = vsub.f32 %v6522, %v6543
  %v6549 = vsub.f32 %v6523, %v6543
  %v6550 = vmul.f32 %v6544, %v6544
  %v6551 = vmul.f32 %v6545, %v6545
  %v6552 = vmul.f32 %v6546, %v6546
  %v6553 = vmul.f32 %v6547, %v6547
  %v6554 = vmul.f32 %v6548, %v6548
  %v6555 = vmul.f32 %v6549, %v6549
  %v6556 = vsel %vm6524, %v6551, 0.0
  %v6557 = vadd.f32 %v6550, %v6556
  %6558 = vadd.xlane.f32.xlu0 %v6557
  %v6559 = vpop.xlane.xlu0 %6558
  %v6560 = vsel %vm6524, %v6553, 0.0
  %v6561 = vadd.f32 %v6552, %v6560
  %6562 = vadd.xlane.f32.xlu0 %v6561
  %v6563 = vpop.xlane.xlu0 %6562
  %v6564 = vsel %vm6533, %v6554, 0.0
  %v6565 = vsel %vm6535, %v6555, 0.0
  %v6566 = vadd.f32 %v6564, %v6565
  %6567 = vadd.xlane.f32.xlu0 %v6566
  %v6568 = vpop.xlane.xlu0 %6567
  %v6569 = vmul.f32 %v6559, %v6540
  %v6570 = vmul.f32 %v6563, %v6540
  %v6571 = vmul.f32 %v6568, %v6540
  %6572 = vset.pattern.permute.xlu0 1
  %6573 = vperm.xlu0 %6572, %v6262
  %v6574 = vpop.permute.xlu0 %6573
  %6576 = vset.pattern.permute.xlu0 1
  %6577 = vperm.xlu0 %6576, %v6263
  %v6578 = vpop.permute.xlu0 %6577
  %6580 = vset.pattern.permute.xlu0 1
  %6581 = vperm.xlu0 %6580, %v6264
  %v6582 = vpop.permute.xlu0 %6581
  %v6584 = vmul.f32 %v6574, %v6544
  %v6585 = vmul.f32 %v6574, %v6545
  %v6586 = vmul.f32 %v6578, %v6546
  %v6587 = vmul.f32 %v6578, %v6547
  %v6588 = vmul.f32 %v6582, %v6548
  %v6589 = vmul.f32 %v6582, %v6549
  %v6590 = vadd.f32 %v6569, 1e-05
  %v6591 = vadd.f32 %v6570, 1e-05
  %v6592 = vadd.f32 %v6571, 1e-05
  %v6593 = vrsqrt.pop %v6590
  %v6594 = vrsqrt.pop %v6591
  %v6595 = vrsqrt.pop %v6592
  %v6596 = vmul.f32 %v6584, %v6593
  %v6597 = vmul.f32 %v6585, %v6593
  %v6598 = vmul.f32 %v6586, %v6594
  %v6599 = vmul.f32 %v6587, %v6594
  %v6600 = vmul.f32 %v6588, %v6595
  %v6601 = vmul.f32 %v6589, %v6595
  %6602 = vset.pattern.permute.xlu0 2
  %6603 = vperm.xlu0 %6602, %v6262
  %v6604 = vpop.permute.xlu0 %6603
  %6606 = vset.pattern.permute.xlu0 2
  %6607 = vperm.xlu0 %6606, %v6263
  %v6608 = vpop.permute.xlu0 %6607
  %6610 = vset.pattern.permute.xlu0 2
  %6611 = vperm.xlu0 %6610, %v6264
  %v6612 = vpop.permute.xlu0 %6611
  %v6614 = vadd.f32 %v6596, %v6604
  %v6615 = vadd.f32 %v6597, %v6604
  %v6616 = vadd.f32 %v6598, %v6608
  %v6617 = vadd.f32 %v6599, %v6608
  %v6618 = vadd.f32 %v6600, %v6612
  %v6619 = vadd.f32 %v6601, %v6612
  %6620 = vrot.lane.b32.xlu0 %v6614, 72
  %v6621 = vpop.permute.xlu0 %6620
  %6622 = vrot.lane.b32.xlu0 %v6616, 72
  %v6623 = vpop.permute.xlu0 %6622
  %6624 = vrot.lane.b32.xlu0 %v6618, 72
  %v6625 = vpop.permute.xlu0 %6624
  %v6626 = vsel %vm6196, %v6621, %v6615
  %v6627 = vsel %vm6196, %v6623, %v6617
  %v6628 = vsel %vm6196, %v6625, %v6619
  %6635 = vrot.lane.b32.xlu0 %v6614, 127
  %v6636 = vpop.permute.xlu0 %6635
  %6637 = vrot.lane.b32.xlu0 %v6626, 127
  %v6638 = vpop.permute.xlu0 %6637
  %6639 = vrot.lane.b32.xlu0 %v6616, 127
  %v6640 = vpop.permute.xlu0 %6639
  %6641 = vrot.lane.b32.xlu0 %v6627, 127
  %v6642 = vpop.permute.xlu0 %6641
  %6643 = vrot.lane.b32.xlu0 %v6618, 127
  %v6644 = vpop.permute.xlu0 %6643
  %6645 = vrot.lane.b32.xlu0 %v6628, 127
  %v6646 = vpop.permute.xlu0 %6645
  %v6647 = vsel %vm5367, %v6636, %v6638
  %v6648 = vsel %vm5367, %v6640, %v6642
  %v6649 = vsel %vm5367, %v6644, %v6646
  %v6656 = vmax.f32 %v6614, %v6647
  %v6657 = vmax.f32 %v6615, %v6638
  %v6658 = vmax.f32 %v6616, %v6648
  %v6659 = vmax.f32 %v6617, %v6642
  %v6660 = vmax.f32 %v6618, %v6649
  %v6661 = vmax.f32 %v6619, %v6646
  %v6663 = vsel %vm6524, %v6657, 0
  %v6666 = vsel %vm6524, %v6659, 0
  %v6669 = vsel %vm6524, %v6661, 0
  %6671 = vmatprep.subr.mxu0 0.0
  %6672 = vmatpush1.msra.mxu0 %v5898
  %6673 = vmatprep.subr.mxu0 0.0
  %6674 = vmatpush1.msra.mxu0 %v5900
  %6675 = vmatprep.subr.mxu0 0.0
  %6676 = vmatpush1.msra.mxu0 %v5902
  %6677 = vmatprep.subr.mxu0 0.0
  %6678 = vmatpush1.msra.mxu0 %v5904
  %6679 = vmatprep.subr.mxu0 0.0
  %6680 = vmatpush1.msra.mxu0 %v5906
  %6681 = vmatprep.subr.mxu0 0.0
  %6682 = vmatpush1.msra.mxu0 %v5908
  %6683 = vmatprep.subr.mxu0 0.0
  %6684 = vmatpush1.msra.mxu0 %v5910
  %6685 = vmatprep.subr.mxu0 0.0
  %6686 = vmatpush1.msra.mxu0 %v5912
  %6687 = vmatprep.subr.mxu0 0.0
  %6688 = vmatpush1.msra.mxu0 %v5914
  %6689 = vmatprep.subr.mxu0 0.0
  %6690 = vmatpush1.msra.mxu0 %v5916
  %6691 = vmatprep.subr.mxu0 0.0
  %6692 = vmatpush1.msra.mxu0 %v5918
  %6693 = vmatprep.subr.mxu0 0.0
  %6694 = vmatpush1.msra.mxu0 %v5920
  %6695 = vmatprep.subr.mxu0 0.0
  %6696 = vmatpush1.msra.mxu0 %v5922
  %6697 = vmatprep.subr.mxu0 0.0
  %6698 = vmatpush1.msra.mxu0 %v5924
  %6699 = vmatprep.subr.mxu0 0.0
  %6700 = vmatpush1.msra.mxu0 %v5926
  %6701 = vmatprep.subr.mxu0 0.0
  %6702 = vmatpush1.msra.mxu0 %v5928
  %6703 = vmatprep.subr.mxu0 0.0
  %6704 = vmatpush1.msra.mxu0 %v5930
  %6705 = vmatprep.subr.mxu0 0.0
  %6706 = vmatpush1.msra.mxu0 %v5932
  %6707 = vmatprep.subr.mxu0 0.0
  %6708 = vmatpush1.msra.mxu0 %v5934
  %6709 = vmatprep.subr.mxu0 0.0
  %6710 = vmatpush1.msra.mxu0 %v5936
  %6711 = vmatprep.subr.mxu0 0.0
  %6712 = vmatpush1.msra.mxu0 %v5938
  %6713 = vmatprep.subr.mxu0 0.0
  %6714 = vmatpush1.msra.mxu0 %v5940
  %6715 = vmatprep.subr.mxu0 0.0
  %6716 = vmatpush1.msra.mxu0 %v5942
  %6717 = vmatprep.subr.mxu0 0.0
  %6718 = vmatpush1.msra.mxu0 %v5944
  %6719 = vmatprep.subr.mxu0 0.0
  %6720 = vmatpush1.msra.mxu0 %v5946
  %6721 = vmatprep.subr.mxu0 0.0
  %6722 = vmatpush1.msra.mxu0 0.0
  %6723 = vmatprep.subr.mxu0 0.0
  %6724 = vmatpush1.msra.mxu0 0.0
  %6725 = vmatprep.subr.mxu0 0.0
  %6726 = vmatpush1.msra.mxu0 0.0
  %6727 = vmatprep.subr.mxu0 0.0
  %6728 = vmatpush1.msra.mxu0 0.0
  %6729 = vmatprep.subr.mxu0 0.0
  %6730 = vmatpush1.msra.mxu0 0.0
  %6731 = vmatprep.subr.mxu0 0.0
  %6732 = vmatpush1.msra.mxu0 0.0
  %6733 = vmatprep.subr.mxu0 0.0
  %6734 = vmatpush1.msra.mxu0 0.0
  %6735 = vmatprep.mubr.f32.mxu0 %v6663
  %6736 = vmatmul.mubr.f32.gmra.mrb[0].mxu0 %v6656
  %v6737 = vpop.f32.mrb[0].mxu0
  %v6738 = vadd.f32 0.0, %v6737
  %v6739 = vpop.f32.mrb[0].mxu0
  %6740 = vmatprep.mubr.f32.mxu0 %v6666
  %6741 = vmatmul.mubr.f32.gmra.mrb[0].mxu0 %v6658
  %v6742 = vpop.f32.mrb[0].mxu0
  %v6743 = vadd.f32 0.0, %v6742
  %v6744 = vpop.f32.mrb[0].mxu0
  %6745 = vmatprep.mubr.f32.mxu0 %v6669
  %6746 = vmatmul.mubr.f32.gmra.mrb[0].mxu0 %v6660
  %v6747 = vpop.f32.mrb[0].mxu0
  %v6748 = vadd.f32 0.0, %v6747
  %v6749 = vpop.f32.mrb[0].mxu0
  %6750 = vdwg.mxu0
  %v6751 = vtanh.pop %v6738
  %v6752 = vtanh.pop %v6743
  %v6753 = vtanh.pop %v6748
  %vm6754 = vcmask 401408
  %6755 = vst.msk [vmem:[#allocation2] sm:$0x1] %vm6754, %v6751
  %v6758 = vunpack.c.l.s4 1983009808
  %v6759 = vunpack.c.0.s8 %v6758
  %v6760 = vlaneseq
  %v6761 = vshrl.u32 %v6760, 7
  %v6762 = vsub.s32 %v6759, %v6761
  %v6763 = vrot.slane %v6751, %v6762
  %v6764 = vrot.slane %v6763, 7
  %v6765 = vrot.slane %v6764, 2
  %6766 = vrot.lane.b32.xlu0 %v6765, 50
  %v6767 = vpop.permute.xlu0 %6766
  %vm6769 = vcmask 811408
  %6770 = vst.msk [vmem:[#allocation2] sm:$0x1] %vm6769, %v6767
  %v6771 = vcombine.high %v6763, %v6763
  %6772 = vrot.lane.b32.xlu0 %v6771, 100
  %v6773 = vpop.permute.xlu0 %6772
  %v6774 = vrot.slane %v6773, 6
  %vm6775 = vcmask 818176
  %v6776 = vsel %vm6775, %v6774, %v6773
  %vm6778 = vcmask 1041184
  %vm6779 = vcmask 174082
  %vm6780 = vmor %vm6779, %vm6778
  %6781 = vst.msk [vmem:[#allocation2] sm:$0x5] %vm6780, %v6776
  %v6782 = vrot.slane %v6771, 7
  %v6783 = vrot.slane %v6782, 2
  %6784 = vrot.lane.b32.xlu0 %v6783, 22
  %v6785 = vpop.permute.xlu0 %6784
  %vm6787 = vcmask 581808
  %6788 = vst.msk [vmem:[#allocation2 + $0x2] sm:$0x1] %vm6787, %v6785
  %v6789 = vcombine.high %v6751, %v6751
  %v6791 = vunpack.c.l.s4 1983009808
  %v6792 = vunpack.c.0.s8 %v6791
  %v6793 = vlaneseq
  %v6794 = vshrl.u32 %v6793, 7
  %v6795 = vsub.s32 %v6792, %v6794
  %v6796 = vrot.slane %v6789, %v6795
  %6797 = vrot.lane.b32.xlu0 %v6796, 72
  %v6798 = vpop.permute.xlu0 %6797
  %vm6800 = vcmask 991808
  %6801 = vst.msk [vmem:[#allocation2 + $0x2] sm:$0x1] %vm6800, %v6798
  %v6802 = vrot.slane %v6796, 7
  %v6803 = vrot.slane %v6802, 2
  %6804 = vrot.lane.b32.xlu0 %v6803, 122
  %v6805 = vpop.permute.xlu0 %6804
  %v6806 = vrot.slane %v6805, 6
  %vm6807 = vcmask 998400
  %v6808 = vsel %vm6807, %v6806, %v6805
  %vm6810 = vcmask 1041360
  %vm6811 = vcmask 354306
  %vm6812 = vmor %vm6811, %vm6810
  %6813 = vst.msk [vmem:[#allocation2 + $0x2] sm:$0x5] %vm6812, %v6808
  %v6814 = vcombine.high %v6796, %v6796
  %6815 = vrot.lane.b32.xlu0 %v6814, 44
  %v6816 = vpop.permute.xlu0 %6815
  %vm6818 = vcmask 762208
  %6819 = vst.msk [vmem:[#allocation2 + $0x4] sm:$0x1] %vm6818, %v6816
  %v6820 = vrot.slane %v6814, 7
  %v6821 = vrot.slane %v6820, 2
  %6822 = vrot.lane.b32.xlu0 %v6821, 94
  %v6823 = vpop.permute.xlu0 %6822
  %v6824 = vrot.slane %v6823, 6
  %vm6825 = vcmask 769024
  %v6826 = vsel %vm6825, %v6824, %v6823
  %vm6828 = vcmask 1041136
  %vm6829 = vcmask 124930
  %vm6830 = vmor %vm6829, %vm6828
  %6831 = vst.msk [vmem:[#allocation2 + $0x4] sm:$0x5] %vm6830, %v6826
  %v6834 = vunpack.c.l.s4 1983009808
  %v6835 = vunpack.c.0.s8 %v6834
  %v6836 = vlaneseq
  %v6837 = vshrl.u32 %v6836, 7
  %v6838 = vsub.s32 %v6835, %v6837
  %v6839 = vrot.slane %v6752, %v6838
  %6840 = vrot.lane.b32.xlu0 %v6839, 16
  %v6841 = vpop.permute.xlu0 %6840
  %vm6843 = vcmask 532608
  %6844 = vst.msk [vmem:[#allocation2 + $0x6] sm:$0x1] %vm6843, %v6841
  %v6845 = vrot.slane %v6839, 7
  %v6846 = vrot.slane %v6845, 2
  %6847 = vrot.lane.b32.xlu0 %v6846, 66
  %v6848 = vpop.permute.xlu0 %6847
  %vm6850 = vcmask 942608
  %6851 = vst.msk [vmem:[#allocation2 + $0x6] sm:$0x1] %vm6850, %v6848
  %v6852 = vcombine.high %v6839, %v6839
  %6853 = vrot.lane.b32.xlu0 %v6852, 116
  %v6854 = vpop.permute.xlu0 %6853
  %v6855 = vrot.slane %v6854, 6
  %vm6856 = vcmask 949248
  %v6857 = vsel %vm6856, %v6855, %v6854
  %vm6859 = vcmask 1041312
  %vm6860 = vcmask 305154
  %vm6861 = vmor %vm6860, %vm6859
  %6862 = vst.msk [vmem:[#allocation2 + $0x6] sm:$0x5] %vm6861, %v6857
  %v6863 = vrot.slane %v6852, 7
  %v6864 = vrot.slane %v6863, 2
  %6865 = vrot.lane.b32.xlu0 %v6864, 38
  %v6866 = vpop.permute.xlu0 %6865
  %vm6868 = vcmask 713008
  %6869 = vst.msk [vmem:[#allocation2 + $0x8] sm:$0x1] %vm6868, %v6866
  %v6870 = vcombine.high %v6752, %v6752
  %v6872 = vunpack.c.l.s4 1983009808
  %v6873 = vunpack.c.0.s8 %v6872
  %v6874 = vlaneseq
  %v6875 = vshrl.u32 %v6874, 7
  %v6876 = vsub.s32 %v6873, %v6875
  %v6877 = vrot.slane %v6870, %v6876
  %6878 = vrot.lane.b32.xlu0 %v6877, 88
  %v6879 = vpop.permute.xlu0 %6878
  %v6880 = vrot.slane %v6879, 6
  %vm6881 = vcmask 719872
  %v6882 = vsel %vm6881, %v6880, %v6879
  %vm6884 = vcmask 1041088
  %vm6885 = vcmask 75778
  %vm6886 = vmor %vm6885, %vm6884
  %6887 = vst.msk [vmem:[#allocation2 + $0x8] sm:$0x5] %vm6886, %v6882
  %v6888 = vrot.slane %v6877, 7
  %v6889 = vrot.slane %v6888, 2
  %6890 = vrot.lane.b32.xlu0 %v6889, 10
  %v6891 = vpop.permute.xlu0 %6890
  %vm6893 = vcmask 483408
  %6894 = vst.msk [vmem:[#allocation2 + $0xa] sm:$0x1] %vm6893, %v6891
  %v6895 = vcombine.high %v6877, %v6877
  %6896 = vrot.lane.b32.xlu0 %v6895, 60
  %v6897 = vpop.permute.xlu0 %6896
  %vm6899 = vcmask 893408
  %6900 = vst.msk [vmem:[#allocation2 + $0xa] sm:$0x1] %vm6899, %v6897
  %v6901 = vrot.slane %v6895, 7
  %v6902 = vrot.slane %v6901, 2
  %6903 = vrot.lane.b32.xlu0 %v6902, 110
  %v6904 = vpop.permute.xlu0 %6903
  %v6905 = vrot.slane %v6904, 6
  %vm6906 = vcmask 900096
  %v6907 = vsel %vm6906, %v6905, %v6904
  %vm6909 = vcmask 1041264
  %vm6910 = vcmask 256002
  %vm6911 = vmor %vm6910, %vm6909
  %6912 = vst.msk [vmem:[#allocation2 + $0xa] sm:$0x5] %vm6911, %v6907
  %v6915 = vunpack.c.l.s4 1983009808
  %v6916 = vunpack.c.0.s8 %v6915
  %v6917 = vlaneseq
  %v6918 = vshrl.u32 %v6917, 7
  %v6919 = vsub.s32 %v6916, %v6918
  %v6920 = vrot.slane %v6753, %v6919
  %6921 = vrot.lane.b32.xlu0 %v6920, 32
  %v6922 = vpop.permute.xlu0 %6921
  %vm6924 = vcmask 663808
  %6925 = vst.msk [vmem:[#allocation2 + $0xc] sm:$0x1] %vm6924, %v6922
  %v6926 = vrot.slane %v6920, 7
  %v6927 = vrot.slane %v6926, 2
  %6928 = vrot.lane.b32.xlu0 %v6927, 82
  %v6929 = vpop.permute.xlu0 %6928
  %v6930 = vrot.slane %v6929, 6
  %vm6931 = vcmask 670720
  %v6932 = vsel %vm6931, %v6930, %v6929
  %vm6934 = vcmask 1041040
  %vm6935 = vcmask 26626
  %vm6936 = vmor %vm6935, %vm6934
  %6937 = vst.msk [vmem:[#allocation2 + $0xc] sm:$0x5] %vm6936, %v6932
  %v6938 = vcombine.high %v6920, %v6920
  %6939 = vrot.lane.b32.xlu0 %v6938, 4
  %v6940 = vpop.permute.xlu0 %6939
  %vm6942 = vcmask 434208
  %6943 = vst.msk [vmem:[#allocation2 + $0xe] sm:$0x1] %vm6942, %v6940
  %v6944 = vrot.slane %v6938, 7
  %v6945 = vrot.slane %v6944, 2
  %6946 = vrot.lane.b32.xlu0 %v6945, 54
  %v6947 = vpop.permute.xlu0 %6946
  %vm6949 = vcmask 844208
  %6950 = vst.msk [vmem:[#allocation2 + $0xe] sm:$0x1] %vm6949, %v6947
  %6951 = vrot.lane.b32.xlu0 %v6763, 78
  %v6952 = vpop.permute.xlu0 %6951
  %6954 = vst.msk [vmem:[#allocation2 + $0x1] sm:$0x1] %vm6754, %v6952
  %6956 = vst.msk [vmem:[#allocation2 + $0x1] sm:$0x1] %vm6769, %v6765
  %6957 = vrot.lane.b32.xlu0 %v6771, 50
  %v6958 = vpop.permute.xlu0 %6957
  %v6959 = vrot.slane %v6958, 6
  %vm6960 = vcmask 408576
  %v6961 = vsel %vm6960, %v6959, %v6958
  %6963 = vst.msk [vmem:[#allocation2 + $0x1] sm:$0x5] %vm6780, %v6961
  %6964 = vrot.lane.b32.xlu0 %v6783, 100
  %v6965 = vpop.permute.xlu0 %6964
  %6967 = vst.msk [vmem:[#allocation2 + $0x3] sm:$0x1] %vm6787, %v6965
  %6968 = vrot.lane.b32.xlu0 %v6796, 22
  %v6969 = vpop.permute.xlu0 %6968
  %6971 = vst.msk [vmem:[#allocation2 + $0x3] sm:$0x1] %vm6800, %v6969
  %6972 = vrot.lane.b32.xlu0 %v6803, 72
  %v6973 = vpop.permute.xlu0 %6972
  %v6974 = vrot.slane %v6973, 6
  %v6975 = vsel %vm6524, %v6974, %v6973
  %6977 = vst.msk [vmem:[#allocation2 + $0x3] sm:$0x5] %vm6812, %v6975
  %6978 = vrot.lane.b32.xlu0 %v6814, 122
  %v6979 = vpop.permute.xlu0 %6978
  %6981 = vst.msk [vmem:[#allocation2 + $0x5] sm:$0x1] %vm6818, %v6979
  %6982 = vrot.lane.b32.xlu0 %v6821, 44
  %v6983 = vpop.permute.xlu0 %6982
  %v6984 = vrot.slane %v6983, 6
  %vm6985 = vcmask 359424
  %v6986 = vsel %vm6985, %v6984, %v6983
  %6988 = vst.msk [vmem:[#allocation2 + $0x5] sm:$0x5] %vm6830, %v6986
  %6989 = vrot.lane.b32.xlu0 %v6839, 94
  %v6990 = vpop.permute.xlu0 %6989
  %6992 = vst.msk [vmem:[#allocation2 + $0x7] sm:$0x1] %vm6843, %v6990
  %6993 = vrot.lane.b32.xlu0 %v6846, 16
  %v6994 = vpop.permute.xlu0 %6993
  %6996 = vst.msk [vmem:[#allocation2 + $0x7] sm:$0x1] %vm6850, %v6994
  %6997 = vrot.lane.b32.xlu0 %v6852, 66
  %v6998 = vpop.permute.xlu0 %6997
  %v6999 = vrot.slane %v6998, 6
  %vm7000 = vcmask 539648
  %v7001 = vsel %vm7000, %v6999, %v6998
  %7003 = vst.msk [vmem:[#allocation2 + $0x7] sm:$0x5] %vm6861, %v7001
  %7004 = vrot.lane.b32.xlu0 %v6864, 116
  %v7005 = vpop.permute.xlu0 %7004
  %7007 = vst.msk [vmem:[#allocation2 + $0x9] sm:$0x1] %vm6868, %v7005
  %7008 = vrot.lane.b32.xlu0 %v6877, 38
  %v7009 = vpop.permute.xlu0 %7008
  %v7010 = vrot.slane %v7009, 6
  %vm7011 = vcmask 310272
  %v7012 = vsel %vm7011, %v7010, %v7009
  %7014 = vst.msk [vmem:[#allocation2 + $0x9] sm:$0x5] %vm6886, %v7012
  %7015 = vrot.lane.b32.xlu0 %v6889, 88
  %v7016 = vpop.permute.xlu0 %7015
  %7018 = vst.msk [vmem:[#allocation2 + $0xb] sm:$0x1] %vm6893, %v7016
  %7019 = vrot.lane.b32.xlu0 %v6895, 10
  %v7020 = vpop.permute.xlu0 %7019
  %7022 = vst.msk [vmem:[#allocation2 + $0xb] sm:$0x1] %vm6899, %v7020
  %7023 = vrot.lane.b32.xlu0 %v6902, 60
  %v7024 = vpop.permute.xlu0 %7023
  %v7025 = vrot.slane %v7024, 6
  %vm7026 = vcmask 490496
  %v7027 = vsel %vm7026, %v7025, %v7024
  %7029 = vst.msk [vmem:[#allocation2 + $0xb] sm:$0x5] %vm6911, %v7027
  %7030 = vrot.lane.b32.xlu0 %v6920, 110
  %v7031 = vpop.permute.xlu0 %7030
  %7033 = vst.msk [vmem:[#allocation2 + $0xd] sm:$0x1] %vm6924, %v7031
  %7034 = vrot.lane.b32.xlu0 %v6927, 32
  %v7035 = vpop.permute.xlu0 %7034
  %v7036 = vrot.slane %v7035, 6
  %vm7037 = vcmask 261120
  %v7038 = vsel %vm7037, %v7036, %v7035
  %7040 = vst.msk [vmem:[#allocation2 + $0xd] sm:$0x5] %vm6936, %v7038
  %7041 = vrot.lane.b32.xlu0 %v6938, 82
  %v7042 = vpop.permute.xlu0 %7041
  %7044 = vst.msk [vmem:[#allocation2 + $0xf] sm:$0x1] %vm6942, %v7042
  %7045 = vrot.lane.b32.xlu0 %v6945, 4
  %v7046 = vpop.permute.xlu0 %7045
  %7048 = vst.msk [vmem:[#allocation2 + $0xf] sm:$0x1] %vm6949, %v7046
  %vm7049 = vcmask 1042240
  %7050 = vst.msk [vmem:[#allocation2 + $0xe] sm:$0x3] %vm7049, 0.0
  %s7051 = smul.u32 4, 128
  %s7052 = smul.u32 %s7051, 5
  %s7053 = sshll.u32 %s7052, 4
  %7054 = dma.done [#allocation4], %s7053
  %v7055 = vld [vmem:[%s4] ss:$4 sm:$0x1f]
  %v7056 = vld [vmem:[#allocation2] sm:$0xff]
  %v7057 = vld [vmem:[#allocation2 + $0x8] sm:$0xff]
  %v7060 = vcombine.high %v7056, %v7056
  %v7062 = vunpack.c.l.s4 1983009808
  %v7063 = vunpack.c.0.s8 %v7062
  %v7064 = vlaneseq
  %v7065 = vshrl.u32 %v7064, 7
  %v7066 = vsub.s32 %v7063, %v7065
  %v7067 = vrot.slane %v7056, %v7066
  %v7069 = vunpack.c.l.s4 1983009808
  %v7070 = vunpack.c.0.s8 %v7069
  %v7071 = vlaneseq
  %v7072 = vshrl.u32 %v7071, 7
  %v7073 = vsub.s32 %v7070, %v7072
  %v7074 = vrot.slane %v7060, %v7073
  %v7075 = vcombine.high %v7067, %v7067
  %v7076 = vcombine.high %v7074, %v7074
  %v7077 = vcombine.high %v7057, %v7057
  %v7079 = vunpack.c.l.s4 1983009808
  %v7080 = vunpack.c.0.s8 %v7079
  %v7081 = vlaneseq
  %v7082 = vshrl.u32 %v7081, 7
  %v7083 = vsub.s32 %v7080, %v7082
  %v7084 = vrot.slane %v7057, %v7083
  %v7086 = vunpack.c.l.s4 1983009808
  %v7087 = vunpack.c.0.s8 %v7086
  %v7088 = vlaneseq
  %v7089 = vshrl.u32 %v7088, 7
  %v7090 = vsub.s32 %v7087, %v7089
  %v7091 = vrot.slane %v7077, %v7090
  %v7092 = vcombine.high %v7084, %v7084
  %v7093 = vcombine.high %v7091, %v7091
  %v7102 = vpack.c.bf16 %v7067, %v7067
  %v7103 = vpack.c.bf16 %v7075, %v7075
  %v7104 = vpack.c.bf16 %v7074, %v7074
  %v7105 = vpack.c.bf16 %v7076, %v7076
  %v7106 = vpack.c.bf16 %v7084, %v7084
  %v7107 = vpack.c.bf16 %v7092, %v7092
  %v7108 = vpack.c.bf16 %v7091, %v7091
  %v7109 = vpack.c.bf16 %v7093, %v7093
  %v7110 = vld [vmem:[#allocation3] sm:$0xff]
  %v7111 = vld [vmem:[#allocation3 + $0x8] sm:$0xff]
  %v7112 = vld [vmem:[#allocation3 + $0x10] sm:$0xff]
  %v7113 = vld [vmem:[#allocation3 + $0x18] sm:$0xff]
  %v7114 = vld [vmem:[#allocation3 + $0x20] sm:$0xff]
  %v7115 = vld [vmem:[#allocation3 + $0x28] sm:$0xff]
  %v7116 = vld [vmem:[#allocation3 + $0x30] sm:$0xff]
  %v7117 = vld [vmem:[#allocation3 + $0x38] sm:$0xff]
  %v7118 = vld [vmem:[#allocation3 + $0x40] sm:$0xff]
  %v7119 = vld [vmem:[#allocation3 + $0x48] sm:$0xff]
  %v7120 = vld [vmem:[#allocation3 + $0x50] sm:$0xff]
  %v7121 = vld [vmem:[#allocation3 + $0x58] sm:$0xff]
  %v7122 = vld [vmem:[#allocation3 + $0x60] sm:$0xff]
  %v7123 = vld [vmem:[#allocation3 + $0x68] sm:$0xff]
  %v7124 = vld [vmem:[#allocation3 + $0x70] sm:$0xff]
  %v7125 = vld [vmem:[#allocation3 + $0x78] sm:$0xff]
  %v7126 = vld [vmem:[#allocation3 + $0x80] sm:$0xff]
  %v7127 = vld [vmem:[#allocation3 + $0x88] sm:$0xff]
  %v7128 = vld [vmem:[#allocation3 + $0x90] sm:$0xff]
  %v7129 = vld [vmem:[#allocation3 + $0x98] sm:$0xff]
  %v7130 = vld [vmem:[#allocation3 + $0xa0] sm:$0xff]
  %v7131 = vld [vmem:[#allocation3 + $0xa8] sm:$0xff]
  %v7132 = vld [vmem:[#allocation3 + $0xb0] sm:$0xff]
  %v7133 = vld [vmem:[#allocation3 + $0xb8] sm:$0xff]
  %v7134 = vld [vmem:[#allocation3 + $0xc0] sm:$0xff]
  %v7135 = vld [vmem:[#allocation3 + $0xc8] sm:$0xff]
  %v7136 = vld [vmem:[#allocation3 + $0xd0] sm:$0xff]
  %v7137 = vld [vmem:[#allocation3 + $0xd8] sm:$0xff]
  %v7138 = vld [vmem:[#allocation3 + $0xe0] sm:$0xff]
  %v7139 = vld [vmem:[#allocation3 + $0xe8] sm:$0xff]
  %v7140 = vld [vmem:[#allocation3 + $0xf0] sm:$0xff]
  %v7141 = vld [vmem:[#allocation3 + $0xf8] sm:$0xff]
  %v7142 = vld [vmem:[#allocation3 + $0x100] sm:$0xff]
  %v7143 = vld [vmem:[#allocation3 + $0x108] sm:$0xff]
  %v7144 = vld [vmem:[#allocation3 + $0x110] sm:$0xff]
  %v7145 = vld [vmem:[#allocation3 + $0x118] sm:$0xff]
  %v7146 = vld [vmem:[#allocation3 + $0x120] sm:$0xff]
  %v7147 = vld [vmem:[#allocation3 + $0x128] sm:$0xff]
  %v7148 = vld [vmem:[#allocation3 + $0x130] sm:$0xff]
  %v7149 = vld [vmem:[#allocation3 + $0x138] sm:$0xff]
  %v7150 = vld [vmem:[#allocation3 + $0x140] sm:$0xff]
  %v7151 = vld [vmem:[#allocation3 + $0x148] sm:$0xff]
  %v7152 = vld [vmem:[#allocation3 + $0x150] sm:$0xff]
  %v7153 = vld [vmem:[#allocation3 + $0x158] sm:$0xff]
  %v7154 = vld [vmem:[#allocation3 + $0x160] sm:$0xff]
  %v7155 = vld [vmem:[#allocation3 + $0x168] sm:$0xff]
  %v7156 = vld [vmem:[#allocation3 + $0x170] sm:$0xff]
  %v7157 = vld [vmem:[#allocation3 + $0x178] sm:$0xff]
  %v7158 = vld [vmem:[#allocation3 + $0x180] sm:$0xff]
  %v7159 = vld [vmem:[#allocation3 + $0x188] sm:$0xff]
  %v7160 = vld [vmem:[#allocation3 + $0x190] sm:$0xff]
  %v7161 = vld [vmem:[#allocation3 + $0x198] sm:$0xff]
  %v7162 = vld [vmem:[#allocation3 + $0x1a0] sm:$0xff]
  %v7163 = vld [vmem:[#allocation3 + $0x1a8] sm:$0xff]
  %v7164 = vld [vmem:[#allocation3 + $0x1b0] sm:$0xff]
  %v7165 = vld [vmem:[#allocation3 + $0x1b8] sm:$0xff]
  %v7166 = vld [vmem:[#allocation3 + $0x1c0] sm:$0xff]
  %v7167 = vld [vmem:[#allocation3 + $0x1c8] sm:$0xff]
  %v7168 = vld [vmem:[#allocation3 + $0x1d0] sm:$0xff]
  %v7169 = vld [vmem:[#allocation3 + $0x1d8] sm:$0xff]
  %v7170 = vld [vmem:[#allocation3 + $0x1e0] sm:$0xff]
  %v7171 = vld [vmem:[#allocation3 + $0x1e8] sm:$0xff]
  %v7172 = vld [vmem:[#allocation3 + $0x1f0] sm:$0xff]
  %v7173 = vld [vmem:[#allocation3 + $0x1f8] sm:$0xff]
  %v7174 = vld [vmem:[#allocation3 + $0x200] sm:$0xff]
  %v7175 = vld [vmem:[#allocation3 + $0x208] sm:$0xff]
  %v7176 = vld [vmem:[#allocation3 + $0x210] sm:$0xff]
  %v7177 = vld [vmem:[#allocation3 + $0x218] sm:$0xff]
  %v7178 = vld [vmem:[#allocation3 + $0x220] sm:$0xff]
  %v7179 = vld [vmem:[#allocation3 + $0x228] sm:$0xff]
  %v7180 = vld [vmem:[#allocation3 + $0x230] sm:$0xff]
  %v7181 = vld [vmem:[#allocation3 + $0x238] sm:$0xff]
  %v7182 = vld [vmem:[#allocation3 + $0x240] sm:$0xff]
  %v7183 = vld [vmem:[#allocation3 + $0x248] sm:$0xff]
  %v7184 = vld [vmem:[#allocation3 + $0x250] sm:$0xff]
  %v7185 = vld [vmem:[#allocation3 + $0x258] sm:$0xff]
  %v7186 = vld [vmem:[#allocation3 + $0x260] sm:$0xff]
  %v7187 = vld [vmem:[#allocation3 + $0x268] sm:$0xff]
  %v7188 = vld [vmem:[#allocation3 + $0x270] sm:$0xff]
  %v7189 = vld [vmem:[#allocation3 + $0x278] sm:$0xff]
  %v7190 = vld [vmem:[#allocation3 + $0x280] sm:$0xff]
  %v7191 = vld [vmem:[#allocation3 + $0x288] sm:$0xff]
  %v7192 = vld [vmem:[#allocation3 + $0x290] sm:$0xff]
  %v7193 = vld [vmem:[#allocation3 + $0x298] sm:$0xff]
  %v7194 = vld [vmem:[#allocation3 + $0x2a0] sm:$0xff]
  %v7195 = vld [vmem:[#allocation3 + $0x2a8] sm:$0xff]
  %v7196 = vld [vmem:[#allocation3 + $0x2b0] sm:$0xff]
  %v7197 = vld [vmem:[#allocation3 + $0x2b8] sm:$0xff]
  %v7198 = vld [vmem:[#allocation3 + $0x2c0] sm:$0xff]
  %v7199 = vld [vmem:[#allocation3 + $0x2c8] sm:$0xff]
  %v7200 = vld [vmem:[#allocation3 + $0x2d0] sm:$0xff]
  %v7201 = vld [vmem:[#allocation3 + $0x2d8] sm:$0xff]
  %v7202 = vld [vmem:[#allocation3 + $0x2e0] sm:$0xff]
  %v7203 = vld [vmem:[#allocation3 + $0x2e8] sm:$0xff]
  %v7204 = vld [vmem:[#allocation3 + $0x2f0] sm:$0xff]
  %v7205 = vld [vmem:[#allocation3 + $0x2f8] sm:$0xff]
  %v7206 = vld [vmem:[#allocation3 + $0x300] sm:$0xff]
  %v7207 = vld [vmem:[#allocation3 + $0x308] sm:$0xff]
  %v7208 = vld [vmem:[#allocation3 + $0x310] sm:$0xff]
  %v7209 = vld [vmem:[#allocation3 + $0x318] sm:$0xff]
  %v7210 = vld [vmem:[#allocation3 + $0x320] sm:$0xff]
  %v7211 = vld [vmem:[#allocation3 + $0x328] sm:$0xff]
  %v7212 = vld [vmem:[#allocation3 + $0x330] sm:$0xff]
  %v7213 = vld [vmem:[#allocation3 + $0x338] sm:$0xff]
  %v7214 = vld [vmem:[#allocation3 + $0x340] sm:$0xff]
  %v7215 = vld [vmem:[#allocation3 + $0x348] sm:$0xff]
  %v7216 = vld [vmem:[#allocation3 + $0x350] sm:$0xff]
  %v7217 = vld [vmem:[#allocation3 + $0x358] sm:$0xff]
  %v7218 = vld [vmem:[#allocation3 + $0x360] sm:$0xff]
  %v7219 = vld [vmem:[#allocation3 + $0x368] sm:$0xff]
  %v7220 = vld [vmem:[#allocation3 + $0x370] sm:$0xff]
  %v7221 = vld [vmem:[#allocation3 + $0x378] sm:$0xff]
  %v7222 = vld [vmem:[#allocation3 + $0x380] sm:$0xff]
  %v7223 = vld [vmem:[#allocation3 + $0x388] sm:$0xff]
  %v7224 = vld [vmem:[#allocation3 + $0x390] sm:$0xff]
  %v7225 = vld [vmem:[#allocation3 + $0x398] sm:$0xff]
  %v7226 = vld [vmem:[#allocation3 + $0x3a0] sm:$0xff]
  %v7227 = vld [vmem:[#allocation3 + $0x3a8] sm:$0xff]
  %v7228 = vld [vmem:[#allocation3 + $0x3b0] sm:$0xff]
  %v7229 = vld [vmem:[#allocation3 + $0x3b8] sm:$0xff]
  %v7230 = vld [vmem:[#allocation3 + $0x3c0] sm:$0xff]
  %v7231 = vld [vmem:[#allocation3 + $0x3c8] sm:$0xff]
  %v7232 = vld [vmem:[#allocation3 + $0x3d0] sm:$0xff]
  %v7233 = vld [vmem:[#allocation3 + $0x3d8] sm:$0xff]
  %v7234 = vld [vmem:[#allocation3 + $0x3e0] sm:$0xff]
  %v7235 = vld [vmem:[#allocation3 + $0x3e8] sm:$0xff]
  %v7236 = vld [vmem:[#allocation3 + $0x3f0] sm:$0xff]
  %v7237 = vld [vmem:[#allocation3 + $0x3f8] sm:$0xff]
  %v7238 = vld [vmem:[#allocation3 + $0x400] sm:$0xff]
  %v7239 = vld [vmem:[#allocation3 + $0x408] sm:$0xff]
  %v7240 = vld [vmem:[#allocation3 + $0x410] sm:$0xff]
  %v7241 = vld [vmem:[#allocation3 + $0x418] sm:$0xff]
  %v7242 = vld [vmem:[#allocation3 + $0x420] sm:$0xff]
  %v7243 = vld [vmem:[#allocation3 + $0x428] sm:$0xff]
  %v7244 = vld [vmem:[#allocation3 + $0x430] sm:$0xff]
  %v7245 = vld [vmem:[#allocation3 + $0x438] sm:$0xff]
  %v7246 = vld [vmem:[#allocation3 + $0x440] sm:$0xff]
  %v7247 = vld [vmem:[#allocation3 + $0x448] sm:$0xff]
  %v7248 = vld [vmem:[#allocation3 + $0x450] sm:$0xff]
  %v7249 = vld [vmem:[#allocation3 + $0x458] sm:$0xff]
  %v7250 = vld [vmem:[#allocation3 + $0x460] sm:$0xff]
  %v7251 = vld [vmem:[#allocation3 + $0x468] sm:$0xff]
  %v7252 = vld [vmem:[#allocation3 + $0x470] sm:$0xff]
  %v7253 = vld [vmem:[#allocation3 + $0x478] sm:$0xff]
  %v7254 = vld [vmem:[#allocation3 + $0x480] sm:$0xff]
  %v7255 = vld [vmem:[#allocation3 + $0x488] sm:$0xff]
  %v7256 = vld [vmem:[#allocation3 + $0x490] sm:$0xff]
  %v7257 = vld [vmem:[#allocation3 + $0x498] sm:$0xff]
  %v7258 = vld [vmem:[#allocation3 + $0x4a0] sm:$0xff]
  %v7259 = vld [vmem:[#allocation3 + $0x4a8] sm:$0xff]
  %v7260 = vld [vmem:[#allocation3 + $0x4b0] sm:$0xff]
  %v7261 = vld [vmem:[#allocation3 + $0x4b8] sm:$0xff]
  %v7262 = vld [vmem:[#allocation3 + $0x4c0] sm:$0xff]
  %v7263 = vld [vmem:[#allocation3 + $0x4c8] sm:$0xff]
  %v7264 = vld [vmem:[#allocation3 + $0x4d0] sm:$0xff]
  %v7265 = vld [vmem:[#allocation3 + $0x4d8] sm:$0xff]
  %v7266 = vld [vmem:[#allocation3 + $0x4e0] sm:$0xff]
  %v7267 = vld [vmem:[#allocation3 + $0x4e8] sm:$0xff]
  %v7268 = vld [vmem:[#allocation3 + $0x4f0] sm:$0xff]
  %v7269 = vld [vmem:[#allocation3 + $0x4f8] sm:$0xff]
  %v7270 = vld [vmem:[#allocation3 + $0x500] sm:$0xff]
  %v7271 = vld [vmem:[#allocation3 + $0x508] sm:$0xff]
  %v7272 = vld [vmem:[#allocation3 + $0x510] sm:$0xff]
  %v7273 = vld [vmem:[#allocation3 + $0x518] sm:$0xff]
  %v7274 = vld [vmem:[#allocation3 + $0x520] sm:$0xff]
  %v7275 = vld [vmem:[#allocation3 + $0x528] sm:$0xff]
  %v7276 = vld [vmem:[#allocation3 + $0x530] sm:$0xff]
  %v7277 = vld [vmem:[#allocation3 + $0x538] sm:$0xff]
  %v7278 = vld [vmem:[#allocation3 + $0x540] sm:$0xff]
  %v7279 = vld [vmem:[#allocation3 + $0x548] sm:$0xff]
  %v7280 = vld [vmem:[#allocation3 + $0x550] sm:$0xff]
  %v7281 = vld [vmem:[#allocation3 + $0x558] sm:$0xff]
  %v7282 = vld [vmem:[#allocation3 + $0x560] sm:$0xff]
  %v7283 = vld [vmem:[#allocation3 + $0x568] sm:$0xff]
  %v7284 = vld [vmem:[#allocation3 + $0x570] sm:$0xff]
  %v7285 = vld [vmem:[#allocation3 + $0x578] sm:$0xff]
  %v7286 = vld [vmem:[#allocation3 + $0x580] sm:$0xff]
  %v7287 = vld [vmem:[#allocation3 + $0x588] sm:$0xff]
  %v7288 = vld [vmem:[#allocation3 + $0x590] sm:$0xff]
  %v7289 = vld [vmem:[#allocation3 + $0x598] sm:$0xff]
  %v7290 = vld [vmem:[#allocation3 + $0x5a0] sm:$0xff]
  %v7291 = vld [vmem:[#allocation3 + $0x5a8] sm:$0xff]
  %v7292 = vld [vmem:[#allocation3 + $0x5b0] sm:$0xff]
  %v7293 = vld [vmem:[#allocation3 + $0x5b8] sm:$0xff]
  %v7294 = vld [vmem:[#allocation3 + $0x5c0] sm:$0xff]
  %v7295 = vld [vmem:[#allocation3 + $0x5c8] sm:$0xff]
  %v7296 = vld [vmem:[#allocation3 + $0x5d0] sm:$0xff]
  %v7297 = vld [vmem:[#allocation3 + $0x5d8] sm:$0xff]
  %v7298 = vld [vmem:[#allocation3 + $0x5e0] sm:$0xff]
  %v7299 = vld [vmem:[#allocation3 + $0x5e8] sm:$0xff]
  %v7300 = vld [vmem:[#allocation3 + $0x5f0] sm:$0xff]
  %v7301 = vld [vmem:[#allocation3 + $0x5f8] sm:$0xff]
  %v7302 = vld [vmem:[#allocation3 + $0x600] sm:$0xff]
  %v7303 = vld [vmem:[#allocation3 + $0x608] sm:$0xff]
  %v7304 = vld [vmem:[#allocation3 + $0x610] sm:$0xff]
  %v7305 = vld [vmem:[#allocation3 + $0x618] sm:$0xff]
  %v7306 = vld [vmem:[#allocation3 + $0x620] sm:$0xff]
  %v7307 = vld [vmem:[#allocation3 + $0x628] sm:$0xff]
  %v7308 = vld [vmem:[#allocation3 + $0x630] sm:$0xff]
  %v7309 = vld [vmem:[#allocation3 + $0x638] sm:$0xff]
  %v7310 = vld [vmem:[#allocation3 + $0x640] sm:$0xff]
  %v7311 = vld [vmem:[#allocation3 + $0x648] sm:$0xff]
  %v7312 = vld [vmem:[#allocation3 + $0x650] sm:$0xff]
  %v7313 = vld [vmem:[#allocation3 + $0x658] sm:$0xff]
  %v7314 = vld [vmem:[#allocation3 + $0x660] sm:$0xff]
  %v7315 = vld [vmem:[#allocation3 + $0x668] sm:$0xff]
  %v7316 = vld [vmem:[#allocation3 + $0x670] sm:$0xff]
  %v7317 = vld [vmem:[#allocation3 + $0x678] sm:$0xff]
  %v7318 = vld [vmem:[#allocation3 + $0x680] sm:$0xff]
  %v7319 = vld [vmem:[#allocation3 + $0x688] sm:$0xff]
  %v7320 = vld [vmem:[#allocation3 + $0x690] sm:$0xff]
  %v7321 = vld [vmem:[#allocation3 + $0x698] sm:$0xff]
  %v7322 = vld [vmem:[#allocation3 + $0x6a0] sm:$0xff]
  %v7323 = vld [vmem:[#allocation3 + $0x6a8] sm:$0xff]
  %v7324 = vld [vmem:[#allocation3 + $0x6b0] sm:$0xff]
  %v7325 = vld [vmem:[#allocation3 + $0x6b8] sm:$0xff]
  %v7326 = vld [vmem:[#allocation3 + $0x6c0] sm:$0xff]
  %v7327 = vld [vmem:[#allocation3 + $0x6c8] sm:$0xff]
  %v7328 = vld [vmem:[#allocation3 + $0x6d0] sm:$0xff]
  %v7329 = vld [vmem:[#allocation3 + $0x6d8] sm:$0xff]
  %v7330 = vld [vmem:[#allocation3 + $0x6e0] sm:$0xff]
  %v7331 = vld [vmem:[#allocation3 + $0x6e8] sm:$0xff]
  %v7332 = vld [vmem:[#allocation3 + $0x6f0] sm:$0xff]
  %v7333 = vld [vmem:[#allocation3 + $0x6f8] sm:$0xff]
  %v7334 = vld [vmem:[#allocation3 + $0x700] sm:$0xff]
  %v7335 = vld [vmem:[#allocation3 + $0x708] sm:$0xff]
  %v7336 = vld [vmem:[#allocation3 + $0x710] sm:$0xff]
  %v7337 = vld [vmem:[#allocation3 + $0x718] sm:$0xff]
  %v7338 = vld [vmem:[#allocation3 + $0x720] sm:$0xff]
  %v7339 = vld [vmem:[#allocation3 + $0x728] sm:$0xff]
  %v7340 = vld [vmem:[#allocation3 + $0x730] sm:$0xff]
  %v7341 = vld [vmem:[#allocation3 + $0x738] sm:$0xff]
  %v7342 = vld [vmem:[#allocation3 + $0x740] sm:$0xff]
  %v7343 = vld [vmem:[#allocation3 + $0x748] sm:$0xff]
  %v7344 = vld [vmem:[#allocation3 + $0x750] sm:$0xff]
  %v7345 = vld [vmem:[#allocation3 + $0x758] sm:$0xff]
  %v7346 = vld [vmem:[#allocation3 + $0x760] sm:$0xff]
  %v7347 = vld [vmem:[#allocation3 + $0x768] sm:$0xff]
  %v7348 = vld [vmem:[#allocation3 + $0x770] sm:$0xff]
  %v7349 = vld [vmem:[#allocation3 + $0x778] sm:$0xff]
  %v7350 = vld [vmem:[#allocation3 + $0x780] sm:$0xff]
  %v7351 = vld [vmem:[#allocation3 + $0x788] sm:$0xff]
  %v7352 = vld [vmem:[#allocation3 + $0x790] sm:$0xff]
  %v7353 = vld [vmem:[#allocation3 + $0x798] sm:$0xff]
  %v7354 = vld [vmem:[#allocation3 + $0x7a0] sm:$0xff]
  %v7355 = vld [vmem:[#allocation3 + $0x7a8] sm:$0xff]
  %v7356 = vld [vmem:[#allocation3 + $0x7b0] sm:$0xff]
  %v7357 = vld [vmem:[#allocation3 + $0x7b8] sm:$0xff]
  %v7358 = vld [vmem:[#allocation3 + $0x7c0] sm:$0xff]
  %v7359 = vld [vmem:[#allocation3 + $0x7c8] sm:$0xff]
  %v7360 = vld [vmem:[#allocation3 + $0x7d0] sm:$0xff]
  %v7361 = vld [vmem:[#allocation3 + $0x7d8] sm:$0xff]
  %v7362 = vld [vmem:[#allocation3 + $0x7e0] sm:$0xff]
  %v7363 = vld [vmem:[#allocation3 + $0x7e8] sm:$0xff]
  %v7364 = vld [vmem:[#allocation3 + $0x7f0] sm:$0xff]
  %v7365 = vld [vmem:[#allocation3 + $0x7f8] sm:$0xff]
  %v7366 = vld [vmem:[#allocation3 + $0x800] sm:$0xff]
  %v7367 = vld [vmem:[#allocation3 + $0x808] sm:$0xff]
  %v7368 = vld [vmem:[#allocation3 + $0x810] sm:$0xff]
  %v7369 = vld [vmem:[#allocation3 + $0x818] sm:$0xff]
  %v7370 = vld [vmem:[#allocation3 + $0x820] sm:$0xff]
  %v7371 = vld [vmem:[#allocation3 + $0x828] sm:$0xff]
  %v7372 = vld [vmem:[#allocation3 + $0x830] sm:$0xff]
  %v7373 = vld [vmem:[#allocation3 + $0x838] sm:$0xff]
  %v7374 = vld [vmem:[#allocation3 + $0x840] sm:$0xff]
  %v7375 = vld [vmem:[#allocation3 + $0x848] sm:$0xff]
  %v7376 = vld [vmem:[#allocation3 + $0x850] sm:$0xff]
  %v7377 = vld [vmem:[#allocation3 + $0x858] sm:$0xff]
  %v7378 = vld [vmem:[#allocation3 + $0x860] sm:$0xff]
  %v7379 = vld [vmem:[#allocation3 + $0x868] sm:$0xff]
  %v7380 = vld [vmem:[#allocation3 + $0x870] sm:$0xff]
  %v7381 = vld [vmem:[#allocation3 + $0x878] sm:$0xff]
  %v7382 = vld [vmem:[#allocation3 + $0x880] sm:$0xff]
  %v7383 = vld [vmem:[#allocation3 + $0x888] sm:$0xff]
  %v7384 = vld [vmem:[#allocation3 + $0x890] sm:$0xff]
  %v7385 = vld [vmem:[#allocation3 + $0x898] sm:$0xff]
  %v7386 = vld [vmem:[#allocation3 + $0x8a0] sm:$0xff]
  %v7387 = vld [vmem:[#allocation3 + $0x8a8] sm:$0xff]
  %v7388 = vld [vmem:[#allocation3 + $0x8b0] sm:$0xff]
  %v7389 = vld [vmem:[#allocation3 + $0x8b8] sm:$0xff]
  %v7390 = vld [vmem:[#allocation3 + $0x8c0] sm:$0xff]
  %v7391 = vld [vmem:[#allocation3 + $0x8c8] sm:$0xff]
  %v7392 = vld [vmem:[#allocation3 + $0x8d0] sm:$0xff]
  %v7393 = vld [vmem:[#allocation3 + $0x8d8] sm:$0xff]
  %v7394 = vld [vmem:[#allocation3 + $0x8e0] sm:$0xff]
  %v7395 = vld [vmem:[#allocation3 + $0x8e8] sm:$0xff]
  %v7396 = vld [vmem:[#allocation3 + $0x8f0] sm:$0xff]
  %v7397 = vld [vmem:[#allocation3 + $0x8f8] sm:$0xff]
  %v7398 = vld [vmem:[#allocation3 + $0x900] sm:$0xff]
  %v7399 = vld [vmem:[#allocation3 + $0x908] sm:$0xff]
  %v7400 = vld [vmem:[#allocation3 + $0x910] sm:$0xff]
  %v7401 = vld [vmem:[#allocation3 + $0x918] sm:$0xff]
  %v7402 = vld [vmem:[#allocation3 + $0x920] sm:$0xff]
  %v7403 = vld [vmem:[#allocation3 + $0x928] sm:$0xff]
  %v7404 = vld [vmem:[#allocation3 + $0x930] sm:$0xff]
  %v7405 = vld [vmem:[#allocation3 + $0x938] sm:$0xff]
  %v7406 = vld [vmem:[#allocation3 + $0x940] sm:$0xff]
  %v7407 = vld [vmem:[#allocation3 + $0x948] sm:$0xff]
  %v7408 = vld [vmem:[#allocation3 + $0x950] sm:$0xff]
  %v7409 = vld [vmem:[#allocation3 + $0x958] sm:$0xff]
  %v7410 = vld [vmem:[#allocation3 + $0x960] sm:$0xff]
  %v7411 = vld [vmem:[#allocation3 + $0x968] sm:$0xff]
  %v7412 = vld [vmem:[#allocation3 + $0x970] sm:$0xff]
  %v7413 = vld [vmem:[#allocation3 + $0x978] sm:$0xff]
  %v7414 = vld [vmem:[#allocation3 + $0x980] sm:$0xff]
  %v7415 = vld [vmem:[#allocation3 + $0x988] sm:$0xff]
  %v7416 = vld [vmem:[#allocation3 + $0x990] sm:$0xff]
  %v7417 = vld [vmem:[#allocation3 + $0x998] sm:$0xff]
  %v7418 = vld [vmem:[#allocation3 + $0x9a0] sm:$0xff]
  %v7419 = vld [vmem:[#allocation3 + $0x9a8] sm:$0xff]
  %v7420 = vld [vmem:[#allocation3 + $0x9b0] sm:$0xff]
  %v7421 = vld [vmem:[#allocation3 + $0x9b8] sm:$0xff]
  %v7422 = vld [vmem:[#allocation3 + $0x9c0] sm:$0xff]
  %v7423 = vld [vmem:[#allocation3 + $0x9c8] sm:$0xff]
  %v7424 = vld [vmem:[#allocation3 + $0x9d0] sm:$0xff]
  %v7425 = vld [vmem:[#allocation3 + $0x9d8] sm:$0xff]
  %v7426 = vld [vmem:[#allocation3 + $0x9e0] sm:$0xff]
  %v7427 = vld [vmem:[#allocation3 + $0x9e8] sm:$0xff]
  %v7428 = vld [vmem:[#allocation3 + $0x9f0] sm:$0xff]
  %v7429 = vld [vmem:[#allocation3 + $0x9f8] sm:$0xff]
  %v7431 = vlaneseq
  %v7432 = vshrl.u32 %v7431, 7
  %v7433 = vsub.s32 0, %v7432
  %v7434 = vrot.slane %v7055, %v7433
  %v7435 = vlaneseq
  %v7436 = vshrl.u32 %v7435, 7
  %v7437 = vsub.s32 1, %v7436
  %v7438 = vrot.slane %v7055, %v7437
  %v7439 = vlaneseq
  %v7440 = vshrl.u32 %v7439, 7
  %v7441 = vsub.s32 2, %v7440
  %v7442 = vrot.slane %v7055, %v7441
  %v7443 = vlaneseq
  %v7444 = vshrl.u32 %v7443, 7
  %v7445 = vsub.s32 3, %v7444
  %v7446 = vrot.slane %v7055, %v7445
  %v7447 = vlaneseq
  %v7448 = vshrl.u32 %v7447, 7
  %v7449 = vsub.s32 4, %v7448
  %v7450 = vrot.slane %v7055, %v7449
  %7456 = vmatprep.subr.bf16.mxu0 %v7111
  %7457 = vmatpush1.bf16.msra.mxu0 %v7110
  %7458 = vmatprep.subr.bf16.mxu0 %v7116
  %7459 = vmatpush1.bf16.msra.mxu0 %v7115
  %7460 = vmatprep.subr.bf16.mxu0 %v7121
  %7461 = vmatpush1.bf16.msra.mxu0 %v7120
  %7462 = vmatprep.subr.bf16.mxu0 %v7126
  %7463 = vmatpush1.bf16.msra.mxu0 %v7125
  %7464 = vmatprep.subr.bf16.mxu0 %v7131
  %7465 = vmatpush1.bf16.msra.mxu0 %v7130
  %7466 = vmatprep.subr.bf16.mxu0 %v7136
  %7467 = vmatpush1.bf16.msra.mxu0 %v7135
  %7468 = vmatprep.subr.bf16.mxu0 %v7141
  %7469 = vmatpush1.bf16.msra.mxu0 %v7140
  %7470 = vmatprep.subr.bf16.mxu0 %v7146
  %7471 = vmatpush1.bf16.msra.mxu0 %v7145
  %7472 = vmatprep.subr.bf16.mxu0 %v7151
  %7473 = vmatpush1.bf16.msra.mxu0 %v7150
  %7474 = vmatprep.subr.bf16.mxu0 %v7156
  %7475 = vmatpush1.bf16.msra.mxu0 %v7155
  %7476 = vmatprep.subr.bf16.mxu0 %v7161
  %7477 = vmatpush1.bf16.msra.mxu0 %v7160
  %7478 = vmatprep.subr.bf16.mxu0 %v7166
  %7479 = vmatpush1.bf16.msra.mxu0 %v7165
  %7480 = vmatprep.subr.bf16.mxu0 %v7171
  %7481 = vmatpush1.bf16.msra.mxu0 %v7170
  %7482 = vmatprep.subr.bf16.mxu0 %v7176
  %7483 = vmatpush1.bf16.msra.mxu0 %v7175
  %7484 = vmatprep.subr.bf16.mxu0 %v7181
  %7485 = vmatpush1.bf16.msra.mxu0 %v7180
  %7486 = vmatprep.subr.bf16.mxu0 %v7186
  %7487 = vmatpush1.bf16.msra.mxu0 %v7185
  %7488 = vmatprep.mubr.bf16.mxu0 %v7103
  %7489 = vmatmul.mubr.bf16.gmra.mrb[0].mxu0 %v7102
  %v7490 = vpop.f32.mrb[0].mxu0
  %v7491 = vadd.f32 %v7434, %v7490
  %v7492 = vpop.f32.mrb[0].mxu0
  %v7493 = vadd.f32 %v7438, %v7492
  %v7494 = vpop.f32.mrb[0].mxu0
  %v7495 = vpop.f32.mrb[0].mxu0
  %7496 = vdwg.mxu0
  %7497 = vmatprep.subr.bf16.mxu0 %v7191
  %7498 = vmatpush1.bf16.msra.mxu0 %v7190
  %7499 = vmatprep.subr.bf16.mxu0 %v7196
  %7500 = vmatpush1.bf16.msra.mxu0 %v7195
  %7501 = vmatprep.subr.bf16.mxu0 %v7201
  %7502 = vmatpush1.bf16.msra.mxu0 %v7200
  %7503 = vmatprep.subr.bf16.mxu0 %v7206
  %7504 = vmatpush1.bf16.msra.mxu0 %v7205
  %7505 = vmatprep.subr.bf16.mxu0 %v7211
  %7506 = vmatpush1.bf16.msra.mxu0 %v7210
  %7507 = vmatprep.subr.bf16.mxu0 %v7216
  %7508 = vmatpush1.bf16.msra.mxu0 %v7215
  %7509 = vmatprep.subr.bf16.mxu0 %v7221
  %7510 = vmatpush1.bf16.msra.mxu0 %v7220
  %7511 = vmatprep.subr.bf16.mxu0 %v7226
  %7512 = vmatpush1.bf16.msra.mxu0 %v7225
  %7513 = vmatprep.subr.bf16.mxu0 %v7231
  %7514 = vmatpush1.bf16.msra.mxu0 %v7230
  %7515 = vmatprep.subr.bf16.mxu0 %v7236
  %7516 = vmatpush1.bf16.msra.mxu0 %v7235
  %7517 = vmatprep.subr.bf16.mxu0 %v7241
  %7518 = vmatpush1.bf16.msra.mxu0 %v7240
  %7519 = vmatprep.subr.bf16.mxu0 %v7246
  %7520 = vmatpush1.bf16.msra.mxu0 %v7245
  %7521 = vmatprep.subr.bf16.mxu0 %v7251
  %7522 = vmatpush1.bf16.msra.mxu0 %v7250
  %7523 = vmatprep.subr.bf16.mxu0 %v7256
  %7524 = vmatpush1.bf16.msra.mxu0 %v7255
  %7525 = vmatprep.subr.bf16.mxu0 %v7261
  %7526 = vmatpush1.bf16.msra.mxu0 %v7260
  %7527 = vmatprep.subr.bf16.mxu0 %v7266
  %7528 = vmatpush1.bf16.msra.mxu0 %v7265
  %7529 = vmatprep.mubr.bf16.mxu0 %v7105
  %7530 = vmatmul.mubr.bf16.gmra.mrb[0].mxu0 %v7104
  %v7531 = vpop.f32.mrb[0].mxu0
  %v7532 = vadd.f32 %v7491, %v7531
  %v7533 = vpop.f32.mrb[0].mxu0
  %v7534 = vadd.f32 %v7493, %v7533
  %v7535 = vpop.f32.mrb[0].mxu0
  %v7536 = vpop.f32.mrb[0].mxu0
  %7537 = vdwg.mxu0
  %7538 = vmatprep.subr.bf16.mxu0 %v7271
  %7539 = vmatpush1.bf16.msra.mxu0 %v7270
  %7540 = vmatprep.subr.bf16.mxu0 %v7276
  %7541 = vmatpush1.bf16.msra.mxu0 %v7275
  %7542 = vmatprep.subr.bf16.mxu0 %v7281
  %7543 = vmatpush1.bf16.msra.mxu0 %v7280
  %7544 = vmatprep.subr.bf16.mxu0 %v7286
  %7545 = vmatpush1.bf16.msra.mxu0 %v7285
  %7546 = vmatprep.subr.bf16.mxu0 %v7291
  %7547 = vmatpush1.bf16.msra.mxu0 %v7290
  %7548 = vmatprep.subr.bf16.mxu0 %v7296
  %7549 = vmatpush1.bf16.msra.mxu0 %v7295
  %7550 = vmatprep.subr.bf16.mxu0 %v7301
  %7551 = vmatpush1.bf16.msra.mxu0 %v7300
  %7552 = vmatprep.subr.bf16.mxu0 %v7306
  %7553 = vmatpush1.bf16.msra.mxu0 %v7305
  %7554 = vmatprep.subr.bf16.mxu0 %v7311
  %7555 = vmatpush1.bf16.msra.mxu0 %v7310
  %7556 = vmatprep.subr.bf16.mxu0 %v7316
  %7557 = vmatpush1.bf16.msra.mxu0 %v7315
  %7558 = vmatprep.subr.bf16.mxu0 %v7321
  %7559 = vmatpush1.bf16.msra.mxu0 %v7320
  %7560 = vmatprep.subr.bf16.mxu0 %v7326
  %7561 = vmatpush1.bf16.msra.mxu0 %v7325
  %7562 = vmatprep.subr.bf16.mxu0 %v7331
  %7563 = vmatpush1.bf16.msra.mxu0 %v7330
  %7564 = vmatprep.subr.bf16.mxu0 %v7336
  %7565 = vmatpush1.bf16.msra.mxu0 %v7335
  %7566 = vmatprep.subr.bf16.mxu0 %v7341
  %7567 = vmatpush1.bf16.msra.mxu0 %v7340
  %7568 = vmatprep.subr.bf16.mxu0 %v7346
  %7569 = vmatpush1.bf16.msra.mxu0 %v7345
  %7570 = vmatprep.mubr.bf16.mxu0 %v7107
  %7571 = vmatmul.mubr.bf16.gmra.mrb[0].mxu0 %v7106
  %v7572 = vpop.f32.mrb[0].mxu0
  %v7573 = vadd.f32 %v7532, %v7572
  %v7574 = vpop.f32.mrb[0].mxu0
  %v7575 = vadd.f32 %v7534, %v7574
  %v7576 = vpop.f32.mrb[0].mxu0
  %v7577 = vpop.f32.mrb[0].mxu0
  %7578 = vdwg.mxu0
  %7579 = vmatprep.subr.bf16.mxu0 %v7351
  %7580 = vmatpush1.bf16.msra.mxu0 %v7350
  %7581 = vmatprep.subr.bf16.mxu0 %v7356
  %7582 = vmatpush1.bf16.msra.mxu0 %v7355
  %7583 = vmatprep.subr.bf16.mxu0 %v7361
  %7584 = vmatpush1.bf16.msra.mxu0 %v7360
  %7585 = vmatprep.subr.bf16.mxu0 %v7366
  %7586 = vmatpush1.bf16.msra.mxu0 %v7365
  %7587 = vmatprep.subr.bf16.mxu0 %v7371
  %7588 = vmatpush1.bf16.msra.mxu0 %v7370
  %7589 = vmatprep.subr.bf16.mxu0 %v7376
  %7590 = vmatpush1.bf16.msra.mxu0 %v7375
  %7591 = vmatprep.subr.bf16.mxu0 %v7381
  %7592 = vmatpush1.bf16.msra.mxu0 %v7380
  %7593 = vmatprep.subr.bf16.mxu0 %v7386
  %7594 = vmatpush1.bf16.msra.mxu0 %v7385
  %7595 = vmatprep.subr.bf16.mxu0 %v7391
  %7596 = vmatpush1.bf16.msra.mxu0 %v7390
  %7597 = vmatprep.subr.bf16.mxu0 %v7396
  %7598 = vmatpush1.bf16.msra.mxu0 %v7395
  %7599 = vmatprep.subr.bf16.mxu0 %v7401
  %7600 = vmatpush1.bf16.msra.mxu0 %v7400
  %7601 = vmatprep.subr.bf16.mxu0 %v7406
  %7602 = vmatpush1.bf16.msra.mxu0 %v7405
  %7603 = vmatprep.subr.bf16.mxu0 %v7411
  %7604 = vmatpush1.bf16.msra.mxu0 %v7410
  %7605 = vmatprep.subr.bf16.mxu0 %v7416
  %7606 = vmatpush1.bf16.msra.mxu0 %v7415
  %7607 = vmatprep.subr.bf16.mxu0 %v7421
  %7608 = vmatpush1.bf16.msra.mxu0 %v7420
  %7609 = vmatprep.subr.bf16.mxu0 %v7426
  %7610 = vmatpush1.bf16.msra.mxu0 %v7425
  %7611 = vmatprep.mubr.bf16.mxu0 %v7109
  %7612 = vmatmul.mubr.bf16.gmra.mrb[0].mxu0 %v7108
  %v7613 = vpop.f32.mrb[0].mxu0
  %v7614 = vadd.f32 %v7573, %v7613
  %v7615 = vpop.f32.mrb[0].mxu0
  %v7616 = vadd.f32 %v7575, %v7615
  %v7617 = vpop.f32.mrb[0].mxu0
  %v7618 = vpop.f32.mrb[0].mxu0
  %7619 = vdwg.mxu0
  %7620 = vmatprep.subr.bf16.mxu0 %v7113
  %7621 = vmatpush1.bf16.msra.mxu0 %v7112
  %7622 = vmatprep.subr.bf16.mxu0 %v7118
  %7623 = vmatpush1.bf16.msra.mxu0 %v7117
  %7624 = vmatprep.subr.bf16.mxu0 %v7123
  %7625 = vmatpush1.bf16.msra.mxu0 %v7122
  %7626 = vmatprep.subr.bf16.mxu0 %v7128
  %7627 = vmatpush1.bf16.msra.mxu0 %v7127
  %7628 = vmatprep.subr.bf16.mxu0 %v7133
  %7629 = vmatpush1.bf16.msra.mxu0 %v7132
  %7630 = vmatprep.subr.bf16.mxu0 %v7138
  %7631 = vmatpush1.bf16.msra.mxu0 %v7137
  %7632 = vmatprep.subr.bf16.mxu0 %v7143
  %7633 = vmatpush1.bf16.msra.mxu0 %v7142
  %7634 = vmatprep.subr.bf16.mxu0 %v7148
  %7635 = vmatpush1.bf16.msra.mxu0 %v7147
  %7636 = vmatprep.subr.bf16.mxu0 %v7153
  %7637 = vmatpush1.bf16.msra.mxu0 %v7152
  %7638 = vmatprep.subr.bf16.mxu0 %v7158
  %7639 = vmatpush1.bf16.msra.mxu0 %v7157
  %7640 = vmatprep.subr.bf16.mxu0 %v7163
  %7641 = vmatpush1.bf16.msra.mxu0 %v7162
  %7642 = vmatprep.subr.bf16.mxu0 %v7168
  %7643 = vmatpush1.bf16.msra.mxu0 %v7167
  %7644 = vmatprep.subr.bf16.mxu0 %v7173
  %7645 = vmatpush1.bf16.msra.mxu0 %v7172
  %7646 = vmatprep.subr.bf16.mxu0 %v7178
  %7647 = vmatpush1.bf16.msra.mxu0 %v7177
  %7648 = vmatprep.subr.bf16.mxu0 %v7183
  %7649 = vmatpush1.bf16.msra.mxu0 %v7182
  %7650 = vmatprep.subr.bf16.mxu0 %v7188
  %7651 = vmatpush1.bf16.msra.mxu0 %v7187
  %7652 = vmatprep.mubr.bf16.mxu0 %v7103
  %7653 = vmatmul.mubr.bf16.gmra.mrb[0].mxu0 %v7102
  %v7654 = vpop.f32.mrb[0].mxu0
  %v7655 = vadd.f32 %v7442, %v7654
  %v7656 = vpop.f32.mrb[0].mxu0
  %v7657 = vadd.f32 %v7446, %v7656
  %v7658 = vpop.f32.mrb[0].mxu0
  %v7659 = vpop.f32.mrb[0].mxu0
  %7660 = vdwg.mxu0
  %7661 = vmatprep.subr.bf16.mxu0 %v7193
  %7662 = vmatpush1.bf16.msra.mxu0 %v7192
  %7663 = vmatprep.subr.bf16.mxu0 %v7198
  %7664 = vmatpush1.bf16.msra.mxu0 %v7197
  %7665 = vmatprep.subr.bf16.mxu0 %v7203
  %7666 = vmatpush1.bf16.msra.mxu0 %v7202
  %7667 = vmatprep.subr.bf16.mxu0 %v7208
  %7668 = vmatpush1.bf16.msra.mxu0 %v7207
  %7669 = vmatprep.subr.bf16.mxu0 %v7213
  %7670 = vmatpush1.bf16.msra.mxu0 %v7212
  %7671 = vmatprep.subr.bf16.mxu0 %v7218
  %7672 = vmatpush1.bf16.msra.mxu0 %v7217
  %7673 = vmatprep.subr.bf16.mxu0 %v7223
  %7674 = vmatpush1.bf16.msra.mxu0 %v7222
  %7675 = vmatprep.subr.bf16.mxu0 %v7228
  %7676 = vmatpush1.bf16.msra.mxu0 %v7227
  %7677 = vmatprep.subr.bf16.mxu0 %v7233
  %7678 = vmatpush1.bf16.msra.mxu0 %v7232
  %7679 = vmatprep.subr.bf16.mxu0 %v7238
  %7680 = vmatpush1.bf16.msra.mxu0 %v7237
  %7681 = vmatprep.subr.bf16.mxu0 %v7243
  %7682 = vmatpush1.bf16.msra.mxu0 %v7242
  %7683 = vmatprep.subr.bf16.mxu0 %v7248
  %7684 = vmatpush1.bf16.msra.mxu0 %v7247
  %7685 = vmatprep.subr.bf16.mxu0 %v7253
  %7686 = vmatpush1.bf16.msra.mxu0 %v7252
  %7687 = vmatprep.subr.bf16.mxu0 %v7258
  %7688 = vmatpush1.bf16.msra.mxu0 %v7257
  %7689 = vmatprep.subr.bf16.mxu0 %v7263
  %7690 = vmatpush1.bf16.msra.mxu0 %v7262
  %7691 = vmatprep.subr.bf16.mxu0 %v7268
  %7692 = vmatpush1.bf16.msra.mxu0 %v7267
  %7693 = vmatprep.mubr.bf16.mxu0 %v7105
  %7694 = vmatmul.mubr.bf16.gmra.mrb[0].mxu0 %v7104
  %v7695 = vpop.f32.mrb[0].mxu0
  %v7696 = vadd.f32 %v7655, %v7695
  %v7697 = vpop.f32.mrb[0].mxu0
  %v7698 = vadd.f32 %v7657, %v7697
  %v7699 = vpop.f32.mrb[0].mxu0
  %v7700 = vpop.f32.mrb[0].mxu0
  %7701 = vdwg.mxu0
  %7702 = vmatprep.subr.bf16.mxu0 %v7273
  %7703 = vmatpush1.bf16.msra.mxu0 %v7272
  %7704 = vmatprep.subr.bf16.mxu0 %v7278
  %7705 = vmatpush1.bf16.msra.mxu0 %v7277
  %7706 = vmatprep.subr.bf16.mxu0 %v7283
  %7707 = vmatpush1.bf16.msra.mxu0 %v7282
  %7708 = vmatprep.subr.bf16.mxu0 %v7288
  %7709 = vmatpush1.bf16.msra.mxu0 %v7287
  %7710 = vmatprep.subr.bf16.mxu0 %v7293
  %7711 = vmatpush1.bf16.msra.mxu0 %v7292
  %7712 = vmatprep.subr.bf16.mxu0 %v7298
  %7713 = vmatpush1.bf16.msra.mxu0 %v7297
  %7714 = vmatprep.subr.bf16.mxu0 %v7303
  %7715 = vmatpush1.bf16.msra.mxu0 %v7302
  %7716 = vmatprep.subr.bf16.mxu0 %v7308
  %7717 = vmatpush1.bf16.msra.mxu0 %v7307
  %7718 = vmatprep.subr.bf16.mxu0 %v7313
  %7719 = vmatpush1.bf16.msra.mxu0 %v7312
  %7720 = vmatprep.subr.bf16.mxu0 %v7318
  %7721 = vmatpush1.bf16.msra.mxu0 %v7317
  %7722 = vmatprep.subr.bf16.mxu0 %v7323
  %7723 = vmatpush1.bf16.msra.mxu0 %v7322
  %7724 = vmatprep.subr.bf16.mxu0 %v7328
  %7725 = vmatpush1.bf16.msra.mxu0 %v7327
  %7726 = vmatprep.subr.bf16.mxu0 %v7333
  %7727 = vmatpush1.bf16.msra.mxu0 %v7332
  %7728 = vmatprep.subr.bf16.mxu0 %v7338
  %7729 = vmatpush1.bf16.msra.mxu0 %v7337
  %7730 = vmatprep.subr.bf16.mxu0 %v7343
  %7731 = vmatpush1.bf16.msra.mxu0 %v7342
  %7732 = vmatprep.subr.bf16.mxu0 %v7348
  %7733 = vmatpush1.bf16.msra.mxu0 %v7347
  %7734 = vmatprep.mubr.bf16.mxu0 %v7107
  %7735 = vmatmul.mubr.bf16.gmra.mrb[0].mxu0 %v7106
  %v7736 = vpop.f32.mrb[0].mxu0
  %v7737 = vadd.f32 %v7696, %v7736
  %v7738 = vpop.f32.mrb[0].mxu0
  %v7739 = vadd.f32 %v7698, %v7738
  %v7740 = vpop.f32.mrb[0].mxu0
  %v7741 = vpop.f32.mrb[0].mxu0
  %7742 = vdwg.mxu0
  %7743 = vmatprep.subr.bf16.mxu0 %v7353
  %7744 = vmatpush1.bf16.msra.mxu0 %v7352
  %7745 = vmatprep.subr.bf16.mxu0 %v7358
  %7746 = vmatpush1.bf16.msra.mxu0 %v7357
  %7747 = vmatprep.subr.bf16.mxu0 %v7363
  %7748 = vmatpush1.bf16.msra.mxu0 %v7362
  %7749 = vmatprep.subr.bf16.mxu0 %v7368
  %7750 = vmatpush1.bf16.msra.mxu0 %v7367
  %7751 = vmatprep.subr.bf16.mxu0 %v7373
  %7752 = vmatpush1.bf16.msra.mxu0 %v7372
  %7753 = vmatprep.subr.bf16.mxu0 %v7378
  %7754 = vmatpush1.bf16.msra.mxu0 %v7377
  %7755 = vmatprep.subr.bf16.mxu0 %v7383
  %7756 = vmatpush1.bf16.msra.mxu0 %v7382
  %7757 = vmatprep.subr.bf16.mxu0 %v7388
  %7758 = vmatpush1.bf16.msra.mxu0 %v7387
  %7759 = vmatprep.subr.bf16.mxu0 %v7393
  %7760 = vmatpush1.bf16.msra.mxu0 %v7392
  %7761 = vmatprep.subr.bf16.mxu0 %v7398
  %7762 = vmatpush1.bf16.msra.mxu0 %v7397
  %7763 = vmatprep.subr.bf16.mxu0 %v7403
  %7764 = vmatpush1.bf16.msra.mxu0 %v7402
  %7765 = vmatprep.subr.bf16.mxu0 %v7408
  %7766 = vmatpush1.bf16.msra.mxu0 %v7407
  %7767 = vmatprep.subr.bf16.mxu0 %v7413
  %7768 = vmatpush1.bf16.msra.mxu0 %v7412
  %7769 = vmatprep.subr.bf16.mxu0 %v7418
  %7770 = vmatpush1.bf16.msra.mxu0 %v7417
  %7771 = vmatprep.subr.bf16.mxu0 %v7423
  %7772 = vmatpush1.bf16.msra.mxu0 %v7422
  %7773 = vmatprep.subr.bf16.mxu0 %v7428
  %7774 = vmatpush1.bf16.msra.mxu0 %v7427
  %7775 = vmatprep.mubr.bf16.mxu0 %v7109
  %7776 = vmatmul.mubr.bf16.gmra.mrb[0].mxu0 %v7108
  %v7777 = vpop.f32.mrb[0].mxu0
  %v7778 = vadd.f32 %v7737, %v7777
  %v7779 = vpop.f32.mrb[0].mxu0
  %v7780 = vadd.f32 %v7739, %v7779
  %v7781 = vpop.f32.mrb[0].mxu0
  %v7782 = vpop.f32.mrb[0].mxu0
  %7783 = vdwg.mxu0
  %7784 = vmatprep.subr.bf16.mxu0 0
  %7785 = vmatpush1.bf16.msra.mxu0 %v7114
  %7786 = vmatprep.subr.bf16.mxu0 0
  %7787 = vmatpush1.bf16.msra.mxu0 %v7119
  %7788 = vmatprep.subr.bf16.mxu0 0
  %7789 = vmatpush1.bf16.msra.mxu0 %v7124
  %7790 = vmatprep.subr.bf16.mxu0 0
  %7791 = vmatpush1.bf16.msra.mxu0 %v7129
  %7792 = vmatprep.subr.bf16.mxu0 0
  %7793 = vmatpush1.bf16.msra.mxu0 %v7134
  %7794 = vmatprep.subr.bf16.mxu0 0
  %7795 = vmatpush1.bf16.msra.mxu0 %v7139
  %7796 = vmatprep.subr.bf16.mxu0 0
  %7797 = vmatpush1.bf16.msra.mxu0 %v7144
  %7798 = vmatprep.subr.bf16.mxu0 0
  %7799 = vmatpush1.bf16.msra.mxu0 %v7149
  %7800 = vmatprep.subr.bf16.mxu0 0
  %7801 = vmatpush1.bf16.msra.mxu0 %v7154
  %7802 = vmatprep.subr.bf16.mxu0 0
  %7803 = vmatpush1.bf16.msra.mxu0 %v7159
  %7804 = vmatprep.subr.bf16.mxu0 0
  %7805 = vmatpush1.bf16.msra.mxu0 %v7164
  %7806 = vmatprep.subr.bf16.mxu0 0
  %7807 = vmatpush1.bf16.msra.mxu0 %v7169
  %7808 = vmatprep.subr.bf16.mxu0 0
  %7809 = vmatpush1.bf16.msra.mxu0 %v7174
  %7810 = vmatprep.subr.bf16.mxu0 0
  %7811 = vmatpush1.bf16.msra.mxu0 %v7179
  %7812 = vmatprep.subr.bf16.mxu0 0
  %7813 = vmatpush1.bf16.msra.mxu0 %v7184
  %7814 = vmatprep.subr.bf16.mxu0 0
  %7815 = vmatpush1.bf16.msra.mxu0 %v7189
  %7816 = vmatprep.mubr.bf16.mxu0 %v7103
  %7817 = vmatmul.mubr.bf16.gmra.mrb[0].mxu0 %v7102
  %v7818 = vpop.f32.mrb[0].mxu0
  %v7819 = vadd.f32 %v7450, %v7818
  %v7820 = vpop.f32.mrb[0].mxu0
  %v7821 = vpop.f32.mrb[0].mxu0
  %v7822 = vpop.f32.mrb[0].mxu0
  %7823 = vdwg.mxu0
  %7824 = vmatprep.subr.bf16.mxu0 0
  %7825 = vmatpush1.bf16.msra.mxu0 %v7194
  %7826 = vmatprep.subr.bf16.mxu0 0
  %7827 = vmatpush1.bf16.msra.mxu0 %v7199
  %7828 = vmatprep.subr.bf16.mxu0 0
  %7829 = vmatpush1.bf16.msra.mxu0 %v7204
  %7830 = vmatprep.subr.bf16.mxu0 0
  %7831 = vmatpush1.bf16.msra.mxu0 %v7209
  %7832 = vmatprep.subr.bf16.mxu0 0
  %7833 = vmatpush1.bf16.msra.mxu0 %v7214
  %7834 = vmatprep.subr.bf16.mxu0 0
  %7835 = vmatpush1.bf16.msra.mxu0 %v7219
  %7836 = vmatprep.subr.bf16.mxu0 0
  %7837 = vmatpush1.bf16.msra.mxu0 %v7224
  %7838 = vmatprep.subr.bf16.mxu0 0
  %7839 = vmatpush1.bf16.msra.mxu0 %v7229
  %7840 = vmatprep.subr.bf16.mxu0 0
  %7841 = vmatpush1.bf16.msra.mxu0 %v7234
  %7842 = vmatprep.subr.bf16.mxu0 0
  %7843 = vmatpush1.bf16.msra.mxu0 %v7239
  %7844 = vmatprep.subr.bf16.mxu0 0
  %7845 = vmatpush1.bf16.msra.mxu0 %v7244
  %7846 = vmatprep.subr.bf16.mxu0 0
  %7847 = vmatpush1.bf16.msra.mxu0 %v7249
  %7848 = vmatprep.subr.bf16.mxu0 0
  %7849 = vmatpush1.bf16.msra.mxu0 %v7254
  %7850 = vmatprep.subr.bf16.mxu0 0
  %7851 = vmatpush1.bf16.msra.mxu0 %v7259
  %7852 = vmatprep.subr.bf16.mxu0 0
  %7853 = vmatpush1.bf16.msra.mxu0 %v7264
  %7854 = vmatprep.subr.bf16.mxu0 0
  %7855 = vmatpush1.bf16.msra.mxu0 %v7269
  %7856 = vmatprep.mubr.bf16.mxu0 %v7105
  %7857 = vmatmul.mubr.bf16.gmra.mrb[0].mxu0 %v7104
  %v7858 = vpop.f32.mrb[0].mxu0
  %v7859 = vadd.f32 %v7819, %v7858
  %v7860 = vpop.f32.mrb[0].mxu0
  %v7861 = vpop.f32.mrb[0].mxu0
  %v7862 = vpop.f32.mrb[0].mxu0
  %7863 = vdwg.mxu0
  %7864 = vmatprep.subr.bf16.mxu0 0
  %7865 = vmatpush1.bf16.msra.mxu0 %v7274
  %7866 = vmatprep.subr.bf16.mxu0 0
  %7867 = vmatpush1.bf16.msra.mxu0 %v7279
  %7868 = vmatprep.subr.bf16.mxu0 0
  %7869 = vmatpush1.bf16.msra.mxu0 %v7284
  %7870 = vmatprep.subr.bf16.mxu0 0
  %7871 = vmatpush1.bf16.msra.mxu0 %v7289
  %7872 = vmatprep.subr.bf16.mxu0 0
  %7873 = vmatpush1.bf16.msra.mxu0 %v7294
  %7874 = vmatprep.subr.bf16.mxu0 0
  %7875 = vmatpush1.bf16.msra.mxu0 %v7299
  %7876 = vmatprep.subr.bf16.mxu0 0
  %7877 = vmatpush1.bf16.msra.mxu0 %v7304
  %7878 = vmatprep.subr.bf16.mxu0 0
  %7879 = vmatpush1.bf16.msra.mxu0 %v7309
  %7880 = vmatprep.subr.bf16.mxu0 0
  %7881 = vmatpush1.bf16.msra.mxu0 %v7314
  %7882 = vmatprep.subr.bf16.mxu0 0
  %7883 = vmatpush1.bf16.msra.mxu0 %v7319
  %7884 = vmatprep.subr.bf16.mxu0 0
  %7885 = vmatpush1.bf16.msra.mxu0 %v7324
  %7886 = vmatprep.subr.bf16.mxu0 0
  %7887 = vmatpush1.bf16.msra.mxu0 %v7329
  %7888 = vmatprep.subr.bf16.mxu0 0
  %7889 = vmatpush1.bf16.msra.mxu0 %v7334
  %7890 = vmatprep.subr.bf16.mxu0 0
  %7891 = vmatpush1.bf16.msra.mxu0 %v7339
  %7892 = vmatprep.subr.bf16.mxu0 0
  %7893 = vmatpush1.bf16.msra.mxu0 %v7344
  %7894 = vmatprep.subr.bf16.mxu0 0
  %7895 = vmatpush1.bf16.msra.mxu0 %v7349
  %7896 = vmatprep.mubr.bf16.mxu0 %v7107
  %7897 = vmatmul.mubr.bf16.gmra.mrb[0].mxu0 %v7106
  %v7898 = vpop.f32.mrb[0].mxu0
  %v7899 = vadd.f32 %v7859, %v7898
  %v7900 = vpop.f32.mrb[0].mxu0
  %v7901 = vpop.f32.mrb[0].mxu0
  %v7902 = vpop.f32.mrb[0].mxu0
  %7903 = vdwg.mxu0
  %7904 = vmatprep.subr.bf16.mxu0 0
  %7905 = vmatpush1.bf16.msra.mxu0 %v7354
  %7906 = vmatprep.subr.bf16.mxu0 0
  %7907 = vmatpush1.bf16.msra.mxu0 %v7359
  %7908 = vmatprep.subr.bf16.mxu0 0
  %7909 = vmatpush1.bf16.msra.mxu0 %v7364
  %7910 = vmatprep.subr.bf16.mxu0 0
  %7911 = vmatpush1.bf16.msra.mxu0 %v7369
  %7912 = vmatprep.subr.bf16.mxu0 0
  %7913 = vmatpush1.bf16.msra.mxu0 %v7374
  %7914 = vmatprep.subr.bf16.mxu0 0
  %7915 = vmatpush1.bf16.msra.mxu0 %v7379
  %7916 = vmatprep.subr.bf16.mxu0 0
  %7917 = vmatpush1.bf16.msra.mxu0 %v7384
  %7918 = vmatprep.subr.bf16.mxu0 0
  %7919 = vmatpush1.bf16.msra.mxu0 %v7389
  %7920 = vmatprep.subr.bf16.mxu0 0
  %7921 = vmatpush1.bf16.msra.mxu0 %v7394
  %7922 = vmatprep.subr.bf16.mxu0 0
  %7923 = vmatpush1.bf16.msra.mxu0 %v7399
  %7924 = vmatprep.subr.bf16.mxu0 0
  %7925 = vmatpush1.bf16.msra.mxu0 %v7404
  %7926 = vmatprep.subr.bf16.mxu0 0
  %7927 = vmatpush1.bf16.msra.mxu0 %v7409
  %7928 = vmatprep.subr.bf16.mxu0 0
  %7929 = vmatpush1.bf16.msra.mxu0 %v7414
  %7930 = vmatprep.subr.bf16.mxu0 0
  %7931 = vmatpush1.bf16.msra.mxu0 %v7419
  %7932 = vmatprep.subr.bf16.mxu0 0
  %7933 = vmatpush1.bf16.msra.mxu0 %v7424
  %7934 = vmatprep.subr.bf16.mxu0 0
  %7935 = vmatpush1.bf16.msra.mxu0 %v7429
  %7936 = vmatprep.mubr.bf16.mxu0 %v7109
  %7937 = vmatmul.mubr.bf16.gmra.mrb[0].mxu0 %v7108
  %v7938 = vpop.f32.mrb[0].mxu0
  %v7939 = vadd.f32 %v7899, %v7938
  %v7940 = vpop.f32.mrb[0].mxu0
  %v7941 = vpop.f32.mrb[0].mxu0
  %v7942 = vpop.f32.mrb[0].mxu0
  %7943 = vdwg.mxu0
  %v7944 = vtanh.pop %v7614
  %v7945 = vtanh.pop %v7616
  %v7946 = vtanh.pop %v7778
  %v7947 = vtanh.pop %v7780
  %v7948 = vtanh.pop %v7939
  %s7949 = scalar_lea.vmem %s4, 1
  %v7950 = vld [vmem:[%s7949] ss:$4 sm:$0x1f]
  %v7951 = vld [vmem:[%s4 + $0x2] sm:$0x1]
  %v7953 = vlaneseq
  %v7954 = vshrl.u32 %v7953, 7
  %v7955 = vsub.s32 0, %v7954
  %v7956 = vrot.slane %v7950, %v7955
  %v7957 = vlaneseq
  %v7958 = vshrl.u32 %v7957, 7
  %v7959 = vsub.s32 1, %v7958
  %v7960 = vrot.slane %v7950, %v7959
  %v7961 = vlaneseq
  %v7962 = vshrl.u32 %v7961, 7
  %v7963 = vsub.s32 2, %v7962
  %v7964 = vrot.slane %v7950, %v7963
  %v7965 = vlaneseq
  %v7966 = vshrl.u32 %v7965, 7
  %v7967 = vsub.s32 3, %v7966
  %v7968 = vrot.slane %v7950, %v7967
  %v7969 = vlaneseq
  %v7970 = vshrl.u32 %v7969, 7
  %v7971 = vsub.s32 4, %v7970
  %v7972 = vrot.slane %v7950, %v7971
  %v7978 = vmul.f32 %v7944, %v7956
  %v7979 = vmul.f32 %v7945, %v7960
  %v7980 = vmul.f32 %v7946, %v7964
  %v7981 = vmul.f32 %v7947, %v7968
  %v7982 = vmul.f32 %v7948, %v7972
  %v7983 = vsel %vm5502, %v7978, 0.0
  %v7984 = vsel %vm5502, %v7979, 0.0
  %v7985 = vadd.f32 %v7983, %v7984
  %v7986 = vsel %vm5502, %v7980, 0.0
  %v7987 = vadd.f32 %v7985, %v7986
  %v7988 = vsel %vm5502, %v7981, 0.0
  %v7989 = vadd.f32 %v7987, %v7988
  %vm7990 = vcmask 713728
  %v7991 = vsel %vm7990, %v7982, 0.0
  %v7992 = vadd.f32 %v7989, %v7991
  %7993 = vadd.xlane.f32.xlu0 %v7992
  %v7994 = vpop.xlane.xlu0 %7993
  %v7995 = vlaneseq
  %v7996 = vshrl.u32 %v7995, 7
  %v7997 = vsub.s32 0, %v7996
  %v7998 = vrot.slane %v7951, %v7997
  %v7999 = vadd.f32 %v7994, %v7998
  %vm8000 = vcmask 1024
  %8001 = vst.msk [vmem:[%s6] sm:$0x3] %vm8000, %v7999
  // Predicated region
  $region70: #{cnn_1d_forward.1} parent=0 // pred_check
    _
  $region71: #{cnn_1d_forward.1} parent=0 // pred_check_branch
    %8003 = sbr.rel (0) target = $region73
  $region72: #{cnn_1d_forward.1} parent=0 // pred_region
    _
  $region73: #{cnn_1d_forward.1} parent=0 // pred_fallthru
    _
  // Predicated region
  $region74: #{cnn_1d_forward.1} parent=0 // pred_check
    _
  $region75: #{cnn_1d_forward.1} parent=0 // pred_check_branch
    %8005 = sbr.rel (0) target = $region77
  $region76: #{cnn_1d_forward.1} parent=0 // pred_region
    _
  $region77: #{cnn_1d_forward.1} parent=0 // pred_fallthru
    _
  %8006 = vsyncmov [#allocation4]
  %s8007 = vpop.sfrf %8006
  %p8008 = scmp.eq.s32.totalorder %s8007, 0
  %p8009 = pneg %p8008
  %8011 = shalt.err (%p8009)

</llo_original>
